<compile_context>
chip_gen: v6e
topology: v6e:2x2x1
jax: 0.10.0
libtpu: 0.0.40
codegen_flags: <defaults>
</compile_context>

<pallas_src>
import functools

import jax
import jax.numpy as jnp
from jax.experimental import pallas as pl
from jax.experimental.pallas import tpu as pltpu

_BN_EPS = 1e-5
_LANE = 128       # lane width (last dim)
_SUBLANE = 16     # pad batch to 16 rows: bf16 LHS packs 16 sublanes per vreg


def _round_up(n, m):
    return ((n + m - 1) // m) * m


# ----------------------------------------------------------------------------
# Pallas kernel: the entire ResidualGenerator forward, fused into one call,
# with per-layer weight DMA overlapped against the MXU.
#
#   refs = (x, w0_hbm, b0, w1_hbm, b1, ..., wL-1_hbm, bL-1,   # inputs
#           out,                                              # output
#           wbuf0, ..., wbufL-1, sems)                        # scratch
#   layer order: inproj, [block_i.lin1, block_i.lin2]*N, out1, out2, out3
# ----------------------------------------------------------------------------
def _fused_forward_kernel(*refs, num_residual_blocks):
    num_layers = 2 * num_residual_blocks + 4
    assert len(refs) == 3 * num_layers + 3

    x_ref = refs[0]
    w_hbm = refs[1:2 * num_layers + 1:2]          # raw HBM refs (pl.ANY)
    b_refs = refs[2:2 * num_layers + 1:2]         # f32 biases, auto-DMA'd
    o_ref = refs[2 * num_layers + 1]
    wbufs = refs[2 * num_layers + 2:3 * num_layers + 2]   # per-layer VMEM
    sems = refs[-1]                                        # DMA sems, shape (L,)

    # Issue ALL weight DMAs now, in layer order.  Layer l's matmul only waits
    # on sem[l], so layers l+1.. stream in behind the MXU.
    copies = []
    for l in range(num_layers):
        cp = pltpu.make_async_copy(w_hbm[l], wbufs[l], sems.at[l])
        cp.start()
        copies.append(cp)

    def layer(x_f32, li, act):
        copies[li].wait()                         # only blocks on THIS layer
        w = wbufs[li][...]                        # bf16 weights (BN pre-folded)
        y = jnp.dot(x_f32.astype(w.dtype), w,     # MXU, f32 accumulation
                    preferred_element_type=jnp.float32)
        y = y + b_refs[li][...]                   # f32 bias (BN pre-folded)
        if act == "relu":
            y = jnp.maximum(y, 0.0)
        elif act == "tanh":
            y = jnp.tanh(y)
        return y

    li = 0
    # input_projection: Linear + BN + ReLU
    x = layer(x_ref[...].astype(jnp.float32), li, "relu"); li += 1
    # residual blocks: Linear+BN+ReLU+(Dropout=id), Linear+BN, +skip, ReLU
    for _ in range(num_residual_blocks):
        h = layer(x, li, "relu"); li += 1
        y = layer(h, li, "none"); li += 1
        x = jnp.maximum(y + x, 0.0)
    # output layers: 512->256 (+Dropout=id), 256->128 (+Dropout=id), 128->out, Tanh
    x = layer(x, li, "relu"); li += 1
    x = layer(x, li, "relu"); li += 1
    x = layer(x, li, "tanh"); li += 1
    o_ref[...] = x.astype(o_ref.dtype)


def residual_generator_forward(prepared, spectrum):
    """Fused Pallas forward.  `prepared` comes from prepare_inference_params()."""
    layers = prepared["layers"]
    output_dim = prepared["output_dim"]
    num_blocks = prepared["num_blocks"]
    num_layers = len(layers)

    if spectrum.ndim > 2:
        spectrum = spectrum.reshape(spectrum.shape[0], -1)
    batch, din = spectrum.shape
    din_p = layers[0][0].shape[0]          # padded input width (lane multiple)
    dout_p = layers[-1][0].shape[1]        # padded output width (lane multiple)
    bp = _round_up(max(batch, _SUBLANE), _SUBLANE)

    # Zero-pad batch (sublane) and feature (lane) dims; padding contributes 0.
    x = jnp.pad(spectrum.astype(jnp.float32),
                ((0, bp - batch), (0, din_p - din)))

    inputs = [x]
    in_specs = [pl.BlockSpec(x.shape, lambda i: (0, 0))]
    scratch_shapes = []
    for (w, b) in layers:
        inputs += [w, b]
        in_specs += [pl.BlockSpec(memory_space=pl.ANY),       # weights stay in HBM
                     pl.BlockSpec(b.shape, lambda i: (0, 0))]  # tiny bias -> VMEM
        scratch_shapes.append(pltpu.VMEM(w.shape, jnp.bfloat16))
    scratch_shapes.append(pltpu.SemaphoreType.DMA((num_layers,)))

    kernel = functools.partial(_fused_forward_kernel,
                               num_residual_blocks=num_blocks)
    out = pl.pallas_call(
        kernel,
        out_shape=jax.ShapeDtypeStruct((bp, dout_p), jnp.float32),
        grid=(1,),
        in_specs=in_specs,
        out_specs=pl.BlockSpec((bp, dout_p), lambda i: (0, 0)),
        scratch_shapes=scratch_shapes,
        compiler_params=pltpu.CompilerParams(
            vmem_limit_bytes=16 * 1024 * 1024),
    )(*inputs)
    return out[:batch, :output_dim]


# ----------------------------------------------------------------------------
# Deterministic parameter construction (synthetic, no checkpoint loading)
# ----------------------------------------------------------------------------
def _init_linear(key, din, dout):
    kw, kb = jax.random.split(key)
    bound = 1.0 / jnp.sqrt(jnp.float32(din))
    w = jax.random.uniform(kw, (din, dout), jnp.float32, -bound, bound)
    b = jax.random.uniform(kb, (dout,), jnp.float32, -bound, bound)
    return w, b


def _init_bn(key, d):
    k1, k2, k3, k4 = jax.random.split(key, 4)
    gamma = 1.0 + 0.1 * jax.random.normal(k1, (d,), jnp.float32)
    beta = 0.1 * jax.random.normal(k2, (d,), jnp.float32)
    mean = 0.1 * jax.random.normal(k3, (d,), jnp.float32)
    var = 0.9 + 0.1 * jnp.abs(jax.random.normal(k4, (d,), jnp.float32))
    return (gamma, beta, mean, var)


def build_params(key, input_dim, output_dim, num_residual_blocks=3):
    keys = jax.random.split(key, 64)
    ki = iter(range(64))
    params = {}
    w, b = _init_linear(keys[next(ki)], input_dim, 512)
    params["inproj"] = (w, b, _init_bn(keys[next(ki)], 512))
    blocks = []
    for _ in range(num_residual_blocks):
        w1, b1 = _init_linear(keys[next(ki)], 512, 512)
        bn1 = _init_bn(keys[next(ki)], 512)
        w2, b2 = _init_linear(keys[next(ki)], 512, 512)
        bn2 = _init_bn(keys[next(ki)], 512)
        blocks.append((w1, b1, bn1, w2, b2, bn2))
    params["blocks"] = blocks
    w, b = _init_linear(keys[next(ki)], 512, 256)
    params["out1"] = (w, b, _init_bn(keys[next(ki)], 256))
    w, b = _init_linear(keys[next(ki)], 256, 128)
    params["out2"] = (w, b, _init_bn(keys[next(ki)], 128))
    params["out3"] = _init_linear(keys[next(ki)], 128, output_dim)
    return params


# ----------------------------------------------------------------------------
# Offline preparation: fold BN, pad to lane/sublane multiples, cast to bf16
# ----------------------------------------------------------------------------
def _fold_bn(w, b, bn):
    gamma, beta, mean, var = bn
    scale = gamma / jnp.sqrt(var + _BN_EPS)
    return w * scale[None, :], b * scale + (beta - mean * scale)


def _pad_layer(w, b):
    din, dout = w.shape
    din_p = _round_up(din, _LANE)
    dout_p = _round_up(dout, _LANE)
    wp = jnp.pad(w, ((0, din_p - din), (0, dout_p - dout))).astype(jnp.bfloat16)
    bp = jnp.pad(b, (0, dout_p - dout)).reshape(1, dout_p).astype(jnp.float32)
    return wp, bp


def prepare_inference_params(params):
    folded = []
    w, b, bn = params["inproj"]
    folded.append(_fold_bn(w, b, bn))
    for (w1, b1, bn1, w2, b2, bn2) in params["blocks"]:
        folded.append(_fold_bn(w1, b1, bn1))
        folded.append(_fold_bn(w2, b2, bn2))
    w, b, bn = params["out1"]; folded.append(_fold_bn(w, b, bn))
    w, b, bn = params["out2"]; folded.append(_fold_bn(w, b, bn))
    w, b = params["out3"]; folded.append((w, b))
    return {
        "layers": [_pad_layer(w, b) for (w, b) in folded],
        "output_dim": params["out3"][0].shape[1],
        "num_blocks": len(params["blocks"]),
    }


# ----------------------------------------------------------------------------
# Pure-JAX references
# ----------------------------------------------------------------------------
def reference_forward(prepared, spectrum):
    """Same numerics as the kernel: folded BN, bf16 weights/activations into the
    MXU, f32 accumulation."""
    layers = prepared["layers"]
    nb = prepared["num_blocks"]
    if spectrum.ndim > 2:
        spectrum = spectrum.reshape(spectrum.shape[0], -1)
    batch, din = spectrum.shape
    din_p = layers[0][0].shape[0]
    x = jnp.pad(spectrum.astype(jnp.float32), ((0, 0), (0, din_p - din)))

    def lin(x, w, b):
        return jnp.dot(x.astype(w.dtype), w,
                       preferred_element_type=jnp.float32) + b

    li = 0
    x = jnp.maximum(lin(x, *layers[li]), 0.0); li += 1
    for _ in range(nb):
        h = jnp.maximum(lin(x, *layers[li]), 0.0); li += 1
        x = jnp.maximum(lin(h, *layers[li]) + x, 0.0); li += 1
    x = jnp.maximum(lin(x, *layers[li]), 0.0); li += 1
    x = jnp.maximum(lin(x, *layers[li]), 0.0); li += 1
    x = jnp.tanh(lin(x, *layers[li])); li += 1
    return x[:, :prepared["output_dim"]]


def reference_forward_f32(params, spectrum):
    """Full-f32 eval-mode reference with unfolded BatchNorm (semantic check)."""
    if spectrum.ndim > 2:
        spectrum = spectrum.reshape(spectrum.shape[0], -1)

    def lin_bn(x, w, b, bn):
        gamma, beta, mean, var = bn
        y = x @ w + b
        return (y - mean) / jnp.sqrt(var + _BN_EPS) * gamma + beta

    w, b, bn = params["inproj"]
    x = jnp.maximum(lin_bn(spectrum, w, b, bn), 0.0)
    for (w1, b1, bn1, w2, b2, bn2) in params["blocks"]:
        h = jnp.maximum(lin_bn(x, w1, b1, bn1), 0.0)
        x = jnp.maximum(lin_bn(h, w2, b2, bn2) + x, 0.0)
    w, b, bn = params["out1"]
    x = jnp.maximum(lin_bn(x, w, b, bn), 0.0)
    w, b, bn = params["out2"]
    x = jnp.maximum(lin_bn(x, w, b, bn), 0.0)
    w, b = params["out3"]
    return jnp.tanh(x @ w + b)


# ----------------------------------------------------------------------------
if __name__ == "__main__":
    key = jax.random.PRNGKey(0)
    k_param, k_in = jax.random.split(key)

    batch, c, s = 2, 4, 16            # spectrum is 3-D -> flattened to (2, 64)
    input_dim = c * s                 # 64
    output_dim = 32
    spectrum = jax.random.normal(k_in, (batch, c, s), jnp.float32)

    params = build_params(k_param, input_dim, output_dim, num_residual_blocks=3)
    prepared = prepare_inference_params(params)

    out = residual_generator_forward(prepared, spectrum)
    out = jax.block_until_ready(out)
    assert out.shape == (batch, output_dim)

    # Tight check vs. a pure-JAX reference with identical numerics (bf16 weights,
    # f32 accumulation): verifies fusion / folding / residual / padding / slicing
    # / the manual DMA pipeline.
    ref = reference_forward(prepared, spectrum)
    assert jnp.allclose(out, ref, atol=1e-3, rtol=1e-3), "mismatch vs matched reference"

    # Loose semantic check vs. the full-f32, unfolded eval-mode forward
    # (tolerance accounts for bf16 weight rounding across 10 layers).
    ref32 = reference_forward_f32(params, spectrum)
    assert float(jnp.max(jnp.abs(out - ref32))) < 0.1, "mismatch vs f32 reference"

    print("KERNEL_OK")
</pallas_src>

<mosaic_0001>
module attributes {stable_mosaic.version = 11 : i64} {
  func.func @_fused_forward_kernel(%arg0: i32, %arg1: memref<16x128xf32, #tpu.memory_space<vmem>>, %arg2: memref<128x512xbf16, #tpu.memory_space<any>>, %arg3: memref<1x512xf32, #tpu.memory_space<vmem>>, %arg4: memref<512x512xbf16, #tpu.memory_space<any>>, %arg5: memref<1x512xf32, #tpu.memory_space<vmem>>, %arg6: memref<512x512xbf16, #tpu.memory_space<any>>, %arg7: memref<1x512xf32, #tpu.memory_space<vmem>>, %arg8: memref<512x512xbf16, #tpu.memory_space<any>>, %arg9: memref<1x512xf32, #tpu.memory_space<vmem>>, %arg10: memref<512x512xbf16, #tpu.memory_space<any>>, %arg11: memref<1x512xf32, #tpu.memory_space<vmem>>, %arg12: memref<512x512xbf16, #tpu.memory_space<any>>, %arg13: memref<1x512xf32, #tpu.memory_space<vmem>>, %arg14: memref<512x512xbf16, #tpu.memory_space<any>>, %arg15: memref<1x512xf32, #tpu.memory_space<vmem>>, %arg16: memref<512x256xbf16, #tpu.memory_space<any>>, %arg17: memref<1x256xf32, #tpu.memory_space<vmem>>, %arg18: memref<256x128xbf16, #tpu.memory_space<any>>, %arg19: memref<1x128xf32, #tpu.memory_space<vmem>>, %arg20: memref<128x128xbf16, #tpu.memory_space<any>>, %arg21: memref<1x128xf32, #tpu.memory_space<vmem>>, %arg22: memref<16x128xf32, #tpu.memory_space<vmem>>, %arg23: memref<128x512xbf16, #tpu.memory_space<vmem>>, %arg24: memref<512x512xbf16, #tpu.memory_space<vmem>>, %arg25: memref<512x512xbf16, #tpu.memory_space<vmem>>, %arg26: memref<512x512xbf16, #tpu.memory_space<vmem>>, %arg27: memref<512x512xbf16, #tpu.memory_space<vmem>>, %arg28: memref<512x512xbf16, #tpu.memory_space<vmem>>, %arg29: memref<512x512xbf16, #tpu.memory_space<vmem>>, %arg30: memref<512x256xbf16, #tpu.memory_space<vmem>>, %arg31: memref<256x128xbf16, #tpu.memory_space<vmem>>, %arg32: memref<128x128xbf16, #tpu.memory_space<vmem>>, %arg33: memref<10x!tpu.dma_semaphore, #tpu.memory_space<semaphore_mem>>) attributes {dimension_semantics = [#tpu.dimension_semantics<arbitrary>], iteration_bounds = array<i64: 1>, scalar_prefetch = 0 : i64, scratch_operands = 11 : i64, tpu.core_type = #tpu.core_type<tc>, window_params = [{pipeline_mode = #tpu.pipeline_mode<synchronous>, transform_indices = @transform_0, window_bounds = array<i64: 16, 128>}, {}, {pipeline_mode = #tpu.pipeline_mode<synchronous>, transform_indices = @transform_2, window_bounds = array<i64: 1, 512>}, {}, {pipeline_mode = #tpu.pipeline_mode<synchronous>, transform_indices = @transform_4, window_bounds = array<i64: 1, 512>}, {}, {pipeline_mode = #tpu.pipeline_mode<synchronous>, transform_indices = @transform_6, window_bounds = array<i64: 1, 512>}, {}, {pipeline_mode = #tpu.pipeline_mode<synchronous>, transform_indices = @transform_8, window_bounds = array<i64: 1, 512>}, {}, {pipeline_mode = #tpu.pipeline_mode<synchronous>, transform_indices = @transform_10, window_bounds = array<i64: 1, 512>}, {}, {pipeline_mode = #tpu.pipeline_mode<synchronous>, transform_indices = @transform_12, window_bounds = array<i64: 1, 512>}, {}, {pipeline_mode = #tpu.pipeline_mode<synchronous>, transform_indices = @transform_14, window_bounds = array<i64: 1, 512>}, {}, {pipeline_mode = #tpu.pipeline_mode<synchronous>, transform_indices = @transform_16, window_bounds = array<i64: 1, 256>}, {}, {pipeline_mode = #tpu.pipeline_mode<synchronous>, transform_indices = @transform_18, window_bounds = array<i64: 1, 128>}, {}, {pipeline_mode = #tpu.pipeline_mode<synchronous>, transform_indices = @transform_20, window_bounds = array<i64: 1, 128>}, {pipeline_mode = #tpu.pipeline_mode<synchronous>, transform_indices = @transform_21, window_bounds = array<i64: 16, 128>}]} {
    %c0_i32 = arith.constant 0 : i32
    %0 = tpu.memref_slice %arg33[%c0_i32] : memref<10x!tpu.dma_semaphore, #tpu.memory_space<semaphore_mem>> -> memref<1x!tpu.dma_semaphore, #tpu.memory_space<semaphore_mem>>
    %1 = tpu.memref_squeeze %0 : memref<1x!tpu.dma_semaphore, #tpu.memory_space<semaphore_mem>> -> memref<!tpu.dma_semaphore, #tpu.memory_space<semaphore_mem>>
    tpu.enqueue_dma source(%arg2 : memref<128x512xbf16, #tpu.memory_space<any>>) target(%arg23 : memref<128x512xbf16, #tpu.memory_space<vmem>>) target_semaphore(%1 : memref<!tpu.dma_semaphore, #tpu.memory_space<semaphore_mem>>)
    %c1_i32 = arith.constant 1 : i32
    %2 = tpu.memref_slice %arg33[%c1_i32] : memref<10x!tpu.dma_semaphore, #tpu.memory_space<semaphore_mem>> -> memref<1x!tpu.dma_semaphore, #tpu.memory_space<semaphore_mem>>
    %3 = tpu.memref_squeeze %2 : memref<1x!tpu.dma_semaphore, #tpu.memory_space<semaphore_mem>> -> memref<!tpu.dma_semaphore, #tpu.memory_space<semaphore_mem>>
    tpu.enqueue_dma source(%arg4 : memref<512x512xbf16, #tpu.memory_space<any>>) target(%arg24 : memref<512x512xbf16, #tpu.memory_space<vmem>>) target_semaphore(%3 : memref<!tpu.dma_semaphore, #tpu.memory_space<semaphore_mem>>)
    %c2_i32 = arith.constant 2 : i32
    %4 = tpu.memref_slice %arg33[%c2_i32] : memref<10x!tpu.dma_semaphore, #tpu.memory_space<semaphore_mem>> -> memref<1x!tpu.dma_semaphore, #tpu.memory_space<semaphore_mem>>
    %5 = tpu.memref_squeeze %4 : memref<1x!tpu.dma_semaphore, #tpu.memory_space<semaphore_mem>> -> memref<!tpu.dma_semaphore, #tpu.memory_space<semaphore_mem>>
    tpu.enqueue_dma source(%arg6 : memref<512x512xbf16, #tpu.memory_space<any>>) target(%arg25 : memref<512x512xbf16, #tpu.memory_space<vmem>>) target_semaphore(%5 : memref<!tpu.dma_semaphore, #tpu.memory_space<semaphore_mem>>)
    %c3_i32 = arith.constant 3 : i32
    %6 = tpu.memref_slice %arg33[%c3_i32] : memref<10x!tpu.dma_semaphore, #tpu.memory_space<semaphore_mem>> -> memref<1x!tpu.dma_semaphore, #tpu.memory_space<semaphore_mem>>
    %7 = tpu.memref_squeeze %6 : memref<1x!tpu.dma_semaphore, #tpu.memory_space<semaphore_mem>> -> memref<!tpu.dma_semaphore, #tpu.memory_space<semaphore_mem>>
    tpu.enqueue_dma source(%arg8 : memref<512x512xbf16, #tpu.memory_space<any>>) target(%arg26 : memref<512x512xbf16, #tpu.memory_space<vmem>>) target_semaphore(%7 : memref<!tpu.dma_semaphore, #tpu.memory_space<semaphore_mem>>)
    %c4_i32 = arith.constant 4 : i32
    %8 = tpu.memref_slice %arg33[%c4_i32] : memref<10x!tpu.dma_semaphore, #tpu.memory_space<semaphore_mem>> -> memref<1x!tpu.dma_semaphore, #tpu.memory_space<semaphore_mem>>
    %9 = tpu.memref_squeeze %8 : memref<1x!tpu.dma_semaphore, #tpu.memory_space<semaphore_mem>> -> memref<!tpu.dma_semaphore, #tpu.memory_space<semaphore_mem>>
    tpu.enqueue_dma source(%arg10 : memref<512x512xbf16, #tpu.memory_space<any>>) target(%arg27 : memref<512x512xbf16, #tpu.memory_space<vmem>>) target_semaphore(%9 : memref<!tpu.dma_semaphore, #tpu.memory_space<semaphore_mem>>)
    %c5_i32 = arith.constant 5 : i32
    %10 = tpu.memref_slice %arg33[%c5_i32] : memref<10x!tpu.dma_semaphore, #tpu.memory_space<semaphore_mem>> -> memref<1x!tpu.dma_semaphore, #tpu.memory_space<semaphore_mem>>
    %11 = tpu.memref_squeeze %10 : memref<1x!tpu.dma_semaphore, #tpu.memory_space<semaphore_mem>> -> memref<!tpu.dma_semaphore, #tpu.memory_space<semaphore_mem>>
    tpu.enqueue_dma source(%arg12 : memref<512x512xbf16, #tpu.memory_space<any>>) target(%arg28 : memref<512x512xbf16, #tpu.memory_space<vmem>>) target_semaphore(%11 : memref<!tpu.dma_semaphore, #tpu.memory_space<semaphore_mem>>)
    %c6_i32 = arith.constant 6 : i32
    %12 = tpu.memref_slice %arg33[%c6_i32] : memref<10x!tpu.dma_semaphore, #tpu.memory_space<semaphore_mem>> -> memref<1x!tpu.dma_semaphore, #tpu.memory_space<semaphore_mem>>
    %13 = tpu.memref_squeeze %12 : memref<1x!tpu.dma_semaphore, #tpu.memory_space<semaphore_mem>> -> memref<!tpu.dma_semaphore, #tpu.memory_space<semaphore_mem>>
    tpu.enqueue_dma source(%arg14 : memref<512x512xbf16, #tpu.memory_space<any>>) target(%arg29 : memref<512x512xbf16, #tpu.memory_space<vmem>>) target_semaphore(%13 : memref<!tpu.dma_semaphore, #tpu.memory_space<semaphore_mem>>)
    %c7_i32 = arith.constant 7 : i32
    %14 = tpu.memref_slice %arg33[%c7_i32] : memref<10x!tpu.dma_semaphore, #tpu.memory_space<semaphore_mem>> -> memref<1x!tpu.dma_semaphore, #tpu.memory_space<semaphore_mem>>
    %15 = tpu.memref_squeeze %14 : memref<1x!tpu.dma_semaphore, #tpu.memory_space<semaphore_mem>> -> memref<!tpu.dma_semaphore, #tpu.memory_space<semaphore_mem>>
    tpu.enqueue_dma source(%arg16 : memref<512x256xbf16, #tpu.memory_space<any>>) target(%arg30 : memref<512x256xbf16, #tpu.memory_space<vmem>>) target_semaphore(%15 : memref<!tpu.dma_semaphore, #tpu.memory_space<semaphore_mem>>)
    %c8_i32 = arith.constant 8 : i32
    %16 = tpu.memref_slice %arg33[%c8_i32] : memref<10x!tpu.dma_semaphore, #tpu.memory_space<semaphore_mem>> -> memref<1x!tpu.dma_semaphore, #tpu.memory_space<semaphore_mem>>
    %17 = tpu.memref_squeeze %16 : memref<1x!tpu.dma_semaphore, #tpu.memory_space<semaphore_mem>> -> memref<!tpu.dma_semaphore, #tpu.memory_space<semaphore_mem>>
    tpu.enqueue_dma source(%arg18 : memref<256x128xbf16, #tpu.memory_space<any>>) target(%arg31 : memref<256x128xbf16, #tpu.memory_space<vmem>>) target_semaphore(%17 : memref<!tpu.dma_semaphore, #tpu.memory_space<semaphore_mem>>)
    %c9_i32 = arith.constant 9 : i32
    %18 = tpu.memref_slice %arg33[%c9_i32] : memref<10x!tpu.dma_semaphore, #tpu.memory_space<semaphore_mem>> -> memref<1x!tpu.dma_semaphore, #tpu.memory_space<semaphore_mem>>
    %19 = tpu.memref_squeeze %18 : memref<1x!tpu.dma_semaphore, #tpu.memory_space<semaphore_mem>> -> memref<!tpu.dma_semaphore, #tpu.memory_space<semaphore_mem>>
    tpu.enqueue_dma source(%arg20 : memref<128x128xbf16, #tpu.memory_space<any>>) target(%arg32 : memref<128x128xbf16, #tpu.memory_space<vmem>>) target_semaphore(%19 : memref<!tpu.dma_semaphore, #tpu.memory_space<semaphore_mem>>)
    %c0 = arith.constant 0 : index
    %c0_0 = arith.constant 0 : index
    %20 = vector.load %arg1[%c0, %c0_0] : memref<16x128xf32, #tpu.memory_space<vmem>>, vector<16x128xf32>
    %c0_i32_1 = arith.constant 0 : i32
    %21 = tpu.memref_slice %arg33[%c0_i32_1] : memref<10x!tpu.dma_semaphore, #tpu.memory_space<semaphore_mem>> -> memref<1x!tpu.dma_semaphore, #tpu.memory_space<semaphore_mem>>
    %22 = tpu.memref_squeeze %21 : memref<1x!tpu.dma_semaphore, #tpu.memory_space<semaphore_mem>> -> memref<!tpu.dma_semaphore, #tpu.memory_space<semaphore_mem>>
    tpu.wait_dma2 semaphore(%22 : memref<!tpu.dma_semaphore, #tpu.memory_space<semaphore_mem>>) src(%arg2 : memref<128x512xbf16, #tpu.memory_space<any>>) dst(%arg23 : memref<128x512xbf16, #tpu.memory_space<vmem>>)
    %c0_2 = arith.constant 0 : index
    %c0_3 = arith.constant 0 : index
    %23 = vector.load %arg23[%c0_2, %c0_3] : memref<128x512xbf16, #tpu.memory_space<vmem>>, vector<128x512xbf16>
    %24 = arith.truncf %20 : vector<16x128xf32> to vector<16x128xbf16>
    %cst = arith.constant dense<0.000000e+00> : vector<16x512xf32>
    %25 = tpu.matmul %24, %23, %cst {dimension_numbers = #tpu.dot_dimension_numbers<[1], [0], [0], [1], [0, 0, 1, 1], [], []>} : vector<16x128xbf16>, vector<128x512xbf16>, vector<16x512xf32> -> vector<16x512xf32>
    %c0_4 = arith.constant 0 : index
    %c0_5 = arith.constant 0 : index
    %26 = vector.load %arg3[%c0_4, %c0_5] : memref<1x512xf32, #tpu.memory_space<vmem>>, vector<1x512xf32>
    %27 = vector.broadcast %26 : vector<1x512xf32> to vector<16x512xf32>
    %28 = arith.addf %25, %27 : vector<16x512xf32>
    %cst_6 = arith.constant 0.000000e+00 : f32
    %29 = vector.broadcast %cst_6 : f32 to vector<16x512xf32>
    %30 = arith.maximumf %28, %29 : vector<16x512xf32>
    %c1_i32_7 = arith.constant 1 : i32
    %31 = tpu.memref_slice %arg33[%c1_i32_7] : memref<10x!tpu.dma_semaphore, #tpu.memory_space<semaphore_mem>> -> memref<1x!tpu.dma_semaphore, #tpu.memory_space<semaphore_mem>>
    %32 = tpu.memref_squeeze %31 : memref<1x!tpu.dma_semaphore, #tpu.memory_space<semaphore_mem>> -> memref<!tpu.dma_semaphore, #tpu.memory_space<semaphore_mem>>
    tpu.wait_dma2 semaphore(%32 : memref<!tpu.dma_semaphore, #tpu.memory_space<semaphore_mem>>) src(%arg4 : memref<512x512xbf16, #tpu.memory_space<any>>) dst(%arg24 : memref<512x512xbf16, #tpu.memory_space<vmem>>)
    %c0_8 = arith.constant 0 : index
    %c0_9 = arith.constant 0 : index
    %33 = vector.load %arg24[%c0_8, %c0_9] : memref<512x512xbf16, #tpu.memory_space<vmem>>, vector<512x512xbf16>
    %34 = arith.truncf %30 : vector<16x512xf32> to vector<16x512xbf16>
    %cst_10 = arith.constant dense<0.000000e+00> : vector<16x512xf32>
    %35 = tpu.matmul %34, %33, %cst_10 {dimension_numbers = #tpu.dot_dimension_numbers<[1], [0], [0], [1], [0, 0, 1, 1], [], []>} : vector<16x512xbf16>, vector<512x512xbf16>, vector<16x512xf32> -> vector<16x512xf32>
    %c0_11 = arith.constant 0 : index
    %c0_12 = arith.constant 0 : index
    %36 = vector.load %arg5[%c0_11, %c0_12] : memref<1x512xf32, #tpu.memory_space<vmem>>, vector<1x512xf32>
    %37 = vector.broadcast %36 : vector<1x512xf32> to vector<16x512xf32>
    %38 = arith.addf %35, %37 : vector<16x512xf32>
    %cst_13 = arith.constant 0.000000e+00 : f32
    %39 = vector.broadcast %cst_13 : f32 to vector<16x512xf32>
    %40 = arith.maximumf %38, %39 : vector<16x512xf32>
    %c2_i32_14 = arith.constant 2 : i32
    %41 = tpu.memref_slice %arg33[%c2_i32_14] : memref<10x!tpu.dma_semaphore, #tpu.memory_space<semaphore_mem>> -> memref<1x!tpu.dma_semaphore, #tpu.memory_space<semaphore_mem>>
    %42 = tpu.memref_squeeze %41 : memref<1x!tpu.dma_semaphore, #tpu.memory_space<semaphore_mem>> -> memref<!tpu.dma_semaphore, #tpu.memory_space<semaphore_mem>>
    tpu.wait_dma2 semaphore(%42 : memref<!tpu.dma_semaphore, #tpu.memory_space<semaphore_mem>>) src(%arg6 : memref<512x512xbf16, #tpu.memory_space<any>>) dst(%arg25 : memref<512x512xbf16, #tpu.memory_space<vmem>>)
    %c0_15 = arith.constant 0 : index
    %c0_16 = arith.constant 0 : index
    %43 = vector.load %arg25[%c0_15, %c0_16] : memref<512x512xbf16, #tpu.memory_space<vmem>>, vector<512x512xbf16>
    %44 = arith.truncf %40 : vector<16x512xf32> to vector<16x512xbf16>
    %cst_17 = arith.constant dense<0.000000e+00> : vector<16x512xf32>
    %45 = tpu.matmul %44, %43, %cst_17 {dimension_numbers = #tpu.dot_dimension_numbers<[1], [0], [0], [1], [0, 0, 1, 1], [], []>} : vector<16x512xbf16>, vector<512x512xbf16>, vector<16x512xf32> -> vector<16x512xf32>
    %c0_18 = arith.constant 0 : index
    %c0_19 = arith.constant 0 : index
    %46 = vector.load %arg7[%c0_18, %c0_19] : memref<1x512xf32, #tpu.memory_space<vmem>>, vector<1x512xf32>
    %47 = vector.broadcast %46 : vector<1x512xf32> to vector<16x512xf32>
    %48 = arith.addf %45, %47 : vector<16x512xf32>
    %49 = arith.addf %48, %30 : vector<16x512xf32>
    %cst_20 = arith.constant 0.000000e+00 : f32
    %50 = vector.broadcast %cst_20 : f32 to vector<16x512xf32>
    %51 = arith.maximumf %49, %50 : vector<16x512xf32>
    %c3_i32_21 = arith.constant 3 : i32
    %52 = tpu.memref_slice %arg33[%c3_i32_21] : memref<10x!tpu.dma_semaphore, #tpu.memory_space<semaphore_mem>> -> memref<1x!tpu.dma_semaphore, #tpu.memory_space<semaphore_mem>>
    %53 = tpu.memref_squeeze %52 : memref<1x!tpu.dma_semaphore, #tpu.memory_space<semaphore_mem>> -> memref<!tpu.dma_semaphore, #tpu.memory_space<semaphore_mem>>
    tpu.wait_dma2 semaphore(%53 : memref<!tpu.dma_semaphore, #tpu.memory_space<semaphore_mem>>) src(%arg8 : memref<512x512xbf16, #tpu.memory_space<any>>) dst(%arg26 : memref<512x512xbf16, #tpu.memory_space<vmem>>)
    %c0_22 = arith.constant 0 : index
    %c0_23 = arith.constant 0 : index
    %54 = vector.load %arg26[%c0_22, %c0_23] : memref<512x512xbf16, #tpu.memory_space<vmem>>, vector<512x512xbf16>
    %55 = arith.truncf %51 : vector<16x512xf32> to vector<16x512xbf16>
    %cst_24 = arith.constant dense<0.000000e+00> : vector<16x512xf32>
    %56 = tpu.matmul %55, %54, %cst_24 {dimension_numbers = #tpu.dot_dimension_numbers<[1], [0], [0], [1], [0, 0, 1, 1], [], []>} : vector<16x512xbf16>, vector<512x512xbf16>, vector<16x512xf32> -> vector<16x512xf32>
    %c0_25 = arith.constant 0 : index
    %c0_26 = arith.constant 0 : index
    %57 = vector.load %arg9[%c0_25, %c0_26] : memref<1x512xf32, #tpu.memory_space<vmem>>, vector<1x512xf32>
    %58 = vector.broadcast %57 : vector<1x512xf32> to vector<16x512xf32>
    %59 = arith.addf %56, %58 : vector<16x512xf32>
    %cst_27 = arith.constant 0.000000e+00 : f32
    %60 = vector.broadcast %cst_27 : f32 to vector<16x512xf32>
    %61 = arith.maximumf %59, %60 : vector<16x512xf32>
    %c4_i32_28 = arith.constant 4 : i32
    %62 = tpu.memref_slice %arg33[%c4_i32_28] : memref<10x!tpu.dma_semaphore, #tpu.memory_space<semaphore_mem>> -> memref<1x!tpu.dma_semaphore, #tpu.memory_space<semaphore_mem>>
    %63 = tpu.memref_squeeze %62 : memref<1x!tpu.dma_semaphore, #tpu.memory_space<semaphore_mem>> -> memref<!tpu.dma_semaphore, #tpu.memory_space<semaphore_mem>>
    tpu.wait_dma2 semaphore(%63 : memref<!tpu.dma_semaphore, #tpu.memory_space<semaphore_mem>>) src(%arg10 : memref<512x512xbf16, #tpu.memory_space<any>>) dst(%arg27 : memref<512x512xbf16, #tpu.memory_space<vmem>>)
    %c0_29 = arith.constant 0 : index
    %c0_30 = arith.constant 0 : index
    %64 = vector.load %arg27[%c0_29, %c0_30] : memref<512x512xbf16, #tpu.memory_space<vmem>>, vector<512x512xbf16>
    %65 = arith.truncf %61 : vector<16x512xf32> to vector<16x512xbf16>
    %cst_31 = arith.constant dense<0.000000e+00> : vector<16x512xf32>
    %66 = tpu.matmul %65, %64, %cst_31 {dimension_numbers = #tpu.dot_dimension_numbers<[1], [0], [0], [1], [0, 0, 1, 1], [], []>} : vector<16x512xbf16>, vector<512x512xbf16>, vector<16x512xf32> -> vector<16x512xf32>
    %c0_32 = arith.constant 0 : index
    %c0_33 = arith.constant 0 : index
    %67 = vector.load %arg11[%c0_32, %c0_33] : memref<1x512xf32, #tpu.memory_space<vmem>>, vector<1x512xf32>
    %68 = vector.broadcast %67 : vector<1x512xf32> to vector<16x512xf32>
    %69 = arith.addf %66, %68 : vector<16x512xf32>
    %70 = arith.addf %69, %51 : vector<16x512xf32>
    %cst_34 = arith.constant 0.000000e+00 : f32
    %71 = vector.broadcast %cst_34 : f32 to vector<16x512xf32>
    %72 = arith.maximumf %70, %71 : vector<16x512xf32>
    %c5_i32_35 = arith.constant 5 : i32
    %73 = tpu.memref_slice %arg33[%c5_i32_35] : memref<10x!tpu.dma_semaphore, #tpu.memory_space<semaphore_mem>> -> memref<1x!tpu.dma_semaphore, #tpu.memory_space<semaphore_mem>>
    %74 = tpu.memref_squeeze %73 : memref<1x!tpu.dma_semaphore, #tpu.memory_space<semaphore_mem>> -> memref<!tpu.dma_semaphore, #tpu.memory_space<semaphore_mem>>
    tpu.wait_dma2 semaphore(%74 : memref<!tpu.dma_semaphore, #tpu.memory_space<semaphore_mem>>) src(%arg12 : memref<512x512xbf16, #tpu.memory_space<any>>) dst(%arg28 : memref<512x512xbf16, #tpu.memory_space<vmem>>)
    %c0_36 = arith.constant 0 : index
    %c0_37 = arith.constant 0 : index
    %75 = vector.load %arg28[%c0_36, %c0_37] : memref<512x512xbf16, #tpu.memory_space<vmem>>, vector<512x512xbf16>
    %76 = arith.truncf %72 : vector<16x512xf32> to vector<16x512xbf16>
    %cst_38 = arith.constant dense<0.000000e+00> : vector<16x512xf32>
    %77 = tpu.matmul %76, %75, %cst_38 {dimension_numbers = #tpu.dot_dimension_numbers<[1], [0], [0], [1], [0, 0, 1, 1], [], []>} : vector<16x512xbf16>, vector<512x512xbf16>, vector<16x512xf32> -> vector<16x512xf32>
    %c0_39 = arith.constant 0 : index
    %c0_40 = arith.constant 0 : index
    %78 = vector.load %arg13[%c0_39, %c0_40] : memref<1x512xf32, #tpu.memory_space<vmem>>, vector<1x512xf32>
    %79 = vector.broadcast %78 : vector<1x512xf32> to vector<16x512xf32>
    %80 = arith.addf %77, %79 : vector<16x512xf32>
    %cst_41 = arith.constant 0.000000e+00 : f32
    %81 = vector.broadcast %cst_41 : f32 to vector<16x512xf32>
    %82 = arith.maximumf %80, %81 : vector<16x512xf32>
    %c6_i32_42 = arith.constant 6 : i32
    %83 = tpu.memref_slice %arg33[%c6_i32_42] : memref<10x!tpu.dma_semaphore, #tpu.memory_space<semaphore_mem>> -> memref<1x!tpu.dma_semaphore, #tpu.memory_space<semaphore_mem>>
    %84 = tpu.memref_squeeze %83 : memref<1x!tpu.dma_semaphore, #tpu.memory_space<semaphore_mem>> -> memref<!tpu.dma_semaphore, #tpu.memory_space<semaphore_mem>>
    tpu.wait_dma2 semaphore(%84 : memref<!tpu.dma_semaphore, #tpu.memory_space<semaphore_mem>>) src(%arg14 : memref<512x512xbf16, #tpu.memory_space<any>>) dst(%arg29 : memref<512x512xbf16, #tpu.memory_space<vmem>>)
    %c0_43 = arith.constant 0 : index
    %c0_44 = arith.constant 0 : index
    %85 = vector.load %arg29[%c0_43, %c0_44] : memref<512x512xbf16, #tpu.memory_space<vmem>>, vector<512x512xbf16>
    %86 = arith.truncf %82 : vector<16x512xf32> to vector<16x512xbf16>
    %cst_45 = arith.constant dense<0.000000e+00> : vector<16x512xf32>
    %87 = tpu.matmul %86, %85, %cst_45 {dimension_numbers = #tpu.dot_dimension_numbers<[1], [0], [0], [1], [0, 0, 1, 1], [], []>} : vector<16x512xbf16>, vector<512x512xbf16>, vector<16x512xf32> -> vector<16x512xf32>
    %c0_46 = arith.constant 0 : index
    %c0_47 = arith.constant 0 : index
    %88 = vector.load %arg15[%c0_46, %c0_47] : memref<1x512xf32, #tpu.memory_space<vmem>>, vector<1x512xf32>
    %89 = vector.broadcast %88 : vector<1x512xf32> to vector<16x512xf32>
    %90 = arith.addf %87, %89 : vector<16x512xf32>
    %91 = arith.addf %90, %72 : vector<16x512xf32>
    %cst_48 = arith.constant 0.000000e+00 : f32
    %92 = vector.broadcast %cst_48 : f32 to vector<16x512xf32>
    %93 = arith.maximumf %91, %92 : vector<16x512xf32>
    %c7_i32_49 = arith.constant 7 : i32
    %94 = tpu.memref_slice %arg33[%c7_i32_49] : memref<10x!tpu.dma_semaphore, #tpu.memory_space<semaphore_mem>> -> memref<1x!tpu.dma_semaphore, #tpu.memory_space<semaphore_mem>>
    %95 = tpu.memref_squeeze %94 : memref<1x!tpu.dma_semaphore, #tpu.memory_space<semaphore_mem>> -> memref<!tpu.dma_semaphore, #tpu.memory_space<semaphore_mem>>
    tpu.wait_dma2 semaphore(%95 : memref<!tpu.dma_semaphore, #tpu.memory_space<semaphore_mem>>) src(%arg16 : memref<512x256xbf16, #tpu.memory_space<any>>) dst(%arg30 : memref<512x256xbf16, #tpu.memory_space<vmem>>)
    %c0_50 = arith.constant 0 : index
    %c0_51 = arith.constant 0 : index
    %96 = vector.load %arg30[%c0_50, %c0_51] : memref<512x256xbf16, #tpu.memory_space<vmem>>, vector<512x256xbf16>
    %97 = arith.truncf %93 : vector<16x512xf32> to vector<16x512xbf16>
    %cst_52 = arith.constant dense<0.000000e+00> : vector<16x256xf32>
    %98 = tpu.matmul %97, %96, %cst_52 {dimension_numbers = #tpu.dot_dimension_numbers<[1], [0], [0], [1], [0, 0, 1, 1], [], []>} : vector<16x512xbf16>, vector<512x256xbf16>, vector<16x256xf32> -> vector<16x256xf32>
    %c0_53 = arith.constant 0 : index
    %c0_54 = arith.constant 0 : index
    %99 = vector.load %arg17[%c0_53, %c0_54] : memref<1x256xf32, #tpu.memory_space<vmem>>, vector<1x256xf32>
    %100 = vector.broadcast %99 : vector<1x256xf32> to vector<16x256xf32>
    %101 = arith.addf %98, %100 : vector<16x256xf32>
    %cst_55 = arith.constant 0.000000e+00 : f32
    %102 = vector.broadcast %cst_55 : f32 to vector<16x256xf32>
    %103 = arith.maximumf %101, %102 : vector<16x256xf32>
    %c8_i32_56 = arith.constant 8 : i32
    %104 = tpu.memref_slice %arg33[%c8_i32_56] : memref<10x!tpu.dma_semaphore, #tpu.memory_space<semaphore_mem>> -> memref<1x!tpu.dma_semaphore, #tpu.memory_space<semaphore_mem>>
    %105 = tpu.memref_squeeze %104 : memref<1x!tpu.dma_semaphore, #tpu.memory_space<semaphore_mem>> -> memref<!tpu.dma_semaphore, #tpu.memory_space<semaphore_mem>>
    tpu.wait_dma2 semaphore(%105 : memref<!tpu.dma_semaphore, #tpu.memory_space<semaphore_mem>>) src(%arg18 : memref<256x128xbf16, #tpu.memory_space<any>>) dst(%arg31 : memref<256x128xbf16, #tpu.memory_space<vmem>>)
    %c0_57 = arith.constant 0 : index
    %c0_58 = arith.constant 0 : index
    %106 = vector.load %arg31[%c0_57, %c0_58] : memref<256x128xbf16, #tpu.memory_space<vmem>>, vector<256x128xbf16>
    %107 = arith.truncf %103 : vector<16x256xf32> to vector<16x256xbf16>
    %cst_59 = arith.constant dense<0.000000e+00> : vector<16x128xf32>
    %108 = tpu.matmul %107, %106, %cst_59 {dimension_numbers = #tpu.dot_dimension_numbers<[1], [0], [0], [1], [0, 0, 1, 1], [], []>} : vector<16x256xbf16>, vector<256x128xbf16>, vector<16x128xf32> -> vector<16x128xf32>
    %c0_60 = arith.constant 0 : index
    %c0_61 = arith.constant 0 : index
    %109 = vector.load %arg19[%c0_60, %c0_61] : memref<1x128xf32, #tpu.memory_space<vmem>>, vector<1x128xf32>
    %110 = vector.broadcast %109 : vector<1x128xf32> to vector<16x128xf32>
    %111 = arith.addf %108, %110 : vector<16x128xf32>
    %cst_62 = arith.constant 0.000000e+00 : f32
    %112 = vector.broadcast %cst_62 : f32 to vector<16x128xf32>
    %113 = arith.maximumf %111, %112 : vector<16x128xf32>
    %c9_i32_63 = arith.constant 9 : i32
    %114 = tpu.memref_slice %arg33[%c9_i32_63] : memref<10x!tpu.dma_semaphore, #tpu.memory_space<semaphore_mem>> -> memref<1x!tpu.dma_semaphore, #tpu.memory_space<semaphore_mem>>
    %115 = tpu.memref_squeeze %114 : memref<1x!tpu.dma_semaphore, #tpu.memory_space<semaphore_mem>> -> memref<!tpu.dma_semaphore, #tpu.memory_space<semaphore_mem>>
    tpu.wait_dma2 semaphore(%115 : memref<!tpu.dma_semaphore, #tpu.memory_space<semaphore_mem>>) src(%arg20 : memref<128x128xbf16, #tpu.memory_space<any>>) dst(%arg32 : memref<128x128xbf16, #tpu.memory_space<vmem>>)
    %c0_64 = arith.constant 0 : index
    %c0_65 = arith.constant 0 : index
    %116 = vector.load %arg32[%c0_64, %c0_65] : memref<128x128xbf16, #tpu.memory_space<vmem>>, vector<128x128xbf16>
    %117 = arith.truncf %113 : vector<16x128xf32> to vector<16x128xbf16>
    %cst_66 = arith.constant dense<0.000000e+00> : vector<16x128xf32>
    %118 = tpu.matmul %117, %116, %cst_66 {dimension_numbers = #tpu.dot_dimension_numbers<[1], [0], [0], [1], [0, 0, 1, 1], [], []>} : vector<16x128xbf16>, vector<128x128xbf16>, vector<16x128xf32> -> vector<16x128xf32>
    %c0_67 = arith.constant 0 : index
    %c0_68 = arith.constant 0 : index
    %119 = vector.load %arg21[%c0_67, %c0_68] : memref<1x128xf32, #tpu.memory_space<vmem>>, vector<1x128xf32>
    %120 = vector.broadcast %119 : vector<1x128xf32> to vector<16x128xf32>
    %121 = arith.addf %118, %120 : vector<16x128xf32>
    %122 = math.tanh %121 : vector<16x128xf32>
    %c0_69 = arith.constant 0 : index
    %c0_70 = arith.constant 0 : index
    %123 = vector.load %arg22[%c0_69, %c0_70] : memref<16x128xf32, #tpu.memory_space<vmem>>, vector<16x128xf32>
    tpu.vector_store %arg22[%c0_69, %c0_70], %122 {strides = array<i32>} : memref<16x128xf32, #tpu.memory_space<vmem>>, vector<16x128xf32>,
    return
  }
  func.func @transform_0(%arg0: i32) -> (i32, i32) {
    %c0_i32 = arith.constant 0 : i32
    %c0_i32_0 = arith.constant 0 : i32
    %c0_i32_1 = arith.constant 0 : i32
    return %c0_i32, %c0_i32_0 : i32, i32
  }
  func.func @transform_2(%arg0: i32) -> (i32, i32) {
    %c0_i32 = arith.constant 0 : i32
    %c0_i32_0 = arith.constant 0 : i32
    %c0_i32_1 = arith.constant 0 : i32
    return %c0_i32, %c0_i32_0 : i32, i32
  }
  func.func @transform_4(%arg0: i32) -> (i32, i32) {
    %c0_i32 = arith.constant 0 : i32
    %c0_i32_0 = arith.constant 0 : i32
    %c0_i32_1 = arith.constant 0 : i32
    return %c0_i32, %c0_i32_0 : i32, i32
  }
  func.func @transform_6(%arg0: i32) -> (i32, i32) {
    %c0_i32 = arith.constant 0 : i32
    %c0_i32_0 = arith.constant 0 : i32
    %c0_i32_1 = arith.constant 0 : i32
    return %c0_i32, %c0_i32_0 : i32, i32
  }
  func.func @transform_8(%arg0: i32) -> (i32, i32) {
    %c0_i32 = arith.constant 0 : i32
    %c0_i32_0 = arith.constant 0 : i32
    %c0_i32_1 = arith.constant 0 : i32
    return %c0_i32, %c0_i32_0 : i32, i32
  }
  func.func @transform_10(%arg0: i32) -> (i32, i32) {
    %c0_i32 = arith.constant 0 : i32
    %c0_i32_0 = arith.constant 0 : i32
    %c0_i32_1 = arith.constant 0 : i32
    return %c0_i32, %c0_i32_0 : i32, i32
  }
  func.func @transform_12(%arg0: i32) -> (i32, i32) {
    %c0_i32 = arith.constant 0 : i32
    %c0_i32_0 = arith.constant 0 : i32
    %c0_i32_1 = arith.constant 0 : i32
    return %c0_i32, %c0_i32_0 : i32, i32
  }
  func.func @transform_14(%arg0: i32) -> (i32, i32) {
    %c0_i32 = arith.constant 0 : i32
    %c0_i32_0 = arith.constant 0 : i32
    %c0_i32_1 = arith.constant 0 : i32
    return %c0_i32, %c0_i32_0 : i32, i32
  }
  func.func @transform_16(%arg0: i32) -> (i32, i32) {
    %c0_i32 = arith.constant 0 : i32
    %c0_i32_0 = arith.constant 0 : i32
    %c0_i32_1 = arith.constant 0 : i32
    return %c0_i32, %c0_i32_0 : i32, i32
  }
  func.func @transform_18(%arg0: i32) -> (i32, i32) {
    %c0_i32 = arith.constant 0 : i32
    %c0_i32_0 = arith.constant 0 : i32
    %c0_i32_1 = arith.constant 0 : i32
    return %c0_i32, %c0_i32_0 : i32, i32
  }
  func.func @transform_20(%arg0: i32) -> (i32, i32) {
    %c0_i32 = arith.constant 0 : i32
    %c0_i32_0 = arith.constant 0 : i32
    %c0_i32_1 = arith.constant 0 : i32
    return %c0_i32, %c0_i32_0 : i32, i32
  }
  func.func @transform_21(%arg0: i32) -> (i32, i32) {
    %c0_i32 = arith.constant 0 : i32
    %c0_i32_0 = arith.constant 0 : i32
    %c0_i32_1 = arith.constant 0 : i32
    return %c0_i32, %c0_i32_0 : i32, i32
  }
}

</mosaic_0001>

<llo_original>
// kernel: tpu_custom_call.1
$region0: #{tpu_custom_call.1}
  #allocation0 [shape = 'u32[]', space=smem, size = 0x4, offset = 0x4, fixed_abs, tag = 'smem constant byte address 0x4 - core index']
  #allocation1 [shape = 'u32[144,128]{1,0:T(1,128)}', space=vmem, size = 0x12000, scoped, tag = 'internal scratch']
  #allocation2 [shape = 'bf16[128,512]{1,0:T(8,128)(2,1)}', space=vmem, size = 0x20000, scoped, tag = 'scratch operand']
  #allocation3 [shape = 'bf16[512,512]{1,0:T(8,128)(2,1)}', space=vmem, size = 0x80000, scoped, tag = 'scratch operand']
  #allocation4 [shape = 'bf16[512,512]{1,0:T(8,128)(2,1)}', space=vmem, size = 0x80000, scoped, tag = 'scratch operand']
  #allocation5 [shape = 'bf16[512,512]{1,0:T(8,128)(2,1)}', space=vmem, size = 0x80000, scoped, tag = 'scratch operand']
  #allocation6 [shape = 'bf16[512,512]{1,0:T(8,128)(2,1)}', space=vmem, size = 0x80000, scoped, tag = 'scratch operand']
  #allocation7 [shape = 'bf16[512,512]{1,0:T(8,128)(2,1)}', space=vmem, size = 0x80000, scoped, tag = 'scratch operand']
  #allocation8 [shape = 'bf16[512,512]{1,0:T(8,128)(2,1)}', space=vmem, size = 0x80000, scoped, tag = 'scratch operand']
  #allocation9 [shape = 'bf16[512,256]{1,0:T(8,128)(2,1)}', space=vmem, size = 0x40000, scoped, tag = 'scratch operand']
  #allocation10 [shape = 'bf16[256,128]{1,0:T(8,128)(2,1)}', space=vmem, size = 0x10000, scoped, tag = 'scratch operand']
  #allocation11 [shape = 'bf16[128,128]{1,0:T(8,128)(2,1)}', space=vmem, size = 0x8000, scoped, tag = 'scratch operand']
  #allocation12 [shape = 's32[10]{0}', space=sflag, size = 0x28, scoped, tag = 'scratch operand']
  #allocation19 [shape = 's32[]', space=sflag, size = 0x4, offset = 0, fixed_abs, tag = 'sflag constant byte address 0x0 - dummy sync flag']
  #allocation20 [shape = 's32[]', space=sflag, size = 0x4, offset = 0, fixed_abs, tag = 'sflag constant byte address 0x0 - dummy sync flag']
  #allocation21 [shape = 'u32[]', space=smem, size = 0x4, offset = 0x44, fixed_abs, tag = 'smem constant byte address 0x44 - assertion arg 0']
  #allocation22 [shape = 'u32[]', space=smem, size = 0x4, offset = 0x48, fixed_abs, tag = 'smem constant byte address 0x48 - assertion arg 1']
  #allocation23 [shape = 's32[]', space=sflag, size = 0x4, offset = 0, fixed_abs, tag = 'sflag constant byte address 0x0 - dummy sync flag']
  #allocation24 [shape = 's32[]', space=sflag, size = 0x4, offset = 0, fixed_abs, tag = 'sflag constant byte address 0x0 - dummy sync flag']
  #allocation25 [shape = 's32[]', space=sflag, size = 0x4, offset = 0, fixed_abs, tag = 'sflag constant byte address 0x0 - dummy sync flag']
  #allocation26 [shape = 's32[]', space=sflag, size = 0x4, offset = 0, fixed_abs, tag = 'sflag constant byte address 0x0 - dummy sync flag']
  #allocation27 [shape = 's32[]', space=sflag, size = 0x4, offset = 0, fixed_abs, tag = 'sflag constant byte address 0x0 - dummy sync flag']
  #allocation28 [shape = 's32[]', space=sflag, size = 0x4, offset = 0, fixed_abs, tag = 'sflag constant byte address 0x0 - dummy sync flag']
  #allocation29 [shape = 's32[]', space=sflag, size = 0x4, offset = 0, fixed_abs, tag = 'sflag constant byte address 0x0 - dummy sync flag']
  #allocation30 [shape = 's32[]', space=sflag, size = 0x4, offset = 0, fixed_abs, tag = 'sflag constant byte address 0x0 - dummy sync flag']
  #allocation31 [shape = 's32[]', space=sflag, size = 0x4, offset = 0, fixed_abs, tag = 'sflag constant byte address 0x0 - dummy sync flag']
  #allocation32 [shape = 's32[]', space=sflag, size = 0x4, offset = 0, fixed_abs, tag = 'sflag constant byte address 0x0 - dummy sync flag']
  #allocation33 [shape = 's32[]', space=sflag, size = 0x4, offset = 0, fixed_abs, tag = 'sflag constant byte address 0x0 - dummy sync flag']
  #allocation34 [shape = 's32[]', space=sflag, size = 0x4, offset = 0, fixed_abs, tag = 'sflag constant byte address 0x0 - dummy sync flag']
  #allocation35 [shape = 's32[]', space=sflag, size = 0x4, offset = 0, fixed_abs, tag = 'sflag constant byte address 0x0 - dummy sync flag']
  #allocation36 [shape = 's32[]', space=sflag, size = 0x4, offset = 0, fixed_abs, tag = 'sflag constant byte address 0x0 - dummy sync flag']
  #allocation37 [shape = 's32[]', space=sflag, size = 0x4, offset = 0, fixed_abs, tag = 'sflag constant byte address 0x0 - dummy sync flag']
  #allocation38 [shape = 's32[]', space=sflag, size = 0x4, offset = 0, fixed_abs, tag = 'sflag constant byte address 0x0 - dummy sync flag']
  #allocation39 [shape = 's32[]', space=sflag, size = 0x4, offset = 0, fixed_abs, tag = 'sflag constant byte address 0x0 - dummy sync flag']
  #allocation40 [shape = 's32[]', space=sflag, size = 0x4, offset = 0, fixed_abs, tag = 'sflag constant byte address 0x0 - dummy sync flag']
  %s0 = inlined_call_operand.hbm [shape: f32[16,128], index: 0, kind: input, shape index: {}]
  %s1 = inlined_call_operand.hbm [shape: bf16[128,512], index: 1, kind: input, shape index: {}]
  %s2 = inlined_call_operand.hbm [shape: f32[1,512], index: 2, kind: input, shape index: {}]
  %s3 = inlined_call_operand.hbm [shape: bf16[512,512], index: 3, kind: input, shape index: {}]
  %s4 = inlined_call_operand.vmem [shape: f32[1,512], index: 4, kind: input, shape index: {}]
  %s5 = inlined_call_operand.hbm [shape: bf16[512,512], index: 5, kind: input, shape index: {}]
  %s6 = inlined_call_operand.vmem [shape: f32[1,512], index: 6, kind: input, shape index: {}]
  %s7 = inlined_call_operand.hbm [shape: bf16[512,512], index: 7, kind: input, shape index: {}]
  %s8 = inlined_call_operand.vmem [shape: f32[1,512], index: 8, kind: input, shape index: {}]
  %s9 = inlined_call_operand.hbm [shape: bf16[512,512], index: 9, kind: input, shape index: {}]
  %s10 = inlined_call_operand.vmem [shape: f32[1,512], index: 10, kind: input, shape index: {}]
  %s11 = inlined_call_operand.hbm [shape: bf16[512,512], index: 11, kind: input, shape index: {}]
  %s12 = inlined_call_operand.vmem [shape: f32[1,512], index: 12, kind: input, shape index: {}]
  %s13 = inlined_call_operand.hbm [shape: bf16[512,512], index: 13, kind: input, shape index: {}]
  %s14 = inlined_call_operand.vmem [shape: f32[1,512], index: 14, kind: input, shape index: {}]
  %s15 = inlined_call_operand.hbm [shape: bf16[512,256], index: 15, kind: input, shape index: {}]
  %s16 = inlined_call_operand.vmem [shape: f32[1,256], index: 16, kind: input, shape index: {}]
  %s17 = inlined_call_operand.hbm [shape: bf16[256,128], index: 17, kind: input, shape index: {}]
  %s18 = inlined_call_operand.vmem [shape: f32[1,128], index: 18, kind: input, shape index: {}]
  %s19 = inlined_call_operand.hbm [shape: bf16[128,128], index: 19, kind: input, shape index: {}]
  %s20 = inlined_call_operand.vmem [shape: f32[1,128], index: 20, kind: input, shape index: {}]
  %s21 = inlined_call_operand.hbm [shape: f32[16,128], index: 21, kind: output, shape index: {}]
  %s22 = sld [smem:[#allocation0]]
  $region102: #{tpu_custom_call.1} parent=0
    _
  %s24 = ssub.s32 1, %s22
  %s25 = scalar_select 0, %s24, %s22
  $region1: #{tpu_custom_call.1} parent=0
    #allocation13 [shape = 'u8[8192]{0}', space=vmem, size = 0x2000, scoped, tag = 'input window, operand 0, single buffered']
    #allocation14 [shape = 's32[1]{0}', space=sflag, size = 0x4, scoped, tag = 'scoped memory for tpu_custom_call.1']
    #allocation15 [shape = 's32[1]{0}', space=sflag, size = 0x4, scoped, tag = 'scoped memory for tpu_custom_call.1']
    #allocation16 [shape = 'u8[2048]{0}', space=vmem, size = 0x800, scoped, tag = 'input window, operand 2, single buffered']
    #allocation17 [shape = 's32[1]{0}', space=sflag, size = 0x4, scoped, tag = 'scoped memory for tpu_custom_call.1']
    #allocation18 [shape = 'u8[8192]{0}', space=vmem, size = 0x2000, scoped, tag = 'output window, operand 0, single buffered']
    %26 = vsyncpa [#allocation14], 0
    %27 = vsyncpa [#allocation17], 0
    %28 = vsyncpa [#allocation15], 0
    // Predicated region
    $region2: #{tpu_custom_call.1} parent=1 // pred_check
      _
    $region3: #{tpu_custom_call.1} parent=1 // pred_check_branch
      %30 = sbr.rel (0) target = $region5
    $region4: #{tpu_custom_call.1} parent=1 // pred_region
      %s32 = ssub.s32 256, 256
      %33 = vsyncadd [#allocation14], %s32
      %s34 = sshll.u32 [#allocation13], 4
      %s35 = int_to_ptr.vmem [resolvable:$true] %s34
      %40 = dma.hbm_to_vmem [thread:$0]  %s0, 256, %s35, [#allocation14], 128, 128, 8
    $region5: #{tpu_custom_call.1} parent=1 // pred_fallthru
      _
    // Predicated region
    $region6: #{tpu_custom_call.1} parent=1 // pred_check
      _
    $region7: #{tpu_custom_call.1} parent=1 // pred_check_branch
      %42 = sbr.rel (0) target = $region9
    $region8: #{tpu_custom_call.1} parent=1 // pred_region
      %s44 = ssub.s32 64, 64
      %45 = vsyncadd [#allocation17], %s44
      %s47 = sshll.u32 [#allocation16], 4
      %s48 = int_to_ptr.vmem [resolvable:$true] %s47
      %50 = dma.hbm_to_vmem [thread:$0]  %s2, 64, %s48, [#allocation17]
    $region9: #{tpu_custom_call.1} parent=1 // pred_fallthru
      _
    // Predicated region
    $region10: #{tpu_custom_call.1} parent=1 // pred_check
      _
    $region11: #{tpu_custom_call.1} parent=1 // pred_check_branch
      %52 = sbr.rel (0) target = $region13
    $region12: #{tpu_custom_call.1} parent=1 // pred_region
      _
    $region13: #{tpu_custom_call.1} parent=1 // pred_fallthru
      _
    // Predicated region
    $region14: #{tpu_custom_call.1} parent=1 // pred_check
      _
    $region15: #{tpu_custom_call.1} parent=1 // pred_check_branch
      %54 = sbr.rel (0) target = $region17
    $region16: #{tpu_custom_call.1} parent=1 // pred_region
      _
    $region17: #{tpu_custom_call.1} parent=1 // pred_fallthru
      _
    // Predicated region
    $region18: #{tpu_custom_call.1} parent=1 // pred_check
      _
    $region19: #{tpu_custom_call.1} parent=1 // pred_check_branch
      %56 = sbr.rel (0) target = $region21
    $region20: #{tpu_custom_call.1} parent=1 // pred_region
      _
    $region21: #{tpu_custom_call.1} parent=1 // pred_fallthru
      _
    // Predicated region
    $region22: #{tpu_custom_call.1} parent=1 // pred_check
      _
    $region23: #{tpu_custom_call.1} parent=1 // pred_check_branch
      %58 = sbr.rel (0) target = $region25
    $region24: #{tpu_custom_call.1} parent=1 // pred_region
      _
    $region25: #{tpu_custom_call.1} parent=1 // pred_fallthru
      _
    // Predicated region
    $region26: #{tpu_custom_call.1} parent=1 // pred_check
      _
    $region27: #{tpu_custom_call.1} parent=1 // pred_check_branch
      %60 = sbr.rel (0) target = $region29
    $region28: #{tpu_custom_call.1} parent=1 // pred_region
      _
    $region29: #{tpu_custom_call.1} parent=1 // pred_fallthru
      _
    // Predicated region
    $region30: #{tpu_custom_call.1} parent=1 // pred_check
      _
    $region31: #{tpu_custom_call.1} parent=1 // pred_check_branch
      %62 = sbr.rel (0) target = $region33
    $region32: #{tpu_custom_call.1} parent=1 // pred_region
      _
    $region33: #{tpu_custom_call.1} parent=1 // pred_fallthru
      _
    // Predicated region
    $region34: #{tpu_custom_call.1} parent=1 // pred_check
      _
    $region35: #{tpu_custom_call.1} parent=1 // pred_check_branch
      %64 = sbr.rel (0) target = $region37
    $region36: #{tpu_custom_call.1} parent=1 // pred_region
      _
    $region37: #{tpu_custom_call.1} parent=1 // pred_fallthru
      _
    // Predicated region
    $region38: #{tpu_custom_call.1} parent=1 // pred_check
      _
    $region39: #{tpu_custom_call.1} parent=1 // pred_check_branch
      %66 = sbr.rel (0) target = $region41
    $region40: #{tpu_custom_call.1} parent=1 // pred_region
      _
    $region41: #{tpu_custom_call.1} parent=1 // pred_fallthru
      _
    // Predicated region
    $region42: #{tpu_custom_call.1} parent=1 // pred_check
      _
    $region43: #{tpu_custom_call.1} parent=1 // pred_check_branch
      %68 = sbr.rel (0) target = $region45
    $region44: #{tpu_custom_call.1} parent=1 // pred_region
      _
    $region45: #{tpu_custom_call.1} parent=1 // pred_fallthru
      _
    // Predicated region
    $region46: #{tpu_custom_call.1} parent=1 // pred_check
      _
    $region47: #{tpu_custom_call.1} parent=1 // pred_check_branch
      %70 = sbr.rel (0) target = $region49
    $region48: #{tpu_custom_call.1} parent=1 // pred_region
      %71 = dma.done [#allocation14], 256
    $region49: #{tpu_custom_call.1} parent=1 // pred_fallthru
      _
    // Predicated region
    $region50: #{tpu_custom_call.1} parent=1 // pred_check
      _
    $region51: #{tpu_custom_call.1} parent=1 // pred_check_branch
      %73 = sbr.rel (0) target = $region53
    $region52: #{tpu_custom_call.1} parent=1 // pred_region
      %74 = dma.done [#allocation17], 64
    $region53: #{tpu_custom_call.1} parent=1 // pred_fallthru
      _
    // Predicated region
    $region54: #{tpu_custom_call.1} parent=1 // pred_check
      _
    $region55: #{tpu_custom_call.1} parent=1 // pred_check_branch
      %77 = sbr.rel target = $region57
    $region56: #{tpu_custom_call.1} parent=1 // pred_region
      %78 = sst [smem:[#allocation21]] [#allocation20]
      %79 = sst [smem:[#allocation22]] [#allocation19]
    $region57: #{tpu_custom_call.1} parent=1 // pred_fallthru
      _
    %81 = shalt.err (0)
    %s83 = sshll.u32 [#allocation2], 4
    %s84 = int_to_ptr.vmem [resolvable:$true] %s83
    %86 = dma.hbm_to_vmem [thread:$0]  %s1, 4096, %s84, [#allocation12]
    %s87 = scalar_lea.sflag [#allocation12], 1
    // Predicated region
    $region58: #{tpu_custom_call.1} parent=1 // pred_check
      _
    $region59: #{tpu_custom_call.1} parent=1 // pred_check_branch
      %89 = sbr.rel target = $region61
    $region60: #{tpu_custom_call.1} parent=1 // pred_region
      %90 = sst [smem:[#allocation21]] [#allocation24]
      %91 = sst [smem:[#allocation22]] [#allocation23]
    $region61: #{tpu_custom_call.1} parent=1 // pred_fallthru
      _
    %93 = shalt.err (0)
    %s95 = sshll.u32 [#allocation3], 4
    %s96 = int_to_ptr.vmem [resolvable:$true] %s95
    %98 = dma.hbm_to_vmem [thread:$0]  %s3, 16384, %s96, %s87
    %s99 = scalar_lea.sflag [#allocation12], 2
    // Predicated region
    $region62: #{tpu_custom_call.1} parent=1 // pred_check
      _
    $region63: #{tpu_custom_call.1} parent=1 // pred_check_branch
      %101 = sbr.rel target = $region65
    $region64: #{tpu_custom_call.1} parent=1 // pred_region
      %102 = sst [smem:[#allocation21]] [#allocation26]
      %103 = sst [smem:[#allocation22]] [#allocation25]
    $region65: #{tpu_custom_call.1} parent=1 // pred_fallthru
      _
    %105 = shalt.err (0)
    %s107 = sshll.u32 [#allocation4], 4
    %s108 = int_to_ptr.vmem [resolvable:$true] %s107
    %110 = dma.hbm_to_vmem [thread:$0]  %s5, 16384, %s108, %s99
    %s111 = scalar_lea.sflag [#allocation12], 3
    // Predicated region
    $region66: #{tpu_custom_call.1} parent=1 // pred_check
      _
    $region67: #{tpu_custom_call.1} parent=1 // pred_check_branch
      %113 = sbr.rel target = $region69
    $region68: #{tpu_custom_call.1} parent=1 // pred_region
      %114 = sst [smem:[#allocation21]] [#allocation28]
      %115 = sst [smem:[#allocation22]] [#allocation27]
    $region69: #{tpu_custom_call.1} parent=1 // pred_fallthru
      _
    %117 = shalt.err (0)
    %s119 = sshll.u32 [#allocation5], 4
    %s120 = int_to_ptr.vmem [resolvable:$true] %s119
    %122 = dma.hbm_to_vmem [thread:$0]  %s7, 16384, %s120, %s111
    %s123 = scalar_lea.sflag [#allocation12], 4
    // Predicated region
    $region70: #{tpu_custom_call.1} parent=1 // pred_check
      _
    $region71: #{tpu_custom_call.1} parent=1 // pred_check_branch
      %125 = sbr.rel target = $region73
    $region72: #{tpu_custom_call.1} parent=1 // pred_region
      %126 = sst [smem:[#allocation21]] [#allocation30]
      %127 = sst [smem:[#allocation22]] [#allocation29]
    $region73: #{tpu_custom_call.1} parent=1 // pred_fallthru
      _
    %129 = shalt.err (0)
    %s131 = sshll.u32 [#allocation6], 4
    %s132 = int_to_ptr.vmem [resolvable:$true] %s131
    %134 = dma.hbm_to_vmem [thread:$0]  %s9, 16384, %s132, %s123
    %s135 = scalar_lea.sflag [#allocation12], 5
    // Predicated region
    $region74: #{tpu_custom_call.1} parent=1 // pred_check
      _
    $region75: #{tpu_custom_call.1} parent=1 // pred_check_branch
      %137 = sbr.rel target = $region77
    $region76: #{tpu_custom_call.1} parent=1 // pred_region
      %138 = sst [smem:[#allocation21]] [#allocation32]
      %139 = sst [smem:[#allocation22]] [#allocation31]
    $region77: #{tpu_custom_call.1} parent=1 // pred_fallthru
      _
    %141 = shalt.err (0)
    %s143 = sshll.u32 [#allocation7], 4
    %s144 = int_to_ptr.vmem [resolvable:$true] %s143
    %146 = dma.hbm_to_vmem [thread:$0]  %s11, 16384, %s144, %s135
    %s147 = scalar_lea.sflag [#allocation12], 6
    // Predicated region
    $region78: #{tpu_custom_call.1} parent=1 // pred_check
      _
    $region79: #{tpu_custom_call.1} parent=1 // pred_check_branch
      %149 = sbr.rel target = $region81
    $region80: #{tpu_custom_call.1} parent=1 // pred_region
      %150 = sst [smem:[#allocation21]] [#allocation34]
      %151 = sst [smem:[#allocation22]] [#allocation33]
    $region81: #{tpu_custom_call.1} parent=1 // pred_fallthru
      _
    %153 = shalt.err (0)
    %s155 = sshll.u32 [#allocation8], 4
    %s156 = int_to_ptr.vmem [resolvable:$true] %s155
    %158 = dma.hbm_to_vmem [thread:$0]  %s13, 16384, %s156, %s147
    %s159 = scalar_lea.sflag [#allocation12], 7
    // Predicated region
    $region82: #{tpu_custom_call.1} parent=1 // pred_check
      _
    $region83: #{tpu_custom_call.1} parent=1 // pred_check_branch
      %161 = sbr.rel target = $region85
    $region84: #{tpu_custom_call.1} parent=1 // pred_region
      %162 = sst [smem:[#allocation21]] [#allocation36]
      %163 = sst [smem:[#allocation22]] [#allocation35]
    $region85: #{tpu_custom_call.1} parent=1 // pred_fallthru
      _
    %165 = shalt.err (0)
    %s167 = sshll.u32 [#allocation9], 4
    %s168 = int_to_ptr.vmem [resolvable:$true] %s167
    %170 = dma.hbm_to_vmem [thread:$0]  %s15, 8192, %s168, %s159
    %s171 = scalar_lea.sflag [#allocation12], 8
    // Predicated region
    $region86: #{tpu_custom_call.1} parent=1 // pred_check
      _
    $region87: #{tpu_custom_call.1} parent=1 // pred_check_branch
      %173 = sbr.rel target = $region89
    $region88: #{tpu_custom_call.1} parent=1 // pred_region
      %174 = sst [smem:[#allocation21]] [#allocation38]
      %175 = sst [smem:[#allocation22]] [#allocation37]
    $region89: #{tpu_custom_call.1} parent=1 // pred_fallthru
      _
    %177 = shalt.err (0)
    %s179 = sshll.u32 [#allocation10], 4
    %s180 = int_to_ptr.vmem [resolvable:$true] %s179
    %182 = dma.hbm_to_vmem [thread:$0]  %s17, 2048, %s180, %s171
    %s183 = scalar_lea.sflag [#allocation12], 9
    // Predicated region
    $region90: #{tpu_custom_call.1} parent=1 // pred_check
      _
    $region91: #{tpu_custom_call.1} parent=1 // pred_check_branch
      %185 = sbr.rel target = $region93
    $region92: #{tpu_custom_call.1} parent=1 // pred_region
      %186 = sst [smem:[#allocation21]] [#allocation40]
      %187 = sst [smem:[#allocation22]] [#allocation39]
    $region93: #{tpu_custom_call.1} parent=1 // pred_fallthru
      _
    %189 = shalt.err (0)
    %s191 = sshll.u32 [#allocation11], 4
    %s192 = int_to_ptr.vmem [resolvable:$true] %s191
    %194 = dma.hbm_to_vmem [thread:$0]  %s19, 1024, %s192, %s183
    %v195 = vld [vmem:[#allocation13] sm:$0xff]
    %v196 = vld [vmem:[#allocation13 + $0x8] sm:$0xff]
    %s197 = smul.u32 4, 16
    %s198 = smul.u32 %s197, 4
    %s199 = sshll.u32 %s198, 4
    %200 = dma.done [#allocation12], %s199
    %v201 = vld [vmem:[#allocation2] sm:$0xff]
    %v202 = vld [vmem:[#allocation2 + $0x8] sm:$0xff]
    %v203 = vld [vmem:[#allocation2 + $0x10] sm:$0xff]
    %v204 = vld [vmem:[#allocation2 + $0x18] sm:$0xff]
    %v205 = vld [vmem:[#allocation2 + $0x20] sm:$0xff]
    %v206 = vld [vmem:[#allocation2 + $0x28] sm:$0xff]
    %v207 = vld [vmem:[#allocation2 + $0x30] sm:$0xff]
    %v208 = vld [vmem:[#allocation2 + $0x38] sm:$0xff]
    %v209 = vld [vmem:[#allocation2 + $0x40] sm:$0xff]
    %v210 = vld [vmem:[#allocation2 + $0x48] sm:$0xff]
    %v211 = vld [vmem:[#allocation2 + $0x50] sm:$0xff]
    %v212 = vld [vmem:[#allocation2 + $0x58] sm:$0xff]
    %v213 = vld [vmem:[#allocation2 + $0x60] sm:$0xff]
    %v214 = vld [vmem:[#allocation2 + $0x68] sm:$0xff]
    %v215 = vld [vmem:[#allocation2 + $0x70] sm:$0xff]
    %v216 = vld [vmem:[#allocation2 + $0x78] sm:$0xff]
    %v217 = vld [vmem:[#allocation2 + $0x80] sm:$0xff]
    %v218 = vld [vmem:[#allocation2 + $0x88] sm:$0xff]
    %v219 = vld [vmem:[#allocation2 + $0x90] sm:$0xff]
    %v220 = vld [vmem:[#allocation2 + $0x98] sm:$0xff]
    %v221 = vld [vmem:[#allocation2 + $0xa0] sm:$0xff]
    %v222 = vld [vmem:[#allocation2 + $0xa8] sm:$0xff]
    %v223 = vld [vmem:[#allocation2 + $0xb0] sm:$0xff]
    %v224 = vld [vmem:[#allocation2 + $0xb8] sm:$0xff]
    %v225 = vld [vmem:[#allocation2 + $0xc0] sm:$0xff]
    %v226 = vld [vmem:[#allocation2 + $0xc8] sm:$0xff]
    %v227 = vld [vmem:[#allocation2 + $0xd0] sm:$0xff]
    %v228 = vld [vmem:[#allocation2 + $0xd8] sm:$0xff]
    %v229 = vld [vmem:[#allocation2 + $0xe0] sm:$0xff]
    %v230 = vld [vmem:[#allocation2 + $0xe8] sm:$0xff]
    %v231 = vld [vmem:[#allocation2 + $0xf0] sm:$0xff]
    %v232 = vld [vmem:[#allocation2 + $0xf8] sm:$0xff]
    %v233 = vpack.c.bf16 %v196, %v195
    %v234 = vld [vmem:[#allocation16] sm:$0xf]
    %v236 = vlaneseq
    %v237 = vshrl.u32 %v236, 7
    %v238 = vsub.s32 0, %v237
    %v239 = vrot.slane %v234, %v238
    %v240 = vlaneseq
    %v241 = vshrl.u32 %v240, 7
    %v242 = vsub.s32 1, %v241
    %v243 = vrot.slane %v234, %v242
    %v244 = vlaneseq
    %v245 = vshrl.u32 %v244, 7
    %v246 = vsub.s32 2, %v245
    %v247 = vrot.slane %v234, %v246
    %v248 = vlaneseq
    %v249 = vshrl.u32 %v248, 7
    %v250 = vsub.s32 3, %v249
    %v251 = vrot.slane %v234, %v250
    %v288 = vunpack.c.l.b16 %v201
    %v289 = vunpack.c.h.b16 %v201
    %v290 = vunpack.c.l.b16 %v202
    %v291 = vunpack.c.h.b16 %v202
    %v292 = vunpack.c.l.b16 %v203
    %v293 = vunpack.c.h.b16 %v203
    %v294 = vunpack.c.l.b16 %v204
    %v295 = vunpack.c.h.b16 %v204
    %v296 = vunpack.c.l.b16 %v205
    %v297 = vunpack.c.h.b16 %v205
    %v298 = vunpack.c.l.b16 %v206
    %v299 = vunpack.c.h.b16 %v206
    %v300 = vunpack.c.l.b16 %v207
    %v301 = vunpack.c.h.b16 %v207
    %v302 = vunpack.c.l.b16 %v208
    %v303 = vunpack.c.h.b16 %v208
    %v304 = vunpack.c.l.b16 %v209
    %v305 = vunpack.c.h.b16 %v209
    %v306 = vunpack.c.l.b16 %v210
    %v307 = vunpack.c.h.b16 %v210
    %v308 = vunpack.c.l.b16 %v211
    %v309 = vunpack.c.h.b16 %v211
    %v310 = vunpack.c.l.b16 %v212
    %v311 = vunpack.c.h.b16 %v212
    %v312 = vunpack.c.l.b16 %v213
    %v313 = vunpack.c.h.b16 %v213
    %v314 = vunpack.c.l.b16 %v214
    %v315 = vunpack.c.h.b16 %v214
    %v316 = vunpack.c.l.b16 %v215
    %v317 = vunpack.c.h.b16 %v215
    %v318 = vunpack.c.l.b16 %v216
    %v319 = vunpack.c.h.b16 %v216
    %v320 = vunpack.c.l.b16 %v217
    %v321 = vunpack.c.h.b16 %v217
    %v322 = vunpack.c.l.b16 %v218
    %v323 = vunpack.c.h.b16 %v218
    %v324 = vunpack.c.l.b16 %v219
    %v325 = vunpack.c.h.b16 %v219
    %v326 = vunpack.c.l.b16 %v220
    %v327 = vunpack.c.h.b16 %v220
    %v328 = vunpack.c.l.b16 %v221
    %v329 = vunpack.c.h.b16 %v221
    %v330 = vunpack.c.l.b16 %v222
    %v331 = vunpack.c.h.b16 %v222
    %v332 = vunpack.c.l.b16 %v223
    %v333 = vunpack.c.h.b16 %v223
    %v334 = vunpack.c.l.b16 %v224
    %v335 = vunpack.c.h.b16 %v224
    %v336 = vunpack.c.l.b16 %v225
    %v337 = vunpack.c.h.b16 %v225
    %v338 = vunpack.c.l.b16 %v226
    %v339 = vunpack.c.h.b16 %v226
    %v340 = vunpack.c.l.b16 %v227
    %v341 = vunpack.c.h.b16 %v227
    %v342 = vunpack.c.l.b16 %v228
    %v343 = vunpack.c.h.b16 %v228
    %v344 = vunpack.c.l.b16 %v229
    %v345 = vunpack.c.h.b16 %v229
    %v346 = vunpack.c.l.b16 %v230
    %v347 = vunpack.c.h.b16 %v230
    %v348 = vunpack.c.l.b16 %v231
    %v349 = vunpack.c.h.b16 %v231
    %v350 = vunpack.c.l.b16 %v232
    %v351 = vunpack.c.h.b16 %v232
    %v352 = vpack.c.b16 %v292, %v288
    %v353 = vpack.c.b16 %v293, %v289
    %v354 = vpack.c.b16 %v294, %v290
    %v355 = vpack.c.b16 %v295, %v291
    %v356 = vpack.c.b16 %v300, %v296
    %v357 = vpack.c.b16 %v301, %v297
    %v358 = vpack.c.b16 %v302, %v298
    %v359 = vpack.c.b16 %v303, %v299
    %v360 = vpack.c.b16 %v308, %v304
    %v361 = vpack.c.b16 %v309, %v305
    %v362 = vpack.c.b16 %v310, %v306
    %v363 = vpack.c.b16 %v311, %v307
    %v364 = vpack.c.b16 %v316, %v312
    %v365 = vpack.c.b16 %v317, %v313
    %v366 = vpack.c.b16 %v318, %v314
    %v367 = vpack.c.b16 %v319, %v315
    %v368 = vpack.c.b16 %v324, %v320
    %v369 = vpack.c.b16 %v325, %v321
    %v370 = vpack.c.b16 %v326, %v322
    %v371 = vpack.c.b16 %v327, %v323
    %v372 = vpack.c.b16 %v332, %v328
    %v373 = vpack.c.b16 %v333, %v329
    %v374 = vpack.c.b16 %v334, %v330
    %v375 = vpack.c.b16 %v335, %v331
    %v376 = vpack.c.b16 %v340, %v336
    %v377 = vpack.c.b16 %v341, %v337
    %v378 = vpack.c.b16 %v342, %v338
    %v379 = vpack.c.b16 %v343, %v339
    %v380 = vpack.c.b16 %v348, %v344
    %v381 = vpack.c.b16 %v349, %v345
    %v382 = vpack.c.b16 %v350, %v346
    %v383 = vpack.c.b16 %v351, %v347
    %416 = vmatprep.subr.bf16.mxu0 %v381
    %417 = vmatpush1.bf16.msra.mxu0 %v380
    %418 = vmatprep.subr.bf16.mxu0 %v377
    %419 = vmatpush1.bf16.msra.mxu0 %v376
    %420 = vmatprep.subr.bf16.mxu0 %v373
    %421 = vmatpush1.bf16.msra.mxu0 %v372
    %422 = vmatprep.subr.bf16.mxu0 %v369
    %423 = vmatpush1.bf16.msra.mxu0 %v368
    %424 = vmatprep.subr.bf16.mxu0 %v365
    %425 = vmatpush1.bf16.msra.mxu0 %v364
    %426 = vmatprep.subr.bf16.mxu0 %v361
    %427 = vmatpush1.bf16.msra.mxu0 %v360
    %428 = vmatprep.subr.bf16.mxu0 %v357
    %429 = vmatpush1.bf16.msra.mxu0 %v356
    %430 = vmatprep.subr.bf16.mxu0 %v353
    %431 = vmatpush1.bf16.msra.mxu0 %v352
    %432 = vmatprep.subr.bf16.mxu0 0
    %433 = vmatpush2.bf16.msra.mxu0 0
    %434 = vmatprep.subr.bf16.mxu0 0
    %435 = vmatpush2.bf16.msra.mxu0 0
    %436 = vmatprep.subr.bf16.mxu0 0
    %437 = vmatpush2.bf16.msra.mxu0 0
    %438 = vmatprep.subr.bf16.mxu0 0
    %439 = vmatpush2.bf16.msra.mxu0 0
    %440 = vmatprep.subr.bf16.mxu0 0
    %441 = vmatpush2.bf16.msra.mxu0 0
    %442 = vmatprep.subr.bf16.mxu0 0
    %443 = vmatpush2.bf16.msra.mxu0 0
    %444 = vmatprep.subr.bf16.mxu0 0
    %445 = vmatpush2.bf16.msra.mxu0 0
    %446 = vmatprep.subr.bf16.mxu0 0
    %447 = vmatpush2.bf16.msra.mxu0 0
    %448 = vmatprep.mubr.bf16.mxu0 0
    %449 = vmatmul.mubr.bf16.gmra.mxu0 %v233
    %v450 = vpop.f32.mrf.mxu0
    %v451 = vadd.f32 %v239, %v450
    %v452 = vpop.f32.mrf.mxu0
    %v453 = vadd.f32 %v243, %v452
    %v454 = vpop.f32.mrf.mxu0
    %v455 = vadd.f32 %v239, %v454
    %v456 = vpop.f32.mrf.mxu0
    %v457 = vadd.f32 %v243, %v456
    %458 = vdwg.mxu0
    %459 = vmatprep.subr.bf16.mxu0 %v383
    %460 = vmatpush1.bf16.msra.mxu0 %v382
    %461 = vmatprep.subr.bf16.mxu0 %v379
    %462 = vmatpush1.bf16.msra.mxu0 %v378
    %463 = vmatprep.subr.bf16.mxu0 %v375
    %464 = vmatpush1.bf16.msra.mxu0 %v374
    %465 = vmatprep.subr.bf16.mxu0 %v371
    %466 = vmatpush1.bf16.msra.mxu0 %v370
    %467 = vmatprep.subr.bf16.mxu0 %v367
    %468 = vmatpush1.bf16.msra.mxu0 %v366
    %469 = vmatprep.subr.bf16.mxu0 %v363
    %470 = vmatpush1.bf16.msra.mxu0 %v362
    %471 = vmatprep.subr.bf16.mxu0 %v359
    %472 = vmatpush1.bf16.msra.mxu0 %v358
    %473 = vmatprep.subr.bf16.mxu0 %v355
    %474 = vmatpush1.bf16.msra.mxu0 %v354
    %475 = vmatprep.subr.bf16.mxu0 0
    %476 = vmatpush2.bf16.msra.mxu0 0
    %477 = vmatprep.subr.bf16.mxu0 0
    %478 = vmatpush2.bf16.msra.mxu0 0
    %479 = vmatprep.subr.bf16.mxu0 0
    %480 = vmatpush2.bf16.msra.mxu0 0
    %481 = vmatprep.subr.bf16.mxu0 0
    %482 = vmatpush2.bf16.msra.mxu0 0
    %483 = vmatprep.subr.bf16.mxu0 0
    %484 = vmatpush2.bf16.msra.mxu0 0
    %485 = vmatprep.subr.bf16.mxu0 0
    %486 = vmatpush2.bf16.msra.mxu0 0
    %487 = vmatprep.subr.bf16.mxu0 0
    %488 = vmatpush2.bf16.msra.mxu0 0
    %489 = vmatprep.subr.bf16.mxu0 0
    %490 = vmatpush2.bf16.msra.mxu0 0
    %491 = vmatprep.mubr.bf16.mxu0 0
    %492 = vmatmul.mubr.bf16.gmra.mxu0 %v233
    %v493 = vpop.f32.mrf.mxu0
    %v494 = vadd.f32 %v247, %v493
    %v495 = vpop.f32.mrf.mxu0
    %v496 = vadd.f32 %v251, %v495
    %v497 = vpop.f32.mrf.mxu0
    %v498 = vadd.f32 %v247, %v497
    %v499 = vpop.f32.mrf.mxu0
    %v500 = vadd.f32 %v251, %v499
    %501 = vdwg.mxu0
    %v502 = vmax.f32 %v451, 0.0
    %v503 = vmax.f32 %v453, 0.0
    %v504 = vmax.f32 %v494, 0.0
    %v505 = vmax.f32 %v496, 0.0
    %v506 = vmax.f32 %v455, 0.0
    %v507 = vmax.f32 %v457, 0.0
    %v508 = vmax.f32 %v498, 0.0
    %v509 = vmax.f32 %v500, 0.0
    %s510 = smul.u32 4, 64
    %s511 = smul.u32 %s510, 4
    %s512 = sshll.u32 %s511, 4
    %513 = dma.done %s87, %s512
    %v514 = vld [vmem:[#allocation3] sm:$0xff]
    %v515 = vld [vmem:[#allocation3 + $0x8] sm:$0xff]
    %v516 = vld [vmem:[#allocation3 + $0x10] sm:$0xff]
    %v517 = vld [vmem:[#allocation3 + $0x18] sm:$0xff]
    %v518 = vld [vmem:[#allocation3 + $0x20] sm:$0xff]
    %v519 = vld [vmem:[#allocation3 + $0x28] sm:$0xff]
    %v520 = vld [vmem:[#allocation3 + $0x30] sm:$0xff]
    %v521 = vld [vmem:[#allocation3 + $0x38] sm:$0xff]
    %v522 = vld [vmem:[#allocation3 + $0x40] sm:$0xff]
    %v523 = vld [vmem:[#allocation3 + $0x48] sm:$0xff]
    %v524 = vld [vmem:[#allocation3 + $0x50] sm:$0xff]
    %v525 = vld [vmem:[#allocation3 + $0x58] sm:$0xff]
    %v526 = vld [vmem:[#allocation3 + $0x60] sm:$0xff]
    %v527 = vld [vmem:[#allocation3 + $0x68] sm:$0xff]
    %v528 = vld [vmem:[#allocation3 + $0x70] sm:$0xff]
    %v529 = vld [vmem:[#allocation3 + $0x78] sm:$0xff]
    %v530 = vld [vmem:[#allocation3 + $0x80] sm:$0xff]
    %v531 = vld [vmem:[#allocation3 + $0x88] sm:$0xff]
    %v532 = vld [vmem:[#allocation3 + $0x90] sm:$0xff]
    %v533 = vld [vmem:[#allocation3 + $0x98] sm:$0xff]
    %v534 = vld [vmem:[#allocation3 + $0xa0] sm:$0xff]
    %v535 = vld [vmem:[#allocation3 + $0xa8] sm:$0xff]
    %v536 = vld [vmem:[#allocation3 + $0xb0] sm:$0xff]
    %v537 = vld [vmem:[#allocation3 + $0xb8] sm:$0xff]
    %v538 = vld [vmem:[#allocation3 + $0xc0] sm:$0xff]
    %v539 = vld [vmem:[#allocation3 + $0xc8] sm:$0xff]
    %v540 = vld [vmem:[#allocation3 + $0xd0] sm:$0xff]
    %v541 = vld [vmem:[#allocation3 + $0xd8] sm:$0xff]
    %v542 = vld [vmem:[#allocation3 + $0xe0] sm:$0xff]
    %v543 = vld [vmem:[#allocation3 + $0xe8] sm:$0xff]
    %v544 = vld [vmem:[#allocation3 + $0xf0] sm:$0xff]
    %v545 = vld [vmem:[#allocation3 + $0xf8] sm:$0xff]
    %v546 = vld [vmem:[#allocation3 + $0x100] sm:$0xff]
    %v547 = vld [vmem:[#allocation3 + $0x108] sm:$0xff]
    %v548 = vld [vmem:[#allocation3 + $0x110] sm:$0xff]
    %v549 = vld [vmem:[#allocation3 + $0x118] sm:$0xff]
    %v550 = vld [vmem:[#allocation3 + $0x120] sm:$0xff]
    %v551 = vld [vmem:[#allocation3 + $0x128] sm:$0xff]
    %v552 = vld [vmem:[#allocation3 + $0x130] sm:$0xff]
    %v553 = vld [vmem:[#allocation3 + $0x138] sm:$0xff]
    %v554 = vld [vmem:[#allocation3 + $0x140] sm:$0xff]
    %v555 = vld [vmem:[#allocation3 + $0x148] sm:$0xff]
    %v556 = vld [vmem:[#allocation3 + $0x150] sm:$0xff]
    %v557 = vld [vmem:[#allocation3 + $0x158] sm:$0xff]
    %v558 = vld [vmem:[#allocation3 + $0x160] sm:$0xff]
    %v559 = vld [vmem:[#allocation3 + $0x168] sm:$0xff]
    %v560 = vld [vmem:[#allocation3 + $0x170] sm:$0xff]
    %v561 = vld [vmem:[#allocation3 + $0x178] sm:$0xff]
    %v562 = vld [vmem:[#allocation3 + $0x180] sm:$0xff]
    %v563 = vld [vmem:[#allocation3 + $0x188] sm:$0xff]
    %v564 = vld [vmem:[#allocation3 + $0x190] sm:$0xff]
    %v565 = vld [vmem:[#allocation3 + $0x198] sm:$0xff]
    %v566 = vld [vmem:[#allocation3 + $0x1a0] sm:$0xff]
    %v567 = vld [vmem:[#allocation3 + $0x1a8] sm:$0xff]
    %v568 = vld [vmem:[#allocation3 + $0x1b0] sm:$0xff]
    %v569 = vld [vmem:[#allocation3 + $0x1b8] sm:$0xff]
    %v570 = vld [vmem:[#allocation3 + $0x1c0] sm:$0xff]
    %v571 = vld [vmem:[#allocation3 + $0x1c8] sm:$0xff]
    %v572 = vld [vmem:[#allocation3 + $0x1d0] sm:$0xff]
    %v573 = vld [vmem:[#allocation3 + $0x1d8] sm:$0xff]
    %v574 = vld [vmem:[#allocation3 + $0x1e0] sm:$0xff]
    %v575 = vld [vmem:[#allocation3 + $0x1e8] sm:$0xff]
    %v576 = vld [vmem:[#allocation3 + $0x1f0] sm:$0xff]
    %v577 = vld [vmem:[#allocation3 + $0x1f8] sm:$0xff]
    %v578 = vld [vmem:[#allocation3 + $0x200] sm:$0xff]
    %v579 = vld [vmem:[#allocation3 + $0x208] sm:$0xff]
    %v580 = vld [vmem:[#allocation3 + $0x210] sm:$0xff]
    %v581 = vld [vmem:[#allocation3 + $0x218] sm:$0xff]
    %v582 = vld [vmem:[#allocation3 + $0x220] sm:$0xff]
    %v583 = vld [vmem:[#allocation3 + $0x228] sm:$0xff]
    %v584 = vld [vmem:[#allocation3 + $0x230] sm:$0xff]
    %v585 = vld [vmem:[#allocation3 + $0x238] sm:$0xff]
    %v586 = vld [vmem:[#allocation3 + $0x240] sm:$0xff]
    %v587 = vld [vmem:[#allocation3 + $0x248] sm:$0xff]
    %v588 = vld [vmem:[#allocation3 + $0x250] sm:$0xff]
    %v589 = vld [vmem:[#allocation3 + $0x258] sm:$0xff]
    %v590 = vld [vmem:[#allocation3 + $0x260] sm:$0xff]
    %v591 = vld [vmem:[#allocation3 + $0x268] sm:$0xff]
    %v592 = vld [vmem:[#allocation3 + $0x270] sm:$0xff]
    %v593 = vld [vmem:[#allocation3 + $0x278] sm:$0xff]
    %v594 = vld [vmem:[#allocation3 + $0x280] sm:$0xff]
    %v595 = vld [vmem:[#allocation3 + $0x288] sm:$0xff]
    %v596 = vld [vmem:[#allocation3 + $0x290] sm:$0xff]
    %v597 = vld [vmem:[#allocation3 + $0x298] sm:$0xff]
    %v598 = vld [vmem:[#allocation3 + $0x2a0] sm:$0xff]
    %v599 = vld [vmem:[#allocation3 + $0x2a8] sm:$0xff]
    %v600 = vld [vmem:[#allocation3 + $0x2b0] sm:$0xff]
    %v601 = vld [vmem:[#allocation3 + $0x2b8] sm:$0xff]
    %v602 = vld [vmem:[#allocation3 + $0x2c0] sm:$0xff]
    %v603 = vld [vmem:[#allocation3 + $0x2c8] sm:$0xff]
    %v604 = vld [vmem:[#allocation3 + $0x2d0] sm:$0xff]
    %v605 = vld [vmem:[#allocation3 + $0x2d8] sm:$0xff]
    %v606 = vld [vmem:[#allocation3 + $0x2e0] sm:$0xff]
    %v607 = vld [vmem:[#allocation3 + $0x2e8] sm:$0xff]
    %v608 = vld [vmem:[#allocation3 + $0x2f0] sm:$0xff]
    %v609 = vld [vmem:[#allocation3 + $0x2f8] sm:$0xff]
    %v610 = vld [vmem:[#allocation3 + $0x300] sm:$0xff]
    %v611 = vld [vmem:[#allocation3 + $0x308] sm:$0xff]
    %v612 = vld [vmem:[#allocation3 + $0x310] sm:$0xff]
    %v613 = vld [vmem:[#allocation3 + $0x318] sm:$0xff]
    %v614 = vld [vmem:[#allocation3 + $0x320] sm:$0xff]
    %v615 = vld [vmem:[#allocation3 + $0x328] sm:$0xff]
    %v616 = vld [vmem:[#allocation3 + $0x330] sm:$0xff]
    %v617 = vld [vmem:[#allocation3 + $0x338] sm:$0xff]
    %v618 = vld [vmem:[#allocation3 + $0x340] sm:$0xff]
    %v619 = vld [vmem:[#allocation3 + $0x348] sm:$0xff]
    %v620 = vld [vmem:[#allocation3 + $0x350] sm:$0xff]
    %v621 = vld [vmem:[#allocation3 + $0x358] sm:$0xff]
    %v622 = vld [vmem:[#allocation3 + $0x360] sm:$0xff]
    %v623 = vld [vmem:[#allocation3 + $0x368] sm:$0xff]
    %v624 = vld [vmem:[#allocation3 + $0x370] sm:$0xff]
    %v625 = vld [vmem:[#allocation3 + $0x378] sm:$0xff]
    %v626 = vld [vmem:[#allocation3 + $0x380] sm:$0xff]
    %v627 = vld [vmem:[#allocation3 + $0x388] sm:$0xff]
    %v628 = vld [vmem:[#allocation3 + $0x390] sm:$0xff]
    %v629 = vld [vmem:[#allocation3 + $0x398] sm:$0xff]
    %v630 = vld [vmem:[#allocation3 + $0x3a0] sm:$0xff]
    %v631 = vld [vmem:[#allocation3 + $0x3a8] sm:$0xff]
    %v632 = vld [vmem:[#allocation3 + $0x3b0] sm:$0xff]
    %v633 = vld [vmem:[#allocation3 + $0x3b8] sm:$0xff]
    %v634 = vld [vmem:[#allocation3 + $0x3c0] sm:$0xff]
    %v635 = vld [vmem:[#allocation3 + $0x3c8] sm:$0xff]
    %v636 = vld [vmem:[#allocation3 + $0x3d0] sm:$0xff]
    %v637 = vld [vmem:[#allocation3 + $0x3d8] sm:$0xff]
    %v638 = vld [vmem:[#allocation3 + $0x3e0] sm:$0xff]
    %v639 = vld [vmem:[#allocation3 + $0x3e8] sm:$0xff]
    %v640 = vld [vmem:[#allocation3 + $0x3f0] sm:$0xff]
    %v641 = vld [vmem:[#allocation3 + $0x3f8] sm:$0xff]
    %v642 = vpack.c.bf16 %v506, %v502
    %v643 = vpack.c.bf16 %v507, %v503
    %v644 = vpack.c.bf16 %v508, %v504
    %v645 = vpack.c.bf16 %v509, %v505
    %v646 = vld [vmem:[%s4] sm:$0xf]
    %v648 = vlaneseq
    %v649 = vshrl.u32 %v648, 7
    %v650 = vsub.s32 0, %v649
    %v651 = vrot.slane %v646, %v650
    %v652 = vlaneseq
    %v653 = vshrl.u32 %v652, 7
    %v654 = vsub.s32 1, %v653
    %v655 = vrot.slane %v646, %v654
    %v656 = vlaneseq
    %v657 = vshrl.u32 %v656, 7
    %v658 = vsub.s32 2, %v657
    %v659 = vrot.slane %v646, %v658
    %v660 = vlaneseq
    %v661 = vshrl.u32 %v660, 7
    %v662 = vsub.s32 3, %v661
    %v663 = vrot.slane %v646, %v662
    %v796 = vunpack.c.l.b16 %v514
    %v797 = vunpack.c.h.b16 %v514
    %v798 = vunpack.c.l.b16 %v515
    %v799 = vunpack.c.h.b16 %v515
    %v800 = vunpack.c.l.b16 %v516
    %v801 = vunpack.c.h.b16 %v516
    %v802 = vunpack.c.l.b16 %v517
    %v803 = vunpack.c.h.b16 %v517
    %v804 = vunpack.c.l.b16 %v518
    %v805 = vunpack.c.h.b16 %v518
    %v806 = vunpack.c.l.b16 %v519
    %v807 = vunpack.c.h.b16 %v519
    %v808 = vunpack.c.l.b16 %v520
    %v809 = vunpack.c.h.b16 %v520
    %v810 = vunpack.c.l.b16 %v521
    %v811 = vunpack.c.h.b16 %v521
    %v812 = vunpack.c.l.b16 %v522
    %v813 = vunpack.c.h.b16 %v522
    %v814 = vunpack.c.l.b16 %v523
    %v815 = vunpack.c.h.b16 %v523
    %v816 = vunpack.c.l.b16 %v524
    %v817 = vunpack.c.h.b16 %v524
    %v818 = vunpack.c.l.b16 %v525
    %v819 = vunpack.c.h.b16 %v525
    %v820 = vunpack.c.l.b16 %v526
    %v821 = vunpack.c.h.b16 %v526
    %v822 = vunpack.c.l.b16 %v527
    %v823 = vunpack.c.h.b16 %v527
    %v824 = vunpack.c.l.b16 %v528
    %v825 = vunpack.c.h.b16 %v528
    %v826 = vunpack.c.l.b16 %v529
    %v827 = vunpack.c.h.b16 %v529
    %v828 = vunpack.c.l.b16 %v530
    %v829 = vunpack.c.h.b16 %v530
    %v830 = vunpack.c.l.b16 %v531
    %v831 = vunpack.c.h.b16 %v531
    %v832 = vunpack.c.l.b16 %v532
    %v833 = vunpack.c.h.b16 %v532
    %v834 = vunpack.c.l.b16 %v533
    %v835 = vunpack.c.h.b16 %v533
    %v836 = vunpack.c.l.b16 %v534
    %v837 = vunpack.c.h.b16 %v534
    %v838 = vunpack.c.l.b16 %v535
    %v839 = vunpack.c.h.b16 %v535
    %v840 = vunpack.c.l.b16 %v536
    %v841 = vunpack.c.h.b16 %v536
    %v842 = vunpack.c.l.b16 %v537
    %v843 = vunpack.c.h.b16 %v537
    %v844 = vunpack.c.l.b16 %v538
    %v845 = vunpack.c.h.b16 %v538
    %v846 = vunpack.c.l.b16 %v539
    %v847 = vunpack.c.h.b16 %v539
    %v848 = vunpack.c.l.b16 %v540
    %v849 = vunpack.c.h.b16 %v540
    %v850 = vunpack.c.l.b16 %v541
    %v851 = vunpack.c.h.b16 %v541
    %v852 = vunpack.c.l.b16 %v542
    %v853 = vunpack.c.h.b16 %v542
    %v854 = vunpack.c.l.b16 %v543
    %v855 = vunpack.c.h.b16 %v543
    %v856 = vunpack.c.l.b16 %v544
    %v857 = vunpack.c.h.b16 %v544
    %v858 = vunpack.c.l.b16 %v545
    %v859 = vunpack.c.h.b16 %v545
    %v860 = vunpack.c.l.b16 %v546
    %v861 = vunpack.c.h.b16 %v546
    %v862 = vunpack.c.l.b16 %v547
    %v863 = vunpack.c.h.b16 %v547
    %v864 = vunpack.c.l.b16 %v548
    %v865 = vunpack.c.h.b16 %v548
    %v866 = vunpack.c.l.b16 %v549
    %v867 = vunpack.c.h.b16 %v549
    %v868 = vunpack.c.l.b16 %v550
    %v869 = vunpack.c.h.b16 %v550
    %v870 = vunpack.c.l.b16 %v551
    %v871 = vunpack.c.h.b16 %v551
    %v872 = vunpack.c.l.b16 %v552
    %v873 = vunpack.c.h.b16 %v552
    %v874 = vunpack.c.l.b16 %v553
    %v875 = vunpack.c.h.b16 %v553
    %v876 = vunpack.c.l.b16 %v554
    %v877 = vunpack.c.h.b16 %v554
    %v878 = vunpack.c.l.b16 %v555
    %v879 = vunpack.c.h.b16 %v555
    %v880 = vunpack.c.l.b16 %v556
    %v881 = vunpack.c.h.b16 %v556
    %v882 = vunpack.c.l.b16 %v557
    %v883 = vunpack.c.h.b16 %v557
    %v884 = vunpack.c.l.b16 %v558
    %v885 = vunpack.c.h.b16 %v558
    %v886 = vunpack.c.l.b16 %v559
    %v887 = vunpack.c.h.b16 %v559
    %v888 = vunpack.c.l.b16 %v560
    %v889 = vunpack.c.h.b16 %v560
    %v890 = vunpack.c.l.b16 %v561
    %v891 = vunpack.c.h.b16 %v561
    %v892 = vunpack.c.l.b16 %v562
    %v893 = vunpack.c.h.b16 %v562
    %v894 = vunpack.c.l.b16 %v563
    %v895 = vunpack.c.h.b16 %v563
    %v896 = vunpack.c.l.b16 %v564
    %v897 = vunpack.c.h.b16 %v564
    %v898 = vunpack.c.l.b16 %v565
    %v899 = vunpack.c.h.b16 %v565
    %v900 = vunpack.c.l.b16 %v566
    %v901 = vunpack.c.h.b16 %v566
    %v902 = vunpack.c.l.b16 %v567
    %v903 = vunpack.c.h.b16 %v567
    %v904 = vunpack.c.l.b16 %v568
    %v905 = vunpack.c.h.b16 %v568
    %v906 = vunpack.c.l.b16 %v569
    %v907 = vunpack.c.h.b16 %v569
    %v908 = vunpack.c.l.b16 %v570
    %v909 = vunpack.c.h.b16 %v570
    %v910 = vunpack.c.l.b16 %v571
    %v911 = vunpack.c.h.b16 %v571
    %v912 = vunpack.c.l.b16 %v572
    %v913 = vunpack.c.h.b16 %v572
    %v914 = vunpack.c.l.b16 %v573
    %v915 = vunpack.c.h.b16 %v573
    %v916 = vunpack.c.l.b16 %v574
    %v917 = vunpack.c.h.b16 %v574
    %v918 = vunpack.c.l.b16 %v575
    %v919 = vunpack.c.h.b16 %v575
    %v920 = vunpack.c.l.b16 %v576
    %v921 = vunpack.c.h.b16 %v576
    %v922 = vunpack.c.l.b16 %v577
    %v923 = vunpack.c.h.b16 %v577
    %v924 = vunpack.c.l.b16 %v578
    %v925 = vunpack.c.h.b16 %v578
    %v926 = vunpack.c.l.b16 %v579
    %v927 = vunpack.c.h.b16 %v579
    %v928 = vunpack.c.l.b16 %v580
    %v929 = vunpack.c.h.b16 %v580
    %v930 = vunpack.c.l.b16 %v581
    %v931 = vunpack.c.h.b16 %v581
    %v932 = vunpack.c.l.b16 %v582
    %v933 = vunpack.c.h.b16 %v582
    %v934 = vunpack.c.l.b16 %v583
    %v935 = vunpack.c.h.b16 %v583
    %v936 = vunpack.c.l.b16 %v584
    %v937 = vunpack.c.h.b16 %v584
    %v938 = vunpack.c.l.b16 %v585
    %v939 = vunpack.c.h.b16 %v585
    %v940 = vunpack.c.l.b16 %v586
    %v941 = vunpack.c.h.b16 %v586
    %v942 = vunpack.c.l.b16 %v587
    %v943 = vunpack.c.h.b16 %v587
    %v944 = vunpack.c.l.b16 %v588
    %v945 = vunpack.c.h.b16 %v588
    %v946 = vunpack.c.l.b16 %v589
    %v947 = vunpack.c.h.b16 %v589
    %v948 = vunpack.c.l.b16 %v590
    %v949 = vunpack.c.h.b16 %v590
    %v950 = vunpack.c.l.b16 %v591
    %v951 = vunpack.c.h.b16 %v591
    %v952 = vunpack.c.l.b16 %v592
    %v953 = vunpack.c.h.b16 %v592
    %v954 = vunpack.c.l.b16 %v593
    %v955 = vunpack.c.h.b16 %v593
    %v956 = vunpack.c.l.b16 %v594
    %v957 = vunpack.c.h.b16 %v594
    %v958 = vunpack.c.l.b16 %v595
    %v959 = vunpack.c.h.b16 %v595
    %v960 = vunpack.c.l.b16 %v596
    %v961 = vunpack.c.h.b16 %v596
    %v962 = vunpack.c.l.b16 %v597
    %v963 = vunpack.c.h.b16 %v597
    %v964 = vunpack.c.l.b16 %v598
    %v965 = vunpack.c.h.b16 %v598
    %v966 = vunpack.c.l.b16 %v599
    %v967 = vunpack.c.h.b16 %v599
    %v968 = vunpack.c.l.b16 %v600
    %v969 = vunpack.c.h.b16 %v600
    %v970 = vunpack.c.l.b16 %v601
    %v971 = vunpack.c.h.b16 %v601
    %v972 = vunpack.c.l.b16 %v602
    %v973 = vunpack.c.h.b16 %v602
    %v974 = vunpack.c.l.b16 %v603
    %v975 = vunpack.c.h.b16 %v603
    %v976 = vunpack.c.l.b16 %v604
    %v977 = vunpack.c.h.b16 %v604
    %v978 = vunpack.c.l.b16 %v605
    %v979 = vunpack.c.h.b16 %v605
    %v980 = vunpack.c.l.b16 %v606
    %v981 = vunpack.c.h.b16 %v606
    %v982 = vunpack.c.l.b16 %v607
    %v983 = vunpack.c.h.b16 %v607
    %v984 = vunpack.c.l.b16 %v608
    %v985 = vunpack.c.h.b16 %v608
    %v986 = vunpack.c.l.b16 %v609
    %v987 = vunpack.c.h.b16 %v609
    %v988 = vunpack.c.l.b16 %v610
    %v989 = vunpack.c.h.b16 %v610
    %v990 = vunpack.c.l.b16 %v611
    %v991 = vunpack.c.h.b16 %v611
    %v992 = vunpack.c.l.b16 %v612
    %v993 = vunpack.c.h.b16 %v612
    %v994 = vunpack.c.l.b16 %v613
    %v995 = vunpack.c.h.b16 %v613
    %v996 = vunpack.c.l.b16 %v614
    %v997 = vunpack.c.h.b16 %v614
    %v998 = vunpack.c.l.b16 %v615
    %v999 = vunpack.c.h.b16 %v615
    %v1000 = vunpack.c.l.b16 %v616
    %v1001 = vunpack.c.h.b16 %v616
    %v1002 = vunpack.c.l.b16 %v617
    %v1003 = vunpack.c.h.b16 %v617
    %v1004 = vunpack.c.l.b16 %v618
    %v1005 = vunpack.c.h.b16 %v618
    %v1006 = vunpack.c.l.b16 %v619
    %v1007 = vunpack.c.h.b16 %v619
    %v1008 = vunpack.c.l.b16 %v620
    %v1009 = vunpack.c.h.b16 %v620
    %v1010 = vunpack.c.l.b16 %v621
    %v1011 = vunpack.c.h.b16 %v621
    %v1012 = vunpack.c.l.b16 %v622
    %v1013 = vunpack.c.h.b16 %v622
    %v1014 = vunpack.c.l.b16 %v623
    %v1015 = vunpack.c.h.b16 %v623
    %v1016 = vunpack.c.l.b16 %v624
    %v1017 = vunpack.c.h.b16 %v624
    %v1018 = vunpack.c.l.b16 %v625
    %v1019 = vunpack.c.h.b16 %v625
    %v1020 = vunpack.c.l.b16 %v626
    %v1021 = vunpack.c.h.b16 %v626
    %v1022 = vunpack.c.l.b16 %v627
    %v1023 = vunpack.c.h.b16 %v627
    %v1024 = vunpack.c.l.b16 %v628
    %v1025 = vunpack.c.h.b16 %v628
    %v1026 = vunpack.c.l.b16 %v629
    %v1027 = vunpack.c.h.b16 %v629
    %v1028 = vunpack.c.l.b16 %v630
    %v1029 = vunpack.c.h.b16 %v630
    %v1030 = vunpack.c.l.b16 %v631
    %v1031 = vunpack.c.h.b16 %v631
    %v1032 = vunpack.c.l.b16 %v632
    %v1033 = vunpack.c.h.b16 %v632
    %v1034 = vunpack.c.l.b16 %v633
    %v1035 = vunpack.c.h.b16 %v633
    %v1036 = vunpack.c.l.b16 %v634
    %v1037 = vunpack.c.h.b16 %v634
    %v1038 = vunpack.c.l.b16 %v635
    %v1039 = vunpack.c.h.b16 %v635
    %v1040 = vunpack.c.l.b16 %v636
    %v1041 = vunpack.c.h.b16 %v636
    %v1042 = vunpack.c.l.b16 %v637
    %v1043 = vunpack.c.h.b16 %v637
    %v1044 = vunpack.c.l.b16 %v638
    %v1045 = vunpack.c.h.b16 %v638
    %v1046 = vunpack.c.l.b16 %v639
    %v1047 = vunpack.c.h.b16 %v639
    %v1048 = vunpack.c.l.b16 %v640
    %v1049 = vunpack.c.h.b16 %v640
    %v1050 = vunpack.c.l.b16 %v641
    %v1051 = vunpack.c.h.b16 %v641
    %v1052 = vpack.c.b16 %v800, %v796
    %v1053 = vpack.c.b16 %v801, %v797
    %v1054 = vpack.c.b16 %v802, %v798
    %v1055 = vpack.c.b16 %v803, %v799
    %v1056 = vpack.c.b16 %v808, %v804
    %v1057 = vpack.c.b16 %v809, %v805
    %v1058 = vpack.c.b16 %v810, %v806
    %v1059 = vpack.c.b16 %v811, %v807
    %v1060 = vpack.c.b16 %v816, %v812
    %v1061 = vpack.c.b16 %v817, %v813
    %v1062 = vpack.c.b16 %v818, %v814
    %v1063 = vpack.c.b16 %v819, %v815
    %v1064 = vpack.c.b16 %v824, %v820
    %v1065 = vpack.c.b16 %v825, %v821
    %v1066 = vpack.c.b16 %v826, %v822
    %v1067 = vpack.c.b16 %v827, %v823
    %v1068 = vpack.c.b16 %v832, %v828
    %v1069 = vpack.c.b16 %v833, %v829
    %v1070 = vpack.c.b16 %v834, %v830
    %v1071 = vpack.c.b16 %v835, %v831
    %v1072 = vpack.c.b16 %v840, %v836
    %v1073 = vpack.c.b16 %v841, %v837
    %v1074 = vpack.c.b16 %v842, %v838
    %v1075 = vpack.c.b16 %v843, %v839
    %v1076 = vpack.c.b16 %v848, %v844
    %v1077 = vpack.c.b16 %v849, %v845
    %v1078 = vpack.c.b16 %v850, %v846
    %v1079 = vpack.c.b16 %v851, %v847
    %v1080 = vpack.c.b16 %v856, %v852
    %v1081 = vpack.c.b16 %v857, %v853
    %v1082 = vpack.c.b16 %v858, %v854
    %v1083 = vpack.c.b16 %v859, %v855
    %v1084 = vpack.c.b16 %v864, %v860
    %v1085 = vpack.c.b16 %v865, %v861
    %v1086 = vpack.c.b16 %v866, %v862
    %v1087 = vpack.c.b16 %v867, %v863
    %v1088 = vpack.c.b16 %v872, %v868
    %v1089 = vpack.c.b16 %v873, %v869
    %v1090 = vpack.c.b16 %v874, %v870
    %v1091 = vpack.c.b16 %v875, %v871
    %v1092 = vpack.c.b16 %v880, %v876
    %v1093 = vpack.c.b16 %v881, %v877
    %v1094 = vpack.c.b16 %v882, %v878
    %v1095 = vpack.c.b16 %v883, %v879
    %v1096 = vpack.c.b16 %v888, %v884
    %v1097 = vpack.c.b16 %v889, %v885
    %v1098 = vpack.c.b16 %v890, %v886
    %v1099 = vpack.c.b16 %v891, %v887
    %v1100 = vpack.c.b16 %v896, %v892
    %v1101 = vpack.c.b16 %v897, %v893
    %v1102 = vpack.c.b16 %v898, %v894
    %v1103 = vpack.c.b16 %v899, %v895
    %v1104 = vpack.c.b16 %v904, %v900
    %v1105 = vpack.c.b16 %v905, %v901
    %v1106 = vpack.c.b16 %v906, %v902
    %v1107 = vpack.c.b16 %v907, %v903
    %v1108 = vpack.c.b16 %v912, %v908
    %v1109 = vpack.c.b16 %v913, %v909
    %v1110 = vpack.c.b16 %v914, %v910
    %v1111 = vpack.c.b16 %v915, %v911
    %v1112 = vpack.c.b16 %v920, %v916
    %v1113 = vpack.c.b16 %v921, %v917
    %v1114 = vpack.c.b16 %v922, %v918
    %v1115 = vpack.c.b16 %v923, %v919
    %v1116 = vpack.c.b16 %v928, %v924
    %v1117 = vpack.c.b16 %v929, %v925
    %v1118 = vpack.c.b16 %v930, %v926
    %v1119 = vpack.c.b16 %v931, %v927
    %v1120 = vpack.c.b16 %v936, %v932
    %v1121 = vpack.c.b16 %v937, %v933
    %v1122 = vpack.c.b16 %v938, %v934
    %v1123 = vpack.c.b16 %v939, %v935
    %v1124 = vpack.c.b16 %v944, %v940
    %v1125 = vpack.c.b16 %v945, %v941
    %v1126 = vpack.c.b16 %v946, %v942
    %v1127 = vpack.c.b16 %v947, %v943
    %v1128 = vpack.c.b16 %v952, %v948
    %v1129 = vpack.c.b16 %v953, %v949
    %v1130 = vpack.c.b16 %v954, %v950
    %v1131 = vpack.c.b16 %v955, %v951
    %v1132 = vpack.c.b16 %v960, %v956
    %v1133 = vpack.c.b16 %v961, %v957
    %v1134 = vpack.c.b16 %v962, %v958
    %v1135 = vpack.c.b16 %v963, %v959
    %v1136 = vpack.c.b16 %v968, %v964
    %v1137 = vpack.c.b16 %v969, %v965
    %v1138 = vpack.c.b16 %v970, %v966
    %v1139 = vpack.c.b16 %v971, %v967
    %v1140 = vpack.c.b16 %v976, %v972
    %v1141 = vpack.c.b16 %v977, %v973
    %v1142 = vpack.c.b16 %v978, %v974
    %v1143 = vpack.c.b16 %v979, %v975
    %v1144 = vpack.c.b16 %v984, %v980
    %v1145 = vpack.c.b16 %v985, %v981
    %v1146 = vpack.c.b16 %v986, %v982
    %v1147 = vpack.c.b16 %v987, %v983
    %v1148 = vpack.c.b16 %v992, %v988
    %v1149 = vpack.c.b16 %v993, %v989
    %v1150 = vpack.c.b16 %v994, %v990
    %v1151 = vpack.c.b16 %v995, %v991
    %v1152 = vpack.c.b16 %v1000, %v996
    %v1153 = vpack.c.b16 %v1001, %v997
    %v1154 = vpack.c.b16 %v1002, %v998
    %v1155 = vpack.c.b16 %v1003, %v999
    %v1156 = vpack.c.b16 %v1008, %v1004
    %v1157 = vpack.c.b16 %v1009, %v1005
    %v1158 = vpack.c.b16 %v1010, %v1006
    %v1159 = vpack.c.b16 %v1011, %v1007
    %v1160 = vpack.c.b16 %v1016, %v1012
    %v1161 = vpack.c.b16 %v1017, %v1013
    %v1162 = vpack.c.b16 %v1018, %v1014
    %v1163 = vpack.c.b16 %v1019, %v1015
    %v1164 = vpack.c.b16 %v1024, %v1020
    %v1165 = vpack.c.b16 %v1025, %v1021
    %v1166 = vpack.c.b16 %v1026, %v1022
    %v1167 = vpack.c.b16 %v1027, %v1023
    %v1168 = vpack.c.b16 %v1032, %v1028
    %v1169 = vpack.c.b16 %v1033, %v1029
    %v1170 = vpack.c.b16 %v1034, %v1030
    %v1171 = vpack.c.b16 %v1035, %v1031
    %v1172 = vpack.c.b16 %v1040, %v1036
    %v1173 = vpack.c.b16 %v1041, %v1037
    %v1174 = vpack.c.b16 %v1042, %v1038
    %v1175 = vpack.c.b16 %v1043, %v1039
    %v1176 = vpack.c.b16 %v1048, %v1044
    %v1177 = vpack.c.b16 %v1049, %v1045
    %v1178 = vpack.c.b16 %v1050, %v1046
    %v1179 = vpack.c.b16 %v1051, %v1047
    %1308 = vmatprep.subr.bf16.mxu0 %v1081
    %1309 = vmatpush1.bf16.msra.mxu0 %v1080
    %1310 = vmatprep.subr.bf16.mxu0 %v1077
    %1311 = vmatpush1.bf16.msra.mxu0 %v1076
    %1312 = vmatprep.subr.bf16.mxu0 %v1073
    %1313 = vmatpush1.bf16.msra.mxu0 %v1072
    %1314 = vmatprep.subr.bf16.mxu0 %v1069
    %1315 = vmatpush1.bf16.msra.mxu0 %v1068
    %1316 = vmatprep.subr.bf16.mxu0 %v1065
    %1317 = vmatpush1.bf16.msra.mxu0 %v1064
    %1318 = vmatprep.subr.bf16.mxu0 %v1061
    %1319 = vmatpush1.bf16.msra.mxu0 %v1060
    %1320 = vmatprep.subr.bf16.mxu0 %v1057
    %1321 = vmatpush1.bf16.msra.mxu0 %v1056
    %1322 = vmatprep.subr.bf16.mxu0 %v1053
    %1323 = vmatpush1.bf16.msra.mxu0 %v1052
    %1324 = vmatprep.subr.bf16.mxu0 %v1113
    %1325 = vmatpush2.bf16.msra.mxu0 %v1112
    %1326 = vmatprep.subr.bf16.mxu0 %v1109
    %1327 = vmatpush2.bf16.msra.mxu0 %v1108
    %1328 = vmatprep.subr.bf16.mxu0 %v1105
    %1329 = vmatpush2.bf16.msra.mxu0 %v1104
    %1330 = vmatprep.subr.bf16.mxu0 %v1101
    %1331 = vmatpush2.bf16.msra.mxu0 %v1100
    %1332 = vmatprep.subr.bf16.mxu0 %v1097
    %1333 = vmatpush2.bf16.msra.mxu0 %v1096
    %1334 = vmatprep.subr.bf16.mxu0 %v1093
    %1335 = vmatpush2.bf16.msra.mxu0 %v1092
    %1336 = vmatprep.subr.bf16.mxu0 %v1089
    %1337 = vmatpush2.bf16.msra.mxu0 %v1088
    %1338 = vmatprep.subr.bf16.mxu0 %v1085
    %1339 = vmatpush2.bf16.msra.mxu0 %v1084
    %1340 = vmatprep.mubr.bf16.mxu0 %v643
    %1341 = vmatmul.mubr.bf16.gmra.mxu0 %v642
    %v1342 = vpop.f32.mrf.mxu0
    %v1343 = vadd.f32 %v651, %v1342
    %v1344 = vpop.f32.mrf.mxu0
    %v1345 = vadd.f32 %v655, %v1344
    %v1346 = vpop.f32.mrf.mxu0
    %v1347 = vadd.f32 %v651, %v1346
    %v1348 = vpop.f32.mrf.mxu0
    %v1349 = vadd.f32 %v655, %v1348
    %1350 = vdwg.mxu0
    %1351 = vmatprep.subr.bf16.mxu0 %v1145
    %1352 = vmatpush1.bf16.msra.mxu0 %v1144
    %1353 = vmatprep.subr.bf16.mxu0 %v1141
    %1354 = vmatpush1.bf16.msra.mxu0 %v1140
    %1355 = vmatprep.subr.bf16.mxu0 %v1137
    %1356 = vmatpush1.bf16.msra.mxu0 %v1136
    %1357 = vmatprep.subr.bf16.mxu0 %v1133
    %1358 = vmatpush1.bf16.msra.mxu0 %v1132
    %1359 = vmatprep.subr.bf16.mxu0 %v1129
    %1360 = vmatpush1.bf16.msra.mxu0 %v1128
    %1361 = vmatprep.subr.bf16.mxu0 %v1125
    %1362 = vmatpush1.bf16.msra.mxu0 %v1124
    %1363 = vmatprep.subr.bf16.mxu0 %v1121
    %1364 = vmatpush1.bf16.msra.mxu0 %v1120
    %1365 = vmatprep.subr.bf16.mxu0 %v1117
    %1366 = vmatpush1.bf16.msra.mxu0 %v1116
    %1367 = vmatprep.subr.bf16.mxu0 %v1177
    %1368 = vmatpush2.bf16.msra.mxu0 %v1176
    %1369 = vmatprep.subr.bf16.mxu0 %v1173
    %1370 = vmatpush2.bf16.msra.mxu0 %v1172
    %1371 = vmatprep.subr.bf16.mxu0 %v1169
    %1372 = vmatpush2.bf16.msra.mxu0 %v1168
    %1373 = vmatprep.subr.bf16.mxu0 %v1165
    %1374 = vmatpush2.bf16.msra.mxu0 %v1164
    %1375 = vmatprep.subr.bf16.mxu0 %v1161
    %1376 = vmatpush2.bf16.msra.mxu0 %v1160
    %1377 = vmatprep.subr.bf16.mxu0 %v1157
    %1378 = vmatpush2.bf16.msra.mxu0 %v1156
    %1379 = vmatprep.subr.bf16.mxu0 %v1153
    %1380 = vmatpush2.bf16.msra.mxu0 %v1152
    %1381 = vmatprep.subr.bf16.mxu0 %v1149
    %1382 = vmatpush2.bf16.msra.mxu0 %v1148
    %1383 = vmatprep.mubr.bf16.mxu0 %v645
    %1384 = vmatmul.mubr.bf16.gmra.mxu0 %v644
    %v1385 = vpop.f32.mrf.mxu0
    %v1386 = vadd.f32 %v1343, %v1385
    %v1387 = vpop.f32.mrf.mxu0
    %v1388 = vadd.f32 %v1345, %v1387
    %v1389 = vpop.f32.mrf.mxu0
    %v1390 = vadd.f32 %v1347, %v1389
    %v1391 = vpop.f32.mrf.mxu0
    %v1392 = vadd.f32 %v1349, %v1391
    %1393 = vdwg.mxu0
    %1394 = vmatprep.subr.bf16.mxu0 %v1083
    %1395 = vmatpush1.bf16.msra.mxu0 %v1082
    %1396 = vmatprep.subr.bf16.mxu0 %v1079
    %1397 = vmatpush1.bf16.msra.mxu0 %v1078
    %1398 = vmatprep.subr.bf16.mxu0 %v1075
    %1399 = vmatpush1.bf16.msra.mxu0 %v1074
    %1400 = vmatprep.subr.bf16.mxu0 %v1071
    %1401 = vmatpush1.bf16.msra.mxu0 %v1070
    %1402 = vmatprep.subr.bf16.mxu0 %v1067
    %1403 = vmatpush1.bf16.msra.mxu0 %v1066
    %1404 = vmatprep.subr.bf16.mxu0 %v1063
    %1405 = vmatpush1.bf16.msra.mxu0 %v1062
    %1406 = vmatprep.subr.bf16.mxu0 %v1059
    %1407 = vmatpush1.bf16.msra.mxu0 %v1058
    %1408 = vmatprep.subr.bf16.mxu0 %v1055
    %1409 = vmatpush1.bf16.msra.mxu0 %v1054
    %1410 = vmatprep.subr.bf16.mxu0 %v1115
    %1411 = vmatpush2.bf16.msra.mxu0 %v1114
    %1412 = vmatprep.subr.bf16.mxu0 %v1111
    %1413 = vmatpush2.bf16.msra.mxu0 %v1110
    %1414 = vmatprep.subr.bf16.mxu0 %v1107
    %1415 = vmatpush2.bf16.msra.mxu0 %v1106
    %1416 = vmatprep.subr.bf16.mxu0 %v1103
    %1417 = vmatpush2.bf16.msra.mxu0 %v1102
    %1418 = vmatprep.subr.bf16.mxu0 %v1099
    %1419 = vmatpush2.bf16.msra.mxu0 %v1098
    %1420 = vmatprep.subr.bf16.mxu0 %v1095
    %1421 = vmatpush2.bf16.msra.mxu0 %v1094
    %1422 = vmatprep.subr.bf16.mxu0 %v1091
    %1423 = vmatpush2.bf16.msra.mxu0 %v1090
    %1424 = vmatprep.subr.bf16.mxu0 %v1087
    %1425 = vmatpush2.bf16.msra.mxu0 %v1086
    %1426 = vmatprep.mubr.bf16.mxu0 %v643
    %1427 = vmatmul.mubr.bf16.gmra.mxu0 %v642
    %v1428 = vpop.f32.mrf.mxu0
    %v1429 = vadd.f32 %v659, %v1428
    %v1430 = vpop.f32.mrf.mxu0
    %v1431 = vadd.f32 %v663, %v1430
    %v1432 = vpop.f32.mrf.mxu0
    %v1433 = vadd.f32 %v659, %v1432
    %v1434 = vpop.f32.mrf.mxu0
    %v1435 = vadd.f32 %v663, %v1434
    %1436 = vdwg.mxu0
    %1437 = vmatprep.subr.bf16.mxu0 %v1147
    %1438 = vmatpush1.bf16.msra.mxu0 %v1146
    %1439 = vmatprep.subr.bf16.mxu0 %v1143
    %1440 = vmatpush1.bf16.msra.mxu0 %v1142
    %1441 = vmatprep.subr.bf16.mxu0 %v1139
    %1442 = vmatpush1.bf16.msra.mxu0 %v1138
    %1443 = vmatprep.subr.bf16.mxu0 %v1135
    %1444 = vmatpush1.bf16.msra.mxu0 %v1134
    %1445 = vmatprep.subr.bf16.mxu0 %v1131
    %1446 = vmatpush1.bf16.msra.mxu0 %v1130
    %1447 = vmatprep.subr.bf16.mxu0 %v1127
    %1448 = vmatpush1.bf16.msra.mxu0 %v1126
    %1449 = vmatprep.subr.bf16.mxu0 %v1123
    %1450 = vmatpush1.bf16.msra.mxu0 %v1122
    %1451 = vmatprep.subr.bf16.mxu0 %v1119
    %1452 = vmatpush1.bf16.msra.mxu0 %v1118
    %1453 = vmatprep.subr.bf16.mxu0 %v1179
    %1454 = vmatpush2.bf16.msra.mxu0 %v1178
    %1455 = vmatprep.subr.bf16.mxu0 %v1175
    %1456 = vmatpush2.bf16.msra.mxu0 %v1174
    %1457 = vmatprep.subr.bf16.mxu0 %v1171
    %1458 = vmatpush2.bf16.msra.mxu0 %v1170
    %1459 = vmatprep.subr.bf16.mxu0 %v1167
    %1460 = vmatpush2.bf16.msra.mxu0 %v1166
    %1461 = vmatprep.subr.bf16.mxu0 %v1163
    %1462 = vmatpush2.bf16.msra.mxu0 %v1162
    %1463 = vmatprep.subr.bf16.mxu0 %v1159
    %1464 = vmatpush2.bf16.msra.mxu0 %v1158
    %1465 = vmatprep.subr.bf16.mxu0 %v1155
    %1466 = vmatpush2.bf16.msra.mxu0 %v1154
    %1467 = vmatprep.subr.bf16.mxu0 %v1151
    %1468 = vmatpush2.bf16.msra.mxu0 %v1150
    %1469 = vmatprep.mubr.bf16.mxu0 %v645
    %1470 = vmatmul.mubr.bf16.gmra.mxu0 %v644
    %v1471 = vpop.f32.mrf.mxu0
    %v1472 = vadd.f32 %v1429, %v1471
    %v1473 = vpop.f32.mrf.mxu0
    %v1474 = vadd.f32 %v1431, %v1473
    %v1475 = vpop.f32.mrf.mxu0
    %v1476 = vadd.f32 %v1433, %v1475
    %v1477 = vpop.f32.mrf.mxu0
    %v1478 = vadd.f32 %v1435, %v1477
    %1479 = vdwg.mxu0
    %v1480 = vmax.f32 %v1386, 0.0
    %v1481 = vmax.f32 %v1388, 0.0
    %v1482 = vmax.f32 %v1472, 0.0
    %v1483 = vmax.f32 %v1474, 0.0
    %v1484 = vmax.f32 %v1390, 0.0
    %v1485 = vmax.f32 %v1392, 0.0
    %v1486 = vmax.f32 %v1476, 0.0
    %v1487 = vmax.f32 %v1478, 0.0
    %s1488 = sshll.u32 %s511, 4
    %1489 = dma.done %s99, %s1488
    %v1490 = vld [vmem:[#allocation4] sm:$0xff]
    %v1491 = vld [vmem:[#allocation4 + $0x8] sm:$0xff]
    %v1492 = vld [vmem:[#allocation4 + $0x10] sm:$0xff]
    %v1493 = vld [vmem:[#allocation4 + $0x18] sm:$0xff]
    %v1494 = vld [vmem:[#allocation4 + $0x20] sm:$0xff]
    %v1495 = vld [vmem:[#allocation4 + $0x28] sm:$0xff]
    %v1496 = vld [vmem:[#allocation4 + $0x30] sm:$0xff]
    %v1497 = vld [vmem:[#allocation4 + $0x38] sm:$0xff]
    %v1498 = vld [vmem:[#allocation4 + $0x40] sm:$0xff]
    %v1499 = vld [vmem:[#allocation4 + $0x48] sm:$0xff]
    %v1500 = vld [vmem:[#allocation4 + $0x50] sm:$0xff]
    %v1501 = vld [vmem:[#allocation4 + $0x58] sm:$0xff]
    %v1502 = vld [vmem:[#allocation4 + $0x60] sm:$0xff]
    %v1503 = vld [vmem:[#allocation4 + $0x68] sm:$0xff]
    %v1504 = vld [vmem:[#allocation4 + $0x70] sm:$0xff]
    %v1505 = vld [vmem:[#allocation4 + $0x78] sm:$0xff]
    %v1506 = vld [vmem:[#allocation4 + $0x80] sm:$0xff]
    %v1507 = vld [vmem:[#allocation4 + $0x88] sm:$0xff]
    %v1508 = vld [vmem:[#allocation4 + $0x90] sm:$0xff]
    %v1509 = vld [vmem:[#allocation4 + $0x98] sm:$0xff]
    %v1510 = vld [vmem:[#allocation4 + $0xa0] sm:$0xff]
    %v1511 = vld [vmem:[#allocation4 + $0xa8] sm:$0xff]
    %v1512 = vld [vmem:[#allocation4 + $0xb0] sm:$0xff]
    %v1513 = vld [vmem:[#allocation4 + $0xb8] sm:$0xff]
    %v1514 = vld [vmem:[#allocation4 + $0xc0] sm:$0xff]
    %v1515 = vld [vmem:[#allocation4 + $0xc8] sm:$0xff]
    %v1516 = vld [vmem:[#allocation4 + $0xd0] sm:$0xff]
    %v1517 = vld [vmem:[#allocation4 + $0xd8] sm:$0xff]
    %v1518 = vld [vmem:[#allocation4 + $0xe0] sm:$0xff]
    %v1519 = vld [vmem:[#allocation4 + $0xe8] sm:$0xff]
    %v1520 = vld [vmem:[#allocation4 + $0xf0] sm:$0xff]
    %v1521 = vld [vmem:[#allocation4 + $0xf8] sm:$0xff]
    %v1522 = vld [vmem:[#allocation4 + $0x100] sm:$0xff]
    %v1523 = vld [vmem:[#allocation4 + $0x108] sm:$0xff]
    %v1524 = vld [vmem:[#allocation4 + $0x110] sm:$0xff]
    %v1525 = vld [vmem:[#allocation4 + $0x118] sm:$0xff]
    %v1526 = vld [vmem:[#allocation4 + $0x120] sm:$0xff]
    %v1527 = vld [vmem:[#allocation4 + $0x128] sm:$0xff]
    %v1528 = vld [vmem:[#allocation4 + $0x130] sm:$0xff]
    %v1529 = vld [vmem:[#allocation4 + $0x138] sm:$0xff]
    %v1530 = vld [vmem:[#allocation4 + $0x140] sm:$0xff]
    %v1531 = vld [vmem:[#allocation4 + $0x148] sm:$0xff]
    %v1532 = vld [vmem:[#allocation4 + $0x150] sm:$0xff]
    %v1533 = vld [vmem:[#allocation4 + $0x158] sm:$0xff]
    %v1534 = vld [vmem:[#allocation4 + $0x160] sm:$0xff]
    %v1535 = vld [vmem:[#allocation4 + $0x168] sm:$0xff]
    %v1536 = vld [vmem:[#allocation4 + $0x170] sm:$0xff]
    %v1537 = vld [vmem:[#allocation4 + $0x178] sm:$0xff]
    %v1538 = vld [vmem:[#allocation4 + $0x180] sm:$0xff]
    %v1539 = vld [vmem:[#allocation4 + $0x188] sm:$0xff]
    %v1540 = vld [vmem:[#allocation4 + $0x190] sm:$0xff]
    %v1541 = vld [vmem:[#allocation4 + $0x198] sm:$0xff]
    %v1542 = vld [vmem:[#allocation4 + $0x1a0] sm:$0xff]
    %v1543 = vld [vmem:[#allocation4 + $0x1a8] sm:$0xff]
    %v1544 = vld [vmem:[#allocation4 + $0x1b0] sm:$0xff]
    %v1545 = vld [vmem:[#allocation4 + $0x1b8] sm:$0xff]
    %v1546 = vld [vmem:[#allocation4 + $0x1c0] sm:$0xff]
    %v1547 = vld [vmem:[#allocation4 + $0x1c8] sm:$0xff]
    %v1548 = vld [vmem:[#allocation4 + $0x1d0] sm:$0xff]
    %v1549 = vld [vmem:[#allocation4 + $0x1d8] sm:$0xff]
    %v1550 = vld [vmem:[#allocation4 + $0x1e0] sm:$0xff]
    %v1551 = vld [vmem:[#allocation4 + $0x1e8] sm:$0xff]
    %v1552 = vld [vmem:[#allocation4 + $0x1f0] sm:$0xff]
    %v1553 = vld [vmem:[#allocation4 + $0x1f8] sm:$0xff]
    %v1554 = vld [vmem:[#allocation4 + $0x200] sm:$0xff]
    %v1555 = vld [vmem:[#allocation4 + $0x208] sm:$0xff]
    %v1556 = vld [vmem:[#allocation4 + $0x210] sm:$0xff]
    %v1557 = vld [vmem:[#allocation4 + $0x218] sm:$0xff]
    %v1558 = vld [vmem:[#allocation4 + $0x220] sm:$0xff]
    %v1559 = vld [vmem:[#allocation4 + $0x228] sm:$0xff]
    %v1560 = vld [vmem:[#allocation4 + $0x230] sm:$0xff]
    %v1561 = vld [vmem:[#allocation4 + $0x238] sm:$0xff]
    %v1562 = vld [vmem:[#allocation4 + $0x240] sm:$0xff]
    %v1563 = vld [vmem:[#allocation4 + $0x248] sm:$0xff]
    %v1564 = vld [vmem:[#allocation4 + $0x250] sm:$0xff]
    %v1565 = vld [vmem:[#allocation4 + $0x258] sm:$0xff]
    %v1566 = vld [vmem:[#allocation4 + $0x260] sm:$0xff]
    %v1567 = vld [vmem:[#allocation4 + $0x268] sm:$0xff]
    %v1568 = vld [vmem:[#allocation4 + $0x270] sm:$0xff]
    %v1569 = vld [vmem:[#allocation4 + $0x278] sm:$0xff]
    %v1570 = vld [vmem:[#allocation4 + $0x280] sm:$0xff]
    %v1571 = vld [vmem:[#allocation4 + $0x288] sm:$0xff]
    %v1572 = vld [vmem:[#allocation4 + $0x290] sm:$0xff]
    %v1573 = vld [vmem:[#allocation4 + $0x298] sm:$0xff]
    %v1574 = vld [vmem:[#allocation4 + $0x2a0] sm:$0xff]
    %v1575 = vld [vmem:[#allocation4 + $0x2a8] sm:$0xff]
    %v1576 = vld [vmem:[#allocation4 + $0x2b0] sm:$0xff]
    %v1577 = vld [vmem:[#allocation4 + $0x2b8] sm:$0xff]
    %v1578 = vld [vmem:[#allocation4 + $0x2c0] sm:$0xff]
    %v1579 = vld [vmem:[#allocation4 + $0x2c8] sm:$0xff]
    %v1580 = vld [vmem:[#allocation4 + $0x2d0] sm:$0xff]
    %v1581 = vld [vmem:[#allocation4 + $0x2d8] sm:$0xff]
    %v1582 = vld [vmem:[#allocation4 + $0x2e0] sm:$0xff]
    %v1583 = vld [vmem:[#allocation4 + $0x2e8] sm:$0xff]
    %v1584 = vld [vmem:[#allocation4 + $0x2f0] sm:$0xff]
    %v1585 = vld [vmem:[#allocation4 + $0x2f8] sm:$0xff]
    %v1586 = vld [vmem:[#allocation4 + $0x300] sm:$0xff]
    %v1587 = vld [vmem:[#allocation4 + $0x308] sm:$0xff]
    %v1588 = vld [vmem:[#allocation4 + $0x310] sm:$0xff]
    %v1589 = vld [vmem:[#allocation4 + $0x318] sm:$0xff]
    %v1590 = vld [vmem:[#allocation4 + $0x320] sm:$0xff]
    %v1591 = vld [vmem:[#allocation4 + $0x328] sm:$0xff]
    %v1592 = vld [vmem:[#allocation4 + $0x330] sm:$0xff]
    %v1593 = vld [vmem:[#allocation4 + $0x338] sm:$0xff]
    %v1594 = vld [vmem:[#allocation4 + $0x340] sm:$0xff]
    %v1595 = vld [vmem:[#allocation4 + $0x348] sm:$0xff]
    %v1596 = vld [vmem:[#allocation4 + $0x350] sm:$0xff]
    %v1597 = vld [vmem:[#allocation4 + $0x358] sm:$0xff]
    %v1598 = vld [vmem:[#allocation4 + $0x360] sm:$0xff]
    %v1599 = vld [vmem:[#allocation4 + $0x368] sm:$0xff]
    %v1600 = vld [vmem:[#allocation4 + $0x370] sm:$0xff]
    %v1601 = vld [vmem:[#allocation4 + $0x378] sm:$0xff]
    %v1602 = vld [vmem:[#allocation4 + $0x380] sm:$0xff]
    %v1603 = vld [vmem:[#allocation4 + $0x388] sm:$0xff]
    %v1604 = vld [vmem:[#allocation4 + $0x390] sm:$0xff]
    %v1605 = vld [vmem:[#allocation4 + $0x398] sm:$0xff]
    %v1606 = vld [vmem:[#allocation4 + $0x3a0] sm:$0xff]
    %v1607 = vld [vmem:[#allocation4 + $0x3a8] sm:$0xff]
    %v1608 = vld [vmem:[#allocation4 + $0x3b0] sm:$0xff]
    %v1609 = vld [vmem:[#allocation4 + $0x3b8] sm:$0xff]
    %v1610 = vld [vmem:[#allocation4 + $0x3c0] sm:$0xff]
    %v1611 = vld [vmem:[#allocation4 + $0x3c8] sm:$0xff]
    %v1612 = vld [vmem:[#allocation4 + $0x3d0] sm:$0xff]
    %v1613 = vld [vmem:[#allocation4 + $0x3d8] sm:$0xff]
    %v1614 = vld [vmem:[#allocation4 + $0x3e0] sm:$0xff]
    %v1615 = vld [vmem:[#allocation4 + $0x3e8] sm:$0xff]
    %v1616 = vld [vmem:[#allocation4 + $0x3f0] sm:$0xff]
    %v1617 = vld [vmem:[#allocation4 + $0x3f8] sm:$0xff]
    %v1618 = vpack.c.bf16 %v1484, %v1480
    %v1619 = vpack.c.bf16 %v1485, %v1481
    %v1620 = vpack.c.bf16 %v1486, %v1482
    %v1621 = vpack.c.bf16 %v1487, %v1483
    %v1622 = vld [vmem:[%s6] sm:$0xf]
    %v1624 = vlaneseq
    %v1625 = vshrl.u32 %v1624, 7
    %v1626 = vsub.s32 0, %v1625
    %v1627 = vrot.slane %v1622, %v1626
    %v1628 = vlaneseq
    %v1629 = vshrl.u32 %v1628, 7
    %v1630 = vsub.s32 1, %v1629
    %v1631 = vrot.slane %v1622, %v1630
    %v1632 = vlaneseq
    %v1633 = vshrl.u32 %v1632, 7
    %v1634 = vsub.s32 2, %v1633
    %v1635 = vrot.slane %v1622, %v1634
    %v1636 = vlaneseq
    %v1637 = vshrl.u32 %v1636, 7
    %v1638 = vsub.s32 3, %v1637
    %v1639 = vrot.slane %v1622, %v1638
    %v1772 = vunpack.c.l.b16 %v1490
    %v1773 = vunpack.c.h.b16 %v1490
    %v1774 = vunpack.c.l.b16 %v1491
    %v1775 = vunpack.c.h.b16 %v1491
    %v1776 = vunpack.c.l.b16 %v1492
    %v1777 = vunpack.c.h.b16 %v1492
    %v1778 = vunpack.c.l.b16 %v1493
    %v1779 = vunpack.c.h.b16 %v1493
    %v1780 = vunpack.c.l.b16 %v1494
    %v1781 = vunpack.c.h.b16 %v1494
    %v1782 = vunpack.c.l.b16 %v1495
    %v1783 = vunpack.c.h.b16 %v1495
    %v1784 = vunpack.c.l.b16 %v1496
    %v1785 = vunpack.c.h.b16 %v1496
    %v1786 = vunpack.c.l.b16 %v1497
    %v1787 = vunpack.c.h.b16 %v1497
    %v1788 = vunpack.c.l.b16 %v1498
    %v1789 = vunpack.c.h.b16 %v1498
    %v1790 = vunpack.c.l.b16 %v1499
    %v1791 = vunpack.c.h.b16 %v1499
    %v1792 = vunpack.c.l.b16 %v1500
    %v1793 = vunpack.c.h.b16 %v1500
    %v1794 = vunpack.c.l.b16 %v1501
    %v1795 = vunpack.c.h.b16 %v1501
    %v1796 = vunpack.c.l.b16 %v1502
    %v1797 = vunpack.c.h.b16 %v1502
    %v1798 = vunpack.c.l.b16 %v1503
    %v1799 = vunpack.c.h.b16 %v1503
    %v1800 = vunpack.c.l.b16 %v1504
    %v1801 = vunpack.c.h.b16 %v1504
    %v1802 = vunpack.c.l.b16 %v1505
    %v1803 = vunpack.c.h.b16 %v1505
    %v1804 = vunpack.c.l.b16 %v1506
    %v1805 = vunpack.c.h.b16 %v1506
    %v1806 = vunpack.c.l.b16 %v1507
    %v1807 = vunpack.c.h.b16 %v1507
    %v1808 = vunpack.c.l.b16 %v1508
    %v1809 = vunpack.c.h.b16 %v1508
    %v1810 = vunpack.c.l.b16 %v1509
    %v1811 = vunpack.c.h.b16 %v1509
    %v1812 = vunpack.c.l.b16 %v1510
    %v1813 = vunpack.c.h.b16 %v1510
    %v1814 = vunpack.c.l.b16 %v1511
    %v1815 = vunpack.c.h.b16 %v1511
    %v1816 = vunpack.c.l.b16 %v1512
    %v1817 = vunpack.c.h.b16 %v1512
    %v1818 = vunpack.c.l.b16 %v1513
    %v1819 = vunpack.c.h.b16 %v1513
    %v1820 = vunpack.c.l.b16 %v1514
    %v1821 = vunpack.c.h.b16 %v1514
    %v1822 = vunpack.c.l.b16 %v1515
    %v1823 = vunpack.c.h.b16 %v1515
    %v1824 = vunpack.c.l.b16 %v1516
    %v1825 = vunpack.c.h.b16 %v1516
    %v1826 = vunpack.c.l.b16 %v1517
    %v1827 = vunpack.c.h.b16 %v1517
    %v1828 = vunpack.c.l.b16 %v1518
    %v1829 = vunpack.c.h.b16 %v1518
    %v1830 = vunpack.c.l.b16 %v1519
    %v1831 = vunpack.c.h.b16 %v1519
    %v1832 = vunpack.c.l.b16 %v1520
    %v1833 = vunpack.c.h.b16 %v1520
    %v1834 = vunpack.c.l.b16 %v1521
    %v1835 = vunpack.c.h.b16 %v1521
    %v1836 = vunpack.c.l.b16 %v1522
    %v1837 = vunpack.c.h.b16 %v1522
    %v1838 = vunpack.c.l.b16 %v1523
    %v1839 = vunpack.c.h.b16 %v1523
    %v1840 = vunpack.c.l.b16 %v1524
    %v1841 = vunpack.c.h.b16 %v1524
    %v1842 = vunpack.c.l.b16 %v1525
    %v1843 = vunpack.c.h.b16 %v1525
    %v1844 = vunpack.c.l.b16 %v1526
    %v1845 = vunpack.c.h.b16 %v1526
    %v1846 = vunpack.c.l.b16 %v1527
    %v1847 = vunpack.c.h.b16 %v1527
    %v1848 = vunpack.c.l.b16 %v1528
    %v1849 = vunpack.c.h.b16 %v1528
    %v1850 = vunpack.c.l.b16 %v1529
    %v1851 = vunpack.c.h.b16 %v1529
    %v1852 = vunpack.c.l.b16 %v1530
    %v1853 = vunpack.c.h.b16 %v1530
    %v1854 = vunpack.c.l.b16 %v1531
    %v1855 = vunpack.c.h.b16 %v1531
    %v1856 = vunpack.c.l.b16 %v1532
    %v1857 = vunpack.c.h.b16 %v1532
    %v1858 = vunpack.c.l.b16 %v1533
    %v1859 = vunpack.c.h.b16 %v1533
    %v1860 = vunpack.c.l.b16 %v1534
    %v1861 = vunpack.c.h.b16 %v1534
    %v1862 = vunpack.c.l.b16 %v1535
    %v1863 = vunpack.c.h.b16 %v1535
    %v1864 = vunpack.c.l.b16 %v1536
    %v1865 = vunpack.c.h.b16 %v1536
    %v1866 = vunpack.c.l.b16 %v1537
    %v1867 = vunpack.c.h.b16 %v1537
    %v1868 = vunpack.c.l.b16 %v1538
    %v1869 = vunpack.c.h.b16 %v1538
    %v1870 = vunpack.c.l.b16 %v1539
    %v1871 = vunpack.c.h.b16 %v1539
    %v1872 = vunpack.c.l.b16 %v1540
    %v1873 = vunpack.c.h.b16 %v1540
    %v1874 = vunpack.c.l.b16 %v1541
    %v1875 = vunpack.c.h.b16 %v1541
    %v1876 = vunpack.c.l.b16 %v1542
    %v1877 = vunpack.c.h.b16 %v1542
    %v1878 = vunpack.c.l.b16 %v1543
    %v1879 = vunpack.c.h.b16 %v1543
    %v1880 = vunpack.c.l.b16 %v1544
    %v1881 = vunpack.c.h.b16 %v1544
    %v1882 = vunpack.c.l.b16 %v1545
    %v1883 = vunpack.c.h.b16 %v1545
    %v1884 = vunpack.c.l.b16 %v1546
    %v1885 = vunpack.c.h.b16 %v1546
    %v1886 = vunpack.c.l.b16 %v1547
    %v1887 = vunpack.c.h.b16 %v1547
    %v1888 = vunpack.c.l.b16 %v1548
    %v1889 = vunpack.c.h.b16 %v1548
    %v1890 = vunpack.c.l.b16 %v1549
    %v1891 = vunpack.c.h.b16 %v1549
    %v1892 = vunpack.c.l.b16 %v1550
    %v1893 = vunpack.c.h.b16 %v1550
    %v1894 = vunpack.c.l.b16 %v1551
    %v1895 = vunpack.c.h.b16 %v1551
    %v1896 = vunpack.c.l.b16 %v1552
    %v1897 = vunpack.c.h.b16 %v1552
    %v1898 = vunpack.c.l.b16 %v1553
    %v1899 = vunpack.c.h.b16 %v1553
    %v1900 = vunpack.c.l.b16 %v1554
    %v1901 = vunpack.c.h.b16 %v1554
    %v1902 = vunpack.c.l.b16 %v1555
    %v1903 = vunpack.c.h.b16 %v1555
    %v1904 = vunpack.c.l.b16 %v1556
    %v1905 = vunpack.c.h.b16 %v1556
    %v1906 = vunpack.c.l.b16 %v1557
    %v1907 = vunpack.c.h.b16 %v1557
    %v1908 = vunpack.c.l.b16 %v1558
    %v1909 = vunpack.c.h.b16 %v1558
    %v1910 = vunpack.c.l.b16 %v1559
    %v1911 = vunpack.c.h.b16 %v1559
    %v1912 = vunpack.c.l.b16 %v1560
    %v1913 = vunpack.c.h.b16 %v1560
    %v1914 = vunpack.c.l.b16 %v1561
    %v1915 = vunpack.c.h.b16 %v1561
    %v1916 = vunpack.c.l.b16 %v1562
    %v1917 = vunpack.c.h.b16 %v1562
    %v1918 = vunpack.c.l.b16 %v1563
    %v1919 = vunpack.c.h.b16 %v1563
    %v1920 = vunpack.c.l.b16 %v1564
    %v1921 = vunpack.c.h.b16 %v1564
    %v1922 = vunpack.c.l.b16 %v1565
    %v1923 = vunpack.c.h.b16 %v1565
    %v1924 = vunpack.c.l.b16 %v1566
    %v1925 = vunpack.c.h.b16 %v1566
    %v1926 = vunpack.c.l.b16 %v1567
    %v1927 = vunpack.c.h.b16 %v1567
    %v1928 = vunpack.c.l.b16 %v1568
    %v1929 = vunpack.c.h.b16 %v1568
    %v1930 = vunpack.c.l.b16 %v1569
    %v1931 = vunpack.c.h.b16 %v1569
    %v1932 = vunpack.c.l.b16 %v1570
    %v1933 = vunpack.c.h.b16 %v1570
    %v1934 = vunpack.c.l.b16 %v1571
    %v1935 = vunpack.c.h.b16 %v1571
    %v1936 = vunpack.c.l.b16 %v1572
    %v1937 = vunpack.c.h.b16 %v1572
    %v1938 = vunpack.c.l.b16 %v1573
    %v1939 = vunpack.c.h.b16 %v1573
    %v1940 = vunpack.c.l.b16 %v1574
    %v1941 = vunpack.c.h.b16 %v1574
    %v1942 = vunpack.c.l.b16 %v1575
    %v1943 = vunpack.c.h.b16 %v1575
    %v1944 = vunpack.c.l.b16 %v1576
    %v1945 = vunpack.c.h.b16 %v1576
    %v1946 = vunpack.c.l.b16 %v1577
    %v1947 = vunpack.c.h.b16 %v1577
    %v1948 = vunpack.c.l.b16 %v1578
    %v1949 = vunpack.c.h.b16 %v1578
    %v1950 = vunpack.c.l.b16 %v1579
    %v1951 = vunpack.c.h.b16 %v1579
    %v1952 = vunpack.c.l.b16 %v1580
    %v1953 = vunpack.c.h.b16 %v1580
    %v1954 = vunpack.c.l.b16 %v1581
    %v1955 = vunpack.c.h.b16 %v1581
    %v1956 = vunpack.c.l.b16 %v1582
    %v1957 = vunpack.c.h.b16 %v1582
    %v1958 = vunpack.c.l.b16 %v1583
    %v1959 = vunpack.c.h.b16 %v1583
    %v1960 = vunpack.c.l.b16 %v1584
    %v1961 = vunpack.c.h.b16 %v1584
    %v1962 = vunpack.c.l.b16 %v1585
    %v1963 = vunpack.c.h.b16 %v1585
    %v1964 = vunpack.c.l.b16 %v1586
    %v1965 = vunpack.c.h.b16 %v1586
    %v1966 = vunpack.c.l.b16 %v1587
    %v1967 = vunpack.c.h.b16 %v1587
    %v1968 = vunpack.c.l.b16 %v1588
    %v1969 = vunpack.c.h.b16 %v1588
    %v1970 = vunpack.c.l.b16 %v1589
    %v1971 = vunpack.c.h.b16 %v1589
    %v1972 = vunpack.c.l.b16 %v1590
    %v1973 = vunpack.c.h.b16 %v1590
    %v1974 = vunpack.c.l.b16 %v1591
    %v1975 = vunpack.c.h.b16 %v1591
    %v1976 = vunpack.c.l.b16 %v1592
    %v1977 = vunpack.c.h.b16 %v1592
    %v1978 = vunpack.c.l.b16 %v1593
    %v1979 = vunpack.c.h.b16 %v1593
    %v1980 = vunpack.c.l.b16 %v1594
    %v1981 = vunpack.c.h.b16 %v1594
    %v1982 = vunpack.c.l.b16 %v1595
    %v1983 = vunpack.c.h.b16 %v1595
    %v1984 = vunpack.c.l.b16 %v1596
    %v1985 = vunpack.c.h.b16 %v1596
    %v1986 = vunpack.c.l.b16 %v1597
    %v1987 = vunpack.c.h.b16 %v1597
    %v1988 = vunpack.c.l.b16 %v1598
    %v1989 = vunpack.c.h.b16 %v1598
    %v1990 = vunpack.c.l.b16 %v1599
    %v1991 = vunpack.c.h.b16 %v1599
    %v1992 = vunpack.c.l.b16 %v1600
    %v1993 = vunpack.c.h.b16 %v1600
    %v1994 = vunpack.c.l.b16 %v1601
    %v1995 = vunpack.c.h.b16 %v1601
    %v1996 = vunpack.c.l.b16 %v1602
    %v1997 = vunpack.c.h.b16 %v1602
    %v1998 = vunpack.c.l.b16 %v1603
    %v1999 = vunpack.c.h.b16 %v1603
    %v2000 = vunpack.c.l.b16 %v1604
    %v2001 = vunpack.c.h.b16 %v1604
    %v2002 = vunpack.c.l.b16 %v1605
    %v2003 = vunpack.c.h.b16 %v1605
    %v2004 = vunpack.c.l.b16 %v1606
    %v2005 = vunpack.c.h.b16 %v1606
    %v2006 = vunpack.c.l.b16 %v1607
    %v2007 = vunpack.c.h.b16 %v1607
    %v2008 = vunpack.c.l.b16 %v1608
    %v2009 = vunpack.c.h.b16 %v1608
    %v2010 = vunpack.c.l.b16 %v1609
    %v2011 = vunpack.c.h.b16 %v1609
    %v2012 = vunpack.c.l.b16 %v1610
    %v2013 = vunpack.c.h.b16 %v1610
    %v2014 = vunpack.c.l.b16 %v1611
    %v2015 = vunpack.c.h.b16 %v1611
    %v2016 = vunpack.c.l.b16 %v1612
    %v2017 = vunpack.c.h.b16 %v1612
    %v2018 = vunpack.c.l.b16 %v1613
    %v2019 = vunpack.c.h.b16 %v1613
    %v2020 = vunpack.c.l.b16 %v1614
    %v2021 = vunpack.c.h.b16 %v1614
    %v2022 = vunpack.c.l.b16 %v1615
    %v2023 = vunpack.c.h.b16 %v1615
    %v2024 = vunpack.c.l.b16 %v1616
    %v2025 = vunpack.c.h.b16 %v1616
    %v2026 = vunpack.c.l.b16 %v1617
    %v2027 = vunpack.c.h.b16 %v1617
    %v2028 = vpack.c.b16 %v1776, %v1772
    %v2029 = vpack.c.b16 %v1777, %v1773
    %v2030 = vpack.c.b16 %v1778, %v1774
    %v2031 = vpack.c.b16 %v1779, %v1775
    %v2032 = vpack.c.b16 %v1784, %v1780
    %v2033 = vpack.c.b16 %v1785, %v1781
    %v2034 = vpack.c.b16 %v1786, %v1782
    %v2035 = vpack.c.b16 %v1787, %v1783
    %v2036 = vpack.c.b16 %v1792, %v1788
    %v2037 = vpack.c.b16 %v1793, %v1789
    %v2038 = vpack.c.b16 %v1794, %v1790
    %v2039 = vpack.c.b16 %v1795, %v1791
    %v2040 = vpack.c.b16 %v1800, %v1796
    %v2041 = vpack.c.b16 %v1801, %v1797
    %v2042 = vpack.c.b16 %v1802, %v1798
    %v2043 = vpack.c.b16 %v1803, %v1799
    %v2044 = vpack.c.b16 %v1808, %v1804
    %v2045 = vpack.c.b16 %v1809, %v1805
    %v2046 = vpack.c.b16 %v1810, %v1806
    %v2047 = vpack.c.b16 %v1811, %v1807
    %v2048 = vpack.c.b16 %v1816, %v1812
    %v2049 = vpack.c.b16 %v1817, %v1813
    %v2050 = vpack.c.b16 %v1818, %v1814
    %v2051 = vpack.c.b16 %v1819, %v1815
    %v2052 = vpack.c.b16 %v1824, %v1820
    %v2053 = vpack.c.b16 %v1825, %v1821
    %v2054 = vpack.c.b16 %v1826, %v1822
    %v2055 = vpack.c.b16 %v1827, %v1823
    %v2056 = vpack.c.b16 %v1832, %v1828
    %v2057 = vpack.c.b16 %v1833, %v1829
    %v2058 = vpack.c.b16 %v1834, %v1830
    %v2059 = vpack.c.b16 %v1835, %v1831
    %v2060 = vpack.c.b16 %v1840, %v1836
    %v2061 = vpack.c.b16 %v1841, %v1837
    %v2062 = vpack.c.b16 %v1842, %v1838
    %v2063 = vpack.c.b16 %v1843, %v1839
    %v2064 = vpack.c.b16 %v1848, %v1844
    %v2065 = vpack.c.b16 %v1849, %v1845
    %v2066 = vpack.c.b16 %v1850, %v1846
    %v2067 = vpack.c.b16 %v1851, %v1847
    %v2068 = vpack.c.b16 %v1856, %v1852
    %v2069 = vpack.c.b16 %v1857, %v1853
    %v2070 = vpack.c.b16 %v1858, %v1854
    %v2071 = vpack.c.b16 %v1859, %v1855
    %v2072 = vpack.c.b16 %v1864, %v1860
    %v2073 = vpack.c.b16 %v1865, %v1861
    %v2074 = vpack.c.b16 %v1866, %v1862
    %v2075 = vpack.c.b16 %v1867, %v1863
    %v2076 = vpack.c.b16 %v1872, %v1868
    %v2077 = vpack.c.b16 %v1873, %v1869
    %v2078 = vpack.c.b16 %v1874, %v1870
    %v2079 = vpack.c.b16 %v1875, %v1871
    %v2080 = vpack.c.b16 %v1880, %v1876
    %v2081 = vpack.c.b16 %v1881, %v1877
    %v2082 = vpack.c.b16 %v1882, %v1878
    %v2083 = vpack.c.b16 %v1883, %v1879
    %v2084 = vpack.c.b16 %v1888, %v1884
    %v2085 = vpack.c.b16 %v1889, %v1885
    %v2086 = vpack.c.b16 %v1890, %v1886
    %v2087 = vpack.c.b16 %v1891, %v1887
    %v2088 = vpack.c.b16 %v1896, %v1892
    %v2089 = vpack.c.b16 %v1897, %v1893
    %v2090 = vpack.c.b16 %v1898, %v1894
    %v2091 = vpack.c.b16 %v1899, %v1895
    %v2092 = vpack.c.b16 %v1904, %v1900
    %v2093 = vpack.c.b16 %v1905, %v1901
    %v2094 = vpack.c.b16 %v1906, %v1902
    %v2095 = vpack.c.b16 %v1907, %v1903
    %v2096 = vpack.c.b16 %v1912, %v1908
    %v2097 = vpack.c.b16 %v1913, %v1909
    %v2098 = vpack.c.b16 %v1914, %v1910
    %v2099 = vpack.c.b16 %v1915, %v1911
    %v2100 = vpack.c.b16 %v1920, %v1916
    %v2101 = vpack.c.b16 %v1921, %v1917
    %v2102 = vpack.c.b16 %v1922, %v1918
    %v2103 = vpack.c.b16 %v1923, %v1919
    %v2104 = vpack.c.b16 %v1928, %v1924
    %v2105 = vpack.c.b16 %v1929, %v1925
    %v2106 = vpack.c.b16 %v1930, %v1926
    %v2107 = vpack.c.b16 %v1931, %v1927
    %v2108 = vpack.c.b16 %v1936, %v1932
    %v2109 = vpack.c.b16 %v1937, %v1933
    %v2110 = vpack.c.b16 %v1938, %v1934
    %v2111 = vpack.c.b16 %v1939, %v1935
    %v2112 = vpack.c.b16 %v1944, %v1940
    %v2113 = vpack.c.b16 %v1945, %v1941
    %v2114 = vpack.c.b16 %v1946, %v1942
    %v2115 = vpack.c.b16 %v1947, %v1943
    %v2116 = vpack.c.b16 %v1952, %v1948
    %v2117 = vpack.c.b16 %v1953, %v1949
    %v2118 = vpack.c.b16 %v1954, %v1950
    %v2119 = vpack.c.b16 %v1955, %v1951
    %v2120 = vpack.c.b16 %v1960, %v1956
    %v2121 = vpack.c.b16 %v1961, %v1957
    %v2122 = vpack.c.b16 %v1962, %v1958
    %v2123 = vpack.c.b16 %v1963, %v1959
    %v2124 = vpack.c.b16 %v1968, %v1964
    %v2125 = vpack.c.b16 %v1969, %v1965
    %v2126 = vpack.c.b16 %v1970, %v1966
    %v2127 = vpack.c.b16 %v1971, %v1967
    %v2128 = vpack.c.b16 %v1976, %v1972
    %v2129 = vpack.c.b16 %v1977, %v1973
    %v2130 = vpack.c.b16 %v1978, %v1974
    %v2131 = vpack.c.b16 %v1979, %v1975
    %v2132 = vpack.c.b16 %v1984, %v1980
    %v2133 = vpack.c.b16 %v1985, %v1981
    %v2134 = vpack.c.b16 %v1986, %v1982
    %v2135 = vpack.c.b16 %v1987, %v1983
    %v2136 = vpack.c.b16 %v1992, %v1988
    %v2137 = vpack.c.b16 %v1993, %v1989
    %v2138 = vpack.c.b16 %v1994, %v1990
    %v2139 = vpack.c.b16 %v1995, %v1991
    %v2140 = vpack.c.b16 %v2000, %v1996
    %v2141 = vpack.c.b16 %v2001, %v1997
    %v2142 = vpack.c.b16 %v2002, %v1998
    %v2143 = vpack.c.b16 %v2003, %v1999
    %v2144 = vpack.c.b16 %v2008, %v2004
    %v2145 = vpack.c.b16 %v2009, %v2005
    %v2146 = vpack.c.b16 %v2010, %v2006
    %v2147 = vpack.c.b16 %v2011, %v2007
    %v2148 = vpack.c.b16 %v2016, %v2012
    %v2149 = vpack.c.b16 %v2017, %v2013
    %v2150 = vpack.c.b16 %v2018, %v2014
    %v2151 = vpack.c.b16 %v2019, %v2015
    %v2152 = vpack.c.b16 %v2024, %v2020
    %v2153 = vpack.c.b16 %v2025, %v2021
    %v2154 = vpack.c.b16 %v2026, %v2022
    %v2155 = vpack.c.b16 %v2027, %v2023
    %2284 = vmatprep.subr.bf16.mxu0 %v2057
    %2285 = vmatpush1.bf16.msra.mxu0 %v2056
    %2286 = vmatprep.subr.bf16.mxu0 %v2053
    %2287 = vmatpush1.bf16.msra.mxu0 %v2052
    %2288 = vmatprep.subr.bf16.mxu0 %v2049
    %2289 = vmatpush1.bf16.msra.mxu0 %v2048
    %2290 = vmatprep.subr.bf16.mxu0 %v2045
    %2291 = vmatpush1.bf16.msra.mxu0 %v2044
    %2292 = vmatprep.subr.bf16.mxu0 %v2041
    %2293 = vmatpush1.bf16.msra.mxu0 %v2040
    %2294 = vmatprep.subr.bf16.mxu0 %v2037
    %2295 = vmatpush1.bf16.msra.mxu0 %v2036
    %2296 = vmatprep.subr.bf16.mxu0 %v2033
    %2297 = vmatpush1.bf16.msra.mxu0 %v2032
    %2298 = vmatprep.subr.bf16.mxu0 %v2029
    %2299 = vmatpush1.bf16.msra.mxu0 %v2028
    %2300 = vmatprep.subr.bf16.mxu0 %v2089
    %2301 = vmatpush2.bf16.msra.mxu0 %v2088
    %2302 = vmatprep.subr.bf16.mxu0 %v2085
    %2303 = vmatpush2.bf16.msra.mxu0 %v2084
    %2304 = vmatprep.subr.bf16.mxu0 %v2081
    %2305 = vmatpush2.bf16.msra.mxu0 %v2080
    %2306 = vmatprep.subr.bf16.mxu0 %v2077
    %2307 = vmatpush2.bf16.msra.mxu0 %v2076
    %2308 = vmatprep.subr.bf16.mxu0 %v2073
    %2309 = vmatpush2.bf16.msra.mxu0 %v2072
    %2310 = vmatprep.subr.bf16.mxu0 %v2069
    %2311 = vmatpush2.bf16.msra.mxu0 %v2068
    %2312 = vmatprep.subr.bf16.mxu0 %v2065
    %2313 = vmatpush2.bf16.msra.mxu0 %v2064
    %2314 = vmatprep.subr.bf16.mxu0 %v2061
    %2315 = vmatpush2.bf16.msra.mxu0 %v2060
    %2316 = vmatprep.mubr.bf16.mxu0 %v1619
    %2317 = vmatmul.mubr.bf16.gmra.mxu0 %v1618
    %v2318 = vpop.f32.mrf.mxu0
    %v2319 = vadd.f32 %v1627, %v2318
    %v2320 = vpop.f32.mrf.mxu0
    %v2321 = vadd.f32 %v1631, %v2320
    %v2322 = vpop.f32.mrf.mxu0
    %v2323 = vadd.f32 %v1627, %v2322
    %v2324 = vpop.f32.mrf.mxu0
    %v2325 = vadd.f32 %v1631, %v2324
    %2326 = vdwg.mxu0
    %2327 = vmatprep.subr.bf16.mxu0 %v2121
    %2328 = vmatpush1.bf16.msra.mxu0 %v2120
    %2329 = vmatprep.subr.bf16.mxu0 %v2117
    %2330 = vmatpush1.bf16.msra.mxu0 %v2116
    %2331 = vmatprep.subr.bf16.mxu0 %v2113
    %2332 = vmatpush1.bf16.msra.mxu0 %v2112
    %2333 = vmatprep.subr.bf16.mxu0 %v2109
    %2334 = vmatpush1.bf16.msra.mxu0 %v2108
    %2335 = vmatprep.subr.bf16.mxu0 %v2105
    %2336 = vmatpush1.bf16.msra.mxu0 %v2104
    %2337 = vmatprep.subr.bf16.mxu0 %v2101
    %2338 = vmatpush1.bf16.msra.mxu0 %v2100
    %2339 = vmatprep.subr.bf16.mxu0 %v2097
    %2340 = vmatpush1.bf16.msra.mxu0 %v2096
    %2341 = vmatprep.subr.bf16.mxu0 %v2093
    %2342 = vmatpush1.bf16.msra.mxu0 %v2092
    %2343 = vmatprep.subr.bf16.mxu0 %v2153
    %2344 = vmatpush2.bf16.msra.mxu0 %v2152
    %2345 = vmatprep.subr.bf16.mxu0 %v2149
    %2346 = vmatpush2.bf16.msra.mxu0 %v2148
    %2347 = vmatprep.subr.bf16.mxu0 %v2145
    %2348 = vmatpush2.bf16.msra.mxu0 %v2144
    %2349 = vmatprep.subr.bf16.mxu0 %v2141
    %2350 = vmatpush2.bf16.msra.mxu0 %v2140
    %2351 = vmatprep.subr.bf16.mxu0 %v2137
    %2352 = vmatpush2.bf16.msra.mxu0 %v2136
    %2353 = vmatprep.subr.bf16.mxu0 %v2133
    %2354 = vmatpush2.bf16.msra.mxu0 %v2132
    %2355 = vmatprep.subr.bf16.mxu0 %v2129
    %2356 = vmatpush2.bf16.msra.mxu0 %v2128
    %2357 = vmatprep.subr.bf16.mxu0 %v2125
    %2358 = vmatpush2.bf16.msra.mxu0 %v2124
    %2359 = vmatprep.mubr.bf16.mxu0 %v1621
    %2360 = vmatmul.mubr.bf16.gmra.mxu0 %v1620
    %v2361 = vpop.f32.mrf.mxu0
    %v2362 = vadd.f32 %v2319, %v2361
    %v2363 = vpop.f32.mrf.mxu0
    %v2364 = vadd.f32 %v2321, %v2363
    %v2365 = vpop.f32.mrf.mxu0
    %v2366 = vadd.f32 %v2323, %v2365
    %v2367 = vpop.f32.mrf.mxu0
    %v2368 = vadd.f32 %v2325, %v2367
    %2369 = vdwg.mxu0
    %2370 = vmatprep.subr.bf16.mxu0 %v2059
    %2371 = vmatpush1.bf16.msra.mxu0 %v2058
    %2372 = vmatprep.subr.bf16.mxu0 %v2055
    %2373 = vmatpush1.bf16.msra.mxu0 %v2054
    %2374 = vmatprep.subr.bf16.mxu0 %v2051
    %2375 = vmatpush1.bf16.msra.mxu0 %v2050
    %2376 = vmatprep.subr.bf16.mxu0 %v2047
    %2377 = vmatpush1.bf16.msra.mxu0 %v2046
    %2378 = vmatprep.subr.bf16.mxu0 %v2043
    %2379 = vmatpush1.bf16.msra.mxu0 %v2042
    %2380 = vmatprep.subr.bf16.mxu0 %v2039
    %2381 = vmatpush1.bf16.msra.mxu0 %v2038
    %2382 = vmatprep.subr.bf16.mxu0 %v2035
    %2383 = vmatpush1.bf16.msra.mxu0 %v2034
    %2384 = vmatprep.subr.bf16.mxu0 %v2031
    %2385 = vmatpush1.bf16.msra.mxu0 %v2030
    %2386 = vmatprep.subr.bf16.mxu0 %v2091
    %2387 = vmatpush2.bf16.msra.mxu0 %v2090
    %2388 = vmatprep.subr.bf16.mxu0 %v2087
    %2389 = vmatpush2.bf16.msra.mxu0 %v2086
    %2390 = vmatprep.subr.bf16.mxu0 %v2083
    %2391 = vmatpush2.bf16.msra.mxu0 %v2082
    %2392 = vmatprep.subr.bf16.mxu0 %v2079
    %2393 = vmatpush2.bf16.msra.mxu0 %v2078
    %2394 = vmatprep.subr.bf16.mxu0 %v2075
    %2395 = vmatpush2.bf16.msra.mxu0 %v2074
    %2396 = vmatprep.subr.bf16.mxu0 %v2071
    %2397 = vmatpush2.bf16.msra.mxu0 %v2070
    %2398 = vmatprep.subr.bf16.mxu0 %v2067
    %2399 = vmatpush2.bf16.msra.mxu0 %v2066
    %2400 = vmatprep.subr.bf16.mxu0 %v2063
    %2401 = vmatpush2.bf16.msra.mxu0 %v2062
    %2402 = vmatprep.mubr.bf16.mxu0 %v1619
    %2403 = vmatmul.mubr.bf16.gmra.mxu0 %v1618
    %v2404 = vpop.f32.mrf.mxu0
    %v2405 = vadd.f32 %v1635, %v2404
    %v2406 = vpop.f32.mrf.mxu0
    %v2407 = vadd.f32 %v1639, %v2406
    %v2408 = vpop.f32.mrf.mxu0
    %v2409 = vadd.f32 %v1635, %v2408
    %v2410 = vpop.f32.mrf.mxu0
    %v2411 = vadd.f32 %v1639, %v2410
    %2412 = vdwg.mxu0
    %2413 = vmatprep.subr.bf16.mxu0 %v2123
    %2414 = vmatpush1.bf16.msra.mxu0 %v2122
    %2415 = vmatprep.subr.bf16.mxu0 %v2119
    %2416 = vmatpush1.bf16.msra.mxu0 %v2118
    %2417 = vmatprep.subr.bf16.mxu0 %v2115
    %2418 = vmatpush1.bf16.msra.mxu0 %v2114
    %2419 = vmatprep.subr.bf16.mxu0 %v2111
    %2420 = vmatpush1.bf16.msra.mxu0 %v2110
    %2421 = vmatprep.subr.bf16.mxu0 %v2107
    %2422 = vmatpush1.bf16.msra.mxu0 %v2106
    %2423 = vmatprep.subr.bf16.mxu0 %v2103
    %2424 = vmatpush1.bf16.msra.mxu0 %v2102
    %2425 = vmatprep.subr.bf16.mxu0 %v2099
    %2426 = vmatpush1.bf16.msra.mxu0 %v2098
    %2427 = vmatprep.subr.bf16.mxu0 %v2095
    %2428 = vmatpush1.bf16.msra.mxu0 %v2094
    %2429 = vmatprep.subr.bf16.mxu0 %v2155
    %2430 = vmatpush2.bf16.msra.mxu0 %v2154
    %2431 = vmatprep.subr.bf16.mxu0 %v2151
    %2432 = vmatpush2.bf16.msra.mxu0 %v2150
    %2433 = vmatprep.subr.bf16.mxu0 %v2147
    %2434 = vmatpush2.bf16.msra.mxu0 %v2146
    %2435 = vmatprep.subr.bf16.mxu0 %v2143
    %2436 = vmatpush2.bf16.msra.mxu0 %v2142
    %2437 = vmatprep.subr.bf16.mxu0 %v2139
    %2438 = vmatpush2.bf16.msra.mxu0 %v2138
    %2439 = vmatprep.subr.bf16.mxu0 %v2135
    %2440 = vmatpush2.bf16.msra.mxu0 %v2134
    %2441 = vmatprep.subr.bf16.mxu0 %v2131
    %2442 = vmatpush2.bf16.msra.mxu0 %v2130
    %2443 = vmatprep.subr.bf16.mxu0 %v2127
    %2444 = vmatpush2.bf16.msra.mxu0 %v2126
    %2445 = vmatprep.mubr.bf16.mxu0 %v1621
    %2446 = vmatmul.mubr.bf16.gmra.mxu0 %v1620
    %v2447 = vpop.f32.mrf.mxu0
    %v2448 = vadd.f32 %v2405, %v2447
    %v2449 = vpop.f32.mrf.mxu0
    %v2450 = vadd.f32 %v2407, %v2449
    %v2451 = vpop.f32.mrf.mxu0
    %v2452 = vadd.f32 %v2409, %v2451
    %v2453 = vpop.f32.mrf.mxu0
    %v2454 = vadd.f32 %v2411, %v2453
    %2455 = vdwg.mxu0
    %v2456 = vadd.f32 %v2362, %v502
    %v2457 = vadd.f32 %v2364, %v503
    %v2458 = vadd.f32 %v2448, %v504
    %v2459 = vadd.f32 %v2450, %v505
    %v2460 = vadd.f32 %v2366, %v506
    %v2461 = vadd.f32 %v2368, %v507
    %v2462 = vadd.f32 %v2452, %v508
    %v2463 = vadd.f32 %v2454, %v509
    %v2464 = vmax.f32 %v2456, 0.0
    %v2465 = vmax.f32 %v2457, 0.0
    %v2466 = vmax.f32 %v2458, 0.0
    %v2467 = vmax.f32 %v2459, 0.0
    %v2468 = vmax.f32 %v2460, 0.0
    %v2469 = vmax.f32 %v2461, 0.0
    %v2470 = vmax.f32 %v2462, 0.0
    %v2471 = vmax.f32 %v2463, 0.0
    %s2472 = sshll.u32 %s511, 4
    %2473 = dma.done %s111, %s2472
    %v2474 = vld [vmem:[#allocation5] sm:$0xff]
    %v2475 = vld [vmem:[#allocation5 + $0x8] sm:$0xff]
    %v2476 = vld [vmem:[#allocation5 + $0x10] sm:$0xff]
    %v2477 = vld [vmem:[#allocation5 + $0x18] sm:$0xff]
    %v2478 = vld [vmem:[#allocation5 + $0x20] sm:$0xff]
    %v2479 = vld [vmem:[#allocation5 + $0x28] sm:$0xff]
    %v2480 = vld [vmem:[#allocation5 + $0x30] sm:$0xff]
    %v2481 = vld [vmem:[#allocation5 + $0x38] sm:$0xff]
    %v2482 = vld [vmem:[#allocation5 + $0x40] sm:$0xff]
    %v2483 = vld [vmem:[#allocation5 + $0x48] sm:$0xff]
    %v2484 = vld [vmem:[#allocation5 + $0x50] sm:$0xff]
    %v2485 = vld [vmem:[#allocation5 + $0x58] sm:$0xff]
    %v2486 = vld [vmem:[#allocation5 + $0x60] sm:$0xff]
    %v2487 = vld [vmem:[#allocation5 + $0x68] sm:$0xff]
    %v2488 = vld [vmem:[#allocation5 + $0x70] sm:$0xff]
    %v2489 = vld [vmem:[#allocation5 + $0x78] sm:$0xff]
    %v2490 = vld [vmem:[#allocation5 + $0x80] sm:$0xff]
    %v2491 = vld [vmem:[#allocation5 + $0x88] sm:$0xff]
    %v2492 = vld [vmem:[#allocation5 + $0x90] sm:$0xff]
    %v2493 = vld [vmem:[#allocation5 + $0x98] sm:$0xff]
    %v2494 = vld [vmem:[#allocation5 + $0xa0] sm:$0xff]
    %v2495 = vld [vmem:[#allocation5 + $0xa8] sm:$0xff]
    %v2496 = vld [vmem:[#allocation5 + $0xb0] sm:$0xff]
    %v2497 = vld [vmem:[#allocation5 + $0xb8] sm:$0xff]
    %v2498 = vld [vmem:[#allocation5 + $0xc0] sm:$0xff]
    %v2499 = vld [vmem:[#allocation5 + $0xc8] sm:$0xff]
    %v2500 = vld [vmem:[#allocation5 + $0xd0] sm:$0xff]
    %v2501 = vld [vmem:[#allocation5 + $0xd8] sm:$0xff]
    %v2502 = vld [vmem:[#allocation5 + $0xe0] sm:$0xff]
    %v2503 = vld [vmem:[#allocation5 + $0xe8] sm:$0xff]
    %v2504 = vld [vmem:[#allocation5 + $0xf0] sm:$0xff]
    %v2505 = vld [vmem:[#allocation5 + $0xf8] sm:$0xff]
    %v2506 = vld [vmem:[#allocation5 + $0x100] sm:$0xff]
    %v2507 = vld [vmem:[#allocation5 + $0x108] sm:$0xff]
    %v2508 = vld [vmem:[#allocation5 + $0x110] sm:$0xff]
    %v2509 = vld [vmem:[#allocation5 + $0x118] sm:$0xff]
    %v2510 = vld [vmem:[#allocation5 + $0x120] sm:$0xff]
    %v2511 = vld [vmem:[#allocation5 + $0x128] sm:$0xff]
    %v2512 = vld [vmem:[#allocation5 + $0x130] sm:$0xff]
    %v2513 = vld [vmem:[#allocation5 + $0x138] sm:$0xff]
    %v2514 = vld [vmem:[#allocation5 + $0x140] sm:$0xff]
    %v2515 = vld [vmem:[#allocation5 + $0x148] sm:$0xff]
    %v2516 = vld [vmem:[#allocation5 + $0x150] sm:$0xff]
    %v2517 = vld [vmem:[#allocation5 + $0x158] sm:$0xff]
    %v2518 = vld [vmem:[#allocation5 + $0x160] sm:$0xff]
    %v2519 = vld [vmem:[#allocation5 + $0x168] sm:$0xff]
    %v2520 = vld [vmem:[#allocation5 + $0x170] sm:$0xff]
    %v2521 = vld [vmem:[#allocation5 + $0x178] sm:$0xff]
    %v2522 = vld [vmem:[#allocation5 + $0x180] sm:$0xff]
    %v2523 = vld [vmem:[#allocation5 + $0x188] sm:$0xff]
    %v2524 = vld [vmem:[#allocation5 + $0x190] sm:$0xff]
    %v2525 = vld [vmem:[#allocation5 + $0x198] sm:$0xff]
    %v2526 = vld [vmem:[#allocation5 + $0x1a0] sm:$0xff]
    %v2527 = vld [vmem:[#allocation5 + $0x1a8] sm:$0xff]
    %v2528 = vld [vmem:[#allocation5 + $0x1b0] sm:$0xff]
    %v2529 = vld [vmem:[#allocation5 + $0x1b8] sm:$0xff]
    %v2530 = vld [vmem:[#allocation5 + $0x1c0] sm:$0xff]
    %v2531 = vld [vmem:[#allocation5 + $0x1c8] sm:$0xff]
    %v2532 = vld [vmem:[#allocation5 + $0x1d0] sm:$0xff]
    %v2533 = vld [vmem:[#allocation5 + $0x1d8] sm:$0xff]
    %v2534 = vld [vmem:[#allocation5 + $0x1e0] sm:$0xff]
    %v2535 = vld [vmem:[#allocation5 + $0x1e8] sm:$0xff]
    %v2536 = vld [vmem:[#allocation5 + $0x1f0] sm:$0xff]
    %v2537 = vld [vmem:[#allocation5 + $0x1f8] sm:$0xff]
    %v2538 = vld [vmem:[#allocation5 + $0x200] sm:$0xff]
    %v2539 = vld [vmem:[#allocation5 + $0x208] sm:$0xff]
    %v2540 = vld [vmem:[#allocation5 + $0x210] sm:$0xff]
    %v2541 = vld [vmem:[#allocation5 + $0x218] sm:$0xff]
    %v2542 = vld [vmem:[#allocation5 + $0x220] sm:$0xff]
    %v2543 = vld [vmem:[#allocation5 + $0x228] sm:$0xff]
    %v2544 = vld [vmem:[#allocation5 + $0x230] sm:$0xff]
    %v2545 = vld [vmem:[#allocation5 + $0x238] sm:$0xff]
    %v2546 = vld [vmem:[#allocation5 + $0x240] sm:$0xff]
    %v2547 = vld [vmem:[#allocation5 + $0x248] sm:$0xff]
    %v2548 = vld [vmem:[#allocation5 + $0x250] sm:$0xff]
    %v2549 = vld [vmem:[#allocation5 + $0x258] sm:$0xff]
    %v2550 = vld [vmem:[#allocation5 + $0x260] sm:$0xff]
    %v2551 = vld [vmem:[#allocation5 + $0x268] sm:$0xff]
    %v2552 = vld [vmem:[#allocation5 + $0x270] sm:$0xff]
    %v2553 = vld [vmem:[#allocation5 + $0x278] sm:$0xff]
    %v2554 = vld [vmem:[#allocation5 + $0x280] sm:$0xff]
    %v2555 = vld [vmem:[#allocation5 + $0x288] sm:$0xff]
    %v2556 = vld [vmem:[#allocation5 + $0x290] sm:$0xff]
    %v2557 = vld [vmem:[#allocation5 + $0x298] sm:$0xff]
    %v2558 = vld [vmem:[#allocation5 + $0x2a0] sm:$0xff]
    %v2559 = vld [vmem:[#allocation5 + $0x2a8] sm:$0xff]
    %v2560 = vld [vmem:[#allocation5 + $0x2b0] sm:$0xff]
    %v2561 = vld [vmem:[#allocation5 + $0x2b8] sm:$0xff]
    %v2562 = vld [vmem:[#allocation5 + $0x2c0] sm:$0xff]
    %v2563 = vld [vmem:[#allocation5 + $0x2c8] sm:$0xff]
    %v2564 = vld [vmem:[#allocation5 + $0x2d0] sm:$0xff]
    %v2565 = vld [vmem:[#allocation5 + $0x2d8] sm:$0xff]
    %v2566 = vld [vmem:[#allocation5 + $0x2e0] sm:$0xff]
    %v2567 = vld [vmem:[#allocation5 + $0x2e8] sm:$0xff]
    %v2568 = vld [vmem:[#allocation5 + $0x2f0] sm:$0xff]
    %v2569 = vld [vmem:[#allocation5 + $0x2f8] sm:$0xff]
    %v2570 = vld [vmem:[#allocation5 + $0x300] sm:$0xff]
    %v2571 = vld [vmem:[#allocation5 + $0x308] sm:$0xff]
    %v2572 = vld [vmem:[#allocation5 + $0x310] sm:$0xff]
    %v2573 = vld [vmem:[#allocation5 + $0x318] sm:$0xff]
    %v2574 = vld [vmem:[#allocation5 + $0x320] sm:$0xff]
    %v2575 = vld [vmem:[#allocation5 + $0x328] sm:$0xff]
    %v2576 = vld [vmem:[#allocation5 + $0x330] sm:$0xff]
    %v2577 = vld [vmem:[#allocation5 + $0x338] sm:$0xff]
    %v2578 = vld [vmem:[#allocation5 + $0x340] sm:$0xff]
    %v2579 = vld [vmem:[#allocation5 + $0x348] sm:$0xff]
    %v2580 = vld [vmem:[#allocation5 + $0x350] sm:$0xff]
    %v2581 = vld [vmem:[#allocation5 + $0x358] sm:$0xff]
    %v2582 = vld [vmem:[#allocation5 + $0x360] sm:$0xff]
    %v2583 = vld [vmem:[#allocation5 + $0x368] sm:$0xff]
    %v2584 = vld [vmem:[#allocation5 + $0x370] sm:$0xff]
    %v2585 = vld [vmem:[#allocation5 + $0x378] sm:$0xff]
    %v2586 = vld [vmem:[#allocation5 + $0x380] sm:$0xff]
    %v2587 = vld [vmem:[#allocation5 + $0x388] sm:$0xff]
    %v2588 = vld [vmem:[#allocation5 + $0x390] sm:$0xff]
    %v2589 = vld [vmem:[#allocation5 + $0x398] sm:$0xff]
    %v2590 = vld [vmem:[#allocation5 + $0x3a0] sm:$0xff]
    %v2591 = vld [vmem:[#allocation5 + $0x3a8] sm:$0xff]
    %v2592 = vld [vmem:[#allocation5 + $0x3b0] sm:$0xff]
    %v2593 = vld [vmem:[#allocation5 + $0x3b8] sm:$0xff]
    %v2594 = vld [vmem:[#allocation5 + $0x3c0] sm:$0xff]
    %v2595 = vld [vmem:[#allocation5 + $0x3c8] sm:$0xff]
    %v2596 = vld [vmem:[#allocation5 + $0x3d0] sm:$0xff]
    %v2597 = vld [vmem:[#allocation5 + $0x3d8] sm:$0xff]
    %v2598 = vld [vmem:[#allocation5 + $0x3e0] sm:$0xff]
    %v2599 = vld [vmem:[#allocation5 + $0x3e8] sm:$0xff]
    %v2600 = vld [vmem:[#allocation5 + $0x3f0] sm:$0xff]
    %v2601 = vld [vmem:[#allocation5 + $0x3f8] sm:$0xff]
    %v2602 = vpack.c.bf16 %v2468, %v2464
    %v2603 = vpack.c.bf16 %v2469, %v2465
    %v2604 = vpack.c.bf16 %v2470, %v2466
    %v2605 = vpack.c.bf16 %v2471, %v2467
    %v2606 = vld [vmem:[%s8] sm:$0xf]
    %v2608 = vlaneseq
    %v2609 = vshrl.u32 %v2608, 7
    %v2610 = vsub.s32 0, %v2609
    %v2611 = vrot.slane %v2606, %v2610
    %v2612 = vlaneseq
    %v2613 = vshrl.u32 %v2612, 7
    %v2614 = vsub.s32 1, %v2613
    %v2615 = vrot.slane %v2606, %v2614
    %v2616 = vlaneseq
    %v2617 = vshrl.u32 %v2616, 7
    %v2618 = vsub.s32 2, %v2617
    %v2619 = vrot.slane %v2606, %v2618
    %v2620 = vlaneseq
    %v2621 = vshrl.u32 %v2620, 7
    %v2622 = vsub.s32 3, %v2621
    %v2623 = vrot.slane %v2606, %v2622
    %v2756 = vunpack.c.l.b16 %v2474
    %v2757 = vunpack.c.h.b16 %v2474
    %v2758 = vunpack.c.l.b16 %v2475
    %v2759 = vunpack.c.h.b16 %v2475
    %v2760 = vunpack.c.l.b16 %v2476
    %v2761 = vunpack.c.h.b16 %v2476
    %v2762 = vunpack.c.l.b16 %v2477
    %v2763 = vunpack.c.h.b16 %v2477
    %v2764 = vunpack.c.l.b16 %v2478
    %v2765 = vunpack.c.h.b16 %v2478
    %v2766 = vunpack.c.l.b16 %v2479
    %v2767 = vunpack.c.h.b16 %v2479
    %v2768 = vunpack.c.l.b16 %v2480
    %v2769 = vunpack.c.h.b16 %v2480
    %v2770 = vunpack.c.l.b16 %v2481
    %v2771 = vunpack.c.h.b16 %v2481
    %v2772 = vunpack.c.l.b16 %v2482
    %v2773 = vunpack.c.h.b16 %v2482
    %v2774 = vunpack.c.l.b16 %v2483
    %v2775 = vunpack.c.h.b16 %v2483
    %v2776 = vunpack.c.l.b16 %v2484
    %v2777 = vunpack.c.h.b16 %v2484
    %v2778 = vunpack.c.l.b16 %v2485
    %v2779 = vunpack.c.h.b16 %v2485
    %v2780 = vunpack.c.l.b16 %v2486
    %v2781 = vunpack.c.h.b16 %v2486
    %v2782 = vunpack.c.l.b16 %v2487
    %v2783 = vunpack.c.h.b16 %v2487
    %v2784 = vunpack.c.l.b16 %v2488
    %v2785 = vunpack.c.h.b16 %v2488
    %v2786 = vunpack.c.l.b16 %v2489
    %v2787 = vunpack.c.h.b16 %v2489
    %v2788 = vunpack.c.l.b16 %v2490
    %v2789 = vunpack.c.h.b16 %v2490
    %v2790 = vunpack.c.l.b16 %v2491
    %v2791 = vunpack.c.h.b16 %v2491
    %v2792 = vunpack.c.l.b16 %v2492
    %v2793 = vunpack.c.h.b16 %v2492
    %v2794 = vunpack.c.l.b16 %v2493
    %v2795 = vunpack.c.h.b16 %v2493
    %v2796 = vunpack.c.l.b16 %v2494
    %v2797 = vunpack.c.h.b16 %v2494
    %v2798 = vunpack.c.l.b16 %v2495
    %v2799 = vunpack.c.h.b16 %v2495
    %v2800 = vunpack.c.l.b16 %v2496
    %v2801 = vunpack.c.h.b16 %v2496
    %v2802 = vunpack.c.l.b16 %v2497
    %v2803 = vunpack.c.h.b16 %v2497
    %v2804 = vunpack.c.l.b16 %v2498
    %v2805 = vunpack.c.h.b16 %v2498
    %v2806 = vunpack.c.l.b16 %v2499
    %v2807 = vunpack.c.h.b16 %v2499
    %v2808 = vunpack.c.l.b16 %v2500
    %v2809 = vunpack.c.h.b16 %v2500
    %v2810 = vunpack.c.l.b16 %v2501
    %v2811 = vunpack.c.h.b16 %v2501
    %v2812 = vunpack.c.l.b16 %v2502
    %v2813 = vunpack.c.h.b16 %v2502
    %v2814 = vunpack.c.l.b16 %v2503
    %v2815 = vunpack.c.h.b16 %v2503
    %v2816 = vunpack.c.l.b16 %v2504
    %v2817 = vunpack.c.h.b16 %v2504
    %v2818 = vunpack.c.l.b16 %v2505
    %v2819 = vunpack.c.h.b16 %v2505
    %v2820 = vunpack.c.l.b16 %v2506
    %v2821 = vunpack.c.h.b16 %v2506
    %v2822 = vunpack.c.l.b16 %v2507
    %v2823 = vunpack.c.h.b16 %v2507
    %v2824 = vunpack.c.l.b16 %v2508
    %v2825 = vunpack.c.h.b16 %v2508
    %v2826 = vunpack.c.l.b16 %v2509
    %v2827 = vunpack.c.h.b16 %v2509
    %v2828 = vunpack.c.l.b16 %v2510
    %v2829 = vunpack.c.h.b16 %v2510
    %v2830 = vunpack.c.l.b16 %v2511
    %v2831 = vunpack.c.h.b16 %v2511
    %v2832 = vunpack.c.l.b16 %v2512
    %v2833 = vunpack.c.h.b16 %v2512
    %v2834 = vunpack.c.l.b16 %v2513
    %v2835 = vunpack.c.h.b16 %v2513
    %v2836 = vunpack.c.l.b16 %v2514
    %v2837 = vunpack.c.h.b16 %v2514
    %v2838 = vunpack.c.l.b16 %v2515
    %v2839 = vunpack.c.h.b16 %v2515
    %v2840 = vunpack.c.l.b16 %v2516
    %v2841 = vunpack.c.h.b16 %v2516
    %v2842 = vunpack.c.l.b16 %v2517
    %v2843 = vunpack.c.h.b16 %v2517
    %v2844 = vunpack.c.l.b16 %v2518
    %v2845 = vunpack.c.h.b16 %v2518
    %v2846 = vunpack.c.l.b16 %v2519
    %v2847 = vunpack.c.h.b16 %v2519
    %v2848 = vunpack.c.l.b16 %v2520
    %v2849 = vunpack.c.h.b16 %v2520
    %v2850 = vunpack.c.l.b16 %v2521
    %v2851 = vunpack.c.h.b16 %v2521
    %v2852 = vunpack.c.l.b16 %v2522
    %v2853 = vunpack.c.h.b16 %v2522
    %v2854 = vunpack.c.l.b16 %v2523
    %v2855 = vunpack.c.h.b16 %v2523
    %v2856 = vunpack.c.l.b16 %v2524
    %v2857 = vunpack.c.h.b16 %v2524
    %v2858 = vunpack.c.l.b16 %v2525
    %v2859 = vunpack.c.h.b16 %v2525
    %v2860 = vunpack.c.l.b16 %v2526
    %v2861 = vunpack.c.h.b16 %v2526
    %v2862 = vunpack.c.l.b16 %v2527
    %v2863 = vunpack.c.h.b16 %v2527
    %v2864 = vunpack.c.l.b16 %v2528
    %v2865 = vunpack.c.h.b16 %v2528
    %v2866 = vunpack.c.l.b16 %v2529
    %v2867 = vunpack.c.h.b16 %v2529
    %v2868 = vunpack.c.l.b16 %v2530
    %v2869 = vunpack.c.h.b16 %v2530
    %v2870 = vunpack.c.l.b16 %v2531
    %v2871 = vunpack.c.h.b16 %v2531
    %v2872 = vunpack.c.l.b16 %v2532
    %v2873 = vunpack.c.h.b16 %v2532
    %v2874 = vunpack.c.l.b16 %v2533
    %v2875 = vunpack.c.h.b16 %v2533
    %v2876 = vunpack.c.l.b16 %v2534
    %v2877 = vunpack.c.h.b16 %v2534
    %v2878 = vunpack.c.l.b16 %v2535
    %v2879 = vunpack.c.h.b16 %v2535
    %v2880 = vunpack.c.l.b16 %v2536
    %v2881 = vunpack.c.h.b16 %v2536
    %v2882 = vunpack.c.l.b16 %v2537
    %v2883 = vunpack.c.h.b16 %v2537
    %v2884 = vunpack.c.l.b16 %v2538
    %v2885 = vunpack.c.h.b16 %v2538
    %v2886 = vunpack.c.l.b16 %v2539
    %v2887 = vunpack.c.h.b16 %v2539
    %v2888 = vunpack.c.l.b16 %v2540
    %v2889 = vunpack.c.h.b16 %v2540
    %v2890 = vunpack.c.l.b16 %v2541
    %v2891 = vunpack.c.h.b16 %v2541
    %v2892 = vunpack.c.l.b16 %v2542
    %v2893 = vunpack.c.h.b16 %v2542
    %v2894 = vunpack.c.l.b16 %v2543
    %v2895 = vunpack.c.h.b16 %v2543
    %v2896 = vunpack.c.l.b16 %v2544
    %v2897 = vunpack.c.h.b16 %v2544
    %v2898 = vunpack.c.l.b16 %v2545
    %v2899 = vunpack.c.h.b16 %v2545
    %v2900 = vunpack.c.l.b16 %v2546
    %v2901 = vunpack.c.h.b16 %v2546
    %v2902 = vunpack.c.l.b16 %v2547
    %v2903 = vunpack.c.h.b16 %v2547
    %v2904 = vunpack.c.l.b16 %v2548
    %v2905 = vunpack.c.h.b16 %v2548
    %v2906 = vunpack.c.l.b16 %v2549
    %v2907 = vunpack.c.h.b16 %v2549
    %v2908 = vunpack.c.l.b16 %v2550
    %v2909 = vunpack.c.h.b16 %v2550
    %v2910 = vunpack.c.l.b16 %v2551
    %v2911 = vunpack.c.h.b16 %v2551
    %v2912 = vunpack.c.l.b16 %v2552
    %v2913 = vunpack.c.h.b16 %v2552
    %v2914 = vunpack.c.l.b16 %v2553
    %v2915 = vunpack.c.h.b16 %v2553
    %v2916 = vunpack.c.l.b16 %v2554
    %v2917 = vunpack.c.h.b16 %v2554
    %v2918 = vunpack.c.l.b16 %v2555
    %v2919 = vunpack.c.h.b16 %v2555
    %v2920 = vunpack.c.l.b16 %v2556
    %v2921 = vunpack.c.h.b16 %v2556
    %v2922 = vunpack.c.l.b16 %v2557
    %v2923 = vunpack.c.h.b16 %v2557
    %v2924 = vunpack.c.l.b16 %v2558
    %v2925 = vunpack.c.h.b16 %v2558
    %v2926 = vunpack.c.l.b16 %v2559
    %v2927 = vunpack.c.h.b16 %v2559
    %v2928 = vunpack.c.l.b16 %v2560
    %v2929 = vunpack.c.h.b16 %v2560
    %v2930 = vunpack.c.l.b16 %v2561
    %v2931 = vunpack.c.h.b16 %v2561
    %v2932 = vunpack.c.l.b16 %v2562
    %v2933 = vunpack.c.h.b16 %v2562
    %v2934 = vunpack.c.l.b16 %v2563
    %v2935 = vunpack.c.h.b16 %v2563
    %v2936 = vunpack.c.l.b16 %v2564
    %v2937 = vunpack.c.h.b16 %v2564
    %v2938 = vunpack.c.l.b16 %v2565
    %v2939 = vunpack.c.h.b16 %v2565
    %v2940 = vunpack.c.l.b16 %v2566
    %v2941 = vunpack.c.h.b16 %v2566
    %v2942 = vunpack.c.l.b16 %v2567
    %v2943 = vunpack.c.h.b16 %v2567
    %v2944 = vunpack.c.l.b16 %v2568
    %v2945 = vunpack.c.h.b16 %v2568
    %v2946 = vunpack.c.l.b16 %v2569
    %v2947 = vunpack.c.h.b16 %v2569
    %v2948 = vunpack.c.l.b16 %v2570
    %v2949 = vunpack.c.h.b16 %v2570
    %v2950 = vunpack.c.l.b16 %v2571
    %v2951 = vunpack.c.h.b16 %v2571
    %v2952 = vunpack.c.l.b16 %v2572
    %v2953 = vunpack.c.h.b16 %v2572
    %v2954 = vunpack.c.l.b16 %v2573
    %v2955 = vunpack.c.h.b16 %v2573
    %v2956 = vunpack.c.l.b16 %v2574
    %v2957 = vunpack.c.h.b16 %v2574
    %v2958 = vunpack.c.l.b16 %v2575
    %v2959 = vunpack.c.h.b16 %v2575
    %v2960 = vunpack.c.l.b16 %v2576
    %v2961 = vunpack.c.h.b16 %v2576
    %v2962 = vunpack.c.l.b16 %v2577
    %v2963 = vunpack.c.h.b16 %v2577
    %v2964 = vunpack.c.l.b16 %v2578
    %v2965 = vunpack.c.h.b16 %v2578
    %v2966 = vunpack.c.l.b16 %v2579
    %v2967 = vunpack.c.h.b16 %v2579
    %v2968 = vunpack.c.l.b16 %v2580
    %v2969 = vunpack.c.h.b16 %v2580
    %v2970 = vunpack.c.l.b16 %v2581
    %v2971 = vunpack.c.h.b16 %v2581
    %v2972 = vunpack.c.l.b16 %v2582
    %v2973 = vunpack.c.h.b16 %v2582
    %v2974 = vunpack.c.l.b16 %v2583
    %v2975 = vunpack.c.h.b16 %v2583
    %v2976 = vunpack.c.l.b16 %v2584
    %v2977 = vunpack.c.h.b16 %v2584
    %v2978 = vunpack.c.l.b16 %v2585
    %v2979 = vunpack.c.h.b16 %v2585
    %v2980 = vunpack.c.l.b16 %v2586
    %v2981 = vunpack.c.h.b16 %v2586
    %v2982 = vunpack.c.l.b16 %v2587
    %v2983 = vunpack.c.h.b16 %v2587
    %v2984 = vunpack.c.l.b16 %v2588
    %v2985 = vunpack.c.h.b16 %v2588
    %v2986 = vunpack.c.l.b16 %v2589
    %v2987 = vunpack.c.h.b16 %v2589
    %v2988 = vunpack.c.l.b16 %v2590
    %v2989 = vunpack.c.h.b16 %v2590
    %v2990 = vunpack.c.l.b16 %v2591
    %v2991 = vunpack.c.h.b16 %v2591
    %v2992 = vunpack.c.l.b16 %v2592
    %v2993 = vunpack.c.h.b16 %v2592
    %v2994 = vunpack.c.l.b16 %v2593
    %v2995 = vunpack.c.h.b16 %v2593
    %v2996 = vunpack.c.l.b16 %v2594
    %v2997 = vunpack.c.h.b16 %v2594
    %v2998 = vunpack.c.l.b16 %v2595
    %v2999 = vunpack.c.h.b16 %v2595
    %v3000 = vunpack.c.l.b16 %v2596
    %v3001 = vunpack.c.h.b16 %v2596
    %v3002 = vunpack.c.l.b16 %v2597
    %v3003 = vunpack.c.h.b16 %v2597
    %v3004 = vunpack.c.l.b16 %v2598
    %v3005 = vunpack.c.h.b16 %v2598
    %v3006 = vunpack.c.l.b16 %v2599
    %v3007 = vunpack.c.h.b16 %v2599
    %v3008 = vunpack.c.l.b16 %v2600
    %v3009 = vunpack.c.h.b16 %v2600
    %v3010 = vunpack.c.l.b16 %v2601
    %v3011 = vunpack.c.h.b16 %v2601
    %v3012 = vpack.c.b16 %v2760, %v2756
    %v3013 = vpack.c.b16 %v2761, %v2757
    %v3014 = vpack.c.b16 %v2762, %v2758
    %v3015 = vpack.c.b16 %v2763, %v2759
    %v3016 = vpack.c.b16 %v2768, %v2764
    %v3017 = vpack.c.b16 %v2769, %v2765
    %v3018 = vpack.c.b16 %v2770, %v2766
    %v3019 = vpack.c.b16 %v2771, %v2767
    %v3020 = vpack.c.b16 %v2776, %v2772
    %v3021 = vpack.c.b16 %v2777, %v2773
    %v3022 = vpack.c.b16 %v2778, %v2774
    %v3023 = vpack.c.b16 %v2779, %v2775
    %v3024 = vpack.c.b16 %v2784, %v2780
    %v3025 = vpack.c.b16 %v2785, %v2781
    %v3026 = vpack.c.b16 %v2786, %v2782
    %v3027 = vpack.c.b16 %v2787, %v2783
    %v3028 = vpack.c.b16 %v2792, %v2788
    %v3029 = vpack.c.b16 %v2793, %v2789
    %v3030 = vpack.c.b16 %v2794, %v2790
    %v3031 = vpack.c.b16 %v2795, %v2791
    %v3032 = vpack.c.b16 %v2800, %v2796
    %v3033 = vpack.c.b16 %v2801, %v2797
    %v3034 = vpack.c.b16 %v2802, %v2798
    %v3035 = vpack.c.b16 %v2803, %v2799
    %v3036 = vpack.c.b16 %v2808, %v2804
    %v3037 = vpack.c.b16 %v2809, %v2805
    %v3038 = vpack.c.b16 %v2810, %v2806
    %v3039 = vpack.c.b16 %v2811, %v2807
    %v3040 = vpack.c.b16 %v2816, %v2812
    %v3041 = vpack.c.b16 %v2817, %v2813
    %v3042 = vpack.c.b16 %v2818, %v2814
    %v3043 = vpack.c.b16 %v2819, %v2815
    %v3044 = vpack.c.b16 %v2824, %v2820
    %v3045 = vpack.c.b16 %v2825, %v2821
    %v3046 = vpack.c.b16 %v2826, %v2822
    %v3047 = vpack.c.b16 %v2827, %v2823
    %v3048 = vpack.c.b16 %v2832, %v2828
    %v3049 = vpack.c.b16 %v2833, %v2829
    %v3050 = vpack.c.b16 %v2834, %v2830
    %v3051 = vpack.c.b16 %v2835, %v2831
    %v3052 = vpack.c.b16 %v2840, %v2836
    %v3053 = vpack.c.b16 %v2841, %v2837
    %v3054 = vpack.c.b16 %v2842, %v2838
    %v3055 = vpack.c.b16 %v2843, %v2839
    %v3056 = vpack.c.b16 %v2848, %v2844
    %v3057 = vpack.c.b16 %v2849, %v2845
    %v3058 = vpack.c.b16 %v2850, %v2846
    %v3059 = vpack.c.b16 %v2851, %v2847
    %v3060 = vpack.c.b16 %v2856, %v2852
    %v3061 = vpack.c.b16 %v2857, %v2853
    %v3062 = vpack.c.b16 %v2858, %v2854
    %v3063 = vpack.c.b16 %v2859, %v2855
    %v3064 = vpack.c.b16 %v2864, %v2860
    %v3065 = vpack.c.b16 %v2865, %v2861
    %v3066 = vpack.c.b16 %v2866, %v2862
    %v3067 = vpack.c.b16 %v2867, %v2863
    %v3068 = vpack.c.b16 %v2872, %v2868
    %v3069 = vpack.c.b16 %v2873, %v2869
    %v3070 = vpack.c.b16 %v2874, %v2870
    %v3071 = vpack.c.b16 %v2875, %v2871
    %v3072 = vpack.c.b16 %v2880, %v2876
    %v3073 = vpack.c.b16 %v2881, %v2877
    %v3074 = vpack.c.b16 %v2882, %v2878
    %v3075 = vpack.c.b16 %v2883, %v2879
    %v3076 = vpack.c.b16 %v2888, %v2884
    %v3077 = vpack.c.b16 %v2889, %v2885
    %v3078 = vpack.c.b16 %v2890, %v2886
    %v3079 = vpack.c.b16 %v2891, %v2887
    %v3080 = vpack.c.b16 %v2896, %v2892
    %v3081 = vpack.c.b16 %v2897, %v2893
    %v3082 = vpack.c.b16 %v2898, %v2894
    %v3083 = vpack.c.b16 %v2899, %v2895
    %v3084 = vpack.c.b16 %v2904, %v2900
    %v3085 = vpack.c.b16 %v2905, %v2901
    %v3086 = vpack.c.b16 %v2906, %v2902
    %v3087 = vpack.c.b16 %v2907, %v2903
    %v3088 = vpack.c.b16 %v2912, %v2908
    %v3089 = vpack.c.b16 %v2913, %v2909
    %v3090 = vpack.c.b16 %v2914, %v2910
    %v3091 = vpack.c.b16 %v2915, %v2911
    %v3092 = vpack.c.b16 %v2920, %v2916
    %v3093 = vpack.c.b16 %v2921, %v2917
    %v3094 = vpack.c.b16 %v2922, %v2918
    %v3095 = vpack.c.b16 %v2923, %v2919
    %v3096 = vpack.c.b16 %v2928, %v2924
    %v3097 = vpack.c.b16 %v2929, %v2925
    %v3098 = vpack.c.b16 %v2930, %v2926
    %v3099 = vpack.c.b16 %v2931, %v2927
    %v3100 = vpack.c.b16 %v2936, %v2932
    %v3101 = vpack.c.b16 %v2937, %v2933
    %v3102 = vpack.c.b16 %v2938, %v2934
    %v3103 = vpack.c.b16 %v2939, %v2935
    %v3104 = vpack.c.b16 %v2944, %v2940
    %v3105 = vpack.c.b16 %v2945, %v2941
    %v3106 = vpack.c.b16 %v2946, %v2942
    %v3107 = vpack.c.b16 %v2947, %v2943
    %v3108 = vpack.c.b16 %v2952, %v2948
    %v3109 = vpack.c.b16 %v2953, %v2949
    %v3110 = vpack.c.b16 %v2954, %v2950
    %v3111 = vpack.c.b16 %v2955, %v2951
    %v3112 = vpack.c.b16 %v2960, %v2956
    %v3113 = vpack.c.b16 %v2961, %v2957
    %v3114 = vpack.c.b16 %v2962, %v2958
    %v3115 = vpack.c.b16 %v2963, %v2959
    %v3116 = vpack.c.b16 %v2968, %v2964
    %v3117 = vpack.c.b16 %v2969, %v2965
    %v3118 = vpack.c.b16 %v2970, %v2966
    %v3119 = vpack.c.b16 %v2971, %v2967
    %v3120 = vpack.c.b16 %v2976, %v2972
    %v3121 = vpack.c.b16 %v2977, %v2973
    %v3122 = vpack.c.b16 %v2978, %v2974
    %v3123 = vpack.c.b16 %v2979, %v2975
    %v3124 = vpack.c.b16 %v2984, %v2980
    %v3125 = vpack.c.b16 %v2985, %v2981
    %v3126 = vpack.c.b16 %v2986, %v2982
    %v3127 = vpack.c.b16 %v2987, %v2983
    %v3128 = vpack.c.b16 %v2992, %v2988
    %v3129 = vpack.c.b16 %v2993, %v2989
    %v3130 = vpack.c.b16 %v2994, %v2990
    %v3131 = vpack.c.b16 %v2995, %v2991
    %v3132 = vpack.c.b16 %v3000, %v2996
    %v3133 = vpack.c.b16 %v3001, %v2997
    %v3134 = vpack.c.b16 %v3002, %v2998
    %v3135 = vpack.c.b16 %v3003, %v2999
    %v3136 = vpack.c.b16 %v3008, %v3004
    %v3137 = vpack.c.b16 %v3009, %v3005
    %v3138 = vpack.c.b16 %v3010, %v3006
    %v3139 = vpack.c.b16 %v3011, %v3007
    %3268 = vmatprep.subr.bf16.mxu0 %v3041
    %3269 = vmatpush1.bf16.msra.mxu0 %v3040
    %3270 = vmatprep.subr.bf16.mxu0 %v3037
    %3271 = vmatpush1.bf16.msra.mxu0 %v3036
    %3272 = vmatprep.subr.bf16.mxu0 %v3033
    %3273 = vmatpush1.bf16.msra.mxu0 %v3032
    %3274 = vmatprep.subr.bf16.mxu0 %v3029
    %3275 = vmatpush1.bf16.msra.mxu0 %v3028
    %3276 = vmatprep.subr.bf16.mxu0 %v3025
    %3277 = vmatpush1.bf16.msra.mxu0 %v3024
    %3278 = vmatprep.subr.bf16.mxu0 %v3021
    %3279 = vmatpush1.bf16.msra.mxu0 %v3020
    %3280 = vmatprep.subr.bf16.mxu0 %v3017
    %3281 = vmatpush1.bf16.msra.mxu0 %v3016
    %3282 = vmatprep.subr.bf16.mxu0 %v3013
    %3283 = vmatpush1.bf16.msra.mxu0 %v3012
    %3284 = vmatprep.subr.bf16.mxu0 %v3073
    %3285 = vmatpush2.bf16.msra.mxu0 %v3072
    %3286 = vmatprep.subr.bf16.mxu0 %v3069
    %3287 = vmatpush2.bf16.msra.mxu0 %v3068
    %3288 = vmatprep.subr.bf16.mxu0 %v3065
    %3289 = vmatpush2.bf16.msra.mxu0 %v3064
    %3290 = vmatprep.subr.bf16.mxu0 %v3061
    %3291 = vmatpush2.bf16.msra.mxu0 %v3060
    %3292 = vmatprep.subr.bf16.mxu0 %v3057
    %3293 = vmatpush2.bf16.msra.mxu0 %v3056
    %3294 = vmatprep.subr.bf16.mxu0 %v3053
    %3295 = vmatpush2.bf16.msra.mxu0 %v3052
    %3296 = vmatprep.subr.bf16.mxu0 %v3049
    %3297 = vmatpush2.bf16.msra.mxu0 %v3048
    %3298 = vmatprep.subr.bf16.mxu0 %v3045
    %3299 = vmatpush2.bf16.msra.mxu0 %v3044
    %3300 = vmatprep.mubr.bf16.mxu0 %v2603
    %3301 = vmatmul.mubr.bf16.gmra.mxu0 %v2602
    %v3302 = vpop.f32.mrf.mxu0
    %v3303 = vadd.f32 %v2611, %v3302
    %v3304 = vpop.f32.mrf.mxu0
    %v3305 = vadd.f32 %v2615, %v3304
    %v3306 = vpop.f32.mrf.mxu0
    %v3307 = vadd.f32 %v2611, %v3306
    %v3308 = vpop.f32.mrf.mxu0
    %v3309 = vadd.f32 %v2615, %v3308
    %3310 = vdwg.mxu0
    %3311 = vmatprep.subr.bf16.mxu0 %v3105
    %3312 = vmatpush1.bf16.msra.mxu0 %v3104
    %3313 = vmatprep.subr.bf16.mxu0 %v3101
    %3314 = vmatpush1.bf16.msra.mxu0 %v3100
    %3315 = vmatprep.subr.bf16.mxu0 %v3097
    %3316 = vmatpush1.bf16.msra.mxu0 %v3096
    %3317 = vmatprep.subr.bf16.mxu0 %v3093
    %3318 = vmatpush1.bf16.msra.mxu0 %v3092
    %3319 = vmatprep.subr.bf16.mxu0 %v3089
    %3320 = vmatpush1.bf16.msra.mxu0 %v3088
    %3321 = vmatprep.subr.bf16.mxu0 %v3085
    %3322 = vmatpush1.bf16.msra.mxu0 %v3084
    %3323 = vmatprep.subr.bf16.mxu0 %v3081
    %3324 = vmatpush1.bf16.msra.mxu0 %v3080
    %3325 = vmatprep.subr.bf16.mxu0 %v3077
    %3326 = vmatpush1.bf16.msra.mxu0 %v3076
    %3327 = vmatprep.subr.bf16.mxu0 %v3137
    %3328 = vmatpush2.bf16.msra.mxu0 %v3136
    %3329 = vmatprep.subr.bf16.mxu0 %v3133
    %3330 = vmatpush2.bf16.msra.mxu0 %v3132
    %3331 = vmatprep.subr.bf16.mxu0 %v3129
    %3332 = vmatpush2.bf16.msra.mxu0 %v3128
    %3333 = vmatprep.subr.bf16.mxu0 %v3125
    %3334 = vmatpush2.bf16.msra.mxu0 %v3124
    %3335 = vmatprep.subr.bf16.mxu0 %v3121
    %3336 = vmatpush2.bf16.msra.mxu0 %v3120
    %3337 = vmatprep.subr.bf16.mxu0 %v3117
    %3338 = vmatpush2.bf16.msra.mxu0 %v3116
    %3339 = vmatprep.subr.bf16.mxu0 %v3113
    %3340 = vmatpush2.bf16.msra.mxu0 %v3112
    %3341 = vmatprep.subr.bf16.mxu0 %v3109
    %3342 = vmatpush2.bf16.msra.mxu0 %v3108
    %3343 = vmatprep.mubr.bf16.mxu0 %v2605
    %3344 = vmatmul.mubr.bf16.gmra.mxu0 %v2604
    %v3345 = vpop.f32.mrf.mxu0
    %v3346 = vadd.f32 %v3303, %v3345
    %v3347 = vpop.f32.mrf.mxu0
    %v3348 = vadd.f32 %v3305, %v3347
    %v3349 = vpop.f32.mrf.mxu0
    %v3350 = vadd.f32 %v3307, %v3349
    %v3351 = vpop.f32.mrf.mxu0
    %v3352 = vadd.f32 %v3309, %v3351
    %3353 = vdwg.mxu0
    %3354 = vmatprep.subr.bf16.mxu0 %v3043
    %3355 = vmatpush1.bf16.msra.mxu0 %v3042
    %3356 = vmatprep.subr.bf16.mxu0 %v3039
    %3357 = vmatpush1.bf16.msra.mxu0 %v3038
    %3358 = vmatprep.subr.bf16.mxu0 %v3035
    %3359 = vmatpush1.bf16.msra.mxu0 %v3034
    %3360 = vmatprep.subr.bf16.mxu0 %v3031
    %3361 = vmatpush1.bf16.msra.mxu0 %v3030
    %3362 = vmatprep.subr.bf16.mxu0 %v3027
    %3363 = vmatpush1.bf16.msra.mxu0 %v3026
    %3364 = vmatprep.subr.bf16.mxu0 %v3023
    %3365 = vmatpush1.bf16.msra.mxu0 %v3022
    %3366 = vmatprep.subr.bf16.mxu0 %v3019
    %3367 = vmatpush1.bf16.msra.mxu0 %v3018
    %3368 = vmatprep.subr.bf16.mxu0 %v3015
    %3369 = vmatpush1.bf16.msra.mxu0 %v3014
    %3370 = vmatprep.subr.bf16.mxu0 %v3075
    %3371 = vmatpush2.bf16.msra.mxu0 %v3074
    %3372 = vmatprep.subr.bf16.mxu0 %v3071
    %3373 = vmatpush2.bf16.msra.mxu0 %v3070
    %3374 = vmatprep.subr.bf16.mxu0 %v3067
    %3375 = vmatpush2.bf16.msra.mxu0 %v3066
    %3376 = vmatprep.subr.bf16.mxu0 %v3063
    %3377 = vmatpush2.bf16.msra.mxu0 %v3062
    %3378 = vmatprep.subr.bf16.mxu0 %v3059
    %3379 = vmatpush2.bf16.msra.mxu0 %v3058
    %3380 = vmatprep.subr.bf16.mxu0 %v3055
    %3381 = vmatpush2.bf16.msra.mxu0 %v3054
    %3382 = vmatprep.subr.bf16.mxu0 %v3051
    %3383 = vmatpush2.bf16.msra.mxu0 %v3050
    %3384 = vmatprep.subr.bf16.mxu0 %v3047
    %3385 = vmatpush2.bf16.msra.mxu0 %v3046
    %3386 = vmatprep.mubr.bf16.mxu0 %v2603
    %3387 = vmatmul.mubr.bf16.gmra.mxu0 %v2602
    %v3388 = vpop.f32.mrf.mxu0
    %v3389 = vadd.f32 %v2619, %v3388
    %v3390 = vpop.f32.mrf.mxu0
    %v3391 = vadd.f32 %v2623, %v3390
    %v3392 = vpop.f32.mrf.mxu0
    %v3393 = vadd.f32 %v2619, %v3392
    %v3394 = vpop.f32.mrf.mxu0
    %v3395 = vadd.f32 %v2623, %v3394
    %3396 = vdwg.mxu0
    %3397 = vmatprep.subr.bf16.mxu0 %v3107
    %3398 = vmatpush1.bf16.msra.mxu0 %v3106
    %3399 = vmatprep.subr.bf16.mxu0 %v3103
    %3400 = vmatpush1.bf16.msra.mxu0 %v3102
    %3401 = vmatprep.subr.bf16.mxu0 %v3099
    %3402 = vmatpush1.bf16.msra.mxu0 %v3098
    %3403 = vmatprep.subr.bf16.mxu0 %v3095
    %3404 = vmatpush1.bf16.msra.mxu0 %v3094
    %3405 = vmatprep.subr.bf16.mxu0 %v3091
    %3406 = vmatpush1.bf16.msra.mxu0 %v3090
    %3407 = vmatprep.subr.bf16.mxu0 %v3087
    %3408 = vmatpush1.bf16.msra.mxu0 %v3086
    %3409 = vmatprep.subr.bf16.mxu0 %v3083
    %3410 = vmatpush1.bf16.msra.mxu0 %v3082
    %3411 = vmatprep.subr.bf16.mxu0 %v3079
    %3412 = vmatpush1.bf16.msra.mxu0 %v3078
    %3413 = vmatprep.subr.bf16.mxu0 %v3139
    %3414 = vmatpush2.bf16.msra.mxu0 %v3138
    %3415 = vmatprep.subr.bf16.mxu0 %v3135
    %3416 = vmatpush2.bf16.msra.mxu0 %v3134
    %3417 = vmatprep.subr.bf16.mxu0 %v3131
    %3418 = vmatpush2.bf16.msra.mxu0 %v3130
    %3419 = vmatprep.subr.bf16.mxu0 %v3127
    %3420 = vmatpush2.bf16.msra.mxu0 %v3126
    %3421 = vmatprep.subr.bf16.mxu0 %v3123
    %3422 = vmatpush2.bf16.msra.mxu0 %v3122
    %3423 = vmatprep.subr.bf16.mxu0 %v3119
    %3424 = vmatpush2.bf16.msra.mxu0 %v3118
    %3425 = vmatprep.subr.bf16.mxu0 %v3115
    %3426 = vmatpush2.bf16.msra.mxu0 %v3114
    %3427 = vmatprep.subr.bf16.mxu0 %v3111
    %3428 = vmatpush2.bf16.msra.mxu0 %v3110
    %3429 = vmatprep.mubr.bf16.mxu0 %v2605
    %3430 = vmatmul.mubr.bf16.gmra.mxu0 %v2604
    %v3431 = vpop.f32.mrf.mxu0
    %v3432 = vadd.f32 %v3389, %v3431
    %v3433 = vpop.f32.mrf.mxu0
    %v3434 = vadd.f32 %v3391, %v3433
    %v3435 = vpop.f32.mrf.mxu0
    %v3436 = vadd.f32 %v3393, %v3435
    %v3437 = vpop.f32.mrf.mxu0
    %v3438 = vadd.f32 %v3395, %v3437
    %3439 = vdwg.mxu0
    %v3440 = vmax.f32 %v3346, 0.0
    %v3441 = vmax.f32 %v3348, 0.0
    %v3442 = vmax.f32 %v3432, 0.0
    %v3443 = vmax.f32 %v3434, 0.0
    %v3444 = vmax.f32 %v3350, 0.0
    %v3445 = vmax.f32 %v3352, 0.0
    %v3446 = vmax.f32 %v3436, 0.0
    %v3447 = vmax.f32 %v3438, 0.0
    %s3448 = sshll.u32 %s511, 4
    %3449 = dma.done %s123, %s3448
    %v3450 = vld [vmem:[#allocation6] sm:$0xff]
    %v3451 = vld [vmem:[#allocation6 + $0x8] sm:$0xff]
    %v3452 = vld [vmem:[#allocation6 + $0x10] sm:$0xff]
    %v3453 = vld [vmem:[#allocation6 + $0x18] sm:$0xff]
    %v3454 = vld [vmem:[#allocation6 + $0x20] sm:$0xff]
    %v3455 = vld [vmem:[#allocation6 + $0x28] sm:$0xff]
    %v3456 = vld [vmem:[#allocation6 + $0x30] sm:$0xff]
    %v3457 = vld [vmem:[#allocation6 + $0x38] sm:$0xff]
    %v3458 = vld [vmem:[#allocation6 + $0x40] sm:$0xff]
    %v3459 = vld [vmem:[#allocation6 + $0x48] sm:$0xff]
    %v3460 = vld [vmem:[#allocation6 + $0x50] sm:$0xff]
    %v3461 = vld [vmem:[#allocation6 + $0x58] sm:$0xff]
    %v3462 = vld [vmem:[#allocation6 + $0x60] sm:$0xff]
    %v3463 = vld [vmem:[#allocation6 + $0x68] sm:$0xff]
    %v3464 = vld [vmem:[#allocation6 + $0x70] sm:$0xff]
    %v3465 = vld [vmem:[#allocation6 + $0x78] sm:$0xff]
    %v3466 = vld [vmem:[#allocation6 + $0x80] sm:$0xff]
    %v3467 = vld [vmem:[#allocation6 + $0x88] sm:$0xff]
    %v3468 = vld [vmem:[#allocation6 + $0x90] sm:$0xff]
    %v3469 = vld [vmem:[#allocation6 + $0x98] sm:$0xff]
    %v3470 = vld [vmem:[#allocation6 + $0xa0] sm:$0xff]
    %v3471 = vld [vmem:[#allocation6 + $0xa8] sm:$0xff]
    %v3472 = vld [vmem:[#allocation6 + $0xb0] sm:$0xff]
    %v3473 = vld [vmem:[#allocation6 + $0xb8] sm:$0xff]
    %v3474 = vld [vmem:[#allocation6 + $0xc0] sm:$0xff]
    %v3475 = vld [vmem:[#allocation6 + $0xc8] sm:$0xff]
    %v3476 = vld [vmem:[#allocation6 + $0xd0] sm:$0xff]
    %v3477 = vld [vmem:[#allocation6 + $0xd8] sm:$0xff]
    %v3478 = vld [vmem:[#allocation6 + $0xe0] sm:$0xff]
    %v3479 = vld [vmem:[#allocation6 + $0xe8] sm:$0xff]
    %v3480 = vld [vmem:[#allocation6 + $0xf0] sm:$0xff]
    %v3481 = vld [vmem:[#allocation6 + $0xf8] sm:$0xff]
    %v3482 = vld [vmem:[#allocation6 + $0x100] sm:$0xff]
    %v3483 = vld [vmem:[#allocation6 + $0x108] sm:$0xff]
    %v3484 = vld [vmem:[#allocation6 + $0x110] sm:$0xff]
    %v3485 = vld [vmem:[#allocation6 + $0x118] sm:$0xff]
    %v3486 = vld [vmem:[#allocation6 + $0x120] sm:$0xff]
    %v3487 = vld [vmem:[#allocation6 + $0x128] sm:$0xff]
    %v3488 = vld [vmem:[#allocation6 + $0x130] sm:$0xff]
    %v3489 = vld [vmem:[#allocation6 + $0x138] sm:$0xff]
    %v3490 = vld [vmem:[#allocation6 + $0x140] sm:$0xff]
    %v3491 = vld [vmem:[#allocation6 + $0x148] sm:$0xff]
    %v3492 = vld [vmem:[#allocation6 + $0x150] sm:$0xff]
    %v3493 = vld [vmem:[#allocation6 + $0x158] sm:$0xff]
    %v3494 = vld [vmem:[#allocation6 + $0x160] sm:$0xff]
    %v3495 = vld [vmem:[#allocation6 + $0x168] sm:$0xff]
    %v3496 = vld [vmem:[#allocation6 + $0x170] sm:$0xff]
    %v3497 = vld [vmem:[#allocation6 + $0x178] sm:$0xff]
    %v3498 = vld [vmem:[#allocation6 + $0x180] sm:$0xff]
    %v3499 = vld [vmem:[#allocation6 + $0x188] sm:$0xff]
    %v3500 = vld [vmem:[#allocation6 + $0x190] sm:$0xff]
    %v3501 = vld [vmem:[#allocation6 + $0x198] sm:$0xff]
    %v3502 = vld [vmem:[#allocation6 + $0x1a0] sm:$0xff]
    %v3503 = vld [vmem:[#allocation6 + $0x1a8] sm:$0xff]
    %v3504 = vld [vmem:[#allocation6 + $0x1b0] sm:$0xff]
    %v3505 = vld [vmem:[#allocation6 + $0x1b8] sm:$0xff]
    %v3506 = vld [vmem:[#allocation6 + $0x1c0] sm:$0xff]
    %v3507 = vld [vmem:[#allocation6 + $0x1c8] sm:$0xff]
    %v3508 = vld [vmem:[#allocation6 + $0x1d0] sm:$0xff]
    %v3509 = vld [vmem:[#allocation6 + $0x1d8] sm:$0xff]
    %v3510 = vld [vmem:[#allocation6 + $0x1e0] sm:$0xff]
    %v3511 = vld [vmem:[#allocation6 + $0x1e8] sm:$0xff]
    %v3512 = vld [vmem:[#allocation6 + $0x1f0] sm:$0xff]
    %v3513 = vld [vmem:[#allocation6 + $0x1f8] sm:$0xff]
    %v3514 = vld [vmem:[#allocation6 + $0x200] sm:$0xff]
    %v3515 = vld [vmem:[#allocation6 + $0x208] sm:$0xff]
    %v3516 = vld [vmem:[#allocation6 + $0x210] sm:$0xff]
    %v3517 = vld [vmem:[#allocation6 + $0x218] sm:$0xff]
    %v3518 = vld [vmem:[#allocation6 + $0x220] sm:$0xff]
    %v3519 = vld [vmem:[#allocation6 + $0x228] sm:$0xff]
    %v3520 = vld [vmem:[#allocation6 + $0x230] sm:$0xff]
    %v3521 = vld [vmem:[#allocation6 + $0x238] sm:$0xff]
    %v3522 = vld [vmem:[#allocation6 + $0x240] sm:$0xff]
    %v3523 = vld [vmem:[#allocation6 + $0x248] sm:$0xff]
    %v3524 = vld [vmem:[#allocation6 + $0x250] sm:$0xff]
    %v3525 = vld [vmem:[#allocation6 + $0x258] sm:$0xff]
    %v3526 = vld [vmem:[#allocation6 + $0x260] sm:$0xff]
    %v3527 = vld [vmem:[#allocation6 + $0x268] sm:$0xff]
    %v3528 = vld [vmem:[#allocation6 + $0x270] sm:$0xff]
    %v3529 = vld [vmem:[#allocation6 + $0x278] sm:$0xff]
    %v3530 = vld [vmem:[#allocation6 + $0x280] sm:$0xff]
    %v3531 = vld [vmem:[#allocation6 + $0x288] sm:$0xff]
    %v3532 = vld [vmem:[#allocation6 + $0x290] sm:$0xff]
    %v3533 = vld [vmem:[#allocation6 + $0x298] sm:$0xff]
    %v3534 = vld [vmem:[#allocation6 + $0x2a0] sm:$0xff]
    %v3535 = vld [vmem:[#allocation6 + $0x2a8] sm:$0xff]
    %v3536 = vld [vmem:[#allocation6 + $0x2b0] sm:$0xff]
    %v3537 = vld [vmem:[#allocation6 + $0x2b8] sm:$0xff]
    %v3538 = vld [vmem:[#allocation6 + $0x2c0] sm:$0xff]
    %v3539 = vld [vmem:[#allocation6 + $0x2c8] sm:$0xff]
    %v3540 = vld [vmem:[#allocation6 + $0x2d0] sm:$0xff]
    %v3541 = vld [vmem:[#allocation6 + $0x2d8] sm:$0xff]
    %v3542 = vld [vmem:[#allocation6 + $0x2e0] sm:$0xff]
    %v3543 = vld [vmem:[#allocation6 + $0x2e8] sm:$0xff]
    %v3544 = vld [vmem:[#allocation6 + $0x2f0] sm:$0xff]
    %v3545 = vld [vmem:[#allocation6 + $0x2f8] sm:$0xff]
    %v3546 = vld [vmem:[#allocation6 + $0x300] sm:$0xff]
    %v3547 = vld [vmem:[#allocation6 + $0x308] sm:$0xff]
    %v3548 = vld [vmem:[#allocation6 + $0x310] sm:$0xff]
    %v3549 = vld [vmem:[#allocation6 + $0x318] sm:$0xff]
    %v3550 = vld [vmem:[#allocation6 + $0x320] sm:$0xff]
    %v3551 = vld [vmem:[#allocation6 + $0x328] sm:$0xff]
    %v3552 = vld [vmem:[#allocation6 + $0x330] sm:$0xff]
    %v3553 = vld [vmem:[#allocation6 + $0x338] sm:$0xff]
    %v3554 = vld [vmem:[#allocation6 + $0x340] sm:$0xff]
    %v3555 = vld [vmem:[#allocation6 + $0x348] sm:$0xff]
    %v3556 = vld [vmem:[#allocation6 + $0x350] sm:$0xff]
    %v3557 = vld [vmem:[#allocation6 + $0x358] sm:$0xff]
    %v3558 = vld [vmem:[#allocation6 + $0x360] sm:$0xff]
    %v3559 = vld [vmem:[#allocation6 + $0x368] sm:$0xff]
    %v3560 = vld [vmem:[#allocation6 + $0x370] sm:$0xff]
    %v3561 = vld [vmem:[#allocation6 + $0x378] sm:$0xff]
    %v3562 = vld [vmem:[#allocation6 + $0x380] sm:$0xff]
    %v3563 = vld [vmem:[#allocation6 + $0x388] sm:$0xff]
    %v3564 = vld [vmem:[#allocation6 + $0x390] sm:$0xff]
    %v3565 = vld [vmem:[#allocation6 + $0x398] sm:$0xff]
    %v3566 = vld [vmem:[#allocation6 + $0x3a0] sm:$0xff]
    %v3567 = vld [vmem:[#allocation6 + $0x3a8] sm:$0xff]
    %v3568 = vld [vmem:[#allocation6 + $0x3b0] sm:$0xff]
    %v3569 = vld [vmem:[#allocation6 + $0x3b8] sm:$0xff]
    %v3570 = vld [vmem:[#allocation6 + $0x3c0] sm:$0xff]
    %v3571 = vld [vmem:[#allocation6 + $0x3c8] sm:$0xff]
    %v3572 = vld [vmem:[#allocation6 + $0x3d0] sm:$0xff]
    %v3573 = vld [vmem:[#allocation6 + $0x3d8] sm:$0xff]
    %v3574 = vld [vmem:[#allocation6 + $0x3e0] sm:$0xff]
    %v3575 = vld [vmem:[#allocation6 + $0x3e8] sm:$0xff]
    %v3576 = vld [vmem:[#allocation6 + $0x3f0] sm:$0xff]
    %v3577 = vld [vmem:[#allocation6 + $0x3f8] sm:$0xff]
    %v3578 = vpack.c.bf16 %v3444, %v3440
    %v3579 = vpack.c.bf16 %v3445, %v3441
    %v3580 = vpack.c.bf16 %v3446, %v3442
    %v3581 = vpack.c.bf16 %v3447, %v3443
    %v3582 = vld [vmem:[%s10] sm:$0xf]
    %v3584 = vlaneseq
    %v3585 = vshrl.u32 %v3584, 7
    %v3586 = vsub.s32 0, %v3585
    %v3587 = vrot.slane %v3582, %v3586
    %v3588 = vlaneseq
    %v3589 = vshrl.u32 %v3588, 7
    %v3590 = vsub.s32 1, %v3589
    %v3591 = vrot.slane %v3582, %v3590
    %v3592 = vlaneseq
    %v3593 = vshrl.u32 %v3592, 7
    %v3594 = vsub.s32 2, %v3593
    %v3595 = vrot.slane %v3582, %v3594
    %v3596 = vlaneseq
    %v3597 = vshrl.u32 %v3596, 7
    %v3598 = vsub.s32 3, %v3597
    %v3599 = vrot.slane %v3582, %v3598
    %v3732 = vunpack.c.l.b16 %v3450
    %v3733 = vunpack.c.h.b16 %v3450
    %v3734 = vunpack.c.l.b16 %v3451
    %v3735 = vunpack.c.h.b16 %v3451
    %v3736 = vunpack.c.l.b16 %v3452
    %v3737 = vunpack.c.h.b16 %v3452
    %v3738 = vunpack.c.l.b16 %v3453
    %v3739 = vunpack.c.h.b16 %v3453
    %v3740 = vunpack.c.l.b16 %v3454
    %v3741 = vunpack.c.h.b16 %v3454
    %v3742 = vunpack.c.l.b16 %v3455
    %v3743 = vunpack.c.h.b16 %v3455
    %v3744 = vunpack.c.l.b16 %v3456
    %v3745 = vunpack.c.h.b16 %v3456
    %v3746 = vunpack.c.l.b16 %v3457
    %v3747 = vunpack.c.h.b16 %v3457
    %v3748 = vunpack.c.l.b16 %v3458
    %v3749 = vunpack.c.h.b16 %v3458
    %v3750 = vunpack.c.l.b16 %v3459
    %v3751 = vunpack.c.h.b16 %v3459
    %v3752 = vunpack.c.l.b16 %v3460
    %v3753 = vunpack.c.h.b16 %v3460
    %v3754 = vunpack.c.l.b16 %v3461
    %v3755 = vunpack.c.h.b16 %v3461
    %v3756 = vunpack.c.l.b16 %v3462
    %v3757 = vunpack.c.h.b16 %v3462
    %v3758 = vunpack.c.l.b16 %v3463
    %v3759 = vunpack.c.h.b16 %v3463
    %v3760 = vunpack.c.l.b16 %v3464
    %v3761 = vunpack.c.h.b16 %v3464
    %v3762 = vunpack.c.l.b16 %v3465
    %v3763 = vunpack.c.h.b16 %v3465
    %v3764 = vunpack.c.l.b16 %v3466
    %v3765 = vunpack.c.h.b16 %v3466
    %v3766 = vunpack.c.l.b16 %v3467
    %v3767 = vunpack.c.h.b16 %v3467
    %v3768 = vunpack.c.l.b16 %v3468
    %v3769 = vunpack.c.h.b16 %v3468
    %v3770 = vunpack.c.l.b16 %v3469
    %v3771 = vunpack.c.h.b16 %v3469
    %v3772 = vunpack.c.l.b16 %v3470
    %v3773 = vunpack.c.h.b16 %v3470
    %v3774 = vunpack.c.l.b16 %v3471
    %v3775 = vunpack.c.h.b16 %v3471
    %v3776 = vunpack.c.l.b16 %v3472
    %v3777 = vunpack.c.h.b16 %v3472
    %v3778 = vunpack.c.l.b16 %v3473
    %v3779 = vunpack.c.h.b16 %v3473
    %v3780 = vunpack.c.l.b16 %v3474
    %v3781 = vunpack.c.h.b16 %v3474
    %v3782 = vunpack.c.l.b16 %v3475
    %v3783 = vunpack.c.h.b16 %v3475
    %v3784 = vunpack.c.l.b16 %v3476
    %v3785 = vunpack.c.h.b16 %v3476
    %v3786 = vunpack.c.l.b16 %v3477
    %v3787 = vunpack.c.h.b16 %v3477
    %v3788 = vunpack.c.l.b16 %v3478
    %v3789 = vunpack.c.h.b16 %v3478
    %v3790 = vunpack.c.l.b16 %v3479
    %v3791 = vunpack.c.h.b16 %v3479
    %v3792 = vunpack.c.l.b16 %v3480
    %v3793 = vunpack.c.h.b16 %v3480
    %v3794 = vunpack.c.l.b16 %v3481
    %v3795 = vunpack.c.h.b16 %v3481
    %v3796 = vunpack.c.l.b16 %v3482
    %v3797 = vunpack.c.h.b16 %v3482
    %v3798 = vunpack.c.l.b16 %v3483
    %v3799 = vunpack.c.h.b16 %v3483
    %v3800 = vunpack.c.l.b16 %v3484
    %v3801 = vunpack.c.h.b16 %v3484
    %v3802 = vunpack.c.l.b16 %v3485
    %v3803 = vunpack.c.h.b16 %v3485
    %v3804 = vunpack.c.l.b16 %v3486
    %v3805 = vunpack.c.h.b16 %v3486
    %v3806 = vunpack.c.l.b16 %v3487
    %v3807 = vunpack.c.h.b16 %v3487
    %v3808 = vunpack.c.l.b16 %v3488
    %v3809 = vunpack.c.h.b16 %v3488
    %v3810 = vunpack.c.l.b16 %v3489
    %v3811 = vunpack.c.h.b16 %v3489
    %v3812 = vunpack.c.l.b16 %v3490
    %v3813 = vunpack.c.h.b16 %v3490
    %v3814 = vunpack.c.l.b16 %v3491
    %v3815 = vunpack.c.h.b16 %v3491
    %v3816 = vunpack.c.l.b16 %v3492
    %v3817 = vunpack.c.h.b16 %v3492
    %v3818 = vunpack.c.l.b16 %v3493
    %v3819 = vunpack.c.h.b16 %v3493
    %v3820 = vunpack.c.l.b16 %v3494
    %v3821 = vunpack.c.h.b16 %v3494
    %v3822 = vunpack.c.l.b16 %v3495
    %v3823 = vunpack.c.h.b16 %v3495
    %v3824 = vunpack.c.l.b16 %v3496
    %v3825 = vunpack.c.h.b16 %v3496
    %v3826 = vunpack.c.l.b16 %v3497
    %v3827 = vunpack.c.h.b16 %v3497
    %v3828 = vunpack.c.l.b16 %v3498
    %v3829 = vunpack.c.h.b16 %v3498
    %v3830 = vunpack.c.l.b16 %v3499
    %v3831 = vunpack.c.h.b16 %v3499
    %v3832 = vunpack.c.l.b16 %v3500
    %v3833 = vunpack.c.h.b16 %v3500
    %v3834 = vunpack.c.l.b16 %v3501
    %v3835 = vunpack.c.h.b16 %v3501
    %v3836 = vunpack.c.l.b16 %v3502
    %v3837 = vunpack.c.h.b16 %v3502
    %v3838 = vunpack.c.l.b16 %v3503
    %v3839 = vunpack.c.h.b16 %v3503
    %v3840 = vunpack.c.l.b16 %v3504
    %v3841 = vunpack.c.h.b16 %v3504
    %v3842 = vunpack.c.l.b16 %v3505
    %v3843 = vunpack.c.h.b16 %v3505
    %v3844 = vunpack.c.l.b16 %v3506
    %v3845 = vunpack.c.h.b16 %v3506
    %v3846 = vunpack.c.l.b16 %v3507
    %v3847 = vunpack.c.h.b16 %v3507
    %v3848 = vunpack.c.l.b16 %v3508
    %v3849 = vunpack.c.h.b16 %v3508
    %v3850 = vunpack.c.l.b16 %v3509
    %v3851 = vunpack.c.h.b16 %v3509
    %v3852 = vunpack.c.l.b16 %v3510
    %v3853 = vunpack.c.h.b16 %v3510
    %v3854 = vunpack.c.l.b16 %v3511
    %v3855 = vunpack.c.h.b16 %v3511
    %v3856 = vunpack.c.l.b16 %v3512
    %v3857 = vunpack.c.h.b16 %v3512
    %v3858 = vunpack.c.l.b16 %v3513
    %v3859 = vunpack.c.h.b16 %v3513
    %v3860 = vunpack.c.l.b16 %v3514
    %v3861 = vunpack.c.h.b16 %v3514
    %v3862 = vunpack.c.l.b16 %v3515
    %v3863 = vunpack.c.h.b16 %v3515
    %v3864 = vunpack.c.l.b16 %v3516
    %v3865 = vunpack.c.h.b16 %v3516
    %v3866 = vunpack.c.l.b16 %v3517
    %v3867 = vunpack.c.h.b16 %v3517
    %v3868 = vunpack.c.l.b16 %v3518
    %v3869 = vunpack.c.h.b16 %v3518
    %v3870 = vunpack.c.l.b16 %v3519
    %v3871 = vunpack.c.h.b16 %v3519
    %v3872 = vunpack.c.l.b16 %v3520
    %v3873 = vunpack.c.h.b16 %v3520
    %v3874 = vunpack.c.l.b16 %v3521
    %v3875 = vunpack.c.h.b16 %v3521
    %v3876 = vunpack.c.l.b16 %v3522
    %v3877 = vunpack.c.h.b16 %v3522
    %v3878 = vunpack.c.l.b16 %v3523
    %v3879 = vunpack.c.h.b16 %v3523
    %v3880 = vunpack.c.l.b16 %v3524
    %v3881 = vunpack.c.h.b16 %v3524
    %v3882 = vunpack.c.l.b16 %v3525
    %v3883 = vunpack.c.h.b16 %v3525
    %v3884 = vunpack.c.l.b16 %v3526
    %v3885 = vunpack.c.h.b16 %v3526
    %v3886 = vunpack.c.l.b16 %v3527
    %v3887 = vunpack.c.h.b16 %v3527
    %v3888 = vunpack.c.l.b16 %v3528
    %v3889 = vunpack.c.h.b16 %v3528
    %v3890 = vunpack.c.l.b16 %v3529
    %v3891 = vunpack.c.h.b16 %v3529
    %v3892 = vunpack.c.l.b16 %v3530
    %v3893 = vunpack.c.h.b16 %v3530
    %v3894 = vunpack.c.l.b16 %v3531
    %v3895 = vunpack.c.h.b16 %v3531
    %v3896 = vunpack.c.l.b16 %v3532
    %v3897 = vunpack.c.h.b16 %v3532
    %v3898 = vunpack.c.l.b16 %v3533
    %v3899 = vunpack.c.h.b16 %v3533
    %v3900 = vunpack.c.l.b16 %v3534
    %v3901 = vunpack.c.h.b16 %v3534
    %v3902 = vunpack.c.l.b16 %v3535
    %v3903 = vunpack.c.h.b16 %v3535
    %v3904 = vunpack.c.l.b16 %v3536
    %v3905 = vunpack.c.h.b16 %v3536
    %v3906 = vunpack.c.l.b16 %v3537
    %v3907 = vunpack.c.h.b16 %v3537
    %v3908 = vunpack.c.l.b16 %v3538
    %v3909 = vunpack.c.h.b16 %v3538
    %v3910 = vunpack.c.l.b16 %v3539
    %v3911 = vunpack.c.h.b16 %v3539
    %v3912 = vunpack.c.l.b16 %v3540
    %v3913 = vunpack.c.h.b16 %v3540
    %v3914 = vunpack.c.l.b16 %v3541
    %v3915 = vunpack.c.h.b16 %v3541
    %v3916 = vunpack.c.l.b16 %v3542
    %v3917 = vunpack.c.h.b16 %v3542
    %v3918 = vunpack.c.l.b16 %v3543
    %v3919 = vunpack.c.h.b16 %v3543
    %v3920 = vunpack.c.l.b16 %v3544
    %v3921 = vunpack.c.h.b16 %v3544
    %v3922 = vunpack.c.l.b16 %v3545
    %v3923 = vunpack.c.h.b16 %v3545
    %v3924 = vunpack.c.l.b16 %v3546
    %v3925 = vunpack.c.h.b16 %v3546
    %v3926 = vunpack.c.l.b16 %v3547
    %v3927 = vunpack.c.h.b16 %v3547
    %v3928 = vunpack.c.l.b16 %v3548
    %v3929 = vunpack.c.h.b16 %v3548
    %v3930 = vunpack.c.l.b16 %v3549
    %v3931 = vunpack.c.h.b16 %v3549
    %v3932 = vunpack.c.l.b16 %v3550
    %v3933 = vunpack.c.h.b16 %v3550
    %v3934 = vunpack.c.l.b16 %v3551
    %v3935 = vunpack.c.h.b16 %v3551
    %v3936 = vunpack.c.l.b16 %v3552
    %v3937 = vunpack.c.h.b16 %v3552
    %v3938 = vunpack.c.l.b16 %v3553
    %v3939 = vunpack.c.h.b16 %v3553
    %v3940 = vunpack.c.l.b16 %v3554
    %v3941 = vunpack.c.h.b16 %v3554
    %v3942 = vunpack.c.l.b16 %v3555
    %v3943 = vunpack.c.h.b16 %v3555
    %v3944 = vunpack.c.l.b16 %v3556
    %v3945 = vunpack.c.h.b16 %v3556
    %v3946 = vunpack.c.l.b16 %v3557
    %v3947 = vunpack.c.h.b16 %v3557
    %v3948 = vunpack.c.l.b16 %v3558
    %v3949 = vunpack.c.h.b16 %v3558
    %v3950 = vunpack.c.l.b16 %v3559
    %v3951 = vunpack.c.h.b16 %v3559
    %v3952 = vunpack.c.l.b16 %v3560
    %v3953 = vunpack.c.h.b16 %v3560
    %v3954 = vunpack.c.l.b16 %v3561
    %v3955 = vunpack.c.h.b16 %v3561
    %v3956 = vunpack.c.l.b16 %v3562
    %v3957 = vunpack.c.h.b16 %v3562
    %v3958 = vunpack.c.l.b16 %v3563
    %v3959 = vunpack.c.h.b16 %v3563
    %v3960 = vunpack.c.l.b16 %v3564
    %v3961 = vunpack.c.h.b16 %v3564
    %v3962 = vunpack.c.l.b16 %v3565
    %v3963 = vunpack.c.h.b16 %v3565
    %v3964 = vunpack.c.l.b16 %v3566
    %v3965 = vunpack.c.h.b16 %v3566
    %v3966 = vunpack.c.l.b16 %v3567
    %v3967 = vunpack.c.h.b16 %v3567
    %v3968 = vunpack.c.l.b16 %v3568
    %v3969 = vunpack.c.h.b16 %v3568
    %v3970 = vunpack.c.l.b16 %v3569
    %v3971 = vunpack.c.h.b16 %v3569
    %v3972 = vunpack.c.l.b16 %v3570
    %v3973 = vunpack.c.h.b16 %v3570
    %v3974 = vunpack.c.l.b16 %v3571
    %v3975 = vunpack.c.h.b16 %v3571
    %v3976 = vunpack.c.l.b16 %v3572
    %v3977 = vunpack.c.h.b16 %v3572
    %v3978 = vunpack.c.l.b16 %v3573
    %v3979 = vunpack.c.h.b16 %v3573
    %v3980 = vunpack.c.l.b16 %v3574
    %v3981 = vunpack.c.h.b16 %v3574
    %v3982 = vunpack.c.l.b16 %v3575
    %v3983 = vunpack.c.h.b16 %v3575
    %v3984 = vunpack.c.l.b16 %v3576
    %v3985 = vunpack.c.h.b16 %v3576
    %v3986 = vunpack.c.l.b16 %v3577
    %v3987 = vunpack.c.h.b16 %v3577
    %v3988 = vpack.c.b16 %v3736, %v3732
    %v3989 = vpack.c.b16 %v3737, %v3733
    %v3990 = vpack.c.b16 %v3738, %v3734
    %v3991 = vpack.c.b16 %v3739, %v3735
    %v3992 = vpack.c.b16 %v3744, %v3740
    %v3993 = vpack.c.b16 %v3745, %v3741
    %v3994 = vpack.c.b16 %v3746, %v3742
    %v3995 = vpack.c.b16 %v3747, %v3743
    %v3996 = vpack.c.b16 %v3752, %v3748
    %v3997 = vpack.c.b16 %v3753, %v3749
    %v3998 = vpack.c.b16 %v3754, %v3750
    %v3999 = vpack.c.b16 %v3755, %v3751
    %v4000 = vpack.c.b16 %v3760, %v3756
    %v4001 = vpack.c.b16 %v3761, %v3757
    %v4002 = vpack.c.b16 %v3762, %v3758
    %v4003 = vpack.c.b16 %v3763, %v3759
    %v4004 = vpack.c.b16 %v3768, %v3764
    %v4005 = vpack.c.b16 %v3769, %v3765
    %v4006 = vpack.c.b16 %v3770, %v3766
    %v4007 = vpack.c.b16 %v3771, %v3767
    %v4008 = vpack.c.b16 %v3776, %v3772
    %v4009 = vpack.c.b16 %v3777, %v3773
    %v4010 = vpack.c.b16 %v3778, %v3774
    %v4011 = vpack.c.b16 %v3779, %v3775
    %v4012 = vpack.c.b16 %v3784, %v3780
    %v4013 = vpack.c.b16 %v3785, %v3781
    %v4014 = vpack.c.b16 %v3786, %v3782
    %v4015 = vpack.c.b16 %v3787, %v3783
    %v4016 = vpack.c.b16 %v3792, %v3788
    %v4017 = vpack.c.b16 %v3793, %v3789
    %v4018 = vpack.c.b16 %v3794, %v3790
    %v4019 = vpack.c.b16 %v3795, %v3791
    %v4020 = vpack.c.b16 %v3800, %v3796
    %v4021 = vpack.c.b16 %v3801, %v3797
    %v4022 = vpack.c.b16 %v3802, %v3798
    %v4023 = vpack.c.b16 %v3803, %v3799
    %v4024 = vpack.c.b16 %v3808, %v3804
    %v4025 = vpack.c.b16 %v3809, %v3805
    %v4026 = vpack.c.b16 %v3810, %v3806
    %v4027 = vpack.c.b16 %v3811, %v3807
    %v4028 = vpack.c.b16 %v3816, %v3812
    %v4029 = vpack.c.b16 %v3817, %v3813
    %v4030 = vpack.c.b16 %v3818, %v3814
    %v4031 = vpack.c.b16 %v3819, %v3815
    %v4032 = vpack.c.b16 %v3824, %v3820
    %v4033 = vpack.c.b16 %v3825, %v3821
    %v4034 = vpack.c.b16 %v3826, %v3822
    %v4035 = vpack.c.b16 %v3827, %v3823
    %v4036 = vpack.c.b16 %v3832, %v3828
    %v4037 = vpack.c.b16 %v3833, %v3829
    %v4038 = vpack.c.b16 %v3834, %v3830
    %v4039 = vpack.c.b16 %v3835, %v3831
    %v4040 = vpack.c.b16 %v3840, %v3836
    %v4041 = vpack.c.b16 %v3841, %v3837
    %v4042 = vpack.c.b16 %v3842, %v3838
    %v4043 = vpack.c.b16 %v3843, %v3839
    %v4044 = vpack.c.b16 %v3848, %v3844
    %v4045 = vpack.c.b16 %v3849, %v3845
    %v4046 = vpack.c.b16 %v3850, %v3846
    %v4047 = vpack.c.b16 %v3851, %v3847
    %v4048 = vpack.c.b16 %v3856, %v3852
    %v4049 = vpack.c.b16 %v3857, %v3853
    %v4050 = vpack.c.b16 %v3858, %v3854
    %v4051 = vpack.c.b16 %v3859, %v3855
    %v4052 = vpack.c.b16 %v3864, %v3860
    %v4053 = vpack.c.b16 %v3865, %v3861
    %v4054 = vpack.c.b16 %v3866, %v3862
    %v4055 = vpack.c.b16 %v3867, %v3863
    %v4056 = vpack.c.b16 %v3872, %v3868
    %v4057 = vpack.c.b16 %v3873, %v3869
    %v4058 = vpack.c.b16 %v3874, %v3870
    %v4059 = vpack.c.b16 %v3875, %v3871
    %v4060 = vpack.c.b16 %v3880, %v3876
    %v4061 = vpack.c.b16 %v3881, %v3877
    %v4062 = vpack.c.b16 %v3882, %v3878
    %v4063 = vpack.c.b16 %v3883, %v3879
    %v4064 = vpack.c.b16 %v3888, %v3884
    %v4065 = vpack.c.b16 %v3889, %v3885
    %v4066 = vpack.c.b16 %v3890, %v3886
    %v4067 = vpack.c.b16 %v3891, %v3887
    %v4068 = vpack.c.b16 %v3896, %v3892
    %v4069 = vpack.c.b16 %v3897, %v3893
    %v4070 = vpack.c.b16 %v3898, %v3894
    %v4071 = vpack.c.b16 %v3899, %v3895
    %v4072 = vpack.c.b16 %v3904, %v3900
    %v4073 = vpack.c.b16 %v3905, %v3901
    %v4074 = vpack.c.b16 %v3906, %v3902
    %v4075 = vpack.c.b16 %v3907, %v3903
    %v4076 = vpack.c.b16 %v3912, %v3908
    %v4077 = vpack.c.b16 %v3913, %v3909
    %v4078 = vpack.c.b16 %v3914, %v3910
    %v4079 = vpack.c.b16 %v3915, %v3911
    %v4080 = vpack.c.b16 %v3920, %v3916
    %v4081 = vpack.c.b16 %v3921, %v3917
    %v4082 = vpack.c.b16 %v3922, %v3918
    %v4083 = vpack.c.b16 %v3923, %v3919
    %v4084 = vpack.c.b16 %v3928, %v3924
    %v4085 = vpack.c.b16 %v3929, %v3925
    %v4086 = vpack.c.b16 %v3930, %v3926
    %v4087 = vpack.c.b16 %v3931, %v3927
    %v4088 = vpack.c.b16 %v3936, %v3932
    %v4089 = vpack.c.b16 %v3937, %v3933
    %v4090 = vpack.c.b16 %v3938, %v3934
    %v4091 = vpack.c.b16 %v3939, %v3935
    %v4092 = vpack.c.b16 %v3944, %v3940
    %v4093 = vpack.c.b16 %v3945, %v3941
    %v4094 = vpack.c.b16 %v3946, %v3942
    %v4095 = vpack.c.b16 %v3947, %v3943
    %v4096 = vpack.c.b16 %v3952, %v3948
    %v4097 = vpack.c.b16 %v3953, %v3949
    %v4098 = vpack.c.b16 %v3954, %v3950
    %v4099 = vpack.c.b16 %v3955, %v3951
    %v4100 = vpack.c.b16 %v3960, %v3956
    %v4101 = vpack.c.b16 %v3961, %v3957
    %v4102 = vpack.c.b16 %v3962, %v3958
    %v4103 = vpack.c.b16 %v3963, %v3959
    %v4104 = vpack.c.b16 %v3968, %v3964
    %v4105 = vpack.c.b16 %v3969, %v3965
    %v4106 = vpack.c.b16 %v3970, %v3966
    %v4107 = vpack.c.b16 %v3971, %v3967
    %v4108 = vpack.c.b16 %v3976, %v3972
    %v4109 = vpack.c.b16 %v3977, %v3973
    %v4110 = vpack.c.b16 %v3978, %v3974
    %v4111 = vpack.c.b16 %v3979, %v3975
    %v4112 = vpack.c.b16 %v3984, %v3980
    %v4113 = vpack.c.b16 %v3985, %v3981
    %v4114 = vpack.c.b16 %v3986, %v3982
    %v4115 = vpack.c.b16 %v3987, %v3983
    %4244 = vmatprep.subr.bf16.mxu0 %v4017
    %4245 = vmatpush1.bf16.msra.mxu0 %v4016
    %4246 = vmatprep.subr.bf16.mxu0 %v4013
    %4247 = vmatpush1.bf16.msra.mxu0 %v4012
    %4248 = vmatprep.subr.bf16.mxu0 %v4009
    %4249 = vmatpush1.bf16.msra.mxu0 %v4008
    %4250 = vmatprep.subr.bf16.mxu0 %v4005
    %4251 = vmatpush1.bf16.msra.mxu0 %v4004
    %4252 = vmatprep.subr.bf16.mxu0 %v4001
    %4253 = vmatpush1.bf16.msra.mxu0 %v4000
    %4254 = vmatprep.subr.bf16.mxu0 %v3997
    %4255 = vmatpush1.bf16.msra.mxu0 %v3996
    %4256 = vmatprep.subr.bf16.mxu0 %v3993
    %4257 = vmatpush1.bf16.msra.mxu0 %v3992
    %4258 = vmatprep.subr.bf16.mxu0 %v3989
    %4259 = vmatpush1.bf16.msra.mxu0 %v3988
    %4260 = vmatprep.subr.bf16.mxu0 %v4049
    %4261 = vmatpush2.bf16.msra.mxu0 %v4048
    %4262 = vmatprep.subr.bf16.mxu0 %v4045
    %4263 = vmatpush2.bf16.msra.mxu0 %v4044
    %4264 = vmatprep.subr.bf16.mxu0 %v4041
    %4265 = vmatpush2.bf16.msra.mxu0 %v4040
    %4266 = vmatprep.subr.bf16.mxu0 %v4037
    %4267 = vmatpush2.bf16.msra.mxu0 %v4036
    %4268 = vmatprep.subr.bf16.mxu0 %v4033
    %4269 = vmatpush2.bf16.msra.mxu0 %v4032
    %4270 = vmatprep.subr.bf16.mxu0 %v4029
    %4271 = vmatpush2.bf16.msra.mxu0 %v4028
    %4272 = vmatprep.subr.bf16.mxu0 %v4025
    %4273 = vmatpush2.bf16.msra.mxu0 %v4024
    %4274 = vmatprep.subr.bf16.mxu0 %v4021
    %4275 = vmatpush2.bf16.msra.mxu0 %v4020
    %4276 = vmatprep.mubr.bf16.mxu0 %v3579
    %4277 = vmatmul.mubr.bf16.gmra.mxu0 %v3578
    %v4278 = vpop.f32.mrf.mxu0
    %v4279 = vadd.f32 %v3587, %v4278
    %v4280 = vpop.f32.mrf.mxu0
    %v4281 = vadd.f32 %v3591, %v4280
    %v4282 = vpop.f32.mrf.mxu0
    %v4283 = vadd.f32 %v3587, %v4282
    %v4284 = vpop.f32.mrf.mxu0
    %v4285 = vadd.f32 %v3591, %v4284
    %4286 = vdwg.mxu0
    %4287 = vmatprep.subr.bf16.mxu0 %v4081
    %4288 = vmatpush1.bf16.msra.mxu0 %v4080
    %4289 = vmatprep.subr.bf16.mxu0 %v4077
    %4290 = vmatpush1.bf16.msra.mxu0 %v4076
    %4291 = vmatprep.subr.bf16.mxu0 %v4073
    %4292 = vmatpush1.bf16.msra.mxu0 %v4072
    %4293 = vmatprep.subr.bf16.mxu0 %v4069
    %4294 = vmatpush1.bf16.msra.mxu0 %v4068
    %4295 = vmatprep.subr.bf16.mxu0 %v4065
    %4296 = vmatpush1.bf16.msra.mxu0 %v4064
    %4297 = vmatprep.subr.bf16.mxu0 %v4061
    %4298 = vmatpush1.bf16.msra.mxu0 %v4060
    %4299 = vmatprep.subr.bf16.mxu0 %v4057
    %4300 = vmatpush1.bf16.msra.mxu0 %v4056
    %4301 = vmatprep.subr.bf16.mxu0 %v4053
    %4302 = vmatpush1.bf16.msra.mxu0 %v4052
    %4303 = vmatprep.subr.bf16.mxu0 %v4113
    %4304 = vmatpush2.bf16.msra.mxu0 %v4112
    %4305 = vmatprep.subr.bf16.mxu0 %v4109
    %4306 = vmatpush2.bf16.msra.mxu0 %v4108
    %4307 = vmatprep.subr.bf16.mxu0 %v4105
    %4308 = vmatpush2.bf16.msra.mxu0 %v4104
    %4309 = vmatprep.subr.bf16.mxu0 %v4101
    %4310 = vmatpush2.bf16.msra.mxu0 %v4100
    %4311 = vmatprep.subr.bf16.mxu0 %v4097
    %4312 = vmatpush2.bf16.msra.mxu0 %v4096
    %4313 = vmatprep.subr.bf16.mxu0 %v4093
    %4314 = vmatpush2.bf16.msra.mxu0 %v4092
    %4315 = vmatprep.subr.bf16.mxu0 %v4089
    %4316 = vmatpush2.bf16.msra.mxu0 %v4088
    %4317 = vmatprep.subr.bf16.mxu0 %v4085
    %4318 = vmatpush2.bf16.msra.mxu0 %v4084
    %4319 = vmatprep.mubr.bf16.mxu0 %v3581
    %4320 = vmatmul.mubr.bf16.gmra.mxu0 %v3580
    %v4321 = vpop.f32.mrf.mxu0
    %v4322 = vadd.f32 %v4279, %v4321
    %v4323 = vpop.f32.mrf.mxu0
    %v4324 = vadd.f32 %v4281, %v4323
    %v4325 = vpop.f32.mrf.mxu0
    %v4326 = vadd.f32 %v4283, %v4325
    %v4327 = vpop.f32.mrf.mxu0
    %v4328 = vadd.f32 %v4285, %v4327
    %4329 = vdwg.mxu0
    %4330 = vmatprep.subr.bf16.mxu0 %v4019
    %4331 = vmatpush1.bf16.msra.mxu0 %v4018
    %4332 = vmatprep.subr.bf16.mxu0 %v4015
    %4333 = vmatpush1.bf16.msra.mxu0 %v4014
    %4334 = vmatprep.subr.bf16.mxu0 %v4011
    %4335 = vmatpush1.bf16.msra.mxu0 %v4010
    %4336 = vmatprep.subr.bf16.mxu0 %v4007
    %4337 = vmatpush1.bf16.msra.mxu0 %v4006
    %4338 = vmatprep.subr.bf16.mxu0 %v4003
    %4339 = vmatpush1.bf16.msra.mxu0 %v4002
    %4340 = vmatprep.subr.bf16.mxu0 %v3999
    %4341 = vmatpush1.bf16.msra.mxu0 %v3998
    %4342 = vmatprep.subr.bf16.mxu0 %v3995
    %4343 = vmatpush1.bf16.msra.mxu0 %v3994
    %4344 = vmatprep.subr.bf16.mxu0 %v3991
    %4345 = vmatpush1.bf16.msra.mxu0 %v3990
    %4346 = vmatprep.subr.bf16.mxu0 %v4051
    %4347 = vmatpush2.bf16.msra.mxu0 %v4050
    %4348 = vmatprep.subr.bf16.mxu0 %v4047
    %4349 = vmatpush2.bf16.msra.mxu0 %v4046
    %4350 = vmatprep.subr.bf16.mxu0 %v4043
    %4351 = vmatpush2.bf16.msra.mxu0 %v4042
    %4352 = vmatprep.subr.bf16.mxu0 %v4039
    %4353 = vmatpush2.bf16.msra.mxu0 %v4038
    %4354 = vmatprep.subr.bf16.mxu0 %v4035
    %4355 = vmatpush2.bf16.msra.mxu0 %v4034
    %4356 = vmatprep.subr.bf16.mxu0 %v4031
    %4357 = vmatpush2.bf16.msra.mxu0 %v4030
    %4358 = vmatprep.subr.bf16.mxu0 %v4027
    %4359 = vmatpush2.bf16.msra.mxu0 %v4026
    %4360 = vmatprep.subr.bf16.mxu0 %v4023
    %4361 = vmatpush2.bf16.msra.mxu0 %v4022
    %4362 = vmatprep.mubr.bf16.mxu0 %v3579
    %4363 = vmatmul.mubr.bf16.gmra.mxu0 %v3578
    %v4364 = vpop.f32.mrf.mxu0
    %v4365 = vadd.f32 %v3595, %v4364
    %v4366 = vpop.f32.mrf.mxu0
    %v4367 = vadd.f32 %v3599, %v4366
    %v4368 = vpop.f32.mrf.mxu0
    %v4369 = vadd.f32 %v3595, %v4368
    %v4370 = vpop.f32.mrf.mxu0
    %v4371 = vadd.f32 %v3599, %v4370
    %4372 = vdwg.mxu0
    %4373 = vmatprep.subr.bf16.mxu0 %v4083
    %4374 = vmatpush1.bf16.msra.mxu0 %v4082
    %4375 = vmatprep.subr.bf16.mxu0 %v4079
    %4376 = vmatpush1.bf16.msra.mxu0 %v4078
    %4377 = vmatprep.subr.bf16.mxu0 %v4075
    %4378 = vmatpush1.bf16.msra.mxu0 %v4074
    %4379 = vmatprep.subr.bf16.mxu0 %v4071
    %4380 = vmatpush1.bf16.msra.mxu0 %v4070
    %4381 = vmatprep.subr.bf16.mxu0 %v4067
    %4382 = vmatpush1.bf16.msra.mxu0 %v4066
    %4383 = vmatprep.subr.bf16.mxu0 %v4063
    %4384 = vmatpush1.bf16.msra.mxu0 %v4062
    %4385 = vmatprep.subr.bf16.mxu0 %v4059
    %4386 = vmatpush1.bf16.msra.mxu0 %v4058
    %4387 = vmatprep.subr.bf16.mxu0 %v4055
    %4388 = vmatpush1.bf16.msra.mxu0 %v4054
    %4389 = vmatprep.subr.bf16.mxu0 %v4115
    %4390 = vmatpush2.bf16.msra.mxu0 %v4114
    %4391 = vmatprep.subr.bf16.mxu0 %v4111
    %4392 = vmatpush2.bf16.msra.mxu0 %v4110
    %4393 = vmatprep.subr.bf16.mxu0 %v4107
    %4394 = vmatpush2.bf16.msra.mxu0 %v4106
    %4395 = vmatprep.subr.bf16.mxu0 %v4103
    %4396 = vmatpush2.bf16.msra.mxu0 %v4102
    %4397 = vmatprep.subr.bf16.mxu0 %v4099
    %4398 = vmatpush2.bf16.msra.mxu0 %v4098
    %4399 = vmatprep.subr.bf16.mxu0 %v4095
    %4400 = vmatpush2.bf16.msra.mxu0 %v4094
    %4401 = vmatprep.subr.bf16.mxu0 %v4091
    %4402 = vmatpush2.bf16.msra.mxu0 %v4090
    %4403 = vmatprep.subr.bf16.mxu0 %v4087
    %4404 = vmatpush2.bf16.msra.mxu0 %v4086
    %4405 = vmatprep.mubr.bf16.mxu0 %v3581
    %4406 = vmatmul.mubr.bf16.gmra.mxu0 %v3580
    %v4407 = vpop.f32.mrf.mxu0
    %v4408 = vadd.f32 %v4365, %v4407
    %v4409 = vpop.f32.mrf.mxu0
    %v4410 = vadd.f32 %v4367, %v4409
    %v4411 = vpop.f32.mrf.mxu0
    %v4412 = vadd.f32 %v4369, %v4411
    %v4413 = vpop.f32.mrf.mxu0
    %v4414 = vadd.f32 %v4371, %v4413
    %4415 = vdwg.mxu0
    %v4416 = vadd.f32 %v4322, %v2464
    %v4417 = vadd.f32 %v4324, %v2465
    %v4418 = vadd.f32 %v4408, %v2466
    %v4419 = vadd.f32 %v4410, %v2467
    %v4420 = vadd.f32 %v4326, %v2468
    %v4421 = vadd.f32 %v4328, %v2469
    %v4422 = vadd.f32 %v4412, %v2470
    %v4423 = vadd.f32 %v4414, %v2471
    %v4424 = vmax.f32 %v4416, 0.0
    %v4425 = vmax.f32 %v4417, 0.0
    %v4426 = vmax.f32 %v4418, 0.0
    %v4427 = vmax.f32 %v4419, 0.0
    %v4428 = vmax.f32 %v4420, 0.0
    %v4429 = vmax.f32 %v4421, 0.0
    %v4430 = vmax.f32 %v4422, 0.0
    %v4431 = vmax.f32 %v4423, 0.0
    %s4432 = sshll.u32 %s511, 4
    %4433 = dma.done %s135, %s4432
    %v4434 = vld [vmem:[#allocation7] sm:$0xff]
    %v4435 = vld [vmem:[#allocation7 + $0x8] sm:$0xff]
    %v4436 = vld [vmem:[#allocation7 + $0x10] sm:$0xff]
    %v4437 = vld [vmem:[#allocation7 + $0x18] sm:$0xff]
    %v4438 = vld [vmem:[#allocation7 + $0x20] sm:$0xff]
    %v4439 = vld [vmem:[#allocation7 + $0x28] sm:$0xff]
    %v4440 = vld [vmem:[#allocation7 + $0x30] sm:$0xff]
    %v4441 = vld [vmem:[#allocation7 + $0x38] sm:$0xff]
    %v4442 = vld [vmem:[#allocation7 + $0x40] sm:$0xff]
    %v4443 = vld [vmem:[#allocation7 + $0x48] sm:$0xff]
    %v4444 = vld [vmem:[#allocation7 + $0x50] sm:$0xff]
    %v4445 = vld [vmem:[#allocation7 + $0x58] sm:$0xff]
    %v4446 = vld [vmem:[#allocation7 + $0x60] sm:$0xff]
    %v4447 = vld [vmem:[#allocation7 + $0x68] sm:$0xff]
    %v4448 = vld [vmem:[#allocation7 + $0x70] sm:$0xff]
    %v4449 = vld [vmem:[#allocation7 + $0x78] sm:$0xff]
    %v4450 = vld [vmem:[#allocation7 + $0x80] sm:$0xff]
    %v4451 = vld [vmem:[#allocation7 + $0x88] sm:$0xff]
    %v4452 = vld [vmem:[#allocation7 + $0x90] sm:$0xff]
    %v4453 = vld [vmem:[#allocation7 + $0x98] sm:$0xff]
    %v4454 = vld [vmem:[#allocation7 + $0xa0] sm:$0xff]
    %v4455 = vld [vmem:[#allocation7 + $0xa8] sm:$0xff]
    %v4456 = vld [vmem:[#allocation7 + $0xb0] sm:$0xff]
    %v4457 = vld [vmem:[#allocation7 + $0xb8] sm:$0xff]
    %v4458 = vld [vmem:[#allocation7 + $0xc0] sm:$0xff]
    %v4459 = vld [vmem:[#allocation7 + $0xc8] sm:$0xff]
    %v4460 = vld [vmem:[#allocation7 + $0xd0] sm:$0xff]
    %v4461 = vld [vmem:[#allocation7 + $0xd8] sm:$0xff]
    %v4462 = vld [vmem:[#allocation7 + $0xe0] sm:$0xff]
    %v4463 = vld [vmem:[#allocation7 + $0xe8] sm:$0xff]
    %v4464 = vld [vmem:[#allocation7 + $0xf0] sm:$0xff]
    %v4465 = vld [vmem:[#allocation7 + $0xf8] sm:$0xff]
    %v4466 = vld [vmem:[#allocation7 + $0x100] sm:$0xff]
    %v4467 = vld [vmem:[#allocation7 + $0x108] sm:$0xff]
    %v4468 = vld [vmem:[#allocation7 + $0x110] sm:$0xff]
    %v4469 = vld [vmem:[#allocation7 + $0x118] sm:$0xff]
    %v4470 = vld [vmem:[#allocation7 + $0x120] sm:$0xff]
    %v4471 = vld [vmem:[#allocation7 + $0x128] sm:$0xff]
    %v4472 = vld [vmem:[#allocation7 + $0x130] sm:$0xff]
    %v4473 = vld [vmem:[#allocation7 + $0x138] sm:$0xff]
    %v4474 = vld [vmem:[#allocation7 + $0x140] sm:$0xff]
    %v4475 = vld [vmem:[#allocation7 + $0x148] sm:$0xff]
    %v4476 = vld [vmem:[#allocation7 + $0x150] sm:$0xff]
    %v4477 = vld [vmem:[#allocation7 + $0x158] sm:$0xff]
    %v4478 = vld [vmem:[#allocation7 + $0x160] sm:$0xff]
    %v4479 = vld [vmem:[#allocation7 + $0x168] sm:$0xff]
    %v4480 = vld [vmem:[#allocation7 + $0x170] sm:$0xff]
    %v4481 = vld [vmem:[#allocation7 + $0x178] sm:$0xff]
    %v4482 = vld [vmem:[#allocation7 + $0x180] sm:$0xff]
    %v4483 = vld [vmem:[#allocation7 + $0x188] sm:$0xff]
    %v4484 = vld [vmem:[#allocation7 + $0x190] sm:$0xff]
    %v4485 = vld [vmem:[#allocation7 + $0x198] sm:$0xff]
    %v4486 = vld [vmem:[#allocation7 + $0x1a0] sm:$0xff]
    %v4487 = vld [vmem:[#allocation7 + $0x1a8] sm:$0xff]
    %v4488 = vld [vmem:[#allocation7 + $0x1b0] sm:$0xff]
    %v4489 = vld [vmem:[#allocation7 + $0x1b8] sm:$0xff]
    %v4490 = vld [vmem:[#allocation7 + $0x1c0] sm:$0xff]
    %v4491 = vld [vmem:[#allocation7 + $0x1c8] sm:$0xff]
    %v4492 = vld [vmem:[#allocation7 + $0x1d0] sm:$0xff]
    %v4493 = vld [vmem:[#allocation7 + $0x1d8] sm:$0xff]
    %v4494 = vld [vmem:[#allocation7 + $0x1e0] sm:$0xff]
    %v4495 = vld [vmem:[#allocation7 + $0x1e8] sm:$0xff]
    %v4496 = vld [vmem:[#allocation7 + $0x1f0] sm:$0xff]
    %v4497 = vld [vmem:[#allocation7 + $0x1f8] sm:$0xff]
    %v4498 = vld [vmem:[#allocation7 + $0x200] sm:$0xff]
    %v4499 = vld [vmem:[#allocation7 + $0x208] sm:$0xff]
    %v4500 = vld [vmem:[#allocation7 + $0x210] sm:$0xff]
    %v4501 = vld [vmem:[#allocation7 + $0x218] sm:$0xff]
    %v4502 = vld [vmem:[#allocation7 + $0x220] sm:$0xff]
    %v4503 = vld [vmem:[#allocation7 + $0x228] sm:$0xff]
    %v4504 = vld [vmem:[#allocation7 + $0x230] sm:$0xff]
    %v4505 = vld [vmem:[#allocation7 + $0x238] sm:$0xff]
    %v4506 = vld [vmem:[#allocation7 + $0x240] sm:$0xff]
    %v4507 = vld [vmem:[#allocation7 + $0x248] sm:$0xff]
    %v4508 = vld [vmem:[#allocation7 + $0x250] sm:$0xff]
    %v4509 = vld [vmem:[#allocation7 + $0x258] sm:$0xff]
    %v4510 = vld [vmem:[#allocation7 + $0x260] sm:$0xff]
    %v4511 = vld [vmem:[#allocation7 + $0x268] sm:$0xff]
    %v4512 = vld [vmem:[#allocation7 + $0x270] sm:$0xff]
    %v4513 = vld [vmem:[#allocation7 + $0x278] sm:$0xff]
    %v4514 = vld [vmem:[#allocation7 + $0x280] sm:$0xff]
    %v4515 = vld [vmem:[#allocation7 + $0x288] sm:$0xff]
    %v4516 = vld [vmem:[#allocation7 + $0x290] sm:$0xff]
    %v4517 = vld [vmem:[#allocation7 + $0x298] sm:$0xff]
    %v4518 = vld [vmem:[#allocation7 + $0x2a0] sm:$0xff]
    %v4519 = vld [vmem:[#allocation7 + $0x2a8] sm:$0xff]
    %v4520 = vld [vmem:[#allocation7 + $0x2b0] sm:$0xff]
    %v4521 = vld [vmem:[#allocation7 + $0x2b8] sm:$0xff]
    %v4522 = vld [vmem:[#allocation7 + $0x2c0] sm:$0xff]
    %v4523 = vld [vmem:[#allocation7 + $0x2c8] sm:$0xff]
    %v4524 = vld [vmem:[#allocation7 + $0x2d0] sm:$0xff]
    %v4525 = vld [vmem:[#allocation7 + $0x2d8] sm:$0xff]
    %v4526 = vld [vmem:[#allocation7 + $0x2e0] sm:$0xff]
    %v4527 = vld [vmem:[#allocation7 + $0x2e8] sm:$0xff]
    %v4528 = vld [vmem:[#allocation7 + $0x2f0] sm:$0xff]
    %v4529 = vld [vmem:[#allocation7 + $0x2f8] sm:$0xff]
    %v4530 = vld [vmem:[#allocation7 + $0x300] sm:$0xff]
    %v4531 = vld [vmem:[#allocation7 + $0x308] sm:$0xff]
    %v4532 = vld [vmem:[#allocation7 + $0x310] sm:$0xff]
    %v4533 = vld [vmem:[#allocation7 + $0x318] sm:$0xff]
    %v4534 = vld [vmem:[#allocation7 + $0x320] sm:$0xff]
    %v4535 = vld [vmem:[#allocation7 + $0x328] sm:$0xff]
    %v4536 = vld [vmem:[#allocation7 + $0x330] sm:$0xff]
    %v4537 = vld [vmem:[#allocation7 + $0x338] sm:$0xff]
    %v4538 = vld [vmem:[#allocation7 + $0x340] sm:$0xff]
    %v4539 = vld [vmem:[#allocation7 + $0x348] sm:$0xff]
    %v4540 = vld [vmem:[#allocation7 + $0x350] sm:$0xff]
    %v4541 = vld [vmem:[#allocation7 + $0x358] sm:$0xff]
    %v4542 = vld [vmem:[#allocation7 + $0x360] sm:$0xff]
    %v4543 = vld [vmem:[#allocation7 + $0x368] sm:$0xff]
    %v4544 = vld [vmem:[#allocation7 + $0x370] sm:$0xff]
    %v4545 = vld [vmem:[#allocation7 + $0x378] sm:$0xff]
    %v4546 = vld [vmem:[#allocation7 + $0x380] sm:$0xff]
    %v4547 = vld [vmem:[#allocation7 + $0x388] sm:$0xff]
    %v4548 = vld [vmem:[#allocation7 + $0x390] sm:$0xff]
    %v4549 = vld [vmem:[#allocation7 + $0x398] sm:$0xff]
    %v4550 = vld [vmem:[#allocation7 + $0x3a0] sm:$0xff]
    %v4551 = vld [vmem:[#allocation7 + $0x3a8] sm:$0xff]
    %v4552 = vld [vmem:[#allocation7 + $0x3b0] sm:$0xff]
    %v4553 = vld [vmem:[#allocation7 + $0x3b8] sm:$0xff]
    %v4554 = vld [vmem:[#allocation7 + $0x3c0] sm:$0xff]
    %v4555 = vld [vmem:[#allocation7 + $0x3c8] sm:$0xff]
    %v4556 = vld [vmem:[#allocation7 + $0x3d0] sm:$0xff]
    %v4557 = vld [vmem:[#allocation7 + $0x3d8] sm:$0xff]
    %v4558 = vld [vmem:[#allocation7 + $0x3e0] sm:$0xff]
    %v4559 = vld [vmem:[#allocation7 + $0x3e8] sm:$0xff]
    %v4560 = vld [vmem:[#allocation7 + $0x3f0] sm:$0xff]
    %v4561 = vld [vmem:[#allocation7 + $0x3f8] sm:$0xff]
    %v4562 = vpack.c.bf16 %v4428, %v4424
    %v4563 = vpack.c.bf16 %v4429, %v4425
    %v4564 = vpack.c.bf16 %v4430, %v4426
    %v4565 = vpack.c.bf16 %v4431, %v4427
    %v4566 = vld [vmem:[%s12] sm:$0xf]
    %v4568 = vlaneseq
    %v4569 = vshrl.u32 %v4568, 7
    %v4570 = vsub.s32 0, %v4569
    %v4571 = vrot.slane %v4566, %v4570
    %v4572 = vlaneseq
    %v4573 = vshrl.u32 %v4572, 7
    %v4574 = vsub.s32 1, %v4573
    %v4575 = vrot.slane %v4566, %v4574
    %v4576 = vlaneseq
    %v4577 = vshrl.u32 %v4576, 7
    %v4578 = vsub.s32 2, %v4577
    %v4579 = vrot.slane %v4566, %v4578
    %v4580 = vlaneseq
    %v4581 = vshrl.u32 %v4580, 7
    %v4582 = vsub.s32 3, %v4581
    %v4583 = vrot.slane %v4566, %v4582
    %v4716 = vunpack.c.l.b16 %v4434
    %v4717 = vunpack.c.h.b16 %v4434
    %v4718 = vunpack.c.l.b16 %v4435
    %v4719 = vunpack.c.h.b16 %v4435
    %v4720 = vunpack.c.l.b16 %v4436
    %v4721 = vunpack.c.h.b16 %v4436
    %v4722 = vunpack.c.l.b16 %v4437
    %v4723 = vunpack.c.h.b16 %v4437
    %v4724 = vunpack.c.l.b16 %v4438
    %v4725 = vunpack.c.h.b16 %v4438
    %v4726 = vunpack.c.l.b16 %v4439
    %v4727 = vunpack.c.h.b16 %v4439
    %v4728 = vunpack.c.l.b16 %v4440
    %v4729 = vunpack.c.h.b16 %v4440
    %v4730 = vunpack.c.l.b16 %v4441
    %v4731 = vunpack.c.h.b16 %v4441
    %v4732 = vunpack.c.l.b16 %v4442
    %v4733 = vunpack.c.h.b16 %v4442
    %v4734 = vunpack.c.l.b16 %v4443
    %v4735 = vunpack.c.h.b16 %v4443
    %v4736 = vunpack.c.l.b16 %v4444
    %v4737 = vunpack.c.h.b16 %v4444
    %v4738 = vunpack.c.l.b16 %v4445
    %v4739 = vunpack.c.h.b16 %v4445
    %v4740 = vunpack.c.l.b16 %v4446
    %v4741 = vunpack.c.h.b16 %v4446
    %v4742 = vunpack.c.l.b16 %v4447
    %v4743 = vunpack.c.h.b16 %v4447
    %v4744 = vunpack.c.l.b16 %v4448
    %v4745 = vunpack.c.h.b16 %v4448
    %v4746 = vunpack.c.l.b16 %v4449
    %v4747 = vunpack.c.h.b16 %v4449
    %v4748 = vunpack.c.l.b16 %v4450
    %v4749 = vunpack.c.h.b16 %v4450
    %v4750 = vunpack.c.l.b16 %v4451
    %v4751 = vunpack.c.h.b16 %v4451
    %v4752 = vunpack.c.l.b16 %v4452
    %v4753 = vunpack.c.h.b16 %v4452
    %v4754 = vunpack.c.l.b16 %v4453
    %v4755 = vunpack.c.h.b16 %v4453
    %v4756 = vunpack.c.l.b16 %v4454
    %v4757 = vunpack.c.h.b16 %v4454
    %v4758 = vunpack.c.l.b16 %v4455
    %v4759 = vunpack.c.h.b16 %v4455
    %v4760 = vunpack.c.l.b16 %v4456
    %v4761 = vunpack.c.h.b16 %v4456
    %v4762 = vunpack.c.l.b16 %v4457
    %v4763 = vunpack.c.h.b16 %v4457
    %v4764 = vunpack.c.l.b16 %v4458
    %v4765 = vunpack.c.h.b16 %v4458
    %v4766 = vunpack.c.l.b16 %v4459
    %v4767 = vunpack.c.h.b16 %v4459
    %v4768 = vunpack.c.l.b16 %v4460
    %v4769 = vunpack.c.h.b16 %v4460
    %v4770 = vunpack.c.l.b16 %v4461
    %v4771 = vunpack.c.h.b16 %v4461
    %v4772 = vunpack.c.l.b16 %v4462
    %v4773 = vunpack.c.h.b16 %v4462
    %v4774 = vunpack.c.l.b16 %v4463
    %v4775 = vunpack.c.h.b16 %v4463
    %v4776 = vunpack.c.l.b16 %v4464
    %v4777 = vunpack.c.h.b16 %v4464
    %v4778 = vunpack.c.l.b16 %v4465
    %v4779 = vunpack.c.h.b16 %v4465
    %v4780 = vunpack.c.l.b16 %v4466
    %v4781 = vunpack.c.h.b16 %v4466
    %v4782 = vunpack.c.l.b16 %v4467
    %v4783 = vunpack.c.h.b16 %v4467
    %v4784 = vunpack.c.l.b16 %v4468
    %v4785 = vunpack.c.h.b16 %v4468
    %v4786 = vunpack.c.l.b16 %v4469
    %v4787 = vunpack.c.h.b16 %v4469
    %v4788 = vunpack.c.l.b16 %v4470
    %v4789 = vunpack.c.h.b16 %v4470
    %v4790 = vunpack.c.l.b16 %v4471
    %v4791 = vunpack.c.h.b16 %v4471
    %v4792 = vunpack.c.l.b16 %v4472
    %v4793 = vunpack.c.h.b16 %v4472
    %v4794 = vunpack.c.l.b16 %v4473
    %v4795 = vunpack.c.h.b16 %v4473
    %v4796 = vunpack.c.l.b16 %v4474
    %v4797 = vunpack.c.h.b16 %v4474
    %v4798 = vunpack.c.l.b16 %v4475
    %v4799 = vunpack.c.h.b16 %v4475
    %v4800 = vunpack.c.l.b16 %v4476
    %v4801 = vunpack.c.h.b16 %v4476
    %v4802 = vunpack.c.l.b16 %v4477
    %v4803 = vunpack.c.h.b16 %v4477
    %v4804 = vunpack.c.l.b16 %v4478
    %v4805 = vunpack.c.h.b16 %v4478
    %v4806 = vunpack.c.l.b16 %v4479
    %v4807 = vunpack.c.h.b16 %v4479
    %v4808 = vunpack.c.l.b16 %v4480
    %v4809 = vunpack.c.h.b16 %v4480
    %v4810 = vunpack.c.l.b16 %v4481
    %v4811 = vunpack.c.h.b16 %v4481
    %v4812 = vunpack.c.l.b16 %v4482
    %v4813 = vunpack.c.h.b16 %v4482
    %v4814 = vunpack.c.l.b16 %v4483
    %v4815 = vunpack.c.h.b16 %v4483
    %v4816 = vunpack.c.l.b16 %v4484
    %v4817 = vunpack.c.h.b16 %v4484
    %v4818 = vunpack.c.l.b16 %v4485
    %v4819 = vunpack.c.h.b16 %v4485
    %v4820 = vunpack.c.l.b16 %v4486
    %v4821 = vunpack.c.h.b16 %v4486
    %v4822 = vunpack.c.l.b16 %v4487
    %v4823 = vunpack.c.h.b16 %v4487
    %v4824 = vunpack.c.l.b16 %v4488
    %v4825 = vunpack.c.h.b16 %v4488
    %v4826 = vunpack.c.l.b16 %v4489
    %v4827 = vunpack.c.h.b16 %v4489
    %v4828 = vunpack.c.l.b16 %v4490
    %v4829 = vunpack.c.h.b16 %v4490
    %v4830 = vunpack.c.l.b16 %v4491
    %v4831 = vunpack.c.h.b16 %v4491
    %v4832 = vunpack.c.l.b16 %v4492
    %v4833 = vunpack.c.h.b16 %v4492
    %v4834 = vunpack.c.l.b16 %v4493
    %v4835 = vunpack.c.h.b16 %v4493
    %v4836 = vunpack.c.l.b16 %v4494
    %v4837 = vunpack.c.h.b16 %v4494
    %v4838 = vunpack.c.l.b16 %v4495
    %v4839 = vunpack.c.h.b16 %v4495
    %v4840 = vunpack.c.l.b16 %v4496
    %v4841 = vunpack.c.h.b16 %v4496
    %v4842 = vunpack.c.l.b16 %v4497
    %v4843 = vunpack.c.h.b16 %v4497
    %v4844 = vunpack.c.l.b16 %v4498
    %v4845 = vunpack.c.h.b16 %v4498
    %v4846 = vunpack.c.l.b16 %v4499
    %v4847 = vunpack.c.h.b16 %v4499
    %v4848 = vunpack.c.l.b16 %v4500
    %v4849 = vunpack.c.h.b16 %v4500
    %v4850 = vunpack.c.l.b16 %v4501
    %v4851 = vunpack.c.h.b16 %v4501
    %v4852 = vunpack.c.l.b16 %v4502
    %v4853 = vunpack.c.h.b16 %v4502
    %v4854 = vunpack.c.l.b16 %v4503
    %v4855 = vunpack.c.h.b16 %v4503
    %v4856 = vunpack.c.l.b16 %v4504
    %v4857 = vunpack.c.h.b16 %v4504
    %v4858 = vunpack.c.l.b16 %v4505
    %v4859 = vunpack.c.h.b16 %v4505
    %v4860 = vunpack.c.l.b16 %v4506
    %v4861 = vunpack.c.h.b16 %v4506
    %v4862 = vunpack.c.l.b16 %v4507
    %v4863 = vunpack.c.h.b16 %v4507
    %v4864 = vunpack.c.l.b16 %v4508
    %v4865 = vunpack.c.h.b16 %v4508
    %v4866 = vunpack.c.l.b16 %v4509
    %v4867 = vunpack.c.h.b16 %v4509
    %v4868 = vunpack.c.l.b16 %v4510
    %v4869 = vunpack.c.h.b16 %v4510
    %v4870 = vunpack.c.l.b16 %v4511
    %v4871 = vunpack.c.h.b16 %v4511
    %v4872 = vunpack.c.l.b16 %v4512
    %v4873 = vunpack.c.h.b16 %v4512
    %v4874 = vunpack.c.l.b16 %v4513
    %v4875 = vunpack.c.h.b16 %v4513
    %v4876 = vunpack.c.l.b16 %v4514
    %v4877 = vunpack.c.h.b16 %v4514
    %v4878 = vunpack.c.l.b16 %v4515
    %v4879 = vunpack.c.h.b16 %v4515
    %v4880 = vunpack.c.l.b16 %v4516
    %v4881 = vunpack.c.h.b16 %v4516
    %v4882 = vunpack.c.l.b16 %v4517
    %v4883 = vunpack.c.h.b16 %v4517
    %v4884 = vunpack.c.l.b16 %v4518
    %v4885 = vunpack.c.h.b16 %v4518
    %v4886 = vunpack.c.l.b16 %v4519
    %v4887 = vunpack.c.h.b16 %v4519
    %v4888 = vunpack.c.l.b16 %v4520
    %v4889 = vunpack.c.h.b16 %v4520
    %v4890 = vunpack.c.l.b16 %v4521
    %v4891 = vunpack.c.h.b16 %v4521
    %v4892 = vunpack.c.l.b16 %v4522
    %v4893 = vunpack.c.h.b16 %v4522
    %v4894 = vunpack.c.l.b16 %v4523
    %v4895 = vunpack.c.h.b16 %v4523
    %v4896 = vunpack.c.l.b16 %v4524
    %v4897 = vunpack.c.h.b16 %v4524
    %v4898 = vunpack.c.l.b16 %v4525
    %v4899 = vunpack.c.h.b16 %v4525
    %v4900 = vunpack.c.l.b16 %v4526
    %v4901 = vunpack.c.h.b16 %v4526
    %v4902 = vunpack.c.l.b16 %v4527
    %v4903 = vunpack.c.h.b16 %v4527
    %v4904 = vunpack.c.l.b16 %v4528
    %v4905 = vunpack.c.h.b16 %v4528
    %v4906 = vunpack.c.l.b16 %v4529
    %v4907 = vunpack.c.h.b16 %v4529
    %v4908 = vunpack.c.l.b16 %v4530
    %v4909 = vunpack.c.h.b16 %v4530
    %v4910 = vunpack.c.l.b16 %v4531
    %v4911 = vunpack.c.h.b16 %v4531
    %v4912 = vunpack.c.l.b16 %v4532
    %v4913 = vunpack.c.h.b16 %v4532
    %v4914 = vunpack.c.l.b16 %v4533
    %v4915 = vunpack.c.h.b16 %v4533
    %v4916 = vunpack.c.l.b16 %v4534
    %v4917 = vunpack.c.h.b16 %v4534
    %v4918 = vunpack.c.l.b16 %v4535
    %v4919 = vunpack.c.h.b16 %v4535
    %v4920 = vunpack.c.l.b16 %v4536
    %v4921 = vunpack.c.h.b16 %v4536
    %v4922 = vunpack.c.l.b16 %v4537
    %v4923 = vunpack.c.h.b16 %v4537
    %v4924 = vunpack.c.l.b16 %v4538
    %v4925 = vunpack.c.h.b16 %v4538
    %v4926 = vunpack.c.l.b16 %v4539
    %v4927 = vunpack.c.h.b16 %v4539
    %v4928 = vunpack.c.l.b16 %v4540
    %v4929 = vunpack.c.h.b16 %v4540
    %v4930 = vunpack.c.l.b16 %v4541
    %v4931 = vunpack.c.h.b16 %v4541
    %v4932 = vunpack.c.l.b16 %v4542
    %v4933 = vunpack.c.h.b16 %v4542
    %v4934 = vunpack.c.l.b16 %v4543
    %v4935 = vunpack.c.h.b16 %v4543
    %v4936 = vunpack.c.l.b16 %v4544
    %v4937 = vunpack.c.h.b16 %v4544
    %v4938 = vunpack.c.l.b16 %v4545
    %v4939 = vunpack.c.h.b16 %v4545
    %v4940 = vunpack.c.l.b16 %v4546
    %v4941 = vunpack.c.h.b16 %v4546
    %v4942 = vunpack.c.l.b16 %v4547
    %v4943 = vunpack.c.h.b16 %v4547
    %v4944 = vunpack.c.l.b16 %v4548
    %v4945 = vunpack.c.h.b16 %v4548
    %v4946 = vunpack.c.l.b16 %v4549
    %v4947 = vunpack.c.h.b16 %v4549
    %v4948 = vunpack.c.l.b16 %v4550
    %v4949 = vunpack.c.h.b16 %v4550
    %v4950 = vunpack.c.l.b16 %v4551
    %v4951 = vunpack.c.h.b16 %v4551
    %v4952 = vunpack.c.l.b16 %v4552
    %v4953 = vunpack.c.h.b16 %v4552
    %v4954 = vunpack.c.l.b16 %v4553
    %v4955 = vunpack.c.h.b16 %v4553
    %v4956 = vunpack.c.l.b16 %v4554
    %v4957 = vunpack.c.h.b16 %v4554
    %v4958 = vunpack.c.l.b16 %v4555
    %v4959 = vunpack.c.h.b16 %v4555
    %v4960 = vunpack.c.l.b16 %v4556
    %v4961 = vunpack.c.h.b16 %v4556
    %v4962 = vunpack.c.l.b16 %v4557
    %v4963 = vunpack.c.h.b16 %v4557
    %v4964 = vunpack.c.l.b16 %v4558
    %v4965 = vunpack.c.h.b16 %v4558
    %v4966 = vunpack.c.l.b16 %v4559
    %v4967 = vunpack.c.h.b16 %v4559
    %v4968 = vunpack.c.l.b16 %v4560
    %v4969 = vunpack.c.h.b16 %v4560
    %v4970 = vunpack.c.l.b16 %v4561
    %v4971 = vunpack.c.h.b16 %v4561
    %v4972 = vpack.c.b16 %v4720, %v4716
    %v4973 = vpack.c.b16 %v4721, %v4717
    %v4974 = vpack.c.b16 %v4722, %v4718
    %v4975 = vpack.c.b16 %v4723, %v4719
    %v4976 = vpack.c.b16 %v4728, %v4724
    %v4977 = vpack.c.b16 %v4729, %v4725
    %v4978 = vpack.c.b16 %v4730, %v4726
    %v4979 = vpack.c.b16 %v4731, %v4727
    %v4980 = vpack.c.b16 %v4736, %v4732
    %v4981 = vpack.c.b16 %v4737, %v4733
    %v4982 = vpack.c.b16 %v4738, %v4734
    %v4983 = vpack.c.b16 %v4739, %v4735
    %v4984 = vpack.c.b16 %v4744, %v4740
    %v4985 = vpack.c.b16 %v4745, %v4741
    %v4986 = vpack.c.b16 %v4746, %v4742
    %v4987 = vpack.c.b16 %v4747, %v4743
    %v4988 = vpack.c.b16 %v4752, %v4748
    %v4989 = vpack.c.b16 %v4753, %v4749
    %v4990 = vpack.c.b16 %v4754, %v4750
    %v4991 = vpack.c.b16 %v4755, %v4751
    %v4992 = vpack.c.b16 %v4760, %v4756
    %v4993 = vpack.c.b16 %v4761, %v4757
    %v4994 = vpack.c.b16 %v4762, %v4758
    %v4995 = vpack.c.b16 %v4763, %v4759
    %v4996 = vpack.c.b16 %v4768, %v4764
    %v4997 = vpack.c.b16 %v4769, %v4765
    %v4998 = vpack.c.b16 %v4770, %v4766
    %v4999 = vpack.c.b16 %v4771, %v4767
    %v5000 = vpack.c.b16 %v4776, %v4772
    %v5001 = vpack.c.b16 %v4777, %v4773
    %v5002 = vpack.c.b16 %v4778, %v4774
    %v5003 = vpack.c.b16 %v4779, %v4775
    %v5004 = vpack.c.b16 %v4784, %v4780
    %v5005 = vpack.c.b16 %v4785, %v4781
    %v5006 = vpack.c.b16 %v4786, %v4782
    %v5007 = vpack.c.b16 %v4787, %v4783
    %v5008 = vpack.c.b16 %v4792, %v4788
    %v5009 = vpack.c.b16 %v4793, %v4789
    %v5010 = vpack.c.b16 %v4794, %v4790
    %v5011 = vpack.c.b16 %v4795, %v4791
    %v5012 = vpack.c.b16 %v4800, %v4796
    %v5013 = vpack.c.b16 %v4801, %v4797
    %v5014 = vpack.c.b16 %v4802, %v4798
    %v5015 = vpack.c.b16 %v4803, %v4799
    %v5016 = vpack.c.b16 %v4808, %v4804
    %v5017 = vpack.c.b16 %v4809, %v4805
    %v5018 = vpack.c.b16 %v4810, %v4806
    %v5019 = vpack.c.b16 %v4811, %v4807
    %v5020 = vpack.c.b16 %v4816, %v4812
    %v5021 = vpack.c.b16 %v4817, %v4813
    %v5022 = vpack.c.b16 %v4818, %v4814
    %v5023 = vpack.c.b16 %v4819, %v4815
    %v5024 = vpack.c.b16 %v4824, %v4820
    %v5025 = vpack.c.b16 %v4825, %v4821
    %v5026 = vpack.c.b16 %v4826, %v4822
    %v5027 = vpack.c.b16 %v4827, %v4823
    %v5028 = vpack.c.b16 %v4832, %v4828
    %v5029 = vpack.c.b16 %v4833, %v4829
    %v5030 = vpack.c.b16 %v4834, %v4830
    %v5031 = vpack.c.b16 %v4835, %v4831
    %v5032 = vpack.c.b16 %v4840, %v4836
    %v5033 = vpack.c.b16 %v4841, %v4837
    %v5034 = vpack.c.b16 %v4842, %v4838
    %v5035 = vpack.c.b16 %v4843, %v4839
    %v5036 = vpack.c.b16 %v4848, %v4844
    %v5037 = vpack.c.b16 %v4849, %v4845
    %v5038 = vpack.c.b16 %v4850, %v4846
    %v5039 = vpack.c.b16 %v4851, %v4847
    %v5040 = vpack.c.b16 %v4856, %v4852
    %v5041 = vpack.c.b16 %v4857, %v4853
    %v5042 = vpack.c.b16 %v4858, %v4854
    %v5043 = vpack.c.b16 %v4859, %v4855
    %v5044 = vpack.c.b16 %v4864, %v4860
    %v5045 = vpack.c.b16 %v4865, %v4861
    %v5046 = vpack.c.b16 %v4866, %v4862
    %v5047 = vpack.c.b16 %v4867, %v4863
    %v5048 = vpack.c.b16 %v4872, %v4868
    %v5049 = vpack.c.b16 %v4873, %v4869
    %v5050 = vpack.c.b16 %v4874, %v4870
    %v5051 = vpack.c.b16 %v4875, %v4871
    %v5052 = vpack.c.b16 %v4880, %v4876
    %v5053 = vpack.c.b16 %v4881, %v4877
    %v5054 = vpack.c.b16 %v4882, %v4878
    %v5055 = vpack.c.b16 %v4883, %v4879
    %v5056 = vpack.c.b16 %v4888, %v4884
    %v5057 = vpack.c.b16 %v4889, %v4885
    %v5058 = vpack.c.b16 %v4890, %v4886
    %v5059 = vpack.c.b16 %v4891, %v4887
    %v5060 = vpack.c.b16 %v4896, %v4892
    %v5061 = vpack.c.b16 %v4897, %v4893
    %v5062 = vpack.c.b16 %v4898, %v4894
    %v5063 = vpack.c.b16 %v4899, %v4895
    %v5064 = vpack.c.b16 %v4904, %v4900
    %v5065 = vpack.c.b16 %v4905, %v4901
    %v5066 = vpack.c.b16 %v4906, %v4902
    %v5067 = vpack.c.b16 %v4907, %v4903
    %v5068 = vpack.c.b16 %v4912, %v4908
    %v5069 = vpack.c.b16 %v4913, %v4909
    %v5070 = vpack.c.b16 %v4914, %v4910
    %v5071 = vpack.c.b16 %v4915, %v4911
    %v5072 = vpack.c.b16 %v4920, %v4916
    %v5073 = vpack.c.b16 %v4921, %v4917
    %v5074 = vpack.c.b16 %v4922, %v4918
    %v5075 = vpack.c.b16 %v4923, %v4919
    %v5076 = vpack.c.b16 %v4928, %v4924
    %v5077 = vpack.c.b16 %v4929, %v4925
    %v5078 = vpack.c.b16 %v4930, %v4926
    %v5079 = vpack.c.b16 %v4931, %v4927
    %v5080 = vpack.c.b16 %v4936, %v4932
    %v5081 = vpack.c.b16 %v4937, %v4933
    %v5082 = vpack.c.b16 %v4938, %v4934
    %v5083 = vpack.c.b16 %v4939, %v4935
    %v5084 = vpack.c.b16 %v4944, %v4940
    %v5085 = vpack.c.b16 %v4945, %v4941
    %v5086 = vpack.c.b16 %v4946, %v4942
    %v5087 = vpack.c.b16 %v4947, %v4943
    %v5088 = vpack.c.b16 %v4952, %v4948
    %v5089 = vpack.c.b16 %v4953, %v4949
    %v5090 = vpack.c.b16 %v4954, %v4950
    %v5091 = vpack.c.b16 %v4955, %v4951
    %v5092 = vpack.c.b16 %v4960, %v4956
    %v5093 = vpack.c.b16 %v4961, %v4957
    %v5094 = vpack.c.b16 %v4962, %v4958
    %v5095 = vpack.c.b16 %v4963, %v4959
    %v5096 = vpack.c.b16 %v4968, %v4964
    %v5097 = vpack.c.b16 %v4969, %v4965
    %v5098 = vpack.c.b16 %v4970, %v4966
    %v5099 = vpack.c.b16 %v4971, %v4967
    %5228 = vmatprep.subr.bf16.mxu0 %v5001
    %5229 = vmatpush1.bf16.msra.mxu0 %v5000
    %5230 = vmatprep.subr.bf16.mxu0 %v4997
    %5231 = vmatpush1.bf16.msra.mxu0 %v4996
    %5232 = vmatprep.subr.bf16.mxu0 %v4993
    %5233 = vmatpush1.bf16.msra.mxu0 %v4992
    %5234 = vmatprep.subr.bf16.mxu0 %v4989
    %5235 = vmatpush1.bf16.msra.mxu0 %v4988
    %5236 = vmatprep.subr.bf16.mxu0 %v4985
    %5237 = vmatpush1.bf16.msra.mxu0 %v4984
    %5238 = vmatprep.subr.bf16.mxu0 %v4981
    %5239 = vmatpush1.bf16.msra.mxu0 %v4980
    %5240 = vmatprep.subr.bf16.mxu0 %v4977
    %5241 = vmatpush1.bf16.msra.mxu0 %v4976
    %5242 = vmatprep.subr.bf16.mxu0 %v4973
    %5243 = vmatpush1.bf16.msra.mxu0 %v4972
    %5244 = vmatprep.subr.bf16.mxu0 %v5033
    %5245 = vmatpush2.bf16.msra.mxu0 %v5032
    %5246 = vmatprep.subr.bf16.mxu0 %v5029
    %5247 = vmatpush2.bf16.msra.mxu0 %v5028
    %5248 = vmatprep.subr.bf16.mxu0 %v5025
    %5249 = vmatpush2.bf16.msra.mxu0 %v5024
    %5250 = vmatprep.subr.bf16.mxu0 %v5021
    %5251 = vmatpush2.bf16.msra.mxu0 %v5020
    %5252 = vmatprep.subr.bf16.mxu0 %v5017
    %5253 = vmatpush2.bf16.msra.mxu0 %v5016
    %5254 = vmatprep.subr.bf16.mxu0 %v5013
    %5255 = vmatpush2.bf16.msra.mxu0 %v5012
    %5256 = vmatprep.subr.bf16.mxu0 %v5009
    %5257 = vmatpush2.bf16.msra.mxu0 %v5008
    %5258 = vmatprep.subr.bf16.mxu0 %v5005
    %5259 = vmatpush2.bf16.msra.mxu0 %v5004
    %5260 = vmatprep.mubr.bf16.mxu0 %v4563
    %5261 = vmatmul.mubr.bf16.gmra.mxu0 %v4562
    %v5262 = vpop.f32.mrf.mxu0
    %v5263 = vadd.f32 %v4571, %v5262
    %v5264 = vpop.f32.mrf.mxu0
    %v5265 = vadd.f32 %v4575, %v5264
    %v5266 = vpop.f32.mrf.mxu0
    %v5267 = vadd.f32 %v4571, %v5266
    %v5268 = vpop.f32.mrf.mxu0
    %v5269 = vadd.f32 %v4575, %v5268
    %5270 = vdwg.mxu0
    %5271 = vmatprep.subr.bf16.mxu0 %v5065
    %5272 = vmatpush1.bf16.msra.mxu0 %v5064
    %5273 = vmatprep.subr.bf16.mxu0 %v5061
    %5274 = vmatpush1.bf16.msra.mxu0 %v5060
    %5275 = vmatprep.subr.bf16.mxu0 %v5057
    %5276 = vmatpush1.bf16.msra.mxu0 %v5056
    %5277 = vmatprep.subr.bf16.mxu0 %v5053
    %5278 = vmatpush1.bf16.msra.mxu0 %v5052
    %5279 = vmatprep.subr.bf16.mxu0 %v5049
    %5280 = vmatpush1.bf16.msra.mxu0 %v5048
    %5281 = vmatprep.subr.bf16.mxu0 %v5045
    %5282 = vmatpush1.bf16.msra.mxu0 %v5044
    %5283 = vmatprep.subr.bf16.mxu0 %v5041
    %5284 = vmatpush1.bf16.msra.mxu0 %v5040
    %5285 = vmatprep.subr.bf16.mxu0 %v5037
    %5286 = vmatpush1.bf16.msra.mxu0 %v5036
    %5287 = vmatprep.subr.bf16.mxu0 %v5097
    %5288 = vmatpush2.bf16.msra.mxu0 %v5096
    %5289 = vmatprep.subr.bf16.mxu0 %v5093
    %5290 = vmatpush2.bf16.msra.mxu0 %v5092
    %5291 = vmatprep.subr.bf16.mxu0 %v5089
    %5292 = vmatpush2.bf16.msra.mxu0 %v5088
    %5293 = vmatprep.subr.bf16.mxu0 %v5085
    %5294 = vmatpush2.bf16.msra.mxu0 %v5084
    %5295 = vmatprep.subr.bf16.mxu0 %v5081
    %5296 = vmatpush2.bf16.msra.mxu0 %v5080
    %5297 = vmatprep.subr.bf16.mxu0 %v5077
    %5298 = vmatpush2.bf16.msra.mxu0 %v5076
    %5299 = vmatprep.subr.bf16.mxu0 %v5073
    %5300 = vmatpush2.bf16.msra.mxu0 %v5072
    %5301 = vmatprep.subr.bf16.mxu0 %v5069
    %5302 = vmatpush2.bf16.msra.mxu0 %v5068
    %5303 = vmatprep.mubr.bf16.mxu0 %v4565
    %5304 = vmatmul.mubr.bf16.gmra.mxu0 %v4564
    %v5305 = vpop.f32.mrf.mxu0
    %v5306 = vadd.f32 %v5263, %v5305
    %v5307 = vpop.f32.mrf.mxu0
    %v5308 = vadd.f32 %v5265, %v5307
    %v5309 = vpop.f32.mrf.mxu0
    %v5310 = vadd.f32 %v5267, %v5309
    %v5311 = vpop.f32.mrf.mxu0
    %v5312 = vadd.f32 %v5269, %v5311
    %5313 = vdwg.mxu0
    %5314 = vmatprep.subr.bf16.mxu0 %v5003
    %5315 = vmatpush1.bf16.msra.mxu0 %v5002
    %5316 = vmatprep.subr.bf16.mxu0 %v4999
    %5317 = vmatpush1.bf16.msra.mxu0 %v4998
    %5318 = vmatprep.subr.bf16.mxu0 %v4995
    %5319 = vmatpush1.bf16.msra.mxu0 %v4994
    %5320 = vmatprep.subr.bf16.mxu0 %v4991
    %5321 = vmatpush1.bf16.msra.mxu0 %v4990
    %5322 = vmatprep.subr.bf16.mxu0 %v4987
    %5323 = vmatpush1.bf16.msra.mxu0 %v4986
    %5324 = vmatprep.subr.bf16.mxu0 %v4983
    %5325 = vmatpush1.bf16.msra.mxu0 %v4982
    %5326 = vmatprep.subr.bf16.mxu0 %v4979
    %5327 = vmatpush1.bf16.msra.mxu0 %v4978
    %5328 = vmatprep.subr.bf16.mxu0 %v4975
    %5329 = vmatpush1.bf16.msra.mxu0 %v4974
    %5330 = vmatprep.subr.bf16.mxu0 %v5035
    %5331 = vmatpush2.bf16.msra.mxu0 %v5034
    %5332 = vmatprep.subr.bf16.mxu0 %v5031
    %5333 = vmatpush2.bf16.msra.mxu0 %v5030
    %5334 = vmatprep.subr.bf16.mxu0 %v5027
    %5335 = vmatpush2.bf16.msra.mxu0 %v5026
    %5336 = vmatprep.subr.bf16.mxu0 %v5023
    %5337 = vmatpush2.bf16.msra.mxu0 %v5022
    %5338 = vmatprep.subr.bf16.mxu0 %v5019
    %5339 = vmatpush2.bf16.msra.mxu0 %v5018
    %5340 = vmatprep.subr.bf16.mxu0 %v5015
    %5341 = vmatpush2.bf16.msra.mxu0 %v5014
    %5342 = vmatprep.subr.bf16.mxu0 %v5011
    %5343 = vmatpush2.bf16.msra.mxu0 %v5010
    %5344 = vmatprep.subr.bf16.mxu0 %v5007
    %5345 = vmatpush2.bf16.msra.mxu0 %v5006
    %5346 = vmatprep.mubr.bf16.mxu0 %v4563
    %5347 = vmatmul.mubr.bf16.gmra.mxu0 %v4562
    %v5348 = vpop.f32.mrf.mxu0
    %v5349 = vadd.f32 %v4579, %v5348
    %v5350 = vpop.f32.mrf.mxu0
    %v5351 = vadd.f32 %v4583, %v5350
    %v5352 = vpop.f32.mrf.mxu0
    %v5353 = vadd.f32 %v4579, %v5352
    %v5354 = vpop.f32.mrf.mxu0
    %v5355 = vadd.f32 %v4583, %v5354
    %5356 = vdwg.mxu0
    %5357 = vmatprep.subr.bf16.mxu0 %v5067
    %5358 = vmatpush1.bf16.msra.mxu0 %v5066
    %5359 = vmatprep.subr.bf16.mxu0 %v5063
    %5360 = vmatpush1.bf16.msra.mxu0 %v5062
    %5361 = vmatprep.subr.bf16.mxu0 %v5059
    %5362 = vmatpush1.bf16.msra.mxu0 %v5058
    %5363 = vmatprep.subr.bf16.mxu0 %v5055
    %5364 = vmatpush1.bf16.msra.mxu0 %v5054
    %5365 = vmatprep.subr.bf16.mxu0 %v5051
    %5366 = vmatpush1.bf16.msra.mxu0 %v5050
    %5367 = vmatprep.subr.bf16.mxu0 %v5047
    %5368 = vmatpush1.bf16.msra.mxu0 %v5046
    %5369 = vmatprep.subr.bf16.mxu0 %v5043
    %5370 = vmatpush1.bf16.msra.mxu0 %v5042
    %5371 = vmatprep.subr.bf16.mxu0 %v5039
    %5372 = vmatpush1.bf16.msra.mxu0 %v5038
    %5373 = vmatprep.subr.bf16.mxu0 %v5099
    %5374 = vmatpush2.bf16.msra.mxu0 %v5098
    %5375 = vmatprep.subr.bf16.mxu0 %v5095
    %5376 = vmatpush2.bf16.msra.mxu0 %v5094
    %5377 = vmatprep.subr.bf16.mxu0 %v5091
    %5378 = vmatpush2.bf16.msra.mxu0 %v5090
    %5379 = vmatprep.subr.bf16.mxu0 %v5087
    %5380 = vmatpush2.bf16.msra.mxu0 %v5086
    %5381 = vmatprep.subr.bf16.mxu0 %v5083
    %5382 = vmatpush2.bf16.msra.mxu0 %v5082
    %5383 = vmatprep.subr.bf16.mxu0 %v5079
    %5384 = vmatpush2.bf16.msra.mxu0 %v5078
    %5385 = vmatprep.subr.bf16.mxu0 %v5075
    %5386 = vmatpush2.bf16.msra.mxu0 %v5074
    %5387 = vmatprep.subr.bf16.mxu0 %v5071
    %5388 = vmatpush2.bf16.msra.mxu0 %v5070
    %5389 = vmatprep.mubr.bf16.mxu0 %v4565
    %5390 = vmatmul.mubr.bf16.gmra.mxu0 %v4564
    %v5391 = vpop.f32.mrf.mxu0
    %v5392 = vadd.f32 %v5349, %v5391
    %v5393 = vpop.f32.mrf.mxu0
    %v5394 = vadd.f32 %v5351, %v5393
    %v5395 = vpop.f32.mrf.mxu0
    %v5396 = vadd.f32 %v5353, %v5395
    %v5397 = vpop.f32.mrf.mxu0
    %v5398 = vadd.f32 %v5355, %v5397
    %5399 = vdwg.mxu0
    %v5400 = vmax.f32 %v5306, 0.0
    %v5401 = vmax.f32 %v5308, 0.0
    %v5402 = vmax.f32 %v5392, 0.0
    %v5403 = vmax.f32 %v5394, 0.0
    %v5404 = vmax.f32 %v5310, 0.0
    %v5405 = vmax.f32 %v5312, 0.0
    %v5406 = vmax.f32 %v5396, 0.0
    %v5407 = vmax.f32 %v5398, 0.0
    %s5408 = sshll.u32 %s511, 4
    %5409 = dma.done %s147, %s5408
    %v5410 = vld [vmem:[#allocation8] sm:$0xff]
    %v5411 = vld [vmem:[#allocation8 + $0x8] sm:$0xff]
    %v5412 = vld [vmem:[#allocation8 + $0x10] sm:$0xff]
    %v5413 = vld [vmem:[#allocation8 + $0x18] sm:$0xff]
    %v5414 = vld [vmem:[#allocation8 + $0x20] sm:$0xff]
    %v5415 = vld [vmem:[#allocation8 + $0x28] sm:$0xff]
    %v5416 = vld [vmem:[#allocation8 + $0x30] sm:$0xff]
    %v5417 = vld [vmem:[#allocation8 + $0x38] sm:$0xff]
    %v5418 = vld [vmem:[#allocation8 + $0x40] sm:$0xff]
    %v5419 = vld [vmem:[#allocation8 + $0x48] sm:$0xff]
    %v5420 = vld [vmem:[#allocation8 + $0x50] sm:$0xff]
    %v5421 = vld [vmem:[#allocation8 + $0x58] sm:$0xff]
    %v5422 = vld [vmem:[#allocation8 + $0x60] sm:$0xff]
    %v5423 = vld [vmem:[#allocation8 + $0x68] sm:$0xff]
    %v5424 = vld [vmem:[#allocation8 + $0x70] sm:$0xff]
    %v5425 = vld [vmem:[#allocation8 + $0x78] sm:$0xff]
    %v5426 = vld [vmem:[#allocation8 + $0x80] sm:$0xff]
    %v5427 = vld [vmem:[#allocation8 + $0x88] sm:$0xff]
    %v5428 = vld [vmem:[#allocation8 + $0x90] sm:$0xff]
    %v5429 = vld [vmem:[#allocation8 + $0x98] sm:$0xff]
    %v5430 = vld [vmem:[#allocation8 + $0xa0] sm:$0xff]
    %v5431 = vld [vmem:[#allocation8 + $0xa8] sm:$0xff]
    %v5432 = vld [vmem:[#allocation8 + $0xb0] sm:$0xff]
    %v5433 = vld [vmem:[#allocation8 + $0xb8] sm:$0xff]
    %v5434 = vld [vmem:[#allocation8 + $0xc0] sm:$0xff]
    %v5435 = vld [vmem:[#allocation8 + $0xc8] sm:$0xff]
    %v5436 = vld [vmem:[#allocation8 + $0xd0] sm:$0xff]
    %v5437 = vld [vmem:[#allocation8 + $0xd8] sm:$0xff]
    %v5438 = vld [vmem:[#allocation8 + $0xe0] sm:$0xff]
    %v5439 = vld [vmem:[#allocation8 + $0xe8] sm:$0xff]
    %v5440 = vld [vmem:[#allocation8 + $0xf0] sm:$0xff]
    %v5441 = vld [vmem:[#allocation8 + $0xf8] sm:$0xff]
    %v5442 = vld [vmem:[#allocation8 + $0x100] sm:$0xff]
    %v5443 = vld [vmem:[#allocation8 + $0x108] sm:$0xff]
    %v5444 = vld [vmem:[#allocation8 + $0x110] sm:$0xff]
    %v5445 = vld [vmem:[#allocation8 + $0x118] sm:$0xff]
    %v5446 = vld [vmem:[#allocation8 + $0x120] sm:$0xff]
    %v5447 = vld [vmem:[#allocation8 + $0x128] sm:$0xff]
    %v5448 = vld [vmem:[#allocation8 + $0x130] sm:$0xff]
    %v5449 = vld [vmem:[#allocation8 + $0x138] sm:$0xff]
    %v5450 = vld [vmem:[#allocation8 + $0x140] sm:$0xff]
    %v5451 = vld [vmem:[#allocation8 + $0x148] sm:$0xff]
    %v5452 = vld [vmem:[#allocation8 + $0x150] sm:$0xff]
    %v5453 = vld [vmem:[#allocation8 + $0x158] sm:$0xff]
    %v5454 = vld [vmem:[#allocation8 + $0x160] sm:$0xff]
    %v5455 = vld [vmem:[#allocation8 + $0x168] sm:$0xff]
    %v5456 = vld [vmem:[#allocation8 + $0x170] sm:$0xff]
    %v5457 = vld [vmem:[#allocation8 + $0x178] sm:$0xff]
    %v5458 = vld [vmem:[#allocation8 + $0x180] sm:$0xff]
    %v5459 = vld [vmem:[#allocation8 + $0x188] sm:$0xff]
    %v5460 = vld [vmem:[#allocation8 + $0x190] sm:$0xff]
    %v5461 = vld [vmem:[#allocation8 + $0x198] sm:$0xff]
    %v5462 = vld [vmem:[#allocation8 + $0x1a0] sm:$0xff]
    %v5463 = vld [vmem:[#allocation8 + $0x1a8] sm:$0xff]
    %v5464 = vld [vmem:[#allocation8 + $0x1b0] sm:$0xff]
    %v5465 = vld [vmem:[#allocation8 + $0x1b8] sm:$0xff]
    %v5466 = vld [vmem:[#allocation8 + $0x1c0] sm:$0xff]
    %v5467 = vld [vmem:[#allocation8 + $0x1c8] sm:$0xff]
    %v5468 = vld [vmem:[#allocation8 + $0x1d0] sm:$0xff]
    %v5469 = vld [vmem:[#allocation8 + $0x1d8] sm:$0xff]
    %v5470 = vld [vmem:[#allocation8 + $0x1e0] sm:$0xff]
    %v5471 = vld [vmem:[#allocation8 + $0x1e8] sm:$0xff]
    %v5472 = vld [vmem:[#allocation8 + $0x1f0] sm:$0xff]
    %v5473 = vld [vmem:[#allocation8 + $0x1f8] sm:$0xff]
    %v5474 = vld [vmem:[#allocation8 + $0x200] sm:$0xff]
    %v5475 = vld [vmem:[#allocation8 + $0x208] sm:$0xff]
    %v5476 = vld [vmem:[#allocation8 + $0x210] sm:$0xff]
    %v5477 = vld [vmem:[#allocation8 + $0x218] sm:$0xff]
    %v5478 = vld [vmem:[#allocation8 + $0x220] sm:$0xff]
    %v5479 = vld [vmem:[#allocation8 + $0x228] sm:$0xff]
    %v5480 = vld [vmem:[#allocation8 + $0x230] sm:$0xff]
    %v5481 = vld [vmem:[#allocation8 + $0x238] sm:$0xff]
    %v5482 = vld [vmem:[#allocation8 + $0x240] sm:$0xff]
    %v5483 = vld [vmem:[#allocation8 + $0x248] sm:$0xff]
    %v5484 = vld [vmem:[#allocation8 + $0x250] sm:$0xff]
    %v5485 = vld [vmem:[#allocation8 + $0x258] sm:$0xff]
    %v5486 = vld [vmem:[#allocation8 + $0x260] sm:$0xff]
    %v5487 = vld [vmem:[#allocation8 + $0x268] sm:$0xff]
    %v5488 = vld [vmem:[#allocation8 + $0x270] sm:$0xff]
    %v5489 = vld [vmem:[#allocation8 + $0x278] sm:$0xff]
    %v5490 = vld [vmem:[#allocation8 + $0x280] sm:$0xff]
    %v5491 = vld [vmem:[#allocation8 + $0x288] sm:$0xff]
    %v5492 = vld [vmem:[#allocation8 + $0x290] sm:$0xff]
    %v5493 = vld [vmem:[#allocation8 + $0x298] sm:$0xff]
    %v5494 = vld [vmem:[#allocation8 + $0x2a0] sm:$0xff]
    %v5495 = vld [vmem:[#allocation8 + $0x2a8] sm:$0xff]
    %v5496 = vld [vmem:[#allocation8 + $0x2b0] sm:$0xff]
    %v5497 = vld [vmem:[#allocation8 + $0x2b8] sm:$0xff]
    %v5498 = vld [vmem:[#allocation8 + $0x2c0] sm:$0xff]
    %v5499 = vld [vmem:[#allocation8 + $0x2c8] sm:$0xff]
    %v5500 = vld [vmem:[#allocation8 + $0x2d0] sm:$0xff]
    %v5501 = vld [vmem:[#allocation8 + $0x2d8] sm:$0xff]
    %v5502 = vld [vmem:[#allocation8 + $0x2e0] sm:$0xff]
    %v5503 = vld [vmem:[#allocation8 + $0x2e8] sm:$0xff]
    %v5504 = vld [vmem:[#allocation8 + $0x2f0] sm:$0xff]
    %v5505 = vld [vmem:[#allocation8 + $0x2f8] sm:$0xff]
    %v5506 = vld [vmem:[#allocation8 + $0x300] sm:$0xff]
    %v5507 = vld [vmem:[#allocation8 + $0x308] sm:$0xff]
    %v5508 = vld [vmem:[#allocation8 + $0x310] sm:$0xff]
    %v5509 = vld [vmem:[#allocation8 + $0x318] sm:$0xff]
    %v5510 = vld [vmem:[#allocation8 + $0x320] sm:$0xff]
    %v5511 = vld [vmem:[#allocation8 + $0x328] sm:$0xff]
    %v5512 = vld [vmem:[#allocation8 + $0x330] sm:$0xff]
    %v5513 = vld [vmem:[#allocation8 + $0x338] sm:$0xff]
    %v5514 = vld [vmem:[#allocation8 + $0x340] sm:$0xff]
    %v5515 = vld [vmem:[#allocation8 + $0x348] sm:$0xff]
    %v5516 = vld [vmem:[#allocation8 + $0x350] sm:$0xff]
    %v5517 = vld [vmem:[#allocation8 + $0x358] sm:$0xff]
    %v5518 = vld [vmem:[#allocation8 + $0x360] sm:$0xff]
    %v5519 = vld [vmem:[#allocation8 + $0x368] sm:$0xff]
    %v5520 = vld [vmem:[#allocation8 + $0x370] sm:$0xff]
    %v5521 = vld [vmem:[#allocation8 + $0x378] sm:$0xff]
    %v5522 = vld [vmem:[#allocation8 + $0x380] sm:$0xff]
    %v5523 = vld [vmem:[#allocation8 + $0x388] sm:$0xff]
    %v5524 = vld [vmem:[#allocation8 + $0x390] sm:$0xff]
    %v5525 = vld [vmem:[#allocation8 + $0x398] sm:$0xff]
    %v5526 = vld [vmem:[#allocation8 + $0x3a0] sm:$0xff]
    %v5527 = vld [vmem:[#allocation8 + $0x3a8] sm:$0xff]
    %v5528 = vld [vmem:[#allocation8 + $0x3b0] sm:$0xff]
    %v5529 = vld [vmem:[#allocation8 + $0x3b8] sm:$0xff]
    %v5530 = vld [vmem:[#allocation8 + $0x3c0] sm:$0xff]
    %v5531 = vld [vmem:[#allocation8 + $0x3c8] sm:$0xff]
    %v5532 = vld [vmem:[#allocation8 + $0x3d0] sm:$0xff]
    %v5533 = vld [vmem:[#allocation8 + $0x3d8] sm:$0xff]
    %v5534 = vld [vmem:[#allocation8 + $0x3e0] sm:$0xff]
    %v5535 = vld [vmem:[#allocation8 + $0x3e8] sm:$0xff]
    %v5536 = vld [vmem:[#allocation8 + $0x3f0] sm:$0xff]
    %v5537 = vld [vmem:[#allocation8 + $0x3f8] sm:$0xff]
    %v5538 = vpack.c.bf16 %v5404, %v5400
    %v5539 = vpack.c.bf16 %v5405, %v5401
    %v5540 = vpack.c.bf16 %v5406, %v5402
    %v5541 = vpack.c.bf16 %v5407, %v5403
    %v5542 = vld [vmem:[%s14] sm:$0xf]
    %v5544 = vlaneseq
    %v5545 = vshrl.u32 %v5544, 7
    %v5546 = vsub.s32 0, %v5545
    %v5547 = vrot.slane %v5542, %v5546
    %v5548 = vlaneseq
    %v5549 = vshrl.u32 %v5548, 7
    %v5550 = vsub.s32 1, %v5549
    %v5551 = vrot.slane %v5542, %v5550
    %v5552 = vlaneseq
    %v5553 = vshrl.u32 %v5552, 7
    %v5554 = vsub.s32 2, %v5553
    %v5555 = vrot.slane %v5542, %v5554
    %v5556 = vlaneseq
    %v5557 = vshrl.u32 %v5556, 7
    %v5558 = vsub.s32 3, %v5557
    %v5559 = vrot.slane %v5542, %v5558
    %v5692 = vunpack.c.l.b16 %v5410
    %v5693 = vunpack.c.h.b16 %v5410
    %v5694 = vunpack.c.l.b16 %v5411
    %v5695 = vunpack.c.h.b16 %v5411
    %v5696 = vunpack.c.l.b16 %v5412
    %v5697 = vunpack.c.h.b16 %v5412
    %v5698 = vunpack.c.l.b16 %v5413
    %v5699 = vunpack.c.h.b16 %v5413
    %v5700 = vunpack.c.l.b16 %v5414
    %v5701 = vunpack.c.h.b16 %v5414
    %v5702 = vunpack.c.l.b16 %v5415
    %v5703 = vunpack.c.h.b16 %v5415
    %v5704 = vunpack.c.l.b16 %v5416
    %v5705 = vunpack.c.h.b16 %v5416
    %v5706 = vunpack.c.l.b16 %v5417
    %v5707 = vunpack.c.h.b16 %v5417
    %v5708 = vunpack.c.l.b16 %v5418
    %v5709 = vunpack.c.h.b16 %v5418
    %v5710 = vunpack.c.l.b16 %v5419
    %v5711 = vunpack.c.h.b16 %v5419
    %v5712 = vunpack.c.l.b16 %v5420
    %v5713 = vunpack.c.h.b16 %v5420
    %v5714 = vunpack.c.l.b16 %v5421
    %v5715 = vunpack.c.h.b16 %v5421
    %v5716 = vunpack.c.l.b16 %v5422
    %v5717 = vunpack.c.h.b16 %v5422
    %v5718 = vunpack.c.l.b16 %v5423
    %v5719 = vunpack.c.h.b16 %v5423
    %v5720 = vunpack.c.l.b16 %v5424
    %v5721 = vunpack.c.h.b16 %v5424
    %v5722 = vunpack.c.l.b16 %v5425
    %v5723 = vunpack.c.h.b16 %v5425
    %v5724 = vunpack.c.l.b16 %v5426
    %v5725 = vunpack.c.h.b16 %v5426
    %v5726 = vunpack.c.l.b16 %v5427
    %v5727 = vunpack.c.h.b16 %v5427
    %v5728 = vunpack.c.l.b16 %v5428
    %v5729 = vunpack.c.h.b16 %v5428
    %v5730 = vunpack.c.l.b16 %v5429
    %v5731 = vunpack.c.h.b16 %v5429
    %v5732 = vunpack.c.l.b16 %v5430
    %v5733 = vunpack.c.h.b16 %v5430
    %v5734 = vunpack.c.l.b16 %v5431
    %v5735 = vunpack.c.h.b16 %v5431
    %v5736 = vunpack.c.l.b16 %v5432
    %v5737 = vunpack.c.h.b16 %v5432
    %v5738 = vunpack.c.l.b16 %v5433
    %v5739 = vunpack.c.h.b16 %v5433
    %v5740 = vunpack.c.l.b16 %v5434
    %v5741 = vunpack.c.h.b16 %v5434
    %v5742 = vunpack.c.l.b16 %v5435
    %v5743 = vunpack.c.h.b16 %v5435
    %v5744 = vunpack.c.l.b16 %v5436
    %v5745 = vunpack.c.h.b16 %v5436
    %v5746 = vunpack.c.l.b16 %v5437
    %v5747 = vunpack.c.h.b16 %v5437
    %v5748 = vunpack.c.l.b16 %v5438
    %v5749 = vunpack.c.h.b16 %v5438
    %v5750 = vunpack.c.l.b16 %v5439
    %v5751 = vunpack.c.h.b16 %v5439
    %v5752 = vunpack.c.l.b16 %v5440
    %v5753 = vunpack.c.h.b16 %v5440
    %v5754 = vunpack.c.l.b16 %v5441
    %v5755 = vunpack.c.h.b16 %v5441
    %v5756 = vunpack.c.l.b16 %v5442
    %v5757 = vunpack.c.h.b16 %v5442
    %v5758 = vunpack.c.l.b16 %v5443
    %v5759 = vunpack.c.h.b16 %v5443
    %v5760 = vunpack.c.l.b16 %v5444
    %v5761 = vunpack.c.h.b16 %v5444
    %v5762 = vunpack.c.l.b16 %v5445
    %v5763 = vunpack.c.h.b16 %v5445
    %v5764 = vunpack.c.l.b16 %v5446
    %v5765 = vunpack.c.h.b16 %v5446
    %v5766 = vunpack.c.l.b16 %v5447
    %v5767 = vunpack.c.h.b16 %v5447
    %v5768 = vunpack.c.l.b16 %v5448
    %v5769 = vunpack.c.h.b16 %v5448
    %v5770 = vunpack.c.l.b16 %v5449
    %v5771 = vunpack.c.h.b16 %v5449
    %v5772 = vunpack.c.l.b16 %v5450
    %v5773 = vunpack.c.h.b16 %v5450
    %v5774 = vunpack.c.l.b16 %v5451
    %v5775 = vunpack.c.h.b16 %v5451
    %v5776 = vunpack.c.l.b16 %v5452
    %v5777 = vunpack.c.h.b16 %v5452
    %v5778 = vunpack.c.l.b16 %v5453
    %v5779 = vunpack.c.h.b16 %v5453
    %v5780 = vunpack.c.l.b16 %v5454
    %v5781 = vunpack.c.h.b16 %v5454
    %v5782 = vunpack.c.l.b16 %v5455
    %v5783 = vunpack.c.h.b16 %v5455
    %v5784 = vunpack.c.l.b16 %v5456
    %v5785 = vunpack.c.h.b16 %v5456
    %v5786 = vunpack.c.l.b16 %v5457
    %v5787 = vunpack.c.h.b16 %v5457
    %v5788 = vunpack.c.l.b16 %v5458
    %v5789 = vunpack.c.h.b16 %v5458
    %v5790 = vunpack.c.l.b16 %v5459
    %v5791 = vunpack.c.h.b16 %v5459
    %v5792 = vunpack.c.l.b16 %v5460
    %v5793 = vunpack.c.h.b16 %v5460
    %v5794 = vunpack.c.l.b16 %v5461
    %v5795 = vunpack.c.h.b16 %v5461
    %v5796 = vunpack.c.l.b16 %v5462
    %v5797 = vunpack.c.h.b16 %v5462
    %v5798 = vunpack.c.l.b16 %v5463
    %v5799 = vunpack.c.h.b16 %v5463
    %v5800 = vunpack.c.l.b16 %v5464
    %v5801 = vunpack.c.h.b16 %v5464
    %v5802 = vunpack.c.l.b16 %v5465
    %v5803 = vunpack.c.h.b16 %v5465
    %v5804 = vunpack.c.l.b16 %v5466
    %v5805 = vunpack.c.h.b16 %v5466
    %v5806 = vunpack.c.l.b16 %v5467
    %v5807 = vunpack.c.h.b16 %v5467
    %v5808 = vunpack.c.l.b16 %v5468
    %v5809 = vunpack.c.h.b16 %v5468
    %v5810 = vunpack.c.l.b16 %v5469
    %v5811 = vunpack.c.h.b16 %v5469
    %v5812 = vunpack.c.l.b16 %v5470
    %v5813 = vunpack.c.h.b16 %v5470
    %v5814 = vunpack.c.l.b16 %v5471
    %v5815 = vunpack.c.h.b16 %v5471
    %v5816 = vunpack.c.l.b16 %v5472
    %v5817 = vunpack.c.h.b16 %v5472
    %v5818 = vunpack.c.l.b16 %v5473
    %v5819 = vunpack.c.h.b16 %v5473
    %v5820 = vunpack.c.l.b16 %v5474
    %v5821 = vunpack.c.h.b16 %v5474
    %v5822 = vunpack.c.l.b16 %v5475
    %v5823 = vunpack.c.h.b16 %v5475
    %v5824 = vunpack.c.l.b16 %v5476
    %v5825 = vunpack.c.h.b16 %v5476
    %v5826 = vunpack.c.l.b16 %v5477
    %v5827 = vunpack.c.h.b16 %v5477
    %v5828 = vunpack.c.l.b16 %v5478
    %v5829 = vunpack.c.h.b16 %v5478
    %v5830 = vunpack.c.l.b16 %v5479
    %v5831 = vunpack.c.h.b16 %v5479
    %v5832 = vunpack.c.l.b16 %v5480
    %v5833 = vunpack.c.h.b16 %v5480
    %v5834 = vunpack.c.l.b16 %v5481
    %v5835 = vunpack.c.h.b16 %v5481
    %v5836 = vunpack.c.l.b16 %v5482
    %v5837 = vunpack.c.h.b16 %v5482
    %v5838 = vunpack.c.l.b16 %v5483
    %v5839 = vunpack.c.h.b16 %v5483
    %v5840 = vunpack.c.l.b16 %v5484
    %v5841 = vunpack.c.h.b16 %v5484
    %v5842 = vunpack.c.l.b16 %v5485
    %v5843 = vunpack.c.h.b16 %v5485
    %v5844 = vunpack.c.l.b16 %v5486
    %v5845 = vunpack.c.h.b16 %v5486
    %v5846 = vunpack.c.l.b16 %v5487
    %v5847 = vunpack.c.h.b16 %v5487
    %v5848 = vunpack.c.l.b16 %v5488
    %v5849 = vunpack.c.h.b16 %v5488
    %v5850 = vunpack.c.l.b16 %v5489
    %v5851 = vunpack.c.h.b16 %v5489
    %v5852 = vunpack.c.l.b16 %v5490
    %v5853 = vunpack.c.h.b16 %v5490
    %v5854 = vunpack.c.l.b16 %v5491
    %v5855 = vunpack.c.h.b16 %v5491
    %v5856 = vunpack.c.l.b16 %v5492
    %v5857 = vunpack.c.h.b16 %v5492
    %v5858 = vunpack.c.l.b16 %v5493
    %v5859 = vunpack.c.h.b16 %v5493
    %v5860 = vunpack.c.l.b16 %v5494
    %v5861 = vunpack.c.h.b16 %v5494
    %v5862 = vunpack.c.l.b16 %v5495
    %v5863 = vunpack.c.h.b16 %v5495
    %v5864 = vunpack.c.l.b16 %v5496
    %v5865 = vunpack.c.h.b16 %v5496
    %v5866 = vunpack.c.l.b16 %v5497
    %v5867 = vunpack.c.h.b16 %v5497
    %v5868 = vunpack.c.l.b16 %v5498
    %v5869 = vunpack.c.h.b16 %v5498
    %v5870 = vunpack.c.l.b16 %v5499
    %v5871 = vunpack.c.h.b16 %v5499
    %v5872 = vunpack.c.l.b16 %v5500
    %v5873 = vunpack.c.h.b16 %v5500
    %v5874 = vunpack.c.l.b16 %v5501
    %v5875 = vunpack.c.h.b16 %v5501
    %v5876 = vunpack.c.l.b16 %v5502
    %v5877 = vunpack.c.h.b16 %v5502
    %v5878 = vunpack.c.l.b16 %v5503
    %v5879 = vunpack.c.h.b16 %v5503
    %v5880 = vunpack.c.l.b16 %v5504
    %v5881 = vunpack.c.h.b16 %v5504
    %v5882 = vunpack.c.l.b16 %v5505
    %v5883 = vunpack.c.h.b16 %v5505
    %v5884 = vunpack.c.l.b16 %v5506
    %v5885 = vunpack.c.h.b16 %v5506
    %v5886 = vunpack.c.l.b16 %v5507
    %v5887 = vunpack.c.h.b16 %v5507
    %v5888 = vunpack.c.l.b16 %v5508
    %v5889 = vunpack.c.h.b16 %v5508
    %v5890 = vunpack.c.l.b16 %v5509
    %v5891 = vunpack.c.h.b16 %v5509
    %v5892 = vunpack.c.l.b16 %v5510
    %v5893 = vunpack.c.h.b16 %v5510
    %v5894 = vunpack.c.l.b16 %v5511
    %v5895 = vunpack.c.h.b16 %v5511
    %v5896 = vunpack.c.l.b16 %v5512
    %v5897 = vunpack.c.h.b16 %v5512
    %v5898 = vunpack.c.l.b16 %v5513
    %v5899 = vunpack.c.h.b16 %v5513
    %v5900 = vunpack.c.l.b16 %v5514
    %v5901 = vunpack.c.h.b16 %v5514
    %v5902 = vunpack.c.l.b16 %v5515
    %v5903 = vunpack.c.h.b16 %v5515
    %v5904 = vunpack.c.l.b16 %v5516
    %v5905 = vunpack.c.h.b16 %v5516
    %v5906 = vunpack.c.l.b16 %v5517
    %v5907 = vunpack.c.h.b16 %v5517
    %v5908 = vunpack.c.l.b16 %v5518
    %v5909 = vunpack.c.h.b16 %v5518
    %v5910 = vunpack.c.l.b16 %v5519
    %v5911 = vunpack.c.h.b16 %v5519
    %v5912 = vunpack.c.l.b16 %v5520
    %v5913 = vunpack.c.h.b16 %v5520
    %v5914 = vunpack.c.l.b16 %v5521
    %v5915 = vunpack.c.h.b16 %v5521
    %v5916 = vunpack.c.l.b16 %v5522
    %v5917 = vunpack.c.h.b16 %v5522
    %v5918 = vunpack.c.l.b16 %v5523
    %v5919 = vunpack.c.h.b16 %v5523
    %v5920 = vunpack.c.l.b16 %v5524
    %v5921 = vunpack.c.h.b16 %v5524
    %v5922 = vunpack.c.l.b16 %v5525
    %v5923 = vunpack.c.h.b16 %v5525
    %v5924 = vunpack.c.l.b16 %v5526
    %v5925 = vunpack.c.h.b16 %v5526
    %v5926 = vunpack.c.l.b16 %v5527
    %v5927 = vunpack.c.h.b16 %v5527
    %v5928 = vunpack.c.l.b16 %v5528
    %v5929 = vunpack.c.h.b16 %v5528
    %v5930 = vunpack.c.l.b16 %v5529
    %v5931 = vunpack.c.h.b16 %v5529
    %v5932 = vunpack.c.l.b16 %v5530
    %v5933 = vunpack.c.h.b16 %v5530
    %v5934 = vunpack.c.l.b16 %v5531
    %v5935 = vunpack.c.h.b16 %v5531
    %v5936 = vunpack.c.l.b16 %v5532
    %v5937 = vunpack.c.h.b16 %v5532
    %v5938 = vunpack.c.l.b16 %v5533
    %v5939 = vunpack.c.h.b16 %v5533
    %v5940 = vunpack.c.l.b16 %v5534
    %v5941 = vunpack.c.h.b16 %v5534
    %v5942 = vunpack.c.l.b16 %v5535
    %v5943 = vunpack.c.h.b16 %v5535
    %v5944 = vunpack.c.l.b16 %v5536
    %v5945 = vunpack.c.h.b16 %v5536
    %v5946 = vunpack.c.l.b16 %v5537
    %v5947 = vunpack.c.h.b16 %v5537
    %v5948 = vpack.c.b16 %v5696, %v5692
    %v5949 = vpack.c.b16 %v5697, %v5693
    %v5950 = vpack.c.b16 %v5698, %v5694
    %v5951 = vpack.c.b16 %v5699, %v5695
    %v5952 = vpack.c.b16 %v5704, %v5700
    %v5953 = vpack.c.b16 %v5705, %v5701
    %v5954 = vpack.c.b16 %v5706, %v5702
    %v5955 = vpack.c.b16 %v5707, %v5703
    %v5956 = vpack.c.b16 %v5712, %v5708
    %v5957 = vpack.c.b16 %v5713, %v5709
    %v5958 = vpack.c.b16 %v5714, %v5710
    %v5959 = vpack.c.b16 %v5715, %v5711
    %v5960 = vpack.c.b16 %v5720, %v5716
    %v5961 = vpack.c.b16 %v5721, %v5717
    %v5962 = vpack.c.b16 %v5722, %v5718
    %v5963 = vpack.c.b16 %v5723, %v5719
    %v5964 = vpack.c.b16 %v5728, %v5724
    %v5965 = vpack.c.b16 %v5729, %v5725
    %v5966 = vpack.c.b16 %v5730, %v5726
    %v5967 = vpack.c.b16 %v5731, %v5727
    %v5968 = vpack.c.b16 %v5736, %v5732
    %v5969 = vpack.c.b16 %v5737, %v5733
    %v5970 = vpack.c.b16 %v5738, %v5734
    %v5971 = vpack.c.b16 %v5739, %v5735
    %v5972 = vpack.c.b16 %v5744, %v5740
    %v5973 = vpack.c.b16 %v5745, %v5741
    %v5974 = vpack.c.b16 %v5746, %v5742
    %v5975 = vpack.c.b16 %v5747, %v5743
    %v5976 = vpack.c.b16 %v5752, %v5748
    %v5977 = vpack.c.b16 %v5753, %v5749
    %v5978 = vpack.c.b16 %v5754, %v5750
    %v5979 = vpack.c.b16 %v5755, %v5751
    %v5980 = vpack.c.b16 %v5760, %v5756
    %v5981 = vpack.c.b16 %v5761, %v5757
    %v5982 = vpack.c.b16 %v5762, %v5758
    %v5983 = vpack.c.b16 %v5763, %v5759
    %v5984 = vpack.c.b16 %v5768, %v5764
    %v5985 = vpack.c.b16 %v5769, %v5765
    %v5986 = vpack.c.b16 %v5770, %v5766
    %v5987 = vpack.c.b16 %v5771, %v5767
    %v5988 = vpack.c.b16 %v5776, %v5772
    %v5989 = vpack.c.b16 %v5777, %v5773
    %v5990 = vpack.c.b16 %v5778, %v5774
    %v5991 = vpack.c.b16 %v5779, %v5775
    %v5992 = vpack.c.b16 %v5784, %v5780
    %v5993 = vpack.c.b16 %v5785, %v5781
    %v5994 = vpack.c.b16 %v5786, %v5782
    %v5995 = vpack.c.b16 %v5787, %v5783
    %v5996 = vpack.c.b16 %v5792, %v5788
    %v5997 = vpack.c.b16 %v5793, %v5789
    %v5998 = vpack.c.b16 %v5794, %v5790
    %v5999 = vpack.c.b16 %v5795, %v5791
    %v6000 = vpack.c.b16 %v5800, %v5796
    %v6001 = vpack.c.b16 %v5801, %v5797
    %v6002 = vpack.c.b16 %v5802, %v5798
    %v6003 = vpack.c.b16 %v5803, %v5799
    %v6004 = vpack.c.b16 %v5808, %v5804
    %v6005 = vpack.c.b16 %v5809, %v5805
    %v6006 = vpack.c.b16 %v5810, %v5806
    %v6007 = vpack.c.b16 %v5811, %v5807
    %v6008 = vpack.c.b16 %v5816, %v5812
    %v6009 = vpack.c.b16 %v5817, %v5813
    %v6010 = vpack.c.b16 %v5818, %v5814
    %v6011 = vpack.c.b16 %v5819, %v5815
    %v6012 = vpack.c.b16 %v5824, %v5820
    %v6013 = vpack.c.b16 %v5825, %v5821
    %v6014 = vpack.c.b16 %v5826, %v5822
    %v6015 = vpack.c.b16 %v5827, %v5823
    %v6016 = vpack.c.b16 %v5832, %v5828
    %v6017 = vpack.c.b16 %v5833, %v5829
    %v6018 = vpack.c.b16 %v5834, %v5830
    %v6019 = vpack.c.b16 %v5835, %v5831
    %v6020 = vpack.c.b16 %v5840, %v5836
    %v6021 = vpack.c.b16 %v5841, %v5837
    %v6022 = vpack.c.b16 %v5842, %v5838
    %v6023 = vpack.c.b16 %v5843, %v5839
    %v6024 = vpack.c.b16 %v5848, %v5844
    %v6025 = vpack.c.b16 %v5849, %v5845
    %v6026 = vpack.c.b16 %v5850, %v5846
    %v6027 = vpack.c.b16 %v5851, %v5847
    %v6028 = vpack.c.b16 %v5856, %v5852
    %v6029 = vpack.c.b16 %v5857, %v5853
    %v6030 = vpack.c.b16 %v5858, %v5854
    %v6031 = vpack.c.b16 %v5859, %v5855
    %v6032 = vpack.c.b16 %v5864, %v5860
    %v6033 = vpack.c.b16 %v5865, %v5861
    %v6034 = vpack.c.b16 %v5866, %v5862
    %v6035 = vpack.c.b16 %v5867, %v5863
    %v6036 = vpack.c.b16 %v5872, %v5868
    %v6037 = vpack.c.b16 %v5873, %v5869
    %v6038 = vpack.c.b16 %v5874, %v5870
    %v6039 = vpack.c.b16 %v5875, %v5871
    %v6040 = vpack.c.b16 %v5880, %v5876
    %v6041 = vpack.c.b16 %v5881, %v5877
    %v6042 = vpack.c.b16 %v5882, %v5878
    %v6043 = vpack.c.b16 %v5883, %v5879
    %v6044 = vpack.c.b16 %v5888, %v5884
    %v6045 = vpack.c.b16 %v5889, %v5885
    %v6046 = vpack.c.b16 %v5890, %v5886
    %v6047 = vpack.c.b16 %v5891, %v5887
    %v6048 = vpack.c.b16 %v5896, %v5892
    %v6049 = vpack.c.b16 %v5897, %v5893
    %v6050 = vpack.c.b16 %v5898, %v5894
    %v6051 = vpack.c.b16 %v5899, %v5895
    %v6052 = vpack.c.b16 %v5904, %v5900
    %v6053 = vpack.c.b16 %v5905, %v5901
    %v6054 = vpack.c.b16 %v5906, %v5902
    %v6055 = vpack.c.b16 %v5907, %v5903
    %v6056 = vpack.c.b16 %v5912, %v5908
    %v6057 = vpack.c.b16 %v5913, %v5909
    %v6058 = vpack.c.b16 %v5914, %v5910
    %v6059 = vpack.c.b16 %v5915, %v5911
    %v6060 = vpack.c.b16 %v5920, %v5916
    %v6061 = vpack.c.b16 %v5921, %v5917
    %v6062 = vpack.c.b16 %v5922, %v5918
    %v6063 = vpack.c.b16 %v5923, %v5919
    %v6064 = vpack.c.b16 %v5928, %v5924
    %v6065 = vpack.c.b16 %v5929, %v5925
    %v6066 = vpack.c.b16 %v5930, %v5926
    %v6067 = vpack.c.b16 %v5931, %v5927
    %v6068 = vpack.c.b16 %v5936, %v5932
    %v6069 = vpack.c.b16 %v5937, %v5933
    %v6070 = vpack.c.b16 %v5938, %v5934
    %v6071 = vpack.c.b16 %v5939, %v5935
    %v6072 = vpack.c.b16 %v5944, %v5940
    %v6073 = vpack.c.b16 %v5945, %v5941
    %v6074 = vpack.c.b16 %v5946, %v5942
    %v6075 = vpack.c.b16 %v5947, %v5943
    %6204 = vmatprep.subr.bf16.mxu0 %v5977
    %6205 = vmatpush1.bf16.msra.mxu0 %v5976
    %6206 = vmatprep.subr.bf16.mxu0 %v5973
    %6207 = vmatpush1.bf16.msra.mxu0 %v5972
    %6208 = vmatprep.subr.bf16.mxu0 %v5969
    %6209 = vmatpush1.bf16.msra.mxu0 %v5968
    %6210 = vmatprep.subr.bf16.mxu0 %v5965
    %6211 = vmatpush1.bf16.msra.mxu0 %v5964
    %6212 = vmatprep.subr.bf16.mxu0 %v5961
    %6213 = vmatpush1.bf16.msra.mxu0 %v5960
    %6214 = vmatprep.subr.bf16.mxu0 %v5957
    %6215 = vmatpush1.bf16.msra.mxu0 %v5956
    %6216 = vmatprep.subr.bf16.mxu0 %v5953
    %6217 = vmatpush1.bf16.msra.mxu0 %v5952
    %6218 = vmatprep.subr.bf16.mxu0 %v5949
    %6219 = vmatpush1.bf16.msra.mxu0 %v5948
    %6220 = vmatprep.subr.bf16.mxu0 %v6009
    %6221 = vmatpush2.bf16.msra.mxu0 %v6008
    %6222 = vmatprep.subr.bf16.mxu0 %v6005
    %6223 = vmatpush2.bf16.msra.mxu0 %v6004
    %6224 = vmatprep.subr.bf16.mxu0 %v6001
    %6225 = vmatpush2.bf16.msra.mxu0 %v6000
    %6226 = vmatprep.subr.bf16.mxu0 %v5997
    %6227 = vmatpush2.bf16.msra.mxu0 %v5996
    %6228 = vmatprep.subr.bf16.mxu0 %v5993
    %6229 = vmatpush2.bf16.msra.mxu0 %v5992
    %6230 = vmatprep.subr.bf16.mxu0 %v5989
    %6231 = vmatpush2.bf16.msra.mxu0 %v5988
    %6232 = vmatprep.subr.bf16.mxu0 %v5985
    %6233 = vmatpush2.bf16.msra.mxu0 %v5984
    %6234 = vmatprep.subr.bf16.mxu0 %v5981
    %6235 = vmatpush2.bf16.msra.mxu0 %v5980
    %6236 = vmatprep.mubr.bf16.mxu0 %v5539
    %6237 = vmatmul.mubr.bf16.gmra.mxu0 %v5538
    %v6238 = vpop.f32.mrf.mxu0
    %v6239 = vadd.f32 %v5547, %v6238
    %v6240 = vpop.f32.mrf.mxu0
    %v6241 = vadd.f32 %v5551, %v6240
    %v6242 = vpop.f32.mrf.mxu0
    %v6243 = vadd.f32 %v5547, %v6242
    %v6244 = vpop.f32.mrf.mxu0
    %v6245 = vadd.f32 %v5551, %v6244
    %6246 = vdwg.mxu0
    %6247 = vmatprep.subr.bf16.mxu0 %v6041
    %6248 = vmatpush1.bf16.msra.mxu0 %v6040
    %6249 = vmatprep.subr.bf16.mxu0 %v6037
    %6250 = vmatpush1.bf16.msra.mxu0 %v6036
    %6251 = vmatprep.subr.bf16.mxu0 %v6033
    %6252 = vmatpush1.bf16.msra.mxu0 %v6032
    %6253 = vmatprep.subr.bf16.mxu0 %v6029
    %6254 = vmatpush1.bf16.msra.mxu0 %v6028
    %6255 = vmatprep.subr.bf16.mxu0 %v6025
    %6256 = vmatpush1.bf16.msra.mxu0 %v6024
    %6257 = vmatprep.subr.bf16.mxu0 %v6021
    %6258 = vmatpush1.bf16.msra.mxu0 %v6020
    %6259 = vmatprep.subr.bf16.mxu0 %v6017
    %6260 = vmatpush1.bf16.msra.mxu0 %v6016
    %6261 = vmatprep.subr.bf16.mxu0 %v6013
    %6262 = vmatpush1.bf16.msra.mxu0 %v6012
    %6263 = vmatprep.subr.bf16.mxu0 %v6073
    %6264 = vmatpush2.bf16.msra.mxu0 %v6072
    %6265 = vmatprep.subr.bf16.mxu0 %v6069
    %6266 = vmatpush2.bf16.msra.mxu0 %v6068
    %6267 = vmatprep.subr.bf16.mxu0 %v6065
    %6268 = vmatpush2.bf16.msra.mxu0 %v6064
    %6269 = vmatprep.subr.bf16.mxu0 %v6061
    %6270 = vmatpush2.bf16.msra.mxu0 %v6060
    %6271 = vmatprep.subr.bf16.mxu0 %v6057
    %6272 = vmatpush2.bf16.msra.mxu0 %v6056
    %6273 = vmatprep.subr.bf16.mxu0 %v6053
    %6274 = vmatpush2.bf16.msra.mxu0 %v6052
    %6275 = vmatprep.subr.bf16.mxu0 %v6049
    %6276 = vmatpush2.bf16.msra.mxu0 %v6048
    %6277 = vmatprep.subr.bf16.mxu0 %v6045
    %6278 = vmatpush2.bf16.msra.mxu0 %v6044
    %6279 = vmatprep.mubr.bf16.mxu0 %v5541
    %6280 = vmatmul.mubr.bf16.gmra.mxu0 %v5540
    %v6281 = vpop.f32.mrf.mxu0
    %v6282 = vadd.f32 %v6239, %v6281
    %v6283 = vpop.f32.mrf.mxu0
    %v6284 = vadd.f32 %v6241, %v6283
    %v6285 = vpop.f32.mrf.mxu0
    %v6286 = vadd.f32 %v6243, %v6285
    %v6287 = vpop.f32.mrf.mxu0
    %v6288 = vadd.f32 %v6245, %v6287
    %6289 = vdwg.mxu0
    %6290 = vmatprep.subr.bf16.mxu0 %v5979
    %6291 = vmatpush1.bf16.msra.mxu0 %v5978
    %6292 = vmatprep.subr.bf16.mxu0 %v5975
    %6293 = vmatpush1.bf16.msra.mxu0 %v5974
    %6294 = vmatprep.subr.bf16.mxu0 %v5971
    %6295 = vmatpush1.bf16.msra.mxu0 %v5970
    %6296 = vmatprep.subr.bf16.mxu0 %v5967
    %6297 = vmatpush1.bf16.msra.mxu0 %v5966
    %6298 = vmatprep.subr.bf16.mxu0 %v5963
    %6299 = vmatpush1.bf16.msra.mxu0 %v5962
    %6300 = vmatprep.subr.bf16.mxu0 %v5959
    %6301 = vmatpush1.bf16.msra.mxu0 %v5958
    %6302 = vmatprep.subr.bf16.mxu0 %v5955
    %6303 = vmatpush1.bf16.msra.mxu0 %v5954
    %6304 = vmatprep.subr.bf16.mxu0 %v5951
    %6305 = vmatpush1.bf16.msra.mxu0 %v5950
    %6306 = vmatprep.subr.bf16.mxu0 %v6011
    %6307 = vmatpush2.bf16.msra.mxu0 %v6010
    %6308 = vmatprep.subr.bf16.mxu0 %v6007
    %6309 = vmatpush2.bf16.msra.mxu0 %v6006
    %6310 = vmatprep.subr.bf16.mxu0 %v6003
    %6311 = vmatpush2.bf16.msra.mxu0 %v6002
    %6312 = vmatprep.subr.bf16.mxu0 %v5999
    %6313 = vmatpush2.bf16.msra.mxu0 %v5998
    %6314 = vmatprep.subr.bf16.mxu0 %v5995
    %6315 = vmatpush2.bf16.msra.mxu0 %v5994
    %6316 = vmatprep.subr.bf16.mxu0 %v5991
    %6317 = vmatpush2.bf16.msra.mxu0 %v5990
    %6318 = vmatprep.subr.bf16.mxu0 %v5987
    %6319 = vmatpush2.bf16.msra.mxu0 %v5986
    %6320 = vmatprep.subr.bf16.mxu0 %v5983
    %6321 = vmatpush2.bf16.msra.mxu0 %v5982
    %6322 = vmatprep.mubr.bf16.mxu0 %v5539
    %6323 = vmatmul.mubr.bf16.gmra.mxu0 %v5538
    %v6324 = vpop.f32.mrf.mxu0
    %v6325 = vadd.f32 %v5555, %v6324
    %v6326 = vpop.f32.mrf.mxu0
    %v6327 = vadd.f32 %v5559, %v6326
    %v6328 = vpop.f32.mrf.mxu0
    %v6329 = vadd.f32 %v5555, %v6328
    %v6330 = vpop.f32.mrf.mxu0
    %v6331 = vadd.f32 %v5559, %v6330
    %6332 = vdwg.mxu0
    %6333 = vmatprep.subr.bf16.mxu0 %v6043
    %6334 = vmatpush1.bf16.msra.mxu0 %v6042
    %6335 = vmatprep.subr.bf16.mxu0 %v6039
    %6336 = vmatpush1.bf16.msra.mxu0 %v6038
    %6337 = vmatprep.subr.bf16.mxu0 %v6035
    %6338 = vmatpush1.bf16.msra.mxu0 %v6034
    %6339 = vmatprep.subr.bf16.mxu0 %v6031
    %6340 = vmatpush1.bf16.msra.mxu0 %v6030
    %6341 = vmatprep.subr.bf16.mxu0 %v6027
    %6342 = vmatpush1.bf16.msra.mxu0 %v6026
    %6343 = vmatprep.subr.bf16.mxu0 %v6023
    %6344 = vmatpush1.bf16.msra.mxu0 %v6022
    %6345 = vmatprep.subr.bf16.mxu0 %v6019
    %6346 = vmatpush1.bf16.msra.mxu0 %v6018
    %6347 = vmatprep.subr.bf16.mxu0 %v6015
    %6348 = vmatpush1.bf16.msra.mxu0 %v6014
    %6349 = vmatprep.subr.bf16.mxu0 %v6075
    %6350 = vmatpush2.bf16.msra.mxu0 %v6074
    %6351 = vmatprep.subr.bf16.mxu0 %v6071
    %6352 = vmatpush2.bf16.msra.mxu0 %v6070
    %6353 = vmatprep.subr.bf16.mxu0 %v6067
    %6354 = vmatpush2.bf16.msra.mxu0 %v6066
    %6355 = vmatprep.subr.bf16.mxu0 %v6063
    %6356 = vmatpush2.bf16.msra.mxu0 %v6062
    %6357 = vmatprep.subr.bf16.mxu0 %v6059
    %6358 = vmatpush2.bf16.msra.mxu0 %v6058
    %6359 = vmatprep.subr.bf16.mxu0 %v6055
    %6360 = vmatpush2.bf16.msra.mxu0 %v6054
    %6361 = vmatprep.subr.bf16.mxu0 %v6051
    %6362 = vmatpush2.bf16.msra.mxu0 %v6050
    %6363 = vmatprep.subr.bf16.mxu0 %v6047
    %6364 = vmatpush2.bf16.msra.mxu0 %v6046
    %6365 = vmatprep.mubr.bf16.mxu0 %v5541
    %6366 = vmatmul.mubr.bf16.gmra.mxu0 %v5540
    %v6367 = vpop.f32.mrf.mxu0
    %v6368 = vadd.f32 %v6325, %v6367
    %v6369 = vpop.f32.mrf.mxu0
    %v6370 = vadd.f32 %v6327, %v6369
    %v6371 = vpop.f32.mrf.mxu0
    %v6372 = vadd.f32 %v6329, %v6371
    %v6373 = vpop.f32.mrf.mxu0
    %v6374 = vadd.f32 %v6331, %v6373
    %6375 = vdwg.mxu0
    %v6376 = vadd.f32 %v6282, %v4424
    %v6377 = vadd.f32 %v6284, %v4425
    %v6378 = vadd.f32 %v6368, %v4426
    %v6379 = vadd.f32 %v6370, %v4427
    %v6380 = vadd.f32 %v6286, %v4428
    %v6381 = vadd.f32 %v6288, %v4429
    %v6382 = vadd.f32 %v6372, %v4430
    %v6383 = vadd.f32 %v6374, %v4431
    %v6384 = vmax.f32 %v6376, 0.0
    %v6385 = vmax.f32 %v6377, 0.0
    %v6386 = vmax.f32 %v6378, 0.0
    %v6387 = vmax.f32 %v6379, 0.0
    %v6388 = vmax.f32 %v6380, 0.0
    %v6389 = vmax.f32 %v6381, 0.0
    %v6390 = vmax.f32 %v6382, 0.0
    %v6391 = vmax.f32 %v6383, 0.0
    %s6392 = smul.u32 %s510, 2
    %s6393 = sshll.u32 %s6392, 4
    %6394 = dma.done %s159, %s6393
    %v6395 = vld [vmem:[#allocation9] sm:$0xff]
    %v6396 = vld [vmem:[#allocation9 + $0x8] sm:$0xff]
    %v6397 = vld [vmem:[#allocation9 + $0x10] sm:$0xff]
    %v6398 = vld [vmem:[#allocation9 + $0x18] sm:$0xff]
    %v6399 = vld [vmem:[#allocation9 + $0x20] sm:$0xff]
    %v6400 = vld [vmem:[#allocation9 + $0x28] sm:$0xff]
    %v6401 = vld [vmem:[#allocation9 + $0x30] sm:$0xff]
    %v6402 = vld [vmem:[#allocation9 + $0x38] sm:$0xff]
    %v6403 = vld [vmem:[#allocation9 + $0x40] sm:$0xff]
    %v6404 = vld [vmem:[#allocation9 + $0x48] sm:$0xff]
    %v6405 = vld [vmem:[#allocation9 + $0x50] sm:$0xff]
    %v6406 = vld [vmem:[#allocation9 + $0x58] sm:$0xff]
    %v6407 = vld [vmem:[#allocation9 + $0x60] sm:$0xff]
    %v6408 = vld [vmem:[#allocation9 + $0x68] sm:$0xff]
    %v6409 = vld [vmem:[#allocation9 + $0x70] sm:$0xff]
    %v6410 = vld [vmem:[#allocation9 + $0x78] sm:$0xff]
    %v6411 = vld [vmem:[#allocation9 + $0x80] sm:$0xff]
    %v6412 = vld [vmem:[#allocation9 + $0x88] sm:$0xff]
    %v6413 = vld [vmem:[#allocation9 + $0x90] sm:$0xff]
    %v6414 = vld [vmem:[#allocation9 + $0x98] sm:$0xff]
    %v6415 = vld [vmem:[#allocation9 + $0xa0] sm:$0xff]
    %v6416 = vld [vmem:[#allocation9 + $0xa8] sm:$0xff]
    %v6417 = vld [vmem:[#allocation9 + $0xb0] sm:$0xff]
    %v6418 = vld [vmem:[#allocation9 + $0xb8] sm:$0xff]
    %v6419 = vld [vmem:[#allocation9 + $0xc0] sm:$0xff]
    %v6420 = vld [vmem:[#allocation9 + $0xc8] sm:$0xff]
    %v6421 = vld [vmem:[#allocation9 + $0xd0] sm:$0xff]
    %v6422 = vld [vmem:[#allocation9 + $0xd8] sm:$0xff]
    %v6423 = vld [vmem:[#allocation9 + $0xe0] sm:$0xff]
    %v6424 = vld [vmem:[#allocation9 + $0xe8] sm:$0xff]
    %v6425 = vld [vmem:[#allocation9 + $0xf0] sm:$0xff]
    %v6426 = vld [vmem:[#allocation9 + $0xf8] sm:$0xff]
    %v6427 = vld [vmem:[#allocation9 + $0x100] sm:$0xff]
    %v6428 = vld [vmem:[#allocation9 + $0x108] sm:$0xff]
    %v6429 = vld [vmem:[#allocation9 + $0x110] sm:$0xff]
    %v6430 = vld [vmem:[#allocation9 + $0x118] sm:$0xff]
    %v6431 = vld [vmem:[#allocation9 + $0x120] sm:$0xff]
    %v6432 = vld [vmem:[#allocation9 + $0x128] sm:$0xff]
    %v6433 = vld [vmem:[#allocation9 + $0x130] sm:$0xff]
    %v6434 = vld [vmem:[#allocation9 + $0x138] sm:$0xff]
    %v6435 = vld [vmem:[#allocation9 + $0x140] sm:$0xff]
    %v6436 = vld [vmem:[#allocation9 + $0x148] sm:$0xff]
    %v6437 = vld [vmem:[#allocation9 + $0x150] sm:$0xff]
    %v6438 = vld [vmem:[#allocation9 + $0x158] sm:$0xff]
    %v6439 = vld [vmem:[#allocation9 + $0x160] sm:$0xff]
    %v6440 = vld [vmem:[#allocation9 + $0x168] sm:$0xff]
    %v6441 = vld [vmem:[#allocation9 + $0x170] sm:$0xff]
    %v6442 = vld [vmem:[#allocation9 + $0x178] sm:$0xff]
    %v6443 = vld [vmem:[#allocation9 + $0x180] sm:$0xff]
    %v6444 = vld [vmem:[#allocation9 + $0x188] sm:$0xff]
    %v6445 = vld [vmem:[#allocation9 + $0x190] sm:$0xff]
    %v6446 = vld [vmem:[#allocation9 + $0x198] sm:$0xff]
    %v6447 = vld [vmem:[#allocation9 + $0x1a0] sm:$0xff]
    %v6448 = vld [vmem:[#allocation9 + $0x1a8] sm:$0xff]
    %v6449 = vld [vmem:[#allocation9 + $0x1b0] sm:$0xff]
    %v6450 = vld [vmem:[#allocation9 + $0x1b8] sm:$0xff]
    %v6451 = vld [vmem:[#allocation9 + $0x1c0] sm:$0xff]
    %v6452 = vld [vmem:[#allocation9 + $0x1c8] sm:$0xff]
    %v6453 = vld [vmem:[#allocation9 + $0x1d0] sm:$0xff]
    %v6454 = vld [vmem:[#allocation9 + $0x1d8] sm:$0xff]
    %v6455 = vld [vmem:[#allocation9 + $0x1e0] sm:$0xff]
    %v6456 = vld [vmem:[#allocation9 + $0x1e8] sm:$0xff]
    %v6457 = vld [vmem:[#allocation9 + $0x1f0] sm:$0xff]
    %v6458 = vld [vmem:[#allocation9 + $0x1f8] sm:$0xff]
    %v6459 = vpack.c.bf16 %v6388, %v6384
    %v6460 = vpack.c.bf16 %v6389, %v6385
    %v6461 = vpack.c.bf16 %v6390, %v6386
    %v6462 = vpack.c.bf16 %v6391, %v6387
    %v6463 = vld [vmem:[%s16] sm:$0x3]
    %v6465 = vlaneseq
    %v6466 = vshrl.u32 %v6465, 7
    %v6467 = vsub.s32 0, %v6466
    %v6468 = vrot.slane %v6463, %v6467
    %v6469 = vlaneseq
    %v6470 = vshrl.u32 %v6469, 7
    %v6471 = vsub.s32 1, %v6470
    %v6472 = vrot.slane %v6463, %v6471
    %v6539 = vunpack.c.l.b16 %v6395
    %v6540 = vunpack.c.h.b16 %v6395
    %v6541 = vunpack.c.l.b16 %v6396
    %v6542 = vunpack.c.h.b16 %v6396
    %v6543 = vunpack.c.l.b16 %v6397
    %v6544 = vunpack.c.h.b16 %v6397
    %v6545 = vunpack.c.l.b16 %v6398
    %v6546 = vunpack.c.h.b16 %v6398
    %v6547 = vunpack.c.l.b16 %v6399
    %v6548 = vunpack.c.h.b16 %v6399
    %v6549 = vunpack.c.l.b16 %v6400
    %v6550 = vunpack.c.h.b16 %v6400
    %v6551 = vunpack.c.l.b16 %v6401
    %v6552 = vunpack.c.h.b16 %v6401
    %v6553 = vunpack.c.l.b16 %v6402
    %v6554 = vunpack.c.h.b16 %v6402
    %v6555 = vunpack.c.l.b16 %v6403
    %v6556 = vunpack.c.h.b16 %v6403
    %v6557 = vunpack.c.l.b16 %v6404
    %v6558 = vunpack.c.h.b16 %v6404
    %v6559 = vunpack.c.l.b16 %v6405
    %v6560 = vunpack.c.h.b16 %v6405
    %v6561 = vunpack.c.l.b16 %v6406
    %v6562 = vunpack.c.h.b16 %v6406
    %v6563 = vunpack.c.l.b16 %v6407
    %v6564 = vunpack.c.h.b16 %v6407
    %v6565 = vunpack.c.l.b16 %v6408
    %v6566 = vunpack.c.h.b16 %v6408
    %v6567 = vunpack.c.l.b16 %v6409
    %v6568 = vunpack.c.h.b16 %v6409
    %v6569 = vunpack.c.l.b16 %v6410
    %v6570 = vunpack.c.h.b16 %v6410
    %v6571 = vunpack.c.l.b16 %v6411
    %v6572 = vunpack.c.h.b16 %v6411
    %v6573 = vunpack.c.l.b16 %v6412
    %v6574 = vunpack.c.h.b16 %v6412
    %v6575 = vunpack.c.l.b16 %v6413
    %v6576 = vunpack.c.h.b16 %v6413
    %v6577 = vunpack.c.l.b16 %v6414
    %v6578 = vunpack.c.h.b16 %v6414
    %v6579 = vunpack.c.l.b16 %v6415
    %v6580 = vunpack.c.h.b16 %v6415
    %v6581 = vunpack.c.l.b16 %v6416
    %v6582 = vunpack.c.h.b16 %v6416
    %v6583 = vunpack.c.l.b16 %v6417
    %v6584 = vunpack.c.h.b16 %v6417
    %v6585 = vunpack.c.l.b16 %v6418
    %v6586 = vunpack.c.h.b16 %v6418
    %v6587 = vunpack.c.l.b16 %v6419
    %v6588 = vunpack.c.h.b16 %v6419
    %v6589 = vunpack.c.l.b16 %v6420
    %v6590 = vunpack.c.h.b16 %v6420
    %v6591 = vunpack.c.l.b16 %v6421
    %v6592 = vunpack.c.h.b16 %v6421
    %v6593 = vunpack.c.l.b16 %v6422
    %v6594 = vunpack.c.h.b16 %v6422
    %v6595 = vunpack.c.l.b16 %v6423
    %v6596 = vunpack.c.h.b16 %v6423
    %v6597 = vunpack.c.l.b16 %v6424
    %v6598 = vunpack.c.h.b16 %v6424
    %v6599 = vunpack.c.l.b16 %v6425
    %v6600 = vunpack.c.h.b16 %v6425
    %v6601 = vunpack.c.l.b16 %v6426
    %v6602 = vunpack.c.h.b16 %v6426
    %v6603 = vunpack.c.l.b16 %v6427
    %v6604 = vunpack.c.h.b16 %v6427
    %v6605 = vunpack.c.l.b16 %v6428
    %v6606 = vunpack.c.h.b16 %v6428
    %v6607 = vunpack.c.l.b16 %v6429
    %v6608 = vunpack.c.h.b16 %v6429
    %v6609 = vunpack.c.l.b16 %v6430
    %v6610 = vunpack.c.h.b16 %v6430
    %v6611 = vunpack.c.l.b16 %v6431
    %v6612 = vunpack.c.h.b16 %v6431
    %v6613 = vunpack.c.l.b16 %v6432
    %v6614 = vunpack.c.h.b16 %v6432
    %v6615 = vunpack.c.l.b16 %v6433
    %v6616 = vunpack.c.h.b16 %v6433
    %v6617 = vunpack.c.l.b16 %v6434
    %v6618 = vunpack.c.h.b16 %v6434
    %v6619 = vunpack.c.l.b16 %v6435
    %v6620 = vunpack.c.h.b16 %v6435
    %v6621 = vunpack.c.l.b16 %v6436
    %v6622 = vunpack.c.h.b16 %v6436
    %v6623 = vunpack.c.l.b16 %v6437
    %v6624 = vunpack.c.h.b16 %v6437
    %v6625 = vunpack.c.l.b16 %v6438
    %v6626 = vunpack.c.h.b16 %v6438
    %v6627 = vunpack.c.l.b16 %v6439
    %v6628 = vunpack.c.h.b16 %v6439
    %v6629 = vunpack.c.l.b16 %v6440
    %v6630 = vunpack.c.h.b16 %v6440
    %v6631 = vunpack.c.l.b16 %v6441
    %v6632 = vunpack.c.h.b16 %v6441
    %v6633 = vunpack.c.l.b16 %v6442
    %v6634 = vunpack.c.h.b16 %v6442
    %v6635 = vunpack.c.l.b16 %v6443
    %v6636 = vunpack.c.h.b16 %v6443
    %v6637 = vunpack.c.l.b16 %v6444
    %v6638 = vunpack.c.h.b16 %v6444
    %v6639 = vunpack.c.l.b16 %v6445
    %v6640 = vunpack.c.h.b16 %v6445
    %v6641 = vunpack.c.l.b16 %v6446
    %v6642 = vunpack.c.h.b16 %v6446
    %v6643 = vunpack.c.l.b16 %v6447
    %v6644 = vunpack.c.h.b16 %v6447
    %v6645 = vunpack.c.l.b16 %v6448
    %v6646 = vunpack.c.h.b16 %v6448
    %v6647 = vunpack.c.l.b16 %v6449
    %v6648 = vunpack.c.h.b16 %v6449
    %v6649 = vunpack.c.l.b16 %v6450
    %v6650 = vunpack.c.h.b16 %v6450
    %v6651 = vunpack.c.l.b16 %v6451
    %v6652 = vunpack.c.h.b16 %v6451
    %v6653 = vunpack.c.l.b16 %v6452
    %v6654 = vunpack.c.h.b16 %v6452
    %v6655 = vunpack.c.l.b16 %v6453
    %v6656 = vunpack.c.h.b16 %v6453
    %v6657 = vunpack.c.l.b16 %v6454
    %v6658 = vunpack.c.h.b16 %v6454
    %v6659 = vunpack.c.l.b16 %v6455
    %v6660 = vunpack.c.h.b16 %v6455
    %v6661 = vunpack.c.l.b16 %v6456
    %v6662 = vunpack.c.h.b16 %v6456
    %v6663 = vunpack.c.l.b16 %v6457
    %v6664 = vunpack.c.h.b16 %v6457
    %v6665 = vunpack.c.l.b16 %v6458
    %v6666 = vunpack.c.h.b16 %v6458
    %v6667 = vpack.c.b16 %v6541, %v6539
    %v6668 = vpack.c.b16 %v6542, %v6540
    %v6669 = vpack.c.b16 %v6545, %v6543
    %v6670 = vpack.c.b16 %v6546, %v6544
    %v6671 = vpack.c.b16 %v6549, %v6547
    %v6672 = vpack.c.b16 %v6550, %v6548
    %v6673 = vpack.c.b16 %v6553, %v6551
    %v6674 = vpack.c.b16 %v6554, %v6552
    %v6675 = vpack.c.b16 %v6557, %v6555
    %v6676 = vpack.c.b16 %v6558, %v6556
    %v6677 = vpack.c.b16 %v6561, %v6559
    %v6678 = vpack.c.b16 %v6562, %v6560
    %v6679 = vpack.c.b16 %v6565, %v6563
    %v6680 = vpack.c.b16 %v6566, %v6564
    %v6681 = vpack.c.b16 %v6569, %v6567
    %v6682 = vpack.c.b16 %v6570, %v6568
    %v6683 = vpack.c.b16 %v6573, %v6571
    %v6684 = vpack.c.b16 %v6574, %v6572
    %v6685 = vpack.c.b16 %v6577, %v6575
    %v6686 = vpack.c.b16 %v6578, %v6576
    %v6687 = vpack.c.b16 %v6581, %v6579
    %v6688 = vpack.c.b16 %v6582, %v6580
    %v6689 = vpack.c.b16 %v6585, %v6583
    %v6690 = vpack.c.b16 %v6586, %v6584
    %v6691 = vpack.c.b16 %v6589, %v6587
    %v6692 = vpack.c.b16 %v6590, %v6588
    %v6693 = vpack.c.b16 %v6593, %v6591
    %v6694 = vpack.c.b16 %v6594, %v6592
    %v6695 = vpack.c.b16 %v6597, %v6595
    %v6696 = vpack.c.b16 %v6598, %v6596
    %v6697 = vpack.c.b16 %v6601, %v6599
    %v6698 = vpack.c.b16 %v6602, %v6600
    %v6699 = vpack.c.b16 %v6605, %v6603
    %v6700 = vpack.c.b16 %v6606, %v6604
    %v6701 = vpack.c.b16 %v6609, %v6607
    %v6702 = vpack.c.b16 %v6610, %v6608
    %v6703 = vpack.c.b16 %v6613, %v6611
    %v6704 = vpack.c.b16 %v6614, %v6612
    %v6705 = vpack.c.b16 %v6617, %v6615
    %v6706 = vpack.c.b16 %v6618, %v6616
    %v6707 = vpack.c.b16 %v6621, %v6619
    %v6708 = vpack.c.b16 %v6622, %v6620
    %v6709 = vpack.c.b16 %v6625, %v6623
    %v6710 = vpack.c.b16 %v6626, %v6624
    %v6711 = vpack.c.b16 %v6629, %v6627
    %v6712 = vpack.c.b16 %v6630, %v6628
    %v6713 = vpack.c.b16 %v6633, %v6631
    %v6714 = vpack.c.b16 %v6634, %v6632
    %v6715 = vpack.c.b16 %v6637, %v6635
    %v6716 = vpack.c.b16 %v6638, %v6636
    %v6717 = vpack.c.b16 %v6641, %v6639
    %v6718 = vpack.c.b16 %v6642, %v6640
    %v6719 = vpack.c.b16 %v6645, %v6643
    %v6720 = vpack.c.b16 %v6646, %v6644
    %v6721 = vpack.c.b16 %v6649, %v6647
    %v6722 = vpack.c.b16 %v6650, %v6648
    %v6723 = vpack.c.b16 %v6653, %v6651
    %v6724 = vpack.c.b16 %v6654, %v6652
    %v6725 = vpack.c.b16 %v6657, %v6655
    %v6726 = vpack.c.b16 %v6658, %v6656
    %v6727 = vpack.c.b16 %v6661, %v6659
    %v6728 = vpack.c.b16 %v6662, %v6660
    %v6729 = vpack.c.b16 %v6665, %v6663
    %v6730 = vpack.c.b16 %v6666, %v6664
    %6795 = vmatprep.subr.bf16.mxu0 %v6682
    %6796 = vmatpush1.bf16.msra.mxu0 %v6681
    %6797 = vmatprep.subr.bf16.mxu0 %v6680
    %6798 = vmatpush1.bf16.msra.mxu0 %v6679
    %6799 = vmatprep.subr.bf16.mxu0 %v6678
    %6800 = vmatpush1.bf16.msra.mxu0 %v6677
    %6801 = vmatprep.subr.bf16.mxu0 %v6676
    %6802 = vmatpush1.bf16.msra.mxu0 %v6675
    %6803 = vmatprep.subr.bf16.mxu0 %v6674
    %6804 = vmatpush1.bf16.msra.mxu0 %v6673
    %6805 = vmatprep.subr.bf16.mxu0 %v6672
    %6806 = vmatpush1.bf16.msra.mxu0 %v6671
    %6807 = vmatprep.subr.bf16.mxu0 %v6670
    %6808 = vmatpush1.bf16.msra.mxu0 %v6669
    %6809 = vmatprep.subr.bf16.mxu0 %v6668
    %6810 = vmatpush1.bf16.msra.mxu0 %v6667
    %6811 = vmatprep.subr.bf16.mxu0 %v6698
    %6812 = vmatpush2.bf16.msra.mxu0 %v6697
    %6813 = vmatprep.subr.bf16.mxu0 %v6696
    %6814 = vmatpush2.bf16.msra.mxu0 %v6695
    %6815 = vmatprep.subr.bf16.mxu0 %v6694
    %6816 = vmatpush2.bf16.msra.mxu0 %v6693
    %6817 = vmatprep.subr.bf16.mxu0 %v6692
    %6818 = vmatpush2.bf16.msra.mxu0 %v6691
    %6819 = vmatprep.subr.bf16.mxu0 %v6690
    %6820 = vmatpush2.bf16.msra.mxu0 %v6689
    %6821 = vmatprep.subr.bf16.mxu0 %v6688
    %6822 = vmatpush2.bf16.msra.mxu0 %v6687
    %6823 = vmatprep.subr.bf16.mxu0 %v6686
    %6824 = vmatpush2.bf16.msra.mxu0 %v6685
    %6825 = vmatprep.subr.bf16.mxu0 %v6684
    %6826 = vmatpush2.bf16.msra.mxu0 %v6683
    %6827 = vmatprep.mubr.bf16.mxu0 %v6460
    %6828 = vmatmul.mubr.bf16.gmra.mxu0 %v6459
    %v6829 = vpop.f32.mrf.mxu0
    %v6830 = vadd.f32 %v6468, %v6829
    %v6831 = vpop.f32.mrf.mxu0
    %v6832 = vadd.f32 %v6472, %v6831
    %v6833 = vpop.f32.mrf.mxu0
    %v6834 = vadd.f32 %v6468, %v6833
    %v6835 = vpop.f32.mrf.mxu0
    %v6836 = vadd.f32 %v6472, %v6835
    %6837 = vdwg.mxu0
    %6838 = vmatprep.subr.bf16.mxu0 %v6714
    %6839 = vmatpush1.bf16.msra.mxu0 %v6713
    %6840 = vmatprep.subr.bf16.mxu0 %v6712
    %6841 = vmatpush1.bf16.msra.mxu0 %v6711
    %6842 = vmatprep.subr.bf16.mxu0 %v6710
    %6843 = vmatpush1.bf16.msra.mxu0 %v6709
    %6844 = vmatprep.subr.bf16.mxu0 %v6708
    %6845 = vmatpush1.bf16.msra.mxu0 %v6707
    %6846 = vmatprep.subr.bf16.mxu0 %v6706
    %6847 = vmatpush1.bf16.msra.mxu0 %v6705
    %6848 = vmatprep.subr.bf16.mxu0 %v6704
    %6849 = vmatpush1.bf16.msra.mxu0 %v6703
    %6850 = vmatprep.subr.bf16.mxu0 %v6702
    %6851 = vmatpush1.bf16.msra.mxu0 %v6701
    %6852 = vmatprep.subr.bf16.mxu0 %v6700
    %6853 = vmatpush1.bf16.msra.mxu0 %v6699
    %6854 = vmatprep.subr.bf16.mxu0 %v6730
    %6855 = vmatpush2.bf16.msra.mxu0 %v6729
    %6856 = vmatprep.subr.bf16.mxu0 %v6728
    %6857 = vmatpush2.bf16.msra.mxu0 %v6727
    %6858 = vmatprep.subr.bf16.mxu0 %v6726
    %6859 = vmatpush2.bf16.msra.mxu0 %v6725
    %6860 = vmatprep.subr.bf16.mxu0 %v6724
    %6861 = vmatpush2.bf16.msra.mxu0 %v6723
    %6862 = vmatprep.subr.bf16.mxu0 %v6722
    %6863 = vmatpush2.bf16.msra.mxu0 %v6721
    %6864 = vmatprep.subr.bf16.mxu0 %v6720
    %6865 = vmatpush2.bf16.msra.mxu0 %v6719
    %6866 = vmatprep.subr.bf16.mxu0 %v6718
    %6867 = vmatpush2.bf16.msra.mxu0 %v6717
    %6868 = vmatprep.subr.bf16.mxu0 %v6716
    %6869 = vmatpush2.bf16.msra.mxu0 %v6715
    %6870 = vmatprep.mubr.bf16.mxu0 %v6462
    %6871 = vmatmul.mubr.bf16.gmra.mxu0 %v6461
    %v6872 = vpop.f32.mrf.mxu0
    %v6873 = vadd.f32 %v6830, %v6872
    %v6874 = vpop.f32.mrf.mxu0
    %v6875 = vadd.f32 %v6832, %v6874
    %v6876 = vpop.f32.mrf.mxu0
    %v6877 = vadd.f32 %v6834, %v6876
    %v6878 = vpop.f32.mrf.mxu0
    %v6879 = vadd.f32 %v6836, %v6878
    %6880 = vdwg.mxu0
    %v6881 = vmax.f32 %v6873, 0.0
    %v6882 = vmax.f32 %v6875, 0.0
    %v6883 = vmax.f32 %v6877, 0.0
    %v6884 = vmax.f32 %v6879, 0.0
    %s6885 = smul.u32 4, 32
    %s6886 = smul.u32 %s6885, 1
    %s6887 = sshll.u32 %s6886, 4
    %6888 = dma.done %s171, %s6887
    %v6889 = vld [vmem:[#allocation10] sm:$0xf]
    %v6890 = vld [vmem:[#allocation10 + $0x4] sm:$0xf]
    %v6891 = vld [vmem:[#allocation10 + $0x8] sm:$0xf]
    %v6892 = vld [vmem:[#allocation10 + $0xc] sm:$0xf]
    %v6893 = vld [vmem:[#allocation10 + $0x10] sm:$0xf]
    %v6894 = vld [vmem:[#allocation10 + $0x14] sm:$0xf]
    %v6895 = vld [vmem:[#allocation10 + $0x18] sm:$0xf]
    %v6896 = vld [vmem:[#allocation10 + $0x1c] sm:$0xf]
    %v6897 = vld [vmem:[#allocation10 + $0x20] sm:$0xf]
    %v6898 = vld [vmem:[#allocation10 + $0x24] sm:$0xf]
    %v6899 = vld [vmem:[#allocation10 + $0x28] sm:$0xf]
    %v6900 = vld [vmem:[#allocation10 + $0x2c] sm:$0xf]
    %v6901 = vld [vmem:[#allocation10 + $0x30] sm:$0xf]
    %v6902 = vld [vmem:[#allocation10 + $0x34] sm:$0xf]
    %v6903 = vld [vmem:[#allocation10 + $0x38] sm:$0xf]
    %v6904 = vld [vmem:[#allocation10 + $0x3c] sm:$0xf]
    %v6905 = vld [vmem:[#allocation10 + $0x40] sm:$0xf]
    %v6906 = vld [vmem:[#allocation10 + $0x44] sm:$0xf]
    %v6907 = vld [vmem:[#allocation10 + $0x48] sm:$0xf]
    %v6908 = vld [vmem:[#allocation10 + $0x4c] sm:$0xf]
    %v6909 = vld [vmem:[#allocation10 + $0x50] sm:$0xf]
    %v6910 = vld [vmem:[#allocation10 + $0x54] sm:$0xf]
    %v6911 = vld [vmem:[#allocation10 + $0x58] sm:$0xf]
    %v6912 = vld [vmem:[#allocation10 + $0x5c] sm:$0xf]
    %v6913 = vld [vmem:[#allocation10 + $0x60] sm:$0xf]
    %v6914 = vld [vmem:[#allocation10 + $0x64] sm:$0xf]
    %v6915 = vld [vmem:[#allocation10 + $0x68] sm:$0xf]
    %v6916 = vld [vmem:[#allocation10 + $0x6c] sm:$0xf]
    %v6917 = vld [vmem:[#allocation10 + $0x70] sm:$0xf]
    %v6918 = vld [vmem:[#allocation10 + $0x74] sm:$0xf]
    %v6919 = vld [vmem:[#allocation10 + $0x78] sm:$0xf]
    %v6920 = vld [vmem:[#allocation10 + $0x7c] sm:$0xf]
    %v6921 = vpack.c.bf16 %v6883, %v6881
    %v6922 = vpack.c.bf16 %v6884, %v6882
    %v6923 = vld [vmem:[%s18] sm:$0x1]
    %v6925 = vlaneseq
    %v6926 = vshrl.u32 %v6925, 7
    %v6927 = vsub.s32 0, %v6926
    %v6928 = vrot.slane %v6923, %v6927
    %v6962 = vunpack.c.l.b16 %v6889
    %v6963 = vunpack.c.l.b16 %v6890
    %v6964 = vunpack.c.l.b16 %v6891
    %v6965 = vunpack.c.l.b16 %v6892
    %v6966 = vunpack.c.l.b16 %v6893
    %v6967 = vunpack.c.l.b16 %v6894
    %v6968 = vunpack.c.l.b16 %v6895
    %v6969 = vunpack.c.l.b16 %v6896
    %v6970 = vunpack.c.l.b16 %v6897
    %v6971 = vunpack.c.l.b16 %v6898
    %v6972 = vunpack.c.l.b16 %v6899
    %v6973 = vunpack.c.l.b16 %v6900
    %v6974 = vunpack.c.l.b16 %v6901
    %v6975 = vunpack.c.l.b16 %v6902
    %v6976 = vunpack.c.l.b16 %v6903
    %v6977 = vunpack.c.l.b16 %v6904
    %v6978 = vunpack.c.l.b16 %v6905
    %v6979 = vunpack.c.l.b16 %v6906
    %v6980 = vunpack.c.l.b16 %v6907
    %v6981 = vunpack.c.l.b16 %v6908
    %v6982 = vunpack.c.l.b16 %v6909
    %v6983 = vunpack.c.l.b16 %v6910
    %v6984 = vunpack.c.l.b16 %v6911
    %v6985 = vunpack.c.l.b16 %v6912
    %v6986 = vunpack.c.l.b16 %v6913
    %v6987 = vunpack.c.l.b16 %v6914
    %v6988 = vunpack.c.l.b16 %v6915
    %v6989 = vunpack.c.l.b16 %v6916
    %v6990 = vunpack.c.l.b16 %v6917
    %v6991 = vunpack.c.l.b16 %v6918
    %v6992 = vunpack.c.l.b16 %v6919
    %v6993 = vunpack.c.l.b16 %v6920
    %v6994 = vpack.c.b16 %v6963, %v6962
    %v6995 = vpack.c.b16 %v6965, %v6964
    %v6996 = vpack.c.b16 %v6967, %v6966
    %v6997 = vpack.c.b16 %v6969, %v6968
    %v6998 = vpack.c.b16 %v6971, %v6970
    %v6999 = vpack.c.b16 %v6973, %v6972
    %v7000 = vpack.c.b16 %v6975, %v6974
    %v7001 = vpack.c.b16 %v6977, %v6976
    %v7002 = vpack.c.b16 %v6979, %v6978
    %v7003 = vpack.c.b16 %v6981, %v6980
    %v7004 = vpack.c.b16 %v6983, %v6982
    %v7005 = vpack.c.b16 %v6985, %v6984
    %v7006 = vpack.c.b16 %v6987, %v6986
    %v7007 = vpack.c.b16 %v6989, %v6988
    %v7008 = vpack.c.b16 %v6991, %v6990
    %v7009 = vpack.c.b16 %v6993, %v6992
    %7026 = vmatprep.subr.bf16.mxu0 0
    %7027 = vmatpush1.bf16.msra.mxu0 %v7001
    %7028 = vmatprep.subr.bf16.mxu0 0
    %7029 = vmatpush1.bf16.msra.mxu0 %v7000
    %7030 = vmatprep.subr.bf16.mxu0 0
    %7031 = vmatpush1.bf16.msra.mxu0 %v6999
    %7032 = vmatprep.subr.bf16.mxu0 0
    %7033 = vmatpush1.bf16.msra.mxu0 %v6998
    %7034 = vmatprep.subr.bf16.mxu0 0
    %7035 = vmatpush1.bf16.msra.mxu0 %v6997
    %7036 = vmatprep.subr.bf16.mxu0 0
    %7037 = vmatpush1.bf16.msra.mxu0 %v6996
    %7038 = vmatprep.subr.bf16.mxu0 0
    %7039 = vmatpush1.bf16.msra.mxu0 %v6995
    %7040 = vmatprep.subr.bf16.mxu0 0
    %7041 = vmatpush1.bf16.msra.mxu0 %v6994
    %7042 = vmatprep.subr.bf16.mxu0 0
    %7043 = vmatpush2.bf16.msra.mxu0 %v7009
    %7044 = vmatprep.subr.bf16.mxu0 0
    %7045 = vmatpush2.bf16.msra.mxu0 %v7008
    %7046 = vmatprep.subr.bf16.mxu0 0
    %7047 = vmatpush2.bf16.msra.mxu0 %v7007
    %7048 = vmatprep.subr.bf16.mxu0 0
    %7049 = vmatpush2.bf16.msra.mxu0 %v7006
    %7050 = vmatprep.subr.bf16.mxu0 0
    %7051 = vmatpush2.bf16.msra.mxu0 %v7005
    %7052 = vmatprep.subr.bf16.mxu0 0
    %7053 = vmatpush2.bf16.msra.mxu0 %v7004
    %7054 = vmatprep.subr.bf16.mxu0 0
    %7055 = vmatpush2.bf16.msra.mxu0 %v7003
    %7056 = vmatprep.subr.bf16.mxu0 0
    %7057 = vmatpush2.bf16.msra.mxu0 %v7002
    %7058 = vmatprep.mubr.bf16.mxu0 %v6922
    %7059 = vmatmul.mubr.bf16.gmra.mxu0 %v6921
    %v7060 = vpop.f32.mrf.mxu0
    %v7061 = vadd.f32 %v6928, %v7060
    %v7062 = vpop.f32.mrf.mxu0
    %v7063 = vpop.f32.mrf.mxu0
    %v7064 = vadd.f32 %v6928, %v7063
    %v7065 = vpop.f32.mrf.mxu0
    %7066 = vdwg.mxu0
    %v7067 = vmax.f32 %v7061, 0.0
    %v7068 = vmax.f32 %v7064, 0.0
    %s7069 = smul.u32 %s197, 1
    %s7070 = sshll.u32 %s7069, 4
    %7071 = dma.done %s183, %s7070
    %v7072 = vld [vmem:[#allocation11] sm:$0xf]
    %v7073 = vld [vmem:[#allocation11 + $0x4] sm:$0xf]
    %v7074 = vld [vmem:[#allocation11 + $0x8] sm:$0xf]
    %v7075 = vld [vmem:[#allocation11 + $0xc] sm:$0xf]
    %v7076 = vld [vmem:[#allocation11 + $0x10] sm:$0xf]
    %v7077 = vld [vmem:[#allocation11 + $0x14] sm:$0xf]
    %v7078 = vld [vmem:[#allocation11 + $0x18] sm:$0xf]
    %v7079 = vld [vmem:[#allocation11 + $0x1c] sm:$0xf]
    %v7080 = vld [vmem:[#allocation11 + $0x20] sm:$0xf]
    %v7081 = vld [vmem:[#allocation11 + $0x24] sm:$0xf]
    %v7082 = vld [vmem:[#allocation11 + $0x28] sm:$0xf]
    %v7083 = vld [vmem:[#allocation11 + $0x2c] sm:$0xf]
    %v7084 = vld [vmem:[#allocation11 + $0x30] sm:$0xf]
    %v7085 = vld [vmem:[#allocation11 + $0x34] sm:$0xf]
    %v7086 = vld [vmem:[#allocation11 + $0x38] sm:$0xf]
    %v7087 = vld [vmem:[#allocation11 + $0x3c] sm:$0xf]
    %v7088 = vpack.c.bf16 %v7068, %v7067
    %v7089 = vld [vmem:[%s20] sm:$0x1]
    %v7091 = vlaneseq
    %v7092 = vshrl.u32 %v7091, 7
    %v7093 = vsub.s32 0, %v7092
    %v7094 = vrot.slane %v7089, %v7093
    %v7112 = vunpack.c.l.b16 %v7072
    %v7113 = vunpack.c.l.b16 %v7073
    %v7114 = vunpack.c.l.b16 %v7074
    %v7115 = vunpack.c.l.b16 %v7075
    %v7116 = vunpack.c.l.b16 %v7076
    %v7117 = vunpack.c.l.b16 %v7077
    %v7118 = vunpack.c.l.b16 %v7078
    %v7119 = vunpack.c.l.b16 %v7079
    %v7120 = vunpack.c.l.b16 %v7080
    %v7121 = vunpack.c.l.b16 %v7081
    %v7122 = vunpack.c.l.b16 %v7082
    %v7123 = vunpack.c.l.b16 %v7083
    %v7124 = vunpack.c.l.b16 %v7084
    %v7125 = vunpack.c.l.b16 %v7085
    %v7126 = vunpack.c.l.b16 %v7086
    %v7127 = vunpack.c.l.b16 %v7087
    %v7128 = vpack.c.b16 %v7113, %v7112
    %v7129 = vpack.c.b16 %v7115, %v7114
    %v7130 = vpack.c.b16 %v7117, %v7116
    %v7131 = vpack.c.b16 %v7119, %v7118
    %v7132 = vpack.c.b16 %v7121, %v7120
    %v7133 = vpack.c.b16 %v7123, %v7122
    %v7134 = vpack.c.b16 %v7125, %v7124
    %v7135 = vpack.c.b16 %v7127, %v7126
    %7144 = vmatprep.subr.bf16.mxu0 0
    %7145 = vmatpush1.bf16.msra.mxu0 %v7135
    %7146 = vmatprep.subr.bf16.mxu0 0
    %7147 = vmatpush1.bf16.msra.mxu0 %v7134
    %7148 = vmatprep.subr.bf16.mxu0 0
    %7149 = vmatpush1.bf16.msra.mxu0 %v7133
    %7150 = vmatprep.subr.bf16.mxu0 0
    %7151 = vmatpush1.bf16.msra.mxu0 %v7132
    %7152 = vmatprep.subr.bf16.mxu0 0
    %7153 = vmatpush1.bf16.msra.mxu0 %v7131
    %7154 = vmatprep.subr.bf16.mxu0 0
    %7155 = vmatpush1.bf16.msra.mxu0 %v7130
    %7156 = vmatprep.subr.bf16.mxu0 0
    %7157 = vmatpush1.bf16.msra.mxu0 %v7129
    %7158 = vmatprep.subr.bf16.mxu0 0
    %7159 = vmatpush1.bf16.msra.mxu0 %v7128
    %7160 = vmatprep.subr.bf16.mxu0 0
    %7161 = vmatpush2.bf16.msra.mxu0 0
    %7162 = vmatprep.subr.bf16.mxu0 0
    %7163 = vmatpush2.bf16.msra.mxu0 0
    %7164 = vmatprep.subr.bf16.mxu0 0
    %7165 = vmatpush2.bf16.msra.mxu0 0
    %7166 = vmatprep.subr.bf16.mxu0 0
    %7167 = vmatpush2.bf16.msra.mxu0 0
    %7168 = vmatprep.subr.bf16.mxu0 0
    %7169 = vmatpush2.bf16.msra.mxu0 0
    %7170 = vmatprep.subr.bf16.mxu0 0
    %7171 = vmatpush2.bf16.msra.mxu0 0
    %7172 = vmatprep.subr.bf16.mxu0 0
    %7173 = vmatpush2.bf16.msra.mxu0 0
    %7174 = vmatprep.subr.bf16.mxu0 0
    %7175 = vmatpush2.bf16.msra.mxu0 0
    %7176 = vmatprep.mubr.bf16.mxu0 0
    %7177 = vmatmul.mubr.bf16.gmra.mxu0 %v7088
    %v7178 = vpop.f32.mrf.mxu0
    %v7179 = vadd.f32 %v7094, %v7178
    %v7180 = vpop.f32.mrf.mxu0
    %v7181 = vpop.f32.mrf.mxu0
    %v7182 = vadd.f32 %v7094, %v7181
    %v7183 = vpop.f32.mrf.mxu0
    %7184 = vdwg.mxu0
    %v7185 = vtanh.pop %v7179
    %v7186 = vtanh.pop %v7182
    %7187 = vst [vmem:[#allocation18] sm:$0xff] %v7185
    %7188 = vst [vmem:[#allocation18 + $0x8] sm:$0xff] %v7186
    // Predicated region
    $region94: #{tpu_custom_call.1} parent=1 // pred_check
      _
    $region95: #{tpu_custom_call.1} parent=1 // pred_check_branch
      %7190 = sbr.rel (0) target = $region97
    $region96: #{tpu_custom_call.1} parent=1 // pred_region
      %s7192 = ssub.s32 256, 256
      %7193 = vsyncadd [#allocation15], %s7192
      %s7194 = sshll.u32 [#allocation18], 4
      %s7195 = int_to_ptr.vmem [resolvable:$true] %s7194
      %7200 = dma.vmem_to_hbm [thread:$0]  %s7195, 256, %s21, [#allocation15], 128, 128, 8
    $region97: #{tpu_custom_call.1} parent=1 // pred_fallthru
      _
    // Predicated region
    $region98: #{tpu_custom_call.1} parent=1 // pred_check
      _
    $region99: #{tpu_custom_call.1} parent=1 // pred_check_branch
      %7202 = sbr.rel (0) target = $region101
    $region100: #{tpu_custom_call.1} parent=1 // pred_region
      %7203 = dma.done [#allocation15], 256
    $region101: #{tpu_custom_call.1} parent=1 // pred_fallthru
      _
    %7204 = vsyncpa [#allocation14], 1
    %7205 = vsyncpa [#allocation17], 1
    %7206 = vsyncpa [#allocation15], 1
  %7207 = vsyncmov [#allocation12]
  %s7208 = vpop.sfrf %7207
  %p7209 = scmp.eq.s32.totalorder %s7208, 0
  %p7210 = pneg %p7209
  %7212 = shalt.err (%p7210)
  %s7213 = scalar_lea.sflag [#allocation12], 1
  %7214 = vsyncmov %s7213
  %s7215 = vpop.sfrf %7214
  %p7216 = scmp.eq.s32.totalorder %s7215, 0
  %p7217 = pneg %p7216
  %7219 = shalt.err (%p7217)
  %s7220 = scalar_lea.sflag [#allocation12], 2
  %7221 = vsyncmov %s7220
  %s7222 = vpop.sfrf %7221
  %p7223 = scmp.eq.s32.totalorder %s7222, 0
  %p7224 = pneg %p7223
  %7226 = shalt.err (%p7224)
  %s7227 = scalar_lea.sflag [#allocation12], 3
  %7228 = vsyncmov %s7227
  %s7229 = vpop.sfrf %7228
  %p7230 = scmp.eq.s32.totalorder %s7229, 0
  %p7231 = pneg %p7230
  %7233 = shalt.err (%p7231)
  %s7234 = scalar_lea.sflag [#allocation12], 4
  %7235 = vsyncmov %s7234
  %s7236 = vpop.sfrf %7235
  %p7237 = scmp.eq.s32.totalorder %s7236, 0
  %p7238 = pneg %p7237
  %7240 = shalt.err (%p7238)
  %s7241 = scalar_lea.sflag [#allocation12], 5
  %7242 = vsyncmov %s7241
  %s7243 = vpop.sfrf %7242
  %p7244 = scmp.eq.s32.totalorder %s7243, 0
  %p7245 = pneg %p7244
  %7247 = shalt.err (%p7245)
  %s7248 = scalar_lea.sflag [#allocation12], 6
  %7249 = vsyncmov %s7248
  %s7250 = vpop.sfrf %7249
  %p7251 = scmp.eq.s32.totalorder %s7250, 0
  %p7252 = pneg %p7251
  %7254 = shalt.err (%p7252)
  %s7255 = scalar_lea.sflag [#allocation12], 7
  %7256 = vsyncmov %s7255
  %s7257 = vpop.sfrf %7256
  %p7258 = scmp.eq.s32.totalorder %s7257, 0
  %p7259 = pneg %p7258
  %7261 = shalt.err (%p7259)
  %s7262 = scalar_lea.sflag [#allocation12], 8
  %7263 = vsyncmov %s7262
  %s7264 = vpop.sfrf %7263
  %p7265 = scmp.eq.s32.totalorder %s7264, 0
  %p7266 = pneg %p7265
  %7268 = shalt.err (%p7266)
  %s7269 = scalar_lea.sflag [#allocation12], 9
  %7270 = vsyncmov %s7269
  %s7271 = vpop.sfrf %7270
  %p7272 = scmp.eq.s32.totalorder %s7271, 0
  %p7273 = pneg %p7272
  %7275 = shalt.err (%p7273)

</llo_original>
